<compile_context>
chip_gen: v6e
topology: v6e:2x2x1
jax: 0.10.0
libtpu: 0.0.40
codegen_flags: <defaults>
</compile_context>

<pallas_src>
import functools

import jax
import jax.numpy as jnp
import numpy as np
from jax.experimental import pallas as pl
from jax.experimental.pallas import tpu as pltpu

# ---------------- static hyper-parameters ----------------
MODEL_DIM = 32
NUM_HEADS = 4
D_V = 8
ATT_DIM = 8
REL_POS_DIM = 8
DEPREL_EDGE_DIM = 8
DEPARC_EDGE_DIM = 8
MAX_REL_POS = 4                      # max_relative_position
DEPREL_SIZE = 16
DEPARC_SIZE = 6
REL_POS_VOCAB = 2 * MAX_REL_POS + 1  # use_neg_dist=True
INF_NUMBER = 1e12                    # word.INFINITY_NUMBER
NEG_SLOPE = 0.2

BR_DIM = DEPREL_EDGE_DIM + DEPARC_EDGE_DIM             # 16
HD = NUM_HEADS * D_V                                   # 32  (head-batched value width)
HA = NUM_HEADS * ATT_DIM                               # 32  (head-batched att width)

N_NODES = 8
N_EDGES = 16

# ---- weight-slab row offsets (all multiples of 8 -> sublane-aligned windows)
_W_KQ    = 0
_W_V     = _W_KQ + MODEL_DIM          # 32
_W_SELF  = _W_V + MODEL_DIM           # 64
_W_ASRC  = _W_SELF + MODEL_DIM        # 96
_W_ATGT  = _W_ASRC + HD               # 128
_W_AP    = _W_ATGT + HD               # 160
_W_EBR   = _W_AP + REL_POS_DIM        # 168
_W_EBETA = _W_EBR + BR_DIM            # 184
_W_FIN   = _W_EBETA + HA              # 216
_W_BIAS  = _W_FIN + HD                # 248
_W_ROWS  = 256                        # padded to a multiple of 8
_W_COLS  = 32

# ---- edge-slab row offsets (rows of a (4E, 16) f32 slab)
_E_SRC = 0
_E_TGT = N_EDGES
_E_POS = 2 * N_EDGES
_E_BR  = 3 * N_EDGES
_E_ROWS = 4 * N_EDGES
_E_COLS = BR_DIM                      # 16

# Precision audit (see header). Gather/scatter dots must stay exact; dense dots
# kept at HIGHEST so the rtol=1e-3/atol=1e-4 parity check passes.
_PREC_GATHER = jax.lax.Precision.HIGHEST
_PREC_DENSE = jax.lax.Precision.HIGHEST
# TN dimension numbers: contract over dim 0 of both operands (== lhs.T @ rhs)
_TN_DIMS = (((0,), (0,)), ((), ()))


def _leaky(x):
    return jnp.where(x >= 0, x, NEG_SLOPE * x)


# ---------------- Pallas kernel ----------------
def argcn_kernel(x_ref, e_ref, w_ref, out_ref, escore_ref):
    f32 = jnp.float32
    dotd = functools.partial(jnp.dot, preferred_element_type=f32, precision=_PREC_DENSE)
    dotg = functools.partial(jnp.dot, preferred_element_type=f32, precision=_PREC_GATHER)

    X = x_ref[...]                                        # (N, MODEL_DIM)
    S = e_ref[_E_SRC:_E_SRC + N_EDGES, 0:N_NODES]         # (E, N) one-hot of src index
    T = e_ref[_E_TGT:_E_TGT + N_EDGES, 0:N_NODES]         # (E, N) one-hot of tgt index
    p = e_ref[_E_POS:_E_POS + N_EDGES, 0:REL_POS_DIM]     # (E, REL_POS_DIM)
    br = e_ref[_E_BR:_E_BR + N_EDGES, :]                  # (E, BR_DIM)

    # node projections: key/query, value, self-edge projection (row-packed slab)
    kq = dotd(X, w_ref[_W_KQ:_W_KQ + MODEL_DIM, :])               # (N, HD)
    v = dotd(X, w_ref[_W_V:_W_V + MODEL_DIM, :])                  # (N, HD)
    self_proj = dotd(X, w_ref[_W_SELF:_W_SELF + MODEL_DIM, :])    # (N, MODEL_DIM)

    # index_select via one-hot matmul (all heads at once, exact f32)
    kq_src = dotg(S, kq)                                          # (E, HD)
    kq_tgt = dotg(T, kq)                                          # (E, HD)
    v_src = dotg(S, v)                                            # (E, HD)

    # attention scores for all heads in one shot (block-diag per-head weights)
    att = _leaky(dotd(kq_src, w_ref[_W_ASRC:_W_ASRC + HD, :])
                 + dotd(kq_tgt, w_ref[_W_ATGT:_W_ATGT + HD, :])
                 + dotd(p, w_ref[_W_AP:_W_AP + REL_POS_DIM, :]))  # (E, HA)

    # single global max (matches att_scores.max() over all edges/heads/att-dim)
    exp_all = jnp.exp(att - att.max())                            # (E, HA)

    # neighborhood softmax denominator: scatter_add over tgt then gather back,
    # both batched over heads; scatter is a TN dot (contract over E, no T.T).
    nsum = jax.lax.dot_general(T, exp_all, _TN_DIMS,
                               preferred_element_type=f32,
                               precision=_PREC_GATHER)            # (N, HA)
    denom = dotg(T, nsum)                                         # (E, HA)
    beta = exp_all / (denom + 1.0 / INF_NUMBER)                   # (E, HA)

    # edge scores: `rep` is folded into the edge weights at pack time, so this
    # matmul directly yields the (E, HD) head-expanded pre-activation. leaky
    # commutes with the column-repeat, so numerics match the reference exactly.
    escore_exp = _leaky(dotd(br, w_ref[_W_EBR:_W_EBR + BR_DIM, :])
                        + dotd(beta, w_ref[_W_EBETA:_W_EBETA + HA, :]))  # (E, HD)
    escore_ref[...] = escore_exp                                  # lane-dense store

    # weight values per head and scatter_add into target nodes (all heads at once)
    weighted = v_src * escore_exp                                 # (E, HD)
    out_nodes = jax.lax.dot_general(T, weighted, _TN_DIMS,
                                    preferred_element_type=f32,
                                    precision=_PREC_GATHER)       # (N, HD)

    out_ref[...] = (dotd(out_nodes, w_ref[_W_FIN:_W_FIN + HD, :])
                    + self_proj
                    + w_ref[_W_BIAS:_W_BIAS + 1, :])              # (N, MODEL_DIM)


# ---------------- weight packing (hoisted; run once, cached with params) ----------------
def pack_weights(params):
    """Re-arrange the module parameters into one sublane/lane-aligned slab.

    Only depends on the weights, so it is computed once outside the per-call
    (jitted) forward path and reused across calls.
    """
    aw = params["att_weight"]                                    # (H, 2*dv+rp, att_dim)
    w_src_bd = jax.scipy.linalg.block_diag(
        *[aw[h, :D_V, :] for h in range(NUM_HEADS)])             # (HD, HA)
    w_tgt_bd = jax.scipy.linalg.block_diag(
        *[aw[h, D_V:2 * D_V, :] for h in range(NUM_HEADS)])      # (HD, HA)
    w_p_all = jnp.concatenate(
        [aw[h, 2 * D_V:, :] for h in range(NUM_HEADS)], axis=1)  # (rp, HA)

    # fold the head->lanes expander into the edge weights (4 -> 32 output lanes)
    rep = jnp.repeat(jnp.eye(NUM_HEADS, dtype=jnp.float32), D_V, axis=1)  # (H, HD)
    ew = params["edge_weight"]                                   # (H, BR_DIM+ATT_DIM, 1)
    ew_br = ew[:, :BR_DIM, 0].T                                  # (BR_DIM, H)
    ew_beta_bd = jax.scipy.linalg.block_diag(
        *[ew[h, BR_DIM:, :] for h in range(NUM_HEADS)])          # (HA, H)
    ew_br_exp = ew_br @ rep                                      # (BR_DIM, HD)
    ew_beta_exp = ew_beta_bd @ rep                               # (HA, HD)

    slab = jnp.concatenate([
        params["wkq_t"], params["wv_t"], params["wself_t"],      # rows   0..95
        w_src_bd, w_tgt_bd, w_p_all,                             # rows  96..167
        ew_br_exp, ew_beta_exp,                                  # rows 168..215
        params["wfinal_t"], params["final_bias"][None, :],       # rows 216..248
    ], axis=0).astype(jnp.float32)                               # (249, 32)
    slab = jnp.pad(slab, ((0, _W_ROWS - slab.shape[0]), (0, 0)))  # (256, 32)
    return slab


# ---------------- jitted forward: lookups, slab assembly, pallas_call ----------------
@jax.jit
def argcn_forward(w_slab, deprel_emb, deparc_emb, rel_pos_emb,
                  inp, dep_rel_pos_edge, edge_index, deprel_edge, deparc_edge):
    # (word_rel_pos_edge / deprel_ext_edge unused under this config:
    #  use_word_rel_pos=False, use_deprel=True, omit_self_edge=False)
    src_index = edge_index[0]
    tgt_index = edge_index[1]

    # embedding lookups (glue)
    deprel = deprel_emb[deprel_edge]                             # (E, DEPREL_EDGE_DIM)
    deparc = deparc_emb[deparc_edge]                             # (E, DEPARC_EDGE_DIM)
    b_r = jnp.concatenate([deprel, deparc], axis=-1)             # (E, BR_DIM)
    p = rel_pos_emb[dep_rel_pos_edge + MAX_REL_POS]              # (E, REL_POS_DIM), use_neg_dist

    # src/tgt one-hots + p + b_r packed into ONE row-aligned edge slab -> 1 DMA
    S = jax.nn.one_hot(src_index, N_NODES, dtype=jnp.float32)    # (E, N)
    T = jax.nn.one_hot(tgt_index, N_NODES, dtype=jnp.float32)    # (E, N)
    stp = jnp.concatenate([S, T, p], axis=0)                     # (3E, 8)
    stp = jnp.pad(stp, ((0, 0), (0, _E_COLS - N_NODES)))         # (3E, 16) lane-padded
    edata = jnp.concatenate([stp, b_r], axis=0)                  # (4E, 16)

    vmem = pl.BlockSpec(memory_space=pltpu.MemorySpace.VMEM)
    out, escore_exp = pl.pallas_call(
        argcn_kernel,
        out_shape=(jax.ShapeDtypeStruct((N_NODES, MODEL_DIM), jnp.float32),
                   jax.ShapeDtypeStruct((N_EDGES, HD), jnp.float32)),
        in_specs=[vmem, vmem, vmem],
        out_specs=(vmem, vmem),
    )(inp, edata, w_slab)

    # (E, HD) expanded scores -> (E, H); column h == torch attn_per_head[h]
    escore = escore_exp[:, ::D_V]
    return out, escore


# ---------------- pure-JAX reference (for verification) ----------------
def argcn_reference(params, inp, dep_rel_pos_edge, edge_index, deprel_edge, deparc_edge):
    src, tgt = edge_index[0], edge_index[1]
    deprel = params["deprel_emb"][deprel_edge]
    deparc = params["deparc_emb"][deparc_edge]
    b_r = jnp.concatenate([deprel, deparc], -1)[:, None, :].repeat(NUM_HEADS, 1)
    p = params["rel_pos_emb"][dep_rel_pos_edge + MAX_REL_POS][:, None, :].repeat(NUM_HEADS, 1)

    kq = (inp @ params["wkq_t"]).reshape(N_NODES, NUM_HEADS, D_V)
    v = (inp @ params["wv_t"]).reshape(N_NODES, NUM_HEADS, D_V)
    kq_src, kq_tgt, v_src = kq[src], kq[tgt], v[src]

    att_cat = jnp.concatenate([kq_src, kq_tgt, p], -1)
    att = _leaky(jnp.einsum("eij,ijk->eik", att_cat, params["att_weight"]))
    att = att - att.max()
    exp_att = jnp.exp(att)
    nsum = jnp.zeros((N_NODES, NUM_HEADS, ATT_DIM)).at[tgt].add(exp_att)
    beta = exp_att / (nsum[tgt] + 1.0 / INF_NUMBER)
    edge_cat = jnp.concatenate([b_r, beta], -1)
    escore = _leaky(jnp.einsum("eij,ijk->eik", edge_cat, params["edge_weight"]))
    weighted = v_src * escore
    out = jnp.zeros((N_NODES, NUM_HEADS, D_V)).at[tgt].add(weighted)
    out = out.reshape(N_NODES, NUM_HEADS * D_V)
    out = out @ params["wfinal_t"] + inp @ params["wself_t"] + params["final_bias"]
    return out, escore[..., 0]


# ---------------- deterministic parameter init ----------------
def init_params(key):
    def xavier(k, shape):
        fan_in, fan_out = shape[-2], shape[-1]
        lim = float(np.sqrt(6.0 / (fan_in + fan_out)))
        return jax.random.uniform(k, shape, jnp.float32, -lim, lim)

    ks = jax.random.split(key, 10)
    params = {
        # Linear weights stored already transposed (in_dim, out_dim) for x @ W^T
        "wkq_t": xavier(ks[0], (MODEL_DIM, NUM_HEADS * D_V)),
        "wv_t": xavier(ks[1], (MODEL_DIM, NUM_HEADS * D_V)),
        "wfinal_t": xavier(ks[2], (NUM_HEADS * D_V, MODEL_DIM)),
        "wself_t": xavier(ks[3], (MODEL_DIM, MODEL_DIM)),
        "att_weight": xavier(ks[4], (NUM_HEADS, 2 * D_V + REL_POS_DIM, ATT_DIM)),
        "edge_weight": xavier(ks[5], (NUM_HEADS, BR_DIM + ATT_DIM, 1)),
        "final_bias": jnp.zeros((MODEL_DIM,), jnp.float32),   # nn.init.zeros_
        "deprel_emb": jax.random.normal(ks[6], (DEPREL_SIZE, DEPREL_EDGE_DIM), jnp.float32) * 0.1,
        "deparc_emb": jax.random.normal(ks[7], (DEPARC_SIZE, DEPARC_EDGE_DIM), jnp.float32) * 0.1,
        "rel_pos_emb": jax.random.normal(ks[8], (REL_POS_VOCAB, REL_POS_DIM), jnp.float32) * 0.1,
    }
    # padding_idx = word.PAD (=0) rows are zero
    params["deprel_emb"] = params["deprel_emb"].at[0].set(0.0)
    params["deparc_emb"] = params["deparc_emb"].at[0].set(0.0)
    return params


if __name__ == "__main__":
    key = jax.random.PRNGKey(0)
    kp, k1, k2, k3, k4, k5, k6 = jax.random.split(key, 7)

    params = init_params(kp)

    inp = jax.random.normal(k1, (N_NODES, MODEL_DIM), jnp.float32)
    edge_index = jax.random.randint(k2, (2, N_EDGES), 0, N_NODES, jnp.int32)
    dep_rel_pos_edge = jax.random.randint(k3, (N_EDGES,), -MAX_REL_POS, MAX_REL_POS + 1, jnp.int32)
    word_rel_pos_edge = jax.random.randint(k4, (N_EDGES,), -MAX_REL_POS, MAX_REL_POS + 1, jnp.int32)  # unused (use_word_rel_pos=False)
    deprel_ext_edge = jnp.zeros((N_EDGES,), jnp.int32)  # unused (use_deprel=True, omit_self_edge=False)
    deprel_edge = jax.random.randint(k5, (N_EDGES,), 1, DEPREL_SIZE, jnp.int32)
    deparc_edge = jax.random.randint(k6, (N_EDGES,), 1, DEPARC_SIZE, jnp.int32)

    # weight packing hoisted out of the per-call path; cached alongside the params
    w_slab = jax.block_until_ready(pack_weights(params))

    out, escore = argcn_forward(w_slab, params["deprel_emb"], params["deparc_emb"],
                                params["rel_pos_emb"], inp, dep_rel_pos_edge,
                                edge_index, deprel_edge, deparc_edge)
    out = jax.block_until_ready(out)
    escore = jax.block_until_ready(escore)

    # verify against a pure-JAX reference of the PyTorch forward
    ref_out, ref_escore = argcn_reference(params, inp, dep_rel_pos_edge, edge_index,
                                          deprel_edge, deparc_edge)
    np.testing.assert_allclose(np.asarray(out), np.asarray(ref_out), rtol=1e-3, atol=1e-4)
    np.testing.assert_allclose(np.asarray(escore), np.asarray(ref_escore), rtol=1e-3, atol=1e-4)

    print("KERNEL_OK")
</pallas_src>

<mosaic_0001>
module attributes {stable_mosaic.version = 11 : i64} {
  func.func @argcn_kernel(%arg0: memref<8x32xf32, #tpu.memory_space<vmem>>, %arg1: memref<64x16xf32, #tpu.memory_space<vmem>>, %arg2: memref<256x32xf32, #tpu.memory_space<vmem>>, %arg3: memref<8x32xf32, #tpu.memory_space<vmem>>, %arg4: memref<16x32xf32, #tpu.memory_space<vmem>>) attributes {dimension_semantics = [], scalar_prefetch = 0 : i64, scratch_operands = 0 : i64, tpu.core_type = #tpu.core_type<tc>} {
    %c0 = arith.constant 0 : index
    %c0_0 = arith.constant 0 : index
    %0 = vector.load %arg0[%c0, %c0_0] : memref<8x32xf32, #tpu.memory_space<vmem>>, vector<8x32xf32>
    %c0_1 = arith.constant 0 : index
    %c0_2 = arith.constant 0 : index
    %1 = vector.load %arg1[%c0_1, %c0_2] : memref<64x16xf32, #tpu.memory_space<vmem>>, vector<16x8xf32>
    %c16 = arith.constant 16 : index
    %c0_3 = arith.constant 0 : index
    %2 = vector.load %arg1[%c16, %c0_3] : memref<64x16xf32, #tpu.memory_space<vmem>>, vector<16x8xf32>
    %c32 = arith.constant 32 : index
    %c0_4 = arith.constant 0 : index
    %3 = vector.load %arg1[%c32, %c0_4] : memref<64x16xf32, #tpu.memory_space<vmem>>, vector<16x8xf32>
    %c48 = arith.constant 48 : index
    %c0_5 = arith.constant 0 : index
    %4 = vector.load %arg1[%c48, %c0_5] : memref<64x16xf32, #tpu.memory_space<vmem>>, vector<16x16xf32>
    %c0_6 = arith.constant 0 : index
    %c0_7 = arith.constant 0 : index
    %5 = vector.load %arg2[%c0_6, %c0_7] : memref<256x32xf32, #tpu.memory_space<vmem>>, vector<32x32xf32>
    %cst = arith.constant dense<0.000000e+00> : vector<8x32xf32>
    %6 = tpu.matmul %0, %5, %cst {dimension_numbers = #tpu.dot_dimension_numbers<[1], [0], [0], [1], [0, 0, 1, 1], [], []>, precision = #tpu.contract_precision<fp32>} : vector<8x32xf32>, vector<32x32xf32>, vector<8x32xf32> -> vector<8x32xf32>
    %c32_8 = arith.constant 32 : index
    %c0_9 = arith.constant 0 : index
    %7 = vector.load %arg2[%c32_8, %c0_9] : memref<256x32xf32, #tpu.memory_space<vmem>>, vector<32x32xf32>
    %cst_10 = arith.constant dense<0.000000e+00> : vector<8x32xf32>
    %8 = tpu.matmul %0, %7, %cst_10 {dimension_numbers = #tpu.dot_dimension_numbers<[1], [0], [0], [1], [0, 0, 1, 1], [], []>, precision = #tpu.contract_precision<fp32>} : vector<8x32xf32>, vector<32x32xf32>, vector<8x32xf32> -> vector<8x32xf32>
    %c64 = arith.constant 64 : index
    %c0_11 = arith.constant 0 : index
    %9 = vector.load %arg2[%c64, %c0_11] : memref<256x32xf32, #tpu.memory_space<vmem>>, vector<32x32xf32>
    %cst_12 = arith.constant dense<0.000000e+00> : vector<8x32xf32>
    %10 = tpu.matmul %0, %9, %cst_12 {dimension_numbers = #tpu.dot_dimension_numbers<[1], [0], [0], [1], [0, 0, 1, 1], [], []>, precision = #tpu.contract_precision<fp32>} : vector<8x32xf32>, vector<32x32xf32>, vector<8x32xf32> -> vector<8x32xf32>
    %cst_13 = arith.constant dense<0.000000e+00> : vector<16x32xf32>
    %11 = tpu.matmul %1, %6, %cst_13 {dimension_numbers = #tpu.dot_dimension_numbers<[1], [0], [0], [1], [0, 0, 1, 1], [], []>, precision = #tpu.contract_precision<fp32>} : vector<16x8xf32>, vector<8x32xf32>, vector<16x32xf32> -> vector<16x32xf32>
    %cst_14 = arith.constant dense<0.000000e+00> : vector<16x32xf32>
    %12 = tpu.matmul %2, %6, %cst_14 {dimension_numbers = #tpu.dot_dimension_numbers<[1], [0], [0], [1], [0, 0, 1, 1], [], []>, precision = #tpu.contract_precision<fp32>} : vector<16x8xf32>, vector<8x32xf32>, vector<16x32xf32> -> vector<16x32xf32>
    %cst_15 = arith.constant dense<0.000000e+00> : vector<16x32xf32>
    %13 = tpu.matmul %1, %8, %cst_15 {dimension_numbers = #tpu.dot_dimension_numbers<[1], [0], [0], [1], [0, 0, 1, 1], [], []>, precision = #tpu.contract_precision<fp32>} : vector<16x8xf32>, vector<8x32xf32>, vector<16x32xf32> -> vector<16x32xf32>
    %c96 = arith.constant 96 : index
    %c0_16 = arith.constant 0 : index
    %14 = vector.load %arg2[%c96, %c0_16] : memref<256x32xf32, #tpu.memory_space<vmem>>, vector<32x32xf32>
    %cst_17 = arith.constant dense<0.000000e+00> : vector<16x32xf32>
    %15 = tpu.matmul %11, %14, %cst_17 {dimension_numbers = #tpu.dot_dimension_numbers<[1], [0], [0], [1], [0, 0, 1, 1], [], []>, precision = #tpu.contract_precision<fp32>} : vector<16x32xf32>, vector<32x32xf32>, vector<16x32xf32> -> vector<16x32xf32>
    %c128 = arith.constant 128 : index
    %c0_18 = arith.constant 0 : index
    %16 = vector.load %arg2[%c128, %c0_18] : memref<256x32xf32, #tpu.memory_space<vmem>>, vector<32x32xf32>
    %cst_19 = arith.constant dense<0.000000e+00> : vector<16x32xf32>
    %17 = tpu.matmul %12, %16, %cst_19 {dimension_numbers = #tpu.dot_dimension_numbers<[1], [0], [0], [1], [0, 0, 1, 1], [], []>, precision = #tpu.contract_precision<fp32>} : vector<16x32xf32>, vector<32x32xf32>, vector<16x32xf32> -> vector<16x32xf32>
    %18 = arith.addf %15, %17 : vector<16x32xf32>
    %c160 = arith.constant 160 : index
    %c0_20 = arith.constant 0 : index
    %19 = vector.load %arg2[%c160, %c0_20] : memref<256x32xf32, #tpu.memory_space<vmem>>, vector<8x32xf32>
    %cst_21 = arith.constant dense<0.000000e+00> : vector<16x32xf32>
    %20 = tpu.matmul %3, %19, %cst_21 {dimension_numbers = #tpu.dot_dimension_numbers<[1], [0], [0], [1], [0, 0, 1, 1], [], []>, precision = #tpu.contract_precision<fp32>} : vector<16x8xf32>, vector<8x32xf32>, vector<16x32xf32> -> vector<16x32xf32>
    %21 = arith.addf %18, %20 : vector<16x32xf32>
    %cst_22 = arith.constant 0.000000e+00 : f32
    %22 = vector.broadcast %cst_22 : f32 to vector<16x32xf32>
    %23 = arith.cmpf oge, %21, %22 : vector<16x32xf32>
    %cst_23 = arith.constant 2.000000e-01 : f32
    %24 = vector.broadcast %cst_23 : f32 to vector<16x32xf32>
    %25 = arith.mulf %24, %21 : vector<16x32xf32>
    %26 = arith.select %23, %21, %25 : vector<16x32xi1>, vector<16x32xf32>
    %27 = vector.shape_cast %26 : vector<16x32xf32> to vector<1x16x32xf32>
    %cst_24 = arith.constant dense<0xFF800000> : vector<1xf32>
    %28 = vector.multi_reduction <maximumf>, %27, %cst_24 [1, 2] : vector<1x16x32xf32> to vector<1xf32>
    %29 = vector.shape_cast %28 : vector<1xf32> to vector<1x1x1xf32>
    %30 = vector.extract %29[0, 0, 0] : f32 from vector<1x1x1xf32>
    %31 = vector.broadcast %30 : f32 to vector<16x32xf32>
    %32 = arith.subf %26, %31 : vector<16x32xf32>
    %33 = math.exp %32 : vector<16x32xf32>
    %cst_25 = arith.constant dense<0.000000e+00> : vector<8x32xf32>
    %34 = tpu.matmul %2, %33, %cst_25 {dimension_numbers = #tpu.dot_dimension_numbers<[0], [0], [1], [1], [0, 1, 1, 1], [], []>, precision = #tpu.contract_precision<fp32>} : vector<16x8xf32>, vector<16x32xf32>, vector<8x32xf32> -> vector<8x32xf32>
    %cst_26 = arith.constant dense<0.000000e+00> : vector<16x32xf32>
    %35 = tpu.matmul %2, %34, %cst_26 {dimension_numbers = #tpu.dot_dimension_numbers<[1], [0], [0], [1], [0, 0, 1, 1], [], []>, precision = #tpu.contract_precision<fp32>} : vector<16x8xf32>, vector<8x32xf32>, vector<16x32xf32> -> vector<16x32xf32>
    %cst_27 = arith.constant 9.99999996E-13 : f32
    %36 = vector.broadcast %cst_27 : f32 to vector<16x32xf32>
    %37 = arith.addf %35, %36 : vector<16x32xf32>
    %38 = arith.divf %33, %37 : vector<16x32xf32>
    %c168 = arith.constant 168 : index
    %c0_28 = arith.constant 0 : index
    %39 = vector.load %arg2[%c168, %c0_28] : memref<256x32xf32, #tpu.memory_space<vmem>>, vector<16x32xf32>
    %cst_29 = arith.constant dense<0.000000e+00> : vector<16x32xf32>
    %40 = tpu.matmul %4, %39, %cst_29 {dimension_numbers = #tpu.dot_dimension_numbers<[1], [0], [0], [1], [0, 0, 1, 1], [], []>, precision = #tpu.contract_precision<fp32>} : vector<16x16xf32>, vector<16x32xf32>, vector<16x32xf32> -> vector<16x32xf32>
    %c184 = arith.constant 184 : index
    %c0_30 = arith.constant 0 : index
    %41 = vector.load %arg2[%c184, %c0_30] : memref<256x32xf32, #tpu.memory_space<vmem>>, vector<32x32xf32>
    %cst_31 = arith.constant dense<0.000000e+00> : vector<16x32xf32>
    %42 = tpu.matmul %38, %41, %cst_31 {dimension_numbers = #tpu.dot_dimension_numbers<[1], [0], [0], [1], [0, 0, 1, 1], [], []>, precision = #tpu.contract_precision<fp32>} : vector<16x32xf32>, vector<32x32xf32>, vector<16x32xf32> -> vector<16x32xf32>
    %43 = arith.addf %40, %42 : vector<16x32xf32>
    %cst_32 = arith.constant 0.000000e+00 : f32
    %44 = vector.broadcast %cst_32 : f32 to vector<16x32xf32>
    %45 = arith.cmpf oge, %43, %44 : vector<16x32xf32>
    %cst_33 = arith.constant 2.000000e-01 : f32
    %46 = vector.broadcast %cst_33 : f32 to vector<16x32xf32>
    %47 = arith.mulf %46, %43 : vector<16x32xf32>
    %48 = arith.select %45, %43, %47 : vector<16x32xi1>, vector<16x32xf32>
    %c0_34 = arith.constant 0 : index
    %c0_35 = arith.constant 0 : index
    %49 = vector.load %arg4[%c0_34, %c0_35] : memref<16x32xf32, #tpu.memory_space<vmem>>, vector<16x32xf32>
    tpu.vector_store %arg4[%c0_34, %c0_35], %48 {strides = array<i32>} : memref<16x32xf32, #tpu.memory_space<vmem>>, vector<16x32xf32>,
    %50 = arith.mulf %13, %48 : vector<16x32xf32>
    %cst_36 = arith.constant dense<0.000000e+00> : vector<8x32xf32>
    %51 = tpu.matmul %2, %50, %cst_36 {dimension_numbers = #tpu.dot_dimension_numbers<[0], [0], [1], [1], [0, 1, 1, 1], [], []>, precision = #tpu.contract_precision<fp32>} : vector<16x8xf32>, vector<16x32xf32>, vector<8x32xf32> -> vector<8x32xf32>
    %c216 = arith.constant 216 : index
    %c0_37 = arith.constant 0 : index
    %52 = vector.load %arg2[%c216, %c0_37] : memref<256x32xf32, #tpu.memory_space<vmem>>, vector<32x32xf32>
    %cst_38 = arith.constant dense<0.000000e+00> : vector<8x32xf32>
    %53 = tpu.matmul %51, %52, %cst_38 {dimension_numbers = #tpu.dot_dimension_numbers<[1], [0], [0], [1], [0, 0, 1, 1], [], []>, precision = #tpu.contract_precision<fp32>} : vector<8x32xf32>, vector<32x32xf32>, vector<8x32xf32> -> vector<8x32xf32>
    %54 = arith.addf %53, %10 : vector<8x32xf32>
    %c248 = arith.constant 248 : index
    %c0_39 = arith.constant 0 : index
    %55 = vector.load %arg2[%c248, %c0_39] : memref<256x32xf32, #tpu.memory_space<vmem>>, vector<1x32xf32>
    %56 = vector.broadcast %55 : vector<1x32xf32> to vector<8x32xf32>
    %57 = arith.addf %54, %56 : vector<8x32xf32>
    %c0_40 = arith.constant 0 : index
    %c0_41 = arith.constant 0 : index
    %58 = vector.load %arg3[%c0_40, %c0_41] : memref<8x32xf32, #tpu.memory_space<vmem>>, vector<8x32xf32>
    tpu.vector_store %arg3[%c0_40, %c0_41], %57 {strides = array<i32>} : memref<8x32xf32, #tpu.memory_space<vmem>>, vector<8x32xf32>,
    return
  }
}

</mosaic_0001>

<llo_original>
// kernel: argcn_forward.1
$region0: #{argcn_forward.1}
  #allocation0 [shape = 'u32[]', space=smem, size = 0x4, offset = 0x4, fixed_abs, tag = 'smem constant byte address 0x4 - core index']
  #allocation1 [shape = 'u32[144,128]{1,0:T(1,128)}', space=vmem, size = 0x12000, scoped, tag = 'internal scratch']
  %s0 = inlined_call_operand.vmem [shape: f32[8,32], index: 0, kind: input, shape index: {}]
  %s1 = inlined_call_operand.vmem [shape: f32[64,16], index: 1, kind: input, shape index: {}]
  %s2 = inlined_call_operand.vmem [shape: f32[256,32], index: 2, kind: input, shape index: {}]
  %s3 = inlined_call_operand.hbm [shape: f32[8,32], index: 3, kind: output, shape index: {0}]
  %s4 = inlined_call_operand.vmem [shape: f32[16,32], index: 4, kind: output, shape index: {1}]
  %5 = xla_tuple %s3, %s4
  %s6 = sld [smem:[#allocation0]]
  $region30: #{argcn_forward.1} parent=0
    _
  %s8 = ssub.s32 1, %s6
  %s9 = scalar_select 0, %s8, %s6
  $region1: #{argcn_forward.1} parent=0
    #allocation2 [shape = 'u8[4096]{0}', space=vmem, size = 0x1000, scoped, tag = 'output window, operand 0, single buffered']
    #allocation3 [shape = 's32[1]{0}', space=sflag, size = 0x4, scoped, tag = 'scoped memory for argcn_forward.1']
    %10 = vsyncpa [#allocation3], 0
    // Predicated region
    $region2: #{argcn_forward.1} parent=1 // pred_check
      _
    $region3: #{argcn_forward.1} parent=1 // pred_check_branch
      %12 = sbr.rel (0) target = $region5
    $region4: #{argcn_forward.1} parent=1 // pred_region
      _
    $region5: #{argcn_forward.1} parent=1 // pred_fallthru
      _
    // Predicated region
    $region6: #{argcn_forward.1} parent=1 // pred_check
      _
    $region7: #{argcn_forward.1} parent=1 // pred_check_branch
      %14 = sbr.rel (0) target = $region9
    $region8: #{argcn_forward.1} parent=1 // pred_region
      _
    $region9: #{argcn_forward.1} parent=1 // pred_fallthru
      _
    // Predicated region
    $region10: #{argcn_forward.1} parent=1 // pred_check
      _
    $region11: #{argcn_forward.1} parent=1 // pred_check_branch
      %16 = sbr.rel (0) target = $region13
    $region12: #{argcn_forward.1} parent=1 // pred_region
      _
    $region13: #{argcn_forward.1} parent=1 // pred_fallthru
      _
    %v17 = vld [vmem:[%s0] sm:$0xff]
    %v18 = vld [vmem:[%s1] sm:$0xff]
    %v19 = vld [vmem:[%s1 + $0x8] sm:$0xff]
    %v20 = vld [vmem:[%s1 + $0x10] sm:$0xff]
    %v21 = vld [vmem:[%s1 + $0x18] sm:$0xff]
    %v22 = vld [vmem:[%s1 + $0x20] sm:$0xff]
    %v23 = vld [vmem:[%s1 + $0x28] sm:$0xff]
    %v24 = vld [vmem:[%s1 + $0x30] sm:$0xff]
    %v25 = vld [vmem:[%s1 + $0x38] sm:$0xff]
    %v26 = vld [vmem:[%s2] sm:$0xff]
    %v27 = vld [vmem:[%s2 + $0x8] sm:$0xff]
    %v28 = vld [vmem:[%s2 + $0x10] sm:$0xff]
    %v29 = vld [vmem:[%s2 + $0x18] sm:$0xff]
    %vm30 = vcmask 261120
    %v32 = vsel %vm30, %v17, 0
    %34 = vmatprep.subr.mxu0 0.0
    %35 = vmatpush1.msra.mxu0 0.0
    %36 = vmatprep.subr.mxu0 0.0
    %37 = vmatpush1.msra.mxu0 0.0
    %38 = vmatprep.subr.mxu0 0.0
    %39 = vmatpush1.msra.mxu0 0.0
    %40 = vmatprep.subr.mxu0 0.0
    %41 = vmatpush1.msra.mxu0 0.0
    %42 = vmatprep.subr.mxu0 0.0
    %43 = vmatpush1.msra.mxu0 0.0
    %44 = vmatprep.subr.mxu0 0.0
    %45 = vmatpush1.msra.mxu0 0.0
    %46 = vmatprep.subr.mxu0 0.0
    %47 = vmatpush1.msra.mxu0 0.0
    %48 = vmatprep.subr.mxu0 0.0
    %49 = vmatpush1.msra.mxu0 0.0
    %50 = vmatprep.subr.mxu0 0.0
    %51 = vmatpush1.msra.mxu0 0.0
    %52 = vmatprep.subr.mxu0 0.0
    %53 = vmatpush1.msra.mxu0 0.0
    %54 = vmatprep.subr.mxu0 0.0
    %55 = vmatpush1.msra.mxu0 0.0
    %56 = vmatprep.subr.mxu0 0.0
    %57 = vmatpush1.msra.mxu0 0.0
    %58 = vmatprep.subr.mxu0 0.0
    %v59 = vand.u32 %v29, 4294901760
    %60 = vmatpush1.msra.mxu0 %v59
    %61 = vmatprep.subr.mxu0 0.0
    %v62 = vand.u32 %v28, 4294901760
    %63 = vmatpush1.msra.mxu0 %v62
    %64 = vmatprep.subr.mxu0 0.0
    %v65 = vand.u32 %v27, 4294901760
    %66 = vmatpush1.msra.mxu0 %v65
    %67 = vmatprep.subr.mxu0 0.0
    %v68 = vand.u32 %v26, 4294901760
    %69 = vmatpush1.msra.mxu0 %v68
    %70 = vmatprep.subr.mxu0 0.0
    %71 = vmatpush2.msra.mxu0 0.0
    %72 = vmatprep.subr.mxu0 0.0
    %73 = vmatpush2.msra.mxu0 0.0
    %74 = vmatprep.subr.mxu0 0.0
    %75 = vmatpush2.msra.mxu0 0.0
    %76 = vmatprep.subr.mxu0 0.0
    %77 = vmatpush2.msra.mxu0 0.0
    %78 = vmatprep.subr.mxu0 0.0
    %79 = vmatpush2.msra.mxu0 0.0
    %80 = vmatprep.subr.mxu0 0.0
    %81 = vmatpush2.msra.mxu0 0.0
    %82 = vmatprep.subr.mxu0 0.0
    %83 = vmatpush2.msra.mxu0 0.0
    %84 = vmatprep.subr.mxu0 0.0
    %85 = vmatpush2.msra.mxu0 0.0
    %86 = vmatprep.subr.mxu0 0.0
    %87 = vmatpush2.msra.mxu0 0.0
    %88 = vmatprep.subr.mxu0 0.0
    %89 = vmatpush2.msra.mxu0 0.0
    %90 = vmatprep.subr.mxu0 0.0
    %91 = vmatpush2.msra.mxu0 0.0
    %92 = vmatprep.subr.mxu0 0.0
    %93 = vmatpush2.msra.mxu0 0.0
    %94 = vmatprep.subr.mxu0 0.0
    %95 = vmatpush2.msra.mxu0 0.0
    %96 = vmatprep.subr.mxu0 0.0
    %97 = vmatpush2.msra.mxu0 0.0
    %98 = vmatprep.subr.mxu0 0.0
    %99 = vmatpush2.msra.mxu0 0.0
    %100 = vmatprep.subr.mxu0 0.0
    %101 = vmatpush2.msra.mxu0 0.0
    %102 = vmatprep.mubr.f32.mxu0 0.0
    %v103 = vand.u32 %v32, 4294901760
    %v104 = vsub.f32 %v32, %v103
    %v105 = vand.u32 %v104, 4294901760
    %v106 = vsub.f32 %v104, %v105
    %v107 = vand.u32 %v106, 4294901760
    %108 = vmatmul.mubr.f32.gmra.mxu0 %v107
    %v109 = vpop.f32.mrf.mxu0
    %v110 = vadd.f32 0.0, %v109
    %v111 = vpop.f32.mrf.mxu0
    %112 = vdwg.mxu0
    %113 = vmatprep.subr.mxu0 0.0
    %114 = vmatpush1.msra.mxu0 0.0
    %115 = vmatprep.subr.mxu0 0.0
    %116 = vmatpush1.msra.mxu0 0.0
    %117 = vmatprep.subr.mxu0 0.0
    %118 = vmatpush1.msra.mxu0 0.0
    %119 = vmatprep.subr.mxu0 0.0
    %120 = vmatpush1.msra.mxu0 0.0
    %121 = vmatprep.subr.mxu0 0.0
    %122 = vmatpush1.msra.mxu0 0.0
    %123 = vmatprep.subr.mxu0 0.0
    %124 = vmatpush1.msra.mxu0 0.0
    %125 = vmatprep.subr.mxu0 0.0
    %126 = vmatpush1.msra.mxu0 0.0
    %127 = vmatprep.subr.mxu0 0.0
    %128 = vmatpush1.msra.mxu0 0.0
    %129 = vmatprep.subr.mxu0 0.0
    %130 = vmatpush1.msra.mxu0 0.0
    %131 = vmatprep.subr.mxu0 0.0
    %132 = vmatpush1.msra.mxu0 0.0
    %133 = vmatprep.subr.mxu0 0.0
    %134 = vmatpush1.msra.mxu0 0.0
    %135 = vmatprep.subr.mxu0 0.0
    %136 = vmatpush1.msra.mxu0 0.0
    %137 = vmatprep.subr.mxu0 0.0
    %v138 = vand.u32 %v29, 4294901760
    %v139 = vsub.f32 %v29, %v138
    %v140 = vand.u32 %v139, 4294901760
    %v141 = vsub.f32 %v139, %v140
    %v142 = vand.u32 %v141, 4294901760
    %143 = vmatpush1.msra.mxu0 %v142
    %144 = vmatprep.subr.mxu0 0.0
    %v145 = vand.u32 %v28, 4294901760
    %v146 = vsub.f32 %v28, %v145
    %v147 = vand.u32 %v146, 4294901760
    %v148 = vsub.f32 %v146, %v147
    %v149 = vand.u32 %v148, 4294901760
    %150 = vmatpush1.msra.mxu0 %v149
    %151 = vmatprep.subr.mxu0 0.0
    %v152 = vand.u32 %v27, 4294901760
    %v153 = vsub.f32 %v27, %v152
    %v154 = vand.u32 %v153, 4294901760
    %v155 = vsub.f32 %v153, %v154
    %v156 = vand.u32 %v155, 4294901760
    %157 = vmatpush1.msra.mxu0 %v156
    %158 = vmatprep.subr.mxu0 0.0
    %v159 = vand.u32 %v26, 4294901760
    %v160 = vsub.f32 %v26, %v159
    %v161 = vand.u32 %v160, 4294901760
    %v162 = vsub.f32 %v160, %v161
    %v163 = vand.u32 %v162, 4294901760
    %164 = vmatpush1.msra.mxu0 %v163
    %165 = vmatprep.subr.mxu0 0.0
    %166 = vmatpush2.msra.mxu0 0.0
    %167 = vmatprep.subr.mxu0 0.0
    %168 = vmatpush2.msra.mxu0 0.0
    %169 = vmatprep.subr.mxu0 0.0
    %170 = vmatpush2.msra.mxu0 0.0
    %171 = vmatprep.subr.mxu0 0.0
    %172 = vmatpush2.msra.mxu0 0.0
    %173 = vmatprep.subr.mxu0 0.0
    %174 = vmatpush2.msra.mxu0 0.0
    %175 = vmatprep.subr.mxu0 0.0
    %176 = vmatpush2.msra.mxu0 0.0
    %177 = vmatprep.subr.mxu0 0.0
    %178 = vmatpush2.msra.mxu0 0.0
    %179 = vmatprep.subr.mxu0 0.0
    %180 = vmatpush2.msra.mxu0 0.0
    %181 = vmatprep.subr.mxu0 0.0
    %182 = vmatpush2.msra.mxu0 0.0
    %183 = vmatprep.subr.mxu0 0.0
    %184 = vmatpush2.msra.mxu0 0.0
    %185 = vmatprep.subr.mxu0 0.0
    %186 = vmatpush2.msra.mxu0 0.0
    %187 = vmatprep.subr.mxu0 0.0
    %188 = vmatpush2.msra.mxu0 0.0
    %189 = vmatprep.subr.mxu0 0.0
    %190 = vmatpush2.msra.mxu0 0.0
    %191 = vmatprep.subr.mxu0 0.0
    %192 = vmatpush2.msra.mxu0 0.0
    %193 = vmatprep.subr.mxu0 0.0
    %194 = vmatpush2.msra.mxu0 0.0
    %195 = vmatprep.subr.mxu0 0.0
    %196 = vmatpush2.msra.mxu0 0.0
    %197 = vmatprep.mubr.f32.mxu0 0.0
    %v198 = vand.u32 %v32, 4294901760
    %199 = vmatmul.mubr.f32.gmra.mxu0 %v198
    %v200 = vpop.f32.mrf.mxu0
    %v201 = vadd.f32 %v110, %v200
    %v202 = vpop.f32.mrf.mxu0
    %203 = vdwg.mxu0
    %204 = vmatprep.subr.mxu0 0.0
    %205 = vmatpush1.msra.mxu0 0.0
    %206 = vmatprep.subr.mxu0 0.0
    %207 = vmatpush1.msra.mxu0 0.0
    %208 = vmatprep.subr.mxu0 0.0
    %209 = vmatpush1.msra.mxu0 0.0
    %210 = vmatprep.subr.mxu0 0.0
    %211 = vmatpush1.msra.mxu0 0.0
    %212 = vmatprep.subr.mxu0 0.0
    %213 = vmatpush1.msra.mxu0 0.0
    %214 = vmatprep.subr.mxu0 0.0
    %215 = vmatpush1.msra.mxu0 0.0
    %216 = vmatprep.subr.mxu0 0.0
    %217 = vmatpush1.msra.mxu0 0.0
    %218 = vmatprep.subr.mxu0 0.0
    %219 = vmatpush1.msra.mxu0 0.0
    %220 = vmatprep.subr.mxu0 0.0
    %221 = vmatpush1.msra.mxu0 0.0
    %222 = vmatprep.subr.mxu0 0.0
    %223 = vmatpush1.msra.mxu0 0.0
    %224 = vmatprep.subr.mxu0 0.0
    %225 = vmatpush1.msra.mxu0 0.0
    %226 = vmatprep.subr.mxu0 0.0
    %227 = vmatpush1.msra.mxu0 0.0
    %228 = vmatprep.subr.mxu0 0.0
    %v229 = vand.u32 %v29, 4294901760
    %v230 = vsub.f32 %v29, %v229
    %231 = vmatpush1.msra.mxu0 %v230
    %232 = vmatprep.subr.mxu0 0.0
    %v233 = vand.u32 %v28, 4294901760
    %v234 = vsub.f32 %v28, %v233
    %235 = vmatpush1.msra.mxu0 %v234
    %236 = vmatprep.subr.mxu0 0.0
    %v237 = vand.u32 %v27, 4294901760
    %v238 = vsub.f32 %v27, %v237
    %239 = vmatpush1.msra.mxu0 %v238
    %240 = vmatprep.subr.mxu0 0.0
    %v241 = vand.u32 %v26, 4294901760
    %v242 = vsub.f32 %v26, %v241
    %243 = vmatpush1.msra.mxu0 %v242
    %244 = vmatprep.subr.mxu0 0.0
    %245 = vmatpush2.msra.mxu0 0.0
    %246 = vmatprep.subr.mxu0 0.0
    %247 = vmatpush2.msra.mxu0 0.0
    %248 = vmatprep.subr.mxu0 0.0
    %249 = vmatpush2.msra.mxu0 0.0
    %250 = vmatprep.subr.mxu0 0.0
    %251 = vmatpush2.msra.mxu0 0.0
    %252 = vmatprep.subr.mxu0 0.0
    %253 = vmatpush2.msra.mxu0 0.0
    %254 = vmatprep.subr.mxu0 0.0
    %255 = vmatpush2.msra.mxu0 0.0
    %256 = vmatprep.subr.mxu0 0.0
    %257 = vmatpush2.msra.mxu0 0.0
    %258 = vmatprep.subr.mxu0 0.0
    %259 = vmatpush2.msra.mxu0 0.0
    %260 = vmatprep.subr.mxu0 0.0
    %261 = vmatpush2.msra.mxu0 0.0
    %262 = vmatprep.subr.mxu0 0.0
    %263 = vmatpush2.msra.mxu0 0.0
    %264 = vmatprep.subr.mxu0 0.0
    %265 = vmatpush2.msra.mxu0 0.0
    %266 = vmatprep.subr.mxu0 0.0
    %267 = vmatpush2.msra.mxu0 0.0
    %268 = vmatprep.subr.mxu0 0.0
    %269 = vmatpush2.msra.mxu0 0.0
    %270 = vmatprep.subr.mxu0 0.0
    %271 = vmatpush2.msra.mxu0 0.0
    %272 = vmatprep.subr.mxu0 0.0
    %273 = vmatpush2.msra.mxu0 0.0
    %274 = vmatprep.subr.mxu0 0.0
    %275 = vmatpush2.msra.mxu0 0.0
    %276 = vmatprep.mubr.f32.mxu0 0.0
    %v277 = vand.u32 %v32, 4294901760
    %v278 = vsub.f32 %v32, %v277
    %279 = vmatmul.mubr.f32.gmra.mxu0 %v278
    %v280 = vpop.f32.mrf.mxu0
    %v281 = vadd.f32 %v201, %v280
    %v282 = vpop.f32.mrf.mxu0
    %283 = vdwg.mxu0
    %284 = vmatprep.subr.mxu0 0.0
    %285 = vmatpush1.msra.mxu0 0.0
    %286 = vmatprep.subr.mxu0 0.0
    %287 = vmatpush1.msra.mxu0 0.0
    %288 = vmatprep.subr.mxu0 0.0
    %289 = vmatpush1.msra.mxu0 0.0
    %290 = vmatprep.subr.mxu0 0.0
    %291 = vmatpush1.msra.mxu0 0.0
    %292 = vmatprep.subr.mxu0 0.0
    %293 = vmatpush1.msra.mxu0 0.0
    %294 = vmatprep.subr.mxu0 0.0
    %295 = vmatpush1.msra.mxu0 0.0
    %296 = vmatprep.subr.mxu0 0.0
    %297 = vmatpush1.msra.mxu0 0.0
    %298 = vmatprep.subr.mxu0 0.0
    %299 = vmatpush1.msra.mxu0 0.0
    %300 = vmatprep.subr.mxu0 0.0
    %301 = vmatpush1.msra.mxu0 0.0
    %302 = vmatprep.subr.mxu0 0.0
    %303 = vmatpush1.msra.mxu0 0.0
    %304 = vmatprep.subr.mxu0 0.0
    %305 = vmatpush1.msra.mxu0 0.0
    %306 = vmatprep.subr.mxu0 0.0
    %307 = vmatpush1.msra.mxu0 0.0
    %308 = vmatprep.subr.mxu0 0.0
    %v309 = vand.u32 %v29, 4294901760
    %310 = vmatpush1.msra.mxu0 %v309
    %311 = vmatprep.subr.mxu0 0.0
    %v312 = vand.u32 %v28, 4294901760
    %313 = vmatpush1.msra.mxu0 %v312
    %314 = vmatprep.subr.mxu0 0.0
    %v315 = vand.u32 %v27, 4294901760
    %316 = vmatpush1.msra.mxu0 %v315
    %317 = vmatprep.subr.mxu0 0.0
    %v318 = vand.u32 %v26, 4294901760
    %319 = vmatpush1.msra.mxu0 %v318
    %320 = vmatprep.subr.mxu0 0.0
    %321 = vmatpush2.msra.mxu0 0.0
    %322 = vmatprep.subr.mxu0 0.0
    %323 = vmatpush2.msra.mxu0 0.0
    %324 = vmatprep.subr.mxu0 0.0
    %325 = vmatpush2.msra.mxu0 0.0
    %326 = vmatprep.subr.mxu0 0.0
    %327 = vmatpush2.msra.mxu0 0.0
    %328 = vmatprep.subr.mxu0 0.0
    %329 = vmatpush2.msra.mxu0 0.0
    %330 = vmatprep.subr.mxu0 0.0
    %331 = vmatpush2.msra.mxu0 0.0
    %332 = vmatprep.subr.mxu0 0.0
    %333 = vmatpush2.msra.mxu0 0.0
    %334 = vmatprep.subr.mxu0 0.0
    %335 = vmatpush2.msra.mxu0 0.0
    %336 = vmatprep.subr.mxu0 0.0
    %337 = vmatpush2.msra.mxu0 0.0
    %338 = vmatprep.subr.mxu0 0.0
    %339 = vmatpush2.msra.mxu0 0.0
    %340 = vmatprep.subr.mxu0 0.0
    %341 = vmatpush2.msra.mxu0 0.0
    %342 = vmatprep.subr.mxu0 0.0
    %343 = vmatpush2.msra.mxu0 0.0
    %344 = vmatprep.subr.mxu0 0.0
    %345 = vmatpush2.msra.mxu0 0.0
    %346 = vmatprep.subr.mxu0 0.0
    %347 = vmatpush2.msra.mxu0 0.0
    %348 = vmatprep.subr.mxu0 0.0
    %349 = vmatpush2.msra.mxu0 0.0
    %350 = vmatprep.subr.mxu0 0.0
    %351 = vmatpush2.msra.mxu0 0.0
    %352 = vmatprep.mubr.f32.mxu0 0.0
    %v353 = vand.u32 %v32, 4294901760
    %v354 = vsub.f32 %v32, %v353
    %v355 = vand.u32 %v354, 4294901760
    %356 = vmatmul.mubr.f32.gmra.mxu0 %v355
    %v357 = vpop.f32.mrf.mxu0
    %v358 = vadd.f32 %v281, %v357
    %v359 = vpop.f32.mrf.mxu0
    %360 = vdwg.mxu0
    %361 = vmatprep.subr.mxu0 0.0
    %362 = vmatpush1.msra.mxu0 0.0
    %363 = vmatprep.subr.mxu0 0.0
    %364 = vmatpush1.msra.mxu0 0.0
    %365 = vmatprep.subr.mxu0 0.0
    %366 = vmatpush1.msra.mxu0 0.0
    %367 = vmatprep.subr.mxu0 0.0
    %368 = vmatpush1.msra.mxu0 0.0
    %369 = vmatprep.subr.mxu0 0.0
    %370 = vmatpush1.msra.mxu0 0.0
    %371 = vmatprep.subr.mxu0 0.0
    %372 = vmatpush1.msra.mxu0 0.0
    %373 = vmatprep.subr.mxu0 0.0
    %374 = vmatpush1.msra.mxu0 0.0
    %375 = vmatprep.subr.mxu0 0.0
    %376 = vmatpush1.msra.mxu0 0.0
    %377 = vmatprep.subr.mxu0 0.0
    %378 = vmatpush1.msra.mxu0 0.0
    %379 = vmatprep.subr.mxu0 0.0
    %380 = vmatpush1.msra.mxu0 0.0
    %381 = vmatprep.subr.mxu0 0.0
    %382 = vmatpush1.msra.mxu0 0.0
    %383 = vmatprep.subr.mxu0 0.0
    %384 = vmatpush1.msra.mxu0 0.0
    %385 = vmatprep.subr.mxu0 0.0
    %v386 = vand.u32 %v29, 4294901760
    %v387 = vsub.f32 %v29, %v386
    %v388 = vand.u32 %v387, 4294901760
    %389 = vmatpush1.msra.mxu0 %v388
    %390 = vmatprep.subr.mxu0 0.0
    %v391 = vand.u32 %v28, 4294901760
    %v392 = vsub.f32 %v28, %v391
    %v393 = vand.u32 %v392, 4294901760
    %394 = vmatpush1.msra.mxu0 %v393
    %395 = vmatprep.subr.mxu0 0.0
    %v396 = vand.u32 %v27, 4294901760
    %v397 = vsub.f32 %v27, %v396
    %v398 = vand.u32 %v397, 4294901760
    %399 = vmatpush1.msra.mxu0 %v398
    %400 = vmatprep.subr.mxu0 0.0
    %v401 = vand.u32 %v26, 4294901760
    %v402 = vsub.f32 %v26, %v401
    %v403 = vand.u32 %v402, 4294901760
    %404 = vmatpush1.msra.mxu0 %v403
    %405 = vmatprep.subr.mxu0 0.0
    %406 = vmatpush2.msra.mxu0 0.0
    %407 = vmatprep.subr.mxu0 0.0
    %408 = vmatpush2.msra.mxu0 0.0
    %409 = vmatprep.subr.mxu0 0.0
    %410 = vmatpush2.msra.mxu0 0.0
    %411 = vmatprep.subr.mxu0 0.0
    %412 = vmatpush2.msra.mxu0 0.0
    %413 = vmatprep.subr.mxu0 0.0
    %414 = vmatpush2.msra.mxu0 0.0
    %415 = vmatprep.subr.mxu0 0.0
    %416 = vmatpush2.msra.mxu0 0.0
    %417 = vmatprep.subr.mxu0 0.0
    %418 = vmatpush2.msra.mxu0 0.0
    %419 = vmatprep.subr.mxu0 0.0
    %420 = vmatpush2.msra.mxu0 0.0
    %421 = vmatprep.subr.mxu0 0.0
    %422 = vmatpush2.msra.mxu0 0.0
    %423 = vmatprep.subr.mxu0 0.0
    %424 = vmatpush2.msra.mxu0 0.0
    %425 = vmatprep.subr.mxu0 0.0
    %426 = vmatpush2.msra.mxu0 0.0
    %427 = vmatprep.subr.mxu0 0.0
    %428 = vmatpush2.msra.mxu0 0.0
    %429 = vmatprep.subr.mxu0 0.0
    %430 = vmatpush2.msra.mxu0 0.0
    %431 = vmatprep.subr.mxu0 0.0
    %432 = vmatpush2.msra.mxu0 0.0
    %433 = vmatprep.subr.mxu0 0.0
    %434 = vmatpush2.msra.mxu0 0.0
    %435 = vmatprep.subr.mxu0 0.0
    %436 = vmatpush2.msra.mxu0 0.0
    %437 = vmatprep.mubr.f32.mxu0 0.0
    %v438 = vand.u32 %v32, 4294901760
    %439 = vmatmul.mubr.f32.gmra.mxu0 %v438
    %v440 = vpop.f32.mrf.mxu0
    %v441 = vadd.f32 %v358, %v440
    %v442 = vpop.f32.mrf.mxu0
    %443 = vdwg.mxu0
    %444 = vmatprep.subr.mxu0 0.0
    %445 = vmatpush1.msra.mxu0 0.0
    %446 = vmatprep.subr.mxu0 0.0
    %447 = vmatpush1.msra.mxu0 0.0
    %448 = vmatprep.subr.mxu0 0.0
    %449 = vmatpush1.msra.mxu0 0.0
    %450 = vmatprep.subr.mxu0 0.0
    %451 = vmatpush1.msra.mxu0 0.0
    %452 = vmatprep.subr.mxu0 0.0
    %453 = vmatpush1.msra.mxu0 0.0
    %454 = vmatprep.subr.mxu0 0.0
    %455 = vmatpush1.msra.mxu0 0.0
    %456 = vmatprep.subr.mxu0 0.0
    %457 = vmatpush1.msra.mxu0 0.0
    %458 = vmatprep.subr.mxu0 0.0
    %459 = vmatpush1.msra.mxu0 0.0
    %460 = vmatprep.subr.mxu0 0.0
    %461 = vmatpush1.msra.mxu0 0.0
    %462 = vmatprep.subr.mxu0 0.0
    %463 = vmatpush1.msra.mxu0 0.0
    %464 = vmatprep.subr.mxu0 0.0
    %465 = vmatpush1.msra.mxu0 0.0
    %466 = vmatprep.subr.mxu0 0.0
    %467 = vmatpush1.msra.mxu0 0.0
    %468 = vmatprep.subr.mxu0 0.0
    %v469 = vand.u32 %v29, 4294901760
    %470 = vmatpush1.msra.mxu0 %v469
    %471 = vmatprep.subr.mxu0 0.0
    %v472 = vand.u32 %v28, 4294901760
    %473 = vmatpush1.msra.mxu0 %v472
    %474 = vmatprep.subr.mxu0 0.0
    %v475 = vand.u32 %v27, 4294901760
    %476 = vmatpush1.msra.mxu0 %v475
    %477 = vmatprep.subr.mxu0 0.0
    %v478 = vand.u32 %v26, 4294901760
    %479 = vmatpush1.msra.mxu0 %v478
    %480 = vmatprep.subr.mxu0 0.0
    %481 = vmatpush2.msra.mxu0 0.0
    %482 = vmatprep.subr.mxu0 0.0
    %483 = vmatpush2.msra.mxu0 0.0
    %484 = vmatprep.subr.mxu0 0.0
    %485 = vmatpush2.msra.mxu0 0.0
    %486 = vmatprep.subr.mxu0 0.0
    %487 = vmatpush2.msra.mxu0 0.0
    %488 = vmatprep.subr.mxu0 0.0
    %489 = vmatpush2.msra.mxu0 0.0
    %490 = vmatprep.subr.mxu0 0.0
    %491 = vmatpush2.msra.mxu0 0.0
    %492 = vmatprep.subr.mxu0 0.0
    %493 = vmatpush2.msra.mxu0 0.0
    %494 = vmatprep.subr.mxu0 0.0
    %495 = vmatpush2.msra.mxu0 0.0
    %496 = vmatprep.subr.mxu0 0.0
    %497 = vmatpush2.msra.mxu0 0.0
    %498 = vmatprep.subr.mxu0 0.0
    %499 = vmatpush2.msra.mxu0 0.0
    %500 = vmatprep.subr.mxu0 0.0
    %501 = vmatpush2.msra.mxu0 0.0
    %502 = vmatprep.subr.mxu0 0.0
    %503 = vmatpush2.msra.mxu0 0.0
    %504 = vmatprep.subr.mxu0 0.0
    %505 = vmatpush2.msra.mxu0 0.0
    %506 = vmatprep.subr.mxu0 0.0
    %507 = vmatpush2.msra.mxu0 0.0
    %508 = vmatprep.subr.mxu0 0.0
    %509 = vmatpush2.msra.mxu0 0.0
    %510 = vmatprep.subr.mxu0 0.0
    %511 = vmatpush2.msra.mxu0 0.0
    %512 = vmatprep.mubr.f32.mxu0 0.0
    %v513 = vand.u32 %v32, 4294901760
    %514 = vmatmul.mubr.f32.gmra.mxu0 %v513
    %v515 = vpop.f32.mrf.mxu0
    %v516 = vadd.f32 %v441, %v515
    %v517 = vpop.f32.mrf.mxu0
    %518 = vdwg.mxu0
    %v519 = vld [vmem:[%s2 + $0x20] sm:$0xff]
    %v520 = vld [vmem:[%s2 + $0x28] sm:$0xff]
    %v521 = vld [vmem:[%s2 + $0x30] sm:$0xff]
    %v522 = vld [vmem:[%s2 + $0x38] sm:$0xff]
    %523 = vmatprep.subr.mxu0 0.0
    %524 = vmatpush1.msra.mxu0 0.0
    %525 = vmatprep.subr.mxu0 0.0
    %526 = vmatpush1.msra.mxu0 0.0
    %527 = vmatprep.subr.mxu0 0.0
    %528 = vmatpush1.msra.mxu0 0.0
    %529 = vmatprep.subr.mxu0 0.0
    %530 = vmatpush1.msra.mxu0 0.0
    %531 = vmatprep.subr.mxu0 0.0
    %532 = vmatpush1.msra.mxu0 0.0
    %533 = vmatprep.subr.mxu0 0.0
    %534 = vmatpush1.msra.mxu0 0.0
    %535 = vmatprep.subr.mxu0 0.0
    %536 = vmatpush1.msra.mxu0 0.0
    %537 = vmatprep.subr.mxu0 0.0
    %538 = vmatpush1.msra.mxu0 0.0
    %539 = vmatprep.subr.mxu0 0.0
    %540 = vmatpush1.msra.mxu0 0.0
    %541 = vmatprep.subr.mxu0 0.0
    %542 = vmatpush1.msra.mxu0 0.0
    %543 = vmatprep.subr.mxu0 0.0
    %544 = vmatpush1.msra.mxu0 0.0
    %545 = vmatprep.subr.mxu0 0.0
    %546 = vmatpush1.msra.mxu0 0.0
    %547 = vmatprep.subr.mxu0 0.0
    %v548 = vand.u32 %v522, 4294901760
    %549 = vmatpush1.msra.mxu0 %v548
    %550 = vmatprep.subr.mxu0 0.0
    %v551 = vand.u32 %v521, 4294901760
    %552 = vmatpush1.msra.mxu0 %v551
    %553 = vmatprep.subr.mxu0 0.0
    %v554 = vand.u32 %v520, 4294901760
    %555 = vmatpush1.msra.mxu0 %v554
    %556 = vmatprep.subr.mxu0 0.0
    %v557 = vand.u32 %v519, 4294901760
    %558 = vmatpush1.msra.mxu0 %v557
    %559 = vmatprep.subr.mxu0 0.0
    %560 = vmatpush2.msra.mxu0 0.0
    %561 = vmatprep.subr.mxu0 0.0
    %562 = vmatpush2.msra.mxu0 0.0
    %563 = vmatprep.subr.mxu0 0.0
    %564 = vmatpush2.msra.mxu0 0.0
    %565 = vmatprep.subr.mxu0 0.0
    %566 = vmatpush2.msra.mxu0 0.0
    %567 = vmatprep.subr.mxu0 0.0
    %568 = vmatpush2.msra.mxu0 0.0
    %569 = vmatprep.subr.mxu0 0.0
    %570 = vmatpush2.msra.mxu0 0.0
    %571 = vmatprep.subr.mxu0 0.0
    %572 = vmatpush2.msra.mxu0 0.0
    %573 = vmatprep.subr.mxu0 0.0
    %574 = vmatpush2.msra.mxu0 0.0
    %575 = vmatprep.subr.mxu0 0.0
    %576 = vmatpush2.msra.mxu0 0.0
    %577 = vmatprep.subr.mxu0 0.0
    %578 = vmatpush2.msra.mxu0 0.0
    %579 = vmatprep.subr.mxu0 0.0
    %580 = vmatpush2.msra.mxu0 0.0
    %581 = vmatprep.subr.mxu0 0.0
    %582 = vmatpush2.msra.mxu0 0.0
    %583 = vmatprep.subr.mxu0 0.0
    %584 = vmatpush2.msra.mxu0 0.0
    %585 = vmatprep.subr.mxu0 0.0
    %586 = vmatpush2.msra.mxu0 0.0
    %587 = vmatprep.subr.mxu0 0.0
    %588 = vmatpush2.msra.mxu0 0.0
    %589 = vmatprep.subr.mxu0 0.0
    %590 = vmatpush2.msra.mxu0 0.0
    %591 = vmatprep.mubr.f32.mxu0 0.0
    %v592 = vand.u32 %v32, 4294901760
    %v593 = vsub.f32 %v32, %v592
    %v594 = vand.u32 %v593, 4294901760
    %v595 = vsub.f32 %v593, %v594
    %v596 = vand.u32 %v595, 4294901760
    %597 = vmatmul.mubr.f32.gmra.mxu0 %v596
    %v598 = vpop.f32.mrf.mxu0
    %v599 = vadd.f32 0.0, %v598
    %v600 = vpop.f32.mrf.mxu0
    %601 = vdwg.mxu0
    %602 = vmatprep.subr.mxu0 0.0
    %603 = vmatpush1.msra.mxu0 0.0
    %604 = vmatprep.subr.mxu0 0.0
    %605 = vmatpush1.msra.mxu0 0.0
    %606 = vmatprep.subr.mxu0 0.0
    %607 = vmatpush1.msra.mxu0 0.0
    %608 = vmatprep.subr.mxu0 0.0
    %609 = vmatpush1.msra.mxu0 0.0
    %610 = vmatprep.subr.mxu0 0.0
    %611 = vmatpush1.msra.mxu0 0.0
    %612 = vmatprep.subr.mxu0 0.0
    %613 = vmatpush1.msra.mxu0 0.0
    %614 = vmatprep.subr.mxu0 0.0
    %615 = vmatpush1.msra.mxu0 0.0
    %616 = vmatprep.subr.mxu0 0.0
    %617 = vmatpush1.msra.mxu0 0.0
    %618 = vmatprep.subr.mxu0 0.0
    %619 = vmatpush1.msra.mxu0 0.0
    %620 = vmatprep.subr.mxu0 0.0
    %621 = vmatpush1.msra.mxu0 0.0
    %622 = vmatprep.subr.mxu0 0.0
    %623 = vmatpush1.msra.mxu0 0.0
    %624 = vmatprep.subr.mxu0 0.0
    %625 = vmatpush1.msra.mxu0 0.0
    %626 = vmatprep.subr.mxu0 0.0
    %v627 = vand.u32 %v522, 4294901760
    %v628 = vsub.f32 %v522, %v627
    %v629 = vand.u32 %v628, 4294901760
    %v630 = vsub.f32 %v628, %v629
    %v631 = vand.u32 %v630, 4294901760
    %632 = vmatpush1.msra.mxu0 %v631
    %633 = vmatprep.subr.mxu0 0.0
    %v634 = vand.u32 %v521, 4294901760
    %v635 = vsub.f32 %v521, %v634
    %v636 = vand.u32 %v635, 4294901760
    %v637 = vsub.f32 %v635, %v636
    %v638 = vand.u32 %v637, 4294901760
    %639 = vmatpush1.msra.mxu0 %v638
    %640 = vmatprep.subr.mxu0 0.0
    %v641 = vand.u32 %v520, 4294901760
    %v642 = vsub.f32 %v520, %v641
    %v643 = vand.u32 %v642, 4294901760
    %v644 = vsub.f32 %v642, %v643
    %v645 = vand.u32 %v644, 4294901760
    %646 = vmatpush1.msra.mxu0 %v645
    %647 = vmatprep.subr.mxu0 0.0
    %v648 = vand.u32 %v519, 4294901760
    %v649 = vsub.f32 %v519, %v648
    %v650 = vand.u32 %v649, 4294901760
    %v651 = vsub.f32 %v649, %v650
    %v652 = vand.u32 %v651, 4294901760
    %653 = vmatpush1.msra.mxu0 %v652
    %654 = vmatprep.subr.mxu0 0.0
    %655 = vmatpush2.msra.mxu0 0.0
    %656 = vmatprep.subr.mxu0 0.0
    %657 = vmatpush2.msra.mxu0 0.0
    %658 = vmatprep.subr.mxu0 0.0
    %659 = vmatpush2.msra.mxu0 0.0
    %660 = vmatprep.subr.mxu0 0.0
    %661 = vmatpush2.msra.mxu0 0.0
    %662 = vmatprep.subr.mxu0 0.0
    %663 = vmatpush2.msra.mxu0 0.0
    %664 = vmatprep.subr.mxu0 0.0
    %665 = vmatpush2.msra.mxu0 0.0
    %666 = vmatprep.subr.mxu0 0.0
    %667 = vmatpush2.msra.mxu0 0.0
    %668 = vmatprep.subr.mxu0 0.0
    %669 = vmatpush2.msra.mxu0 0.0
    %670 = vmatprep.subr.mxu0 0.0
    %671 = vmatpush2.msra.mxu0 0.0
    %672 = vmatprep.subr.mxu0 0.0
    %673 = vmatpush2.msra.mxu0 0.0
    %674 = vmatprep.subr.mxu0 0.0
    %675 = vmatpush2.msra.mxu0 0.0
    %676 = vmatprep.subr.mxu0 0.0
    %677 = vmatpush2.msra.mxu0 0.0
    %678 = vmatprep.subr.mxu0 0.0
    %679 = vmatpush2.msra.mxu0 0.0
    %680 = vmatprep.subr.mxu0 0.0
    %681 = vmatpush2.msra.mxu0 0.0
    %682 = vmatprep.subr.mxu0 0.0
    %683 = vmatpush2.msra.mxu0 0.0
    %684 = vmatprep.subr.mxu0 0.0
    %685 = vmatpush2.msra.mxu0 0.0
    %686 = vmatprep.mubr.f32.mxu0 0.0
    %v687 = vand.u32 %v32, 4294901760
    %688 = vmatmul.mubr.f32.gmra.mxu0 %v687
    %v689 = vpop.f32.mrf.mxu0
    %v690 = vadd.f32 %v599, %v689
    %v691 = vpop.f32.mrf.mxu0
    %692 = vdwg.mxu0
    %693 = vmatprep.subr.mxu0 0.0
    %694 = vmatpush1.msra.mxu0 0.0
    %695 = vmatprep.subr.mxu0 0.0
    %696 = vmatpush1.msra.mxu0 0.0
    %697 = vmatprep.subr.mxu0 0.0
    %698 = vmatpush1.msra.mxu0 0.0
    %699 = vmatprep.subr.mxu0 0.0
    %700 = vmatpush1.msra.mxu0 0.0
    %701 = vmatprep.subr.mxu0 0.0
    %702 = vmatpush1.msra.mxu0 0.0
    %703 = vmatprep.subr.mxu0 0.0
    %704 = vmatpush1.msra.mxu0 0.0
    %705 = vmatprep.subr.mxu0 0.0
    %706 = vmatpush1.msra.mxu0 0.0
    %707 = vmatprep.subr.mxu0 0.0
    %708 = vmatpush1.msra.mxu0 0.0
    %709 = vmatprep.subr.mxu0 0.0
    %710 = vmatpush1.msra.mxu0 0.0
    %711 = vmatprep.subr.mxu0 0.0
    %712 = vmatpush1.msra.mxu0 0.0
    %713 = vmatprep.subr.mxu0 0.0
    %714 = vmatpush1.msra.mxu0 0.0
    %715 = vmatprep.subr.mxu0 0.0
    %716 = vmatpush1.msra.mxu0 0.0
    %717 = vmatprep.subr.mxu0 0.0
    %v718 = vand.u32 %v522, 4294901760
    %v719 = vsub.f32 %v522, %v718
    %720 = vmatpush1.msra.mxu0 %v719
    %721 = vmatprep.subr.mxu0 0.0
    %v722 = vand.u32 %v521, 4294901760
    %v723 = vsub.f32 %v521, %v722
    %724 = vmatpush1.msra.mxu0 %v723
    %725 = vmatprep.subr.mxu0 0.0
    %v726 = vand.u32 %v520, 4294901760
    %v727 = vsub.f32 %v520, %v726
    %728 = vmatpush1.msra.mxu0 %v727
    %729 = vmatprep.subr.mxu0 0.0
    %v730 = vand.u32 %v519, 4294901760
    %v731 = vsub.f32 %v519, %v730
    %732 = vmatpush1.msra.mxu0 %v731
    %733 = vmatprep.subr.mxu0 0.0
    %734 = vmatpush2.msra.mxu0 0.0
    %735 = vmatprep.subr.mxu0 0.0
    %736 = vmatpush2.msra.mxu0 0.0
    %737 = vmatprep.subr.mxu0 0.0
    %738 = vmatpush2.msra.mxu0 0.0
    %739 = vmatprep.subr.mxu0 0.0
    %740 = vmatpush2.msra.mxu0 0.0
    %741 = vmatprep.subr.mxu0 0.0
    %742 = vmatpush2.msra.mxu0 0.0
    %743 = vmatprep.subr.mxu0 0.0
    %744 = vmatpush2.msra.mxu0 0.0
    %745 = vmatprep.subr.mxu0 0.0
    %746 = vmatpush2.msra.mxu0 0.0
    %747 = vmatprep.subr.mxu0 0.0
    %748 = vmatpush2.msra.mxu0 0.0
    %749 = vmatprep.subr.mxu0 0.0
    %750 = vmatpush2.msra.mxu0 0.0
    %751 = vmatprep.subr.mxu0 0.0
    %752 = vmatpush2.msra.mxu0 0.0
    %753 = vmatprep.subr.mxu0 0.0
    %754 = vmatpush2.msra.mxu0 0.0
    %755 = vmatprep.subr.mxu0 0.0
    %756 = vmatpush2.msra.mxu0 0.0
    %757 = vmatprep.subr.mxu0 0.0
    %758 = vmatpush2.msra.mxu0 0.0
    %759 = vmatprep.subr.mxu0 0.0
    %760 = vmatpush2.msra.mxu0 0.0
    %761 = vmatprep.subr.mxu0 0.0
    %762 = vmatpush2.msra.mxu0 0.0
    %763 = vmatprep.subr.mxu0 0.0
    %764 = vmatpush2.msra.mxu0 0.0
    %765 = vmatprep.mubr.f32.mxu0 0.0
    %v766 = vand.u32 %v32, 4294901760
    %v767 = vsub.f32 %v32, %v766
    %768 = vmatmul.mubr.f32.gmra.mxu0 %v767
    %v769 = vpop.f32.mrf.mxu0
    %v770 = vadd.f32 %v690, %v769
    %v771 = vpop.f32.mrf.mxu0
    %772 = vdwg.mxu0
    %773 = vmatprep.subr.mxu0 0.0
    %774 = vmatpush1.msra.mxu0 0.0
    %775 = vmatprep.subr.mxu0 0.0
    %776 = vmatpush1.msra.mxu0 0.0
    %777 = vmatprep.subr.mxu0 0.0
    %778 = vmatpush1.msra.mxu0 0.0
    %779 = vmatprep.subr.mxu0 0.0
    %780 = vmatpush1.msra.mxu0 0.0
    %781 = vmatprep.subr.mxu0 0.0
    %782 = vmatpush1.msra.mxu0 0.0
    %783 = vmatprep.subr.mxu0 0.0
    %784 = vmatpush1.msra.mxu0 0.0
    %785 = vmatprep.subr.mxu0 0.0
    %786 = vmatpush1.msra.mxu0 0.0
    %787 = vmatprep.subr.mxu0 0.0
    %788 = vmatpush1.msra.mxu0 0.0
    %789 = vmatprep.subr.mxu0 0.0
    %790 = vmatpush1.msra.mxu0 0.0
    %791 = vmatprep.subr.mxu0 0.0
    %792 = vmatpush1.msra.mxu0 0.0
    %793 = vmatprep.subr.mxu0 0.0
    %794 = vmatpush1.msra.mxu0 0.0
    %795 = vmatprep.subr.mxu0 0.0
    %796 = vmatpush1.msra.mxu0 0.0
    %797 = vmatprep.subr.mxu0 0.0
    %v798 = vand.u32 %v522, 4294901760
    %799 = vmatpush1.msra.mxu0 %v798
    %800 = vmatprep.subr.mxu0 0.0
    %v801 = vand.u32 %v521, 4294901760
    %802 = vmatpush1.msra.mxu0 %v801
    %803 = vmatprep.subr.mxu0 0.0
    %v804 = vand.u32 %v520, 4294901760
    %805 = vmatpush1.msra.mxu0 %v804
    %806 = vmatprep.subr.mxu0 0.0
    %v807 = vand.u32 %v519, 4294901760
    %808 = vmatpush1.msra.mxu0 %v807
    %809 = vmatprep.subr.mxu0 0.0
    %810 = vmatpush2.msra.mxu0 0.0
    %811 = vmatprep.subr.mxu0 0.0
    %812 = vmatpush2.msra.mxu0 0.0
    %813 = vmatprep.subr.mxu0 0.0
    %814 = vmatpush2.msra.mxu0 0.0
    %815 = vmatprep.subr.mxu0 0.0
    %816 = vmatpush2.msra.mxu0 0.0
    %817 = vmatprep.subr.mxu0 0.0
    %818 = vmatpush2.msra.mxu0 0.0
    %819 = vmatprep.subr.mxu0 0.0
    %820 = vmatpush2.msra.mxu0 0.0
    %821 = vmatprep.subr.mxu0 0.0
    %822 = vmatpush2.msra.mxu0 0.0
    %823 = vmatprep.subr.mxu0 0.0
    %824 = vmatpush2.msra.mxu0 0.0
    %825 = vmatprep.subr.mxu0 0.0
    %826 = vmatpush2.msra.mxu0 0.0
    %827 = vmatprep.subr.mxu0 0.0
    %828 = vmatpush2.msra.mxu0 0.0
    %829 = vmatprep.subr.mxu0 0.0
    %830 = vmatpush2.msra.mxu0 0.0
    %831 = vmatprep.subr.mxu0 0.0
    %832 = vmatpush2.msra.mxu0 0.0
    %833 = vmatprep.subr.mxu0 0.0
    %834 = vmatpush2.msra.mxu0 0.0
    %835 = vmatprep.subr.mxu0 0.0
    %836 = vmatpush2.msra.mxu0 0.0
    %837 = vmatprep.subr.mxu0 0.0
    %838 = vmatpush2.msra.mxu0 0.0
    %839 = vmatprep.subr.mxu0 0.0
    %840 = vmatpush2.msra.mxu0 0.0
    %841 = vmatprep.mubr.f32.mxu0 0.0
    %v842 = vand.u32 %v32, 4294901760
    %v843 = vsub.f32 %v32, %v842
    %v844 = vand.u32 %v843, 4294901760
    %845 = vmatmul.mubr.f32.gmra.mxu0 %v844
    %v846 = vpop.f32.mrf.mxu0
    %v847 = vadd.f32 %v770, %v846
    %v848 = vpop.f32.mrf.mxu0
    %849 = vdwg.mxu0
    %850 = vmatprep.subr.mxu0 0.0
    %851 = vmatpush1.msra.mxu0 0.0
    %852 = vmatprep.subr.mxu0 0.0
    %853 = vmatpush1.msra.mxu0 0.0
    %854 = vmatprep.subr.mxu0 0.0
    %855 = vmatpush1.msra.mxu0 0.0
    %856 = vmatprep.subr.mxu0 0.0
    %857 = vmatpush1.msra.mxu0 0.0
    %858 = vmatprep.subr.mxu0 0.0
    %859 = vmatpush1.msra.mxu0 0.0
    %860 = vmatprep.subr.mxu0 0.0
    %861 = vmatpush1.msra.mxu0 0.0
    %862 = vmatprep.subr.mxu0 0.0
    %863 = vmatpush1.msra.mxu0 0.0
    %864 = vmatprep.subr.mxu0 0.0
    %865 = vmatpush1.msra.mxu0 0.0
    %866 = vmatprep.subr.mxu0 0.0
    %867 = vmatpush1.msra.mxu0 0.0
    %868 = vmatprep.subr.mxu0 0.0
    %869 = vmatpush1.msra.mxu0 0.0
    %870 = vmatprep.subr.mxu0 0.0
    %871 = vmatpush1.msra.mxu0 0.0
    %872 = vmatprep.subr.mxu0 0.0
    %873 = vmatpush1.msra.mxu0 0.0
    %874 = vmatprep.subr.mxu0 0.0
    %v875 = vand.u32 %v522, 4294901760
    %v876 = vsub.f32 %v522, %v875
    %v877 = vand.u32 %v876, 4294901760
    %878 = vmatpush1.msra.mxu0 %v877
    %879 = vmatprep.subr.mxu0 0.0
    %v880 = vand.u32 %v521, 4294901760
    %v881 = vsub.f32 %v521, %v880
    %v882 = vand.u32 %v881, 4294901760
    %883 = vmatpush1.msra.mxu0 %v882
    %884 = vmatprep.subr.mxu0 0.0
    %v885 = vand.u32 %v520, 4294901760
    %v886 = vsub.f32 %v520, %v885
    %v887 = vand.u32 %v886, 4294901760
    %888 = vmatpush1.msra.mxu0 %v887
    %889 = vmatprep.subr.mxu0 0.0
    %v890 = vand.u32 %v519, 4294901760
    %v891 = vsub.f32 %v519, %v890
    %v892 = vand.u32 %v891, 4294901760
    %893 = vmatpush1.msra.mxu0 %v892
    %894 = vmatprep.subr.mxu0 0.0
    %895 = vmatpush2.msra.mxu0 0.0
    %896 = vmatprep.subr.mxu0 0.0
    %897 = vmatpush2.msra.mxu0 0.0
    %898 = vmatprep.subr.mxu0 0.0
    %899 = vmatpush2.msra.mxu0 0.0
    %900 = vmatprep.subr.mxu0 0.0
    %901 = vmatpush2.msra.mxu0 0.0
    %902 = vmatprep.subr.mxu0 0.0
    %903 = vmatpush2.msra.mxu0 0.0
    %904 = vmatprep.subr.mxu0 0.0
    %905 = vmatpush2.msra.mxu0 0.0
    %906 = vmatprep.subr.mxu0 0.0
    %907 = vmatpush2.msra.mxu0 0.0
    %908 = vmatprep.subr.mxu0 0.0
    %909 = vmatpush2.msra.mxu0 0.0
    %910 = vmatprep.subr.mxu0 0.0
    %911 = vmatpush2.msra.mxu0 0.0
    %912 = vmatprep.subr.mxu0 0.0
    %913 = vmatpush2.msra.mxu0 0.0
    %914 = vmatprep.subr.mxu0 0.0
    %915 = vmatpush2.msra.mxu0 0.0
    %916 = vmatprep.subr.mxu0 0.0
    %917 = vmatpush2.msra.mxu0 0.0
    %918 = vmatprep.subr.mxu0 0.0
    %919 = vmatpush2.msra.mxu0 0.0
    %920 = vmatprep.subr.mxu0 0.0
    %921 = vmatpush2.msra.mxu0 0.0
    %922 = vmatprep.subr.mxu0 0.0
    %923 = vmatpush2.msra.mxu0 0.0
    %924 = vmatprep.subr.mxu0 0.0
    %925 = vmatpush2.msra.mxu0 0.0
    %926 = vmatprep.mubr.f32.mxu0 0.0
    %v927 = vand.u32 %v32, 4294901760
    %928 = vmatmul.mubr.f32.gmra.mxu0 %v927
    %v929 = vpop.f32.mrf.mxu0
    %v930 = vadd.f32 %v847, %v929
    %v931 = vpop.f32.mrf.mxu0
    %932 = vdwg.mxu0
    %933 = vmatprep.subr.mxu0 0.0
    %934 = vmatpush1.msra.mxu0 0.0
    %935 = vmatprep.subr.mxu0 0.0
    %936 = vmatpush1.msra.mxu0 0.0
    %937 = vmatprep.subr.mxu0 0.0
    %938 = vmatpush1.msra.mxu0 0.0
    %939 = vmatprep.subr.mxu0 0.0
    %940 = vmatpush1.msra.mxu0 0.0
    %941 = vmatprep.subr.mxu0 0.0
    %942 = vmatpush1.msra.mxu0 0.0
    %943 = vmatprep.subr.mxu0 0.0
    %944 = vmatpush1.msra.mxu0 0.0
    %945 = vmatprep.subr.mxu0 0.0
    %946 = vmatpush1.msra.mxu0 0.0
    %947 = vmatprep.subr.mxu0 0.0
    %948 = vmatpush1.msra.mxu0 0.0
    %949 = vmatprep.subr.mxu0 0.0
    %950 = vmatpush1.msra.mxu0 0.0
    %951 = vmatprep.subr.mxu0 0.0
    %952 = vmatpush1.msra.mxu0 0.0
    %953 = vmatprep.subr.mxu0 0.0
    %954 = vmatpush1.msra.mxu0 0.0
    %955 = vmatprep.subr.mxu0 0.0
    %956 = vmatpush1.msra.mxu0 0.0
    %957 = vmatprep.subr.mxu0 0.0
    %v958 = vand.u32 %v522, 4294901760
    %959 = vmatpush1.msra.mxu0 %v958
    %960 = vmatprep.subr.mxu0 0.0
    %v961 = vand.u32 %v521, 4294901760
    %962 = vmatpush1.msra.mxu0 %v961
    %963 = vmatprep.subr.mxu0 0.0
    %v964 = vand.u32 %v520, 4294901760
    %965 = vmatpush1.msra.mxu0 %v964
    %966 = vmatprep.subr.mxu0 0.0
    %v967 = vand.u32 %v519, 4294901760
    %968 = vmatpush1.msra.mxu0 %v967
    %969 = vmatprep.subr.mxu0 0.0
    %970 = vmatpush2.msra.mxu0 0.0
    %971 = vmatprep.subr.mxu0 0.0
    %972 = vmatpush2.msra.mxu0 0.0
    %973 = vmatprep.subr.mxu0 0.0
    %974 = vmatpush2.msra.mxu0 0.0
    %975 = vmatprep.subr.mxu0 0.0
    %976 = vmatpush2.msra.mxu0 0.0
    %977 = vmatprep.subr.mxu0 0.0
    %978 = vmatpush2.msra.mxu0 0.0
    %979 = vmatprep.subr.mxu0 0.0
    %980 = vmatpush2.msra.mxu0 0.0
    %981 = vmatprep.subr.mxu0 0.0
    %982 = vmatpush2.msra.mxu0 0.0
    %983 = vmatprep.subr.mxu0 0.0
    %984 = vmatpush2.msra.mxu0 0.0
    %985 = vmatprep.subr.mxu0 0.0
    %986 = vmatpush2.msra.mxu0 0.0
    %987 = vmatprep.subr.mxu0 0.0
    %988 = vmatpush2.msra.mxu0 0.0
    %989 = vmatprep.subr.mxu0 0.0
    %990 = vmatpush2.msra.mxu0 0.0
    %991 = vmatprep.subr.mxu0 0.0
    %992 = vmatpush2.msra.mxu0 0.0
    %993 = vmatprep.subr.mxu0 0.0
    %994 = vmatpush2.msra.mxu0 0.0
    %995 = vmatprep.subr.mxu0 0.0
    %996 = vmatpush2.msra.mxu0 0.0
    %997 = vmatprep.subr.mxu0 0.0
    %998 = vmatpush2.msra.mxu0 0.0
    %999 = vmatprep.subr.mxu0 0.0
    %1000 = vmatpush2.msra.mxu0 0.0
    %1001 = vmatprep.mubr.f32.mxu0 0.0
    %v1002 = vand.u32 %v32, 4294901760
    %1003 = vmatmul.mubr.f32.gmra.mxu0 %v1002
    %v1004 = vpop.f32.mrf.mxu0
    %v1005 = vadd.f32 %v930, %v1004
    %v1006 = vpop.f32.mrf.mxu0
    %1007 = vdwg.mxu0
    %v1008 = vld [vmem:[%s2 + $0x40] sm:$0xff]
    %v1009 = vld [vmem:[%s2 + $0x48] sm:$0xff]
    %v1010 = vld [vmem:[%s2 + $0x50] sm:$0xff]
    %v1011 = vld [vmem:[%s2 + $0x58] sm:$0xff]
    %1012 = vmatprep.subr.mxu0 0.0
    %1013 = vmatpush1.msra.mxu0 0.0
    %1014 = vmatprep.subr.mxu0 0.0
    %1015 = vmatpush1.msra.mxu0 0.0
    %1016 = vmatprep.subr.mxu0 0.0
    %1017 = vmatpush1.msra.mxu0 0.0
    %1018 = vmatprep.subr.mxu0 0.0
    %1019 = vmatpush1.msra.mxu0 0.0
    %1020 = vmatprep.subr.mxu0 0.0
    %1021 = vmatpush1.msra.mxu0 0.0
    %1022 = vmatprep.subr.mxu0 0.0
    %1023 = vmatpush1.msra.mxu0 0.0
    %1024 = vmatprep.subr.mxu0 0.0
    %1025 = vmatpush1.msra.mxu0 0.0
    %1026 = vmatprep.subr.mxu0 0.0
    %1027 = vmatpush1.msra.mxu0 0.0
    %1028 = vmatprep.subr.mxu0 0.0
    %1029 = vmatpush1.msra.mxu0 0.0
    %1030 = vmatprep.subr.mxu0 0.0
    %1031 = vmatpush1.msra.mxu0 0.0
    %1032 = vmatprep.subr.mxu0 0.0
    %1033 = vmatpush1.msra.mxu0 0.0
    %1034 = vmatprep.subr.mxu0 0.0
    %1035 = vmatpush1.msra.mxu0 0.0
    %1036 = vmatprep.subr.mxu0 0.0
    %v1037 = vand.u32 %v1011, 4294901760
    %1038 = vmatpush1.msra.mxu0 %v1037
    %1039 = vmatprep.subr.mxu0 0.0
    %v1040 = vand.u32 %v1010, 4294901760
    %1041 = vmatpush1.msra.mxu0 %v1040
    %1042 = vmatprep.subr.mxu0 0.0
    %v1043 = vand.u32 %v1009, 4294901760
    %1044 = vmatpush1.msra.mxu0 %v1043
    %1045 = vmatprep.subr.mxu0 0.0
    %v1046 = vand.u32 %v1008, 4294901760
    %1047 = vmatpush1.msra.mxu0 %v1046
    %1048 = vmatprep.subr.mxu0 0.0
    %1049 = vmatpush2.msra.mxu0 0.0
    %1050 = vmatprep.subr.mxu0 0.0
    %1051 = vmatpush2.msra.mxu0 0.0
    %1052 = vmatprep.subr.mxu0 0.0
    %1053 = vmatpush2.msra.mxu0 0.0
    %1054 = vmatprep.subr.mxu0 0.0
    %1055 = vmatpush2.msra.mxu0 0.0
    %1056 = vmatprep.subr.mxu0 0.0
    %1057 = vmatpush2.msra.mxu0 0.0
    %1058 = vmatprep.subr.mxu0 0.0
    %1059 = vmatpush2.msra.mxu0 0.0
    %1060 = vmatprep.subr.mxu0 0.0
    %1061 = vmatpush2.msra.mxu0 0.0
    %1062 = vmatprep.subr.mxu0 0.0
    %1063 = vmatpush2.msra.mxu0 0.0
    %1064 = vmatprep.subr.mxu0 0.0
    %1065 = vmatpush2.msra.mxu0 0.0
    %1066 = vmatprep.subr.mxu0 0.0
    %1067 = vmatpush2.msra.mxu0 0.0
    %1068 = vmatprep.subr.mxu0 0.0
    %1069 = vmatpush2.msra.mxu0 0.0
    %1070 = vmatprep.subr.mxu0 0.0
    %1071 = vmatpush2.msra.mxu0 0.0
    %1072 = vmatprep.subr.mxu0 0.0
    %1073 = vmatpush2.msra.mxu0 0.0
    %1074 = vmatprep.subr.mxu0 0.0
    %1075 = vmatpush2.msra.mxu0 0.0
    %1076 = vmatprep.subr.mxu0 0.0
    %1077 = vmatpush2.msra.mxu0 0.0
    %1078 = vmatprep.subr.mxu0 0.0
    %1079 = vmatpush2.msra.mxu0 0.0
    %1080 = vmatprep.mubr.f32.mxu0 0.0
    %v1081 = vand.u32 %v32, 4294901760
    %v1082 = vsub.f32 %v32, %v1081
    %v1083 = vand.u32 %v1082, 4294901760
    %v1084 = vsub.f32 %v1082, %v1083
    %v1085 = vand.u32 %v1084, 4294901760
    %1086 = vmatmul.mubr.f32.gmra.mxu0 %v1085
    %v1087 = vpop.f32.mrf.mxu0
    %v1088 = vadd.f32 0.0, %v1087
    %v1089 = vpop.f32.mrf.mxu0
    %1090 = vdwg.mxu0
    %1091 = vmatprep.subr.mxu0 0.0
    %1092 = vmatpush1.msra.mxu0 0.0
    %1093 = vmatprep.subr.mxu0 0.0
    %1094 = vmatpush1.msra.mxu0 0.0
    %1095 = vmatprep.subr.mxu0 0.0
    %1096 = vmatpush1.msra.mxu0 0.0
    %1097 = vmatprep.subr.mxu0 0.0
    %1098 = vmatpush1.msra.mxu0 0.0
    %1099 = vmatprep.subr.mxu0 0.0
    %1100 = vmatpush1.msra.mxu0 0.0
    %1101 = vmatprep.subr.mxu0 0.0
    %1102 = vmatpush1.msra.mxu0 0.0
    %1103 = vmatprep.subr.mxu0 0.0
    %1104 = vmatpush1.msra.mxu0 0.0
    %1105 = vmatprep.subr.mxu0 0.0
    %1106 = vmatpush1.msra.mxu0 0.0
    %1107 = vmatprep.subr.mxu0 0.0
    %1108 = vmatpush1.msra.mxu0 0.0
    %1109 = vmatprep.subr.mxu0 0.0
    %1110 = vmatpush1.msra.mxu0 0.0
    %1111 = vmatprep.subr.mxu0 0.0
    %1112 = vmatpush1.msra.mxu0 0.0
    %1113 = vmatprep.subr.mxu0 0.0
    %1114 = vmatpush1.msra.mxu0 0.0
    %1115 = vmatprep.subr.mxu0 0.0
    %v1116 = vand.u32 %v1011, 4294901760
    %v1117 = vsub.f32 %v1011, %v1116
    %v1118 = vand.u32 %v1117, 4294901760
    %v1119 = vsub.f32 %v1117, %v1118
    %v1120 = vand.u32 %v1119, 4294901760
    %1121 = vmatpush1.msra.mxu0 %v1120
    %1122 = vmatprep.subr.mxu0 0.0
    %v1123 = vand.u32 %v1010, 4294901760
    %v1124 = vsub.f32 %v1010, %v1123
    %v1125 = vand.u32 %v1124, 4294901760
    %v1126 = vsub.f32 %v1124, %v1125
    %v1127 = vand.u32 %v1126, 4294901760
    %1128 = vmatpush1.msra.mxu0 %v1127
    %1129 = vmatprep.subr.mxu0 0.0
    %v1130 = vand.u32 %v1009, 4294901760
    %v1131 = vsub.f32 %v1009, %v1130
    %v1132 = vand.u32 %v1131, 4294901760
    %v1133 = vsub.f32 %v1131, %v1132
    %v1134 = vand.u32 %v1133, 4294901760
    %1135 = vmatpush1.msra.mxu0 %v1134
    %1136 = vmatprep.subr.mxu0 0.0
    %v1137 = vand.u32 %v1008, 4294901760
    %v1138 = vsub.f32 %v1008, %v1137
    %v1139 = vand.u32 %v1138, 4294901760
    %v1140 = vsub.f32 %v1138, %v1139
    %v1141 = vand.u32 %v1140, 4294901760
    %1142 = vmatpush1.msra.mxu0 %v1141
    %1143 = vmatprep.subr.mxu0 0.0
    %1144 = vmatpush2.msra.mxu0 0.0
    %1145 = vmatprep.subr.mxu0 0.0
    %1146 = vmatpush2.msra.mxu0 0.0
    %1147 = vmatprep.subr.mxu0 0.0
    %1148 = vmatpush2.msra.mxu0 0.0
    %1149 = vmatprep.subr.mxu0 0.0
    %1150 = vmatpush2.msra.mxu0 0.0
    %1151 = vmatprep.subr.mxu0 0.0
    %1152 = vmatpush2.msra.mxu0 0.0
    %1153 = vmatprep.subr.mxu0 0.0
    %1154 = vmatpush2.msra.mxu0 0.0
    %1155 = vmatprep.subr.mxu0 0.0
    %1156 = vmatpush2.msra.mxu0 0.0
    %1157 = vmatprep.subr.mxu0 0.0
    %1158 = vmatpush2.msra.mxu0 0.0
    %1159 = vmatprep.subr.mxu0 0.0
    %1160 = vmatpush2.msra.mxu0 0.0
    %1161 = vmatprep.subr.mxu0 0.0
    %1162 = vmatpush2.msra.mxu0 0.0
    %1163 = vmatprep.subr.mxu0 0.0
    %1164 = vmatpush2.msra.mxu0 0.0
    %1165 = vmatprep.subr.mxu0 0.0
    %1166 = vmatpush2.msra.mxu0 0.0
    %1167 = vmatprep.subr.mxu0 0.0
    %1168 = vmatpush2.msra.mxu0 0.0
    %1169 = vmatprep.subr.mxu0 0.0
    %1170 = vmatpush2.msra.mxu0 0.0
    %1171 = vmatprep.subr.mxu0 0.0
    %1172 = vmatpush2.msra.mxu0 0.0
    %1173 = vmatprep.subr.mxu0 0.0
    %1174 = vmatpush2.msra.mxu0 0.0
    %1175 = vmatprep.mubr.f32.mxu0 0.0
    %v1176 = vand.u32 %v32, 4294901760
    %1177 = vmatmul.mubr.f32.gmra.mxu0 %v1176
    %v1178 = vpop.f32.mrf.mxu0
    %v1179 = vadd.f32 %v1088, %v1178
    %v1180 = vpop.f32.mrf.mxu0
    %1181 = vdwg.mxu0
    %1182 = vmatprep.subr.mxu0 0.0
    %1183 = vmatpush1.msra.mxu0 0.0
    %1184 = vmatprep.subr.mxu0 0.0
    %1185 = vmatpush1.msra.mxu0 0.0
    %1186 = vmatprep.subr.mxu0 0.0
    %1187 = vmatpush1.msra.mxu0 0.0
    %1188 = vmatprep.subr.mxu0 0.0
    %1189 = vmatpush1.msra.mxu0 0.0
    %1190 = vmatprep.subr.mxu0 0.0
    %1191 = vmatpush1.msra.mxu0 0.0
    %1192 = vmatprep.subr.mxu0 0.0
    %1193 = vmatpush1.msra.mxu0 0.0
    %1194 = vmatprep.subr.mxu0 0.0
    %1195 = vmatpush1.msra.mxu0 0.0
    %1196 = vmatprep.subr.mxu0 0.0
    %1197 = vmatpush1.msra.mxu0 0.0
    %1198 = vmatprep.subr.mxu0 0.0
    %1199 = vmatpush1.msra.mxu0 0.0
    %1200 = vmatprep.subr.mxu0 0.0
    %1201 = vmatpush1.msra.mxu0 0.0
    %1202 = vmatprep.subr.mxu0 0.0
    %1203 = vmatpush1.msra.mxu0 0.0
    %1204 = vmatprep.subr.mxu0 0.0
    %1205 = vmatpush1.msra.mxu0 0.0
    %1206 = vmatprep.subr.mxu0 0.0
    %v1207 = vand.u32 %v1011, 4294901760
    %v1208 = vsub.f32 %v1011, %v1207
    %1209 = vmatpush1.msra.mxu0 %v1208
    %1210 = vmatprep.subr.mxu0 0.0
    %v1211 = vand.u32 %v1010, 4294901760
    %v1212 = vsub.f32 %v1010, %v1211
    %1213 = vmatpush1.msra.mxu0 %v1212
    %1214 = vmatprep.subr.mxu0 0.0
    %v1215 = vand.u32 %v1009, 4294901760
    %v1216 = vsub.f32 %v1009, %v1215
    %1217 = vmatpush1.msra.mxu0 %v1216
    %1218 = vmatprep.subr.mxu0 0.0
    %v1219 = vand.u32 %v1008, 4294901760
    %v1220 = vsub.f32 %v1008, %v1219
    %1221 = vmatpush1.msra.mxu0 %v1220
    %1222 = vmatprep.subr.mxu0 0.0
    %1223 = vmatpush2.msra.mxu0 0.0
    %1224 = vmatprep.subr.mxu0 0.0
    %1225 = vmatpush2.msra.mxu0 0.0
    %1226 = vmatprep.subr.mxu0 0.0
    %1227 = vmatpush2.msra.mxu0 0.0
    %1228 = vmatprep.subr.mxu0 0.0
    %1229 = vmatpush2.msra.mxu0 0.0
    %1230 = vmatprep.subr.mxu0 0.0
    %1231 = vmatpush2.msra.mxu0 0.0
    %1232 = vmatprep.subr.mxu0 0.0
    %1233 = vmatpush2.msra.mxu0 0.0
    %1234 = vmatprep.subr.mxu0 0.0
    %1235 = vmatpush2.msra.mxu0 0.0
    %1236 = vmatprep.subr.mxu0 0.0
    %1237 = vmatpush2.msra.mxu0 0.0
    %1238 = vmatprep.subr.mxu0 0.0
    %1239 = vmatpush2.msra.mxu0 0.0
    %1240 = vmatprep.subr.mxu0 0.0
    %1241 = vmatpush2.msra.mxu0 0.0
    %1242 = vmatprep.subr.mxu0 0.0
    %1243 = vmatpush2.msra.mxu0 0.0
    %1244 = vmatprep.subr.mxu0 0.0
    %1245 = vmatpush2.msra.mxu0 0.0
    %1246 = vmatprep.subr.mxu0 0.0
    %1247 = vmatpush2.msra.mxu0 0.0
    %1248 = vmatprep.subr.mxu0 0.0
    %1249 = vmatpush2.msra.mxu0 0.0
    %1250 = vmatprep.subr.mxu0 0.0
    %1251 = vmatpush2.msra.mxu0 0.0
    %1252 = vmatprep.subr.mxu0 0.0
    %1253 = vmatpush2.msra.mxu0 0.0
    %1254 = vmatprep.mubr.f32.mxu0 0.0
    %v1255 = vand.u32 %v32, 4294901760
    %v1256 = vsub.f32 %v32, %v1255
    %1257 = vmatmul.mubr.f32.gmra.mxu0 %v1256
    %v1258 = vpop.f32.mrf.mxu0
    %v1259 = vadd.f32 %v1179, %v1258
    %v1260 = vpop.f32.mrf.mxu0
    %1261 = vdwg.mxu0
    %1262 = vmatprep.subr.mxu0 0.0
    %1263 = vmatpush1.msra.mxu0 0.0
    %1264 = vmatprep.subr.mxu0 0.0
    %1265 = vmatpush1.msra.mxu0 0.0
    %1266 = vmatprep.subr.mxu0 0.0
    %1267 = vmatpush1.msra.mxu0 0.0
    %1268 = vmatprep.subr.mxu0 0.0
    %1269 = vmatpush1.msra.mxu0 0.0
    %1270 = vmatprep.subr.mxu0 0.0
    %1271 = vmatpush1.msra.mxu0 0.0
    %1272 = vmatprep.subr.mxu0 0.0
    %1273 = vmatpush1.msra.mxu0 0.0
    %1274 = vmatprep.subr.mxu0 0.0
    %1275 = vmatpush1.msra.mxu0 0.0
    %1276 = vmatprep.subr.mxu0 0.0
    %1277 = vmatpush1.msra.mxu0 0.0
    %1278 = vmatprep.subr.mxu0 0.0
    %1279 = vmatpush1.msra.mxu0 0.0
    %1280 = vmatprep.subr.mxu0 0.0
    %1281 = vmatpush1.msra.mxu0 0.0
    %1282 = vmatprep.subr.mxu0 0.0
    %1283 = vmatpush1.msra.mxu0 0.0
    %1284 = vmatprep.subr.mxu0 0.0
    %1285 = vmatpush1.msra.mxu0 0.0
    %1286 = vmatprep.subr.mxu0 0.0
    %v1287 = vand.u32 %v1011, 4294901760
    %1288 = vmatpush1.msra.mxu0 %v1287
    %1289 = vmatprep.subr.mxu0 0.0
    %v1290 = vand.u32 %v1010, 4294901760
    %1291 = vmatpush1.msra.mxu0 %v1290
    %1292 = vmatprep.subr.mxu0 0.0
    %v1293 = vand.u32 %v1009, 4294901760
    %1294 = vmatpush1.msra.mxu0 %v1293
    %1295 = vmatprep.subr.mxu0 0.0
    %v1296 = vand.u32 %v1008, 4294901760
    %1297 = vmatpush1.msra.mxu0 %v1296
    %1298 = vmatprep.subr.mxu0 0.0
    %1299 = vmatpush2.msra.mxu0 0.0
    %1300 = vmatprep.subr.mxu0 0.0
    %1301 = vmatpush2.msra.mxu0 0.0
    %1302 = vmatprep.subr.mxu0 0.0
    %1303 = vmatpush2.msra.mxu0 0.0
    %1304 = vmatprep.subr.mxu0 0.0
    %1305 = vmatpush2.msra.mxu0 0.0
    %1306 = vmatprep.subr.mxu0 0.0
    %1307 = vmatpush2.msra.mxu0 0.0
    %1308 = vmatprep.subr.mxu0 0.0
    %1309 = vmatpush2.msra.mxu0 0.0
    %1310 = vmatprep.subr.mxu0 0.0
    %1311 = vmatpush2.msra.mxu0 0.0
    %1312 = vmatprep.subr.mxu0 0.0
    %1313 = vmatpush2.msra.mxu0 0.0
    %1314 = vmatprep.subr.mxu0 0.0
    %1315 = vmatpush2.msra.mxu0 0.0
    %1316 = vmatprep.subr.mxu0 0.0
    %1317 = vmatpush2.msra.mxu0 0.0
    %1318 = vmatprep.subr.mxu0 0.0
    %1319 = vmatpush2.msra.mxu0 0.0
    %1320 = vmatprep.subr.mxu0 0.0
    %1321 = vmatpush2.msra.mxu0 0.0
    %1322 = vmatprep.subr.mxu0 0.0
    %1323 = vmatpush2.msra.mxu0 0.0
    %1324 = vmatprep.subr.mxu0 0.0
    %1325 = vmatpush2.msra.mxu0 0.0
    %1326 = vmatprep.subr.mxu0 0.0
    %1327 = vmatpush2.msra.mxu0 0.0
    %1328 = vmatprep.subr.mxu0 0.0
    %1329 = vmatpush2.msra.mxu0 0.0
    %1330 = vmatprep.mubr.f32.mxu0 0.0
    %v1331 = vand.u32 %v32, 4294901760
    %v1332 = vsub.f32 %v32, %v1331
    %v1333 = vand.u32 %v1332, 4294901760
    %1334 = vmatmul.mubr.f32.gmra.mxu0 %v1333
    %v1335 = vpop.f32.mrf.mxu0
    %v1336 = vadd.f32 %v1259, %v1335
    %v1337 = vpop.f32.mrf.mxu0
    %1338 = vdwg.mxu0
    %1339 = vmatprep.subr.mxu0 0.0
    %1340 = vmatpush1.msra.mxu0 0.0
    %1341 = vmatprep.subr.mxu0 0.0
    %1342 = vmatpush1.msra.mxu0 0.0
    %1343 = vmatprep.subr.mxu0 0.0
    %1344 = vmatpush1.msra.mxu0 0.0
    %1345 = vmatprep.subr.mxu0 0.0
    %1346 = vmatpush1.msra.mxu0 0.0
    %1347 = vmatprep.subr.mxu0 0.0
    %1348 = vmatpush1.msra.mxu0 0.0
    %1349 = vmatprep.subr.mxu0 0.0
    %1350 = vmatpush1.msra.mxu0 0.0
    %1351 = vmatprep.subr.mxu0 0.0
    %1352 = vmatpush1.msra.mxu0 0.0
    %1353 = vmatprep.subr.mxu0 0.0
    %1354 = vmatpush1.msra.mxu0 0.0
    %1355 = vmatprep.subr.mxu0 0.0
    %1356 = vmatpush1.msra.mxu0 0.0
    %1357 = vmatprep.subr.mxu0 0.0
    %1358 = vmatpush1.msra.mxu0 0.0
    %1359 = vmatprep.subr.mxu0 0.0
    %1360 = vmatpush1.msra.mxu0 0.0
    %1361 = vmatprep.subr.mxu0 0.0
    %1362 = vmatpush1.msra.mxu0 0.0
    %1363 = vmatprep.subr.mxu0 0.0
    %v1364 = vand.u32 %v1011, 4294901760
    %v1365 = vsub.f32 %v1011, %v1364
    %v1366 = vand.u32 %v1365, 4294901760
    %1367 = vmatpush1.msra.mxu0 %v1366
    %1368 = vmatprep.subr.mxu0 0.0
    %v1369 = vand.u32 %v1010, 4294901760
    %v1370 = vsub.f32 %v1010, %v1369
    %v1371 = vand.u32 %v1370, 4294901760
    %1372 = vmatpush1.msra.mxu0 %v1371
    %1373 = vmatprep.subr.mxu0 0.0
    %v1374 = vand.u32 %v1009, 4294901760
    %v1375 = vsub.f32 %v1009, %v1374
    %v1376 = vand.u32 %v1375, 4294901760
    %1377 = vmatpush1.msra.mxu0 %v1376
    %1378 = vmatprep.subr.mxu0 0.0
    %v1379 = vand.u32 %v1008, 4294901760
    %v1380 = vsub.f32 %v1008, %v1379
    %v1381 = vand.u32 %v1380, 4294901760
    %1382 = vmatpush1.msra.mxu0 %v1381
    %1383 = vmatprep.subr.mxu0 0.0
    %1384 = vmatpush2.msra.mxu0 0.0
    %1385 = vmatprep.subr.mxu0 0.0
    %1386 = vmatpush2.msra.mxu0 0.0
    %1387 = vmatprep.subr.mxu0 0.0
    %1388 = vmatpush2.msra.mxu0 0.0
    %1389 = vmatprep.subr.mxu0 0.0
    %1390 = vmatpush2.msra.mxu0 0.0
    %1391 = vmatprep.subr.mxu0 0.0
    %1392 = vmatpush2.msra.mxu0 0.0
    %1393 = vmatprep.subr.mxu0 0.0
    %1394 = vmatpush2.msra.mxu0 0.0
    %1395 = vmatprep.subr.mxu0 0.0
    %1396 = vmatpush2.msra.mxu0 0.0
    %1397 = vmatprep.subr.mxu0 0.0
    %1398 = vmatpush2.msra.mxu0 0.0
    %1399 = vmatprep.subr.mxu0 0.0
    %1400 = vmatpush2.msra.mxu0 0.0
    %1401 = vmatprep.subr.mxu0 0.0
    %1402 = vmatpush2.msra.mxu0 0.0
    %1403 = vmatprep.subr.mxu0 0.0
    %1404 = vmatpush2.msra.mxu0 0.0
    %1405 = vmatprep.subr.mxu0 0.0
    %1406 = vmatpush2.msra.mxu0 0.0
    %1407 = vmatprep.subr.mxu0 0.0
    %1408 = vmatpush2.msra.mxu0 0.0
    %1409 = vmatprep.subr.mxu0 0.0
    %1410 = vmatpush2.msra.mxu0 0.0
    %1411 = vmatprep.subr.mxu0 0.0
    %1412 = vmatpush2.msra.mxu0 0.0
    %1413 = vmatprep.subr.mxu0 0.0
    %1414 = vmatpush2.msra.mxu0 0.0
    %1415 = vmatprep.mubr.f32.mxu0 0.0
    %v1416 = vand.u32 %v32, 4294901760
    %1417 = vmatmul.mubr.f32.gmra.mxu0 %v1416
    %v1418 = vpop.f32.mrf.mxu0
    %v1419 = vadd.f32 %v1336, %v1418
    %v1420 = vpop.f32.mrf.mxu0
    %1421 = vdwg.mxu0
    %1422 = vmatprep.subr.mxu0 0.0
    %1423 = vmatpush1.msra.mxu0 0.0
    %1424 = vmatprep.subr.mxu0 0.0
    %1425 = vmatpush1.msra.mxu0 0.0
    %1426 = vmatprep.subr.mxu0 0.0
    %1427 = vmatpush1.msra.mxu0 0.0
    %1428 = vmatprep.subr.mxu0 0.0
    %1429 = vmatpush1.msra.mxu0 0.0
    %1430 = vmatprep.subr.mxu0 0.0
    %1431 = vmatpush1.msra.mxu0 0.0
    %1432 = vmatprep.subr.mxu0 0.0
    %1433 = vmatpush1.msra.mxu0 0.0
    %1434 = vmatprep.subr.mxu0 0.0
    %1435 = vmatpush1.msra.mxu0 0.0
    %1436 = vmatprep.subr.mxu0 0.0
    %1437 = vmatpush1.msra.mxu0 0.0
    %1438 = vmatprep.subr.mxu0 0.0
    %1439 = vmatpush1.msra.mxu0 0.0
    %1440 = vmatprep.subr.mxu0 0.0
    %1441 = vmatpush1.msra.mxu0 0.0
    %1442 = vmatprep.subr.mxu0 0.0
    %1443 = vmatpush1.msra.mxu0 0.0
    %1444 = vmatprep.subr.mxu0 0.0
    %1445 = vmatpush1.msra.mxu0 0.0
    %1446 = vmatprep.subr.mxu0 0.0
    %v1447 = vand.u32 %v1011, 4294901760
    %1448 = vmatpush1.msra.mxu0 %v1447
    %1449 = vmatprep.subr.mxu0 0.0
    %v1450 = vand.u32 %v1010, 4294901760
    %1451 = vmatpush1.msra.mxu0 %v1450
    %1452 = vmatprep.subr.mxu0 0.0
    %v1453 = vand.u32 %v1009, 4294901760
    %1454 = vmatpush1.msra.mxu0 %v1453
    %1455 = vmatprep.subr.mxu0 0.0
    %v1456 = vand.u32 %v1008, 4294901760
    %1457 = vmatpush1.msra.mxu0 %v1456
    %1458 = vmatprep.subr.mxu0 0.0
    %1459 = vmatpush2.msra.mxu0 0.0
    %1460 = vmatprep.subr.mxu0 0.0
    %1461 = vmatpush2.msra.mxu0 0.0
    %1462 = vmatprep.subr.mxu0 0.0
    %1463 = vmatpush2.msra.mxu0 0.0
    %1464 = vmatprep.subr.mxu0 0.0
    %1465 = vmatpush2.msra.mxu0 0.0
    %1466 = vmatprep.subr.mxu0 0.0
    %1467 = vmatpush2.msra.mxu0 0.0
    %1468 = vmatprep.subr.mxu0 0.0
    %1469 = vmatpush2.msra.mxu0 0.0
    %1470 = vmatprep.subr.mxu0 0.0
    %1471 = vmatpush2.msra.mxu0 0.0
    %1472 = vmatprep.subr.mxu0 0.0
    %1473 = vmatpush2.msra.mxu0 0.0
    %1474 = vmatprep.subr.mxu0 0.0
    %1475 = vmatpush2.msra.mxu0 0.0
    %1476 = vmatprep.subr.mxu0 0.0
    %1477 = vmatpush2.msra.mxu0 0.0
    %1478 = vmatprep.subr.mxu0 0.0
    %1479 = vmatpush2.msra.mxu0 0.0
    %1480 = vmatprep.subr.mxu0 0.0
    %1481 = vmatpush2.msra.mxu0 0.0
    %1482 = vmatprep.subr.mxu0 0.0
    %1483 = vmatpush2.msra.mxu0 0.0
    %1484 = vmatprep.subr.mxu0 0.0
    %1485 = vmatpush2.msra.mxu0 0.0
    %1486 = vmatprep.subr.mxu0 0.0
    %1487 = vmatpush2.msra.mxu0 0.0
    %1488 = vmatprep.subr.mxu0 0.0
    %1489 = vmatpush2.msra.mxu0 0.0
    %1490 = vmatprep.mubr.f32.mxu0 0.0
    %v1491 = vand.u32 %v32, 4294901760
    %1492 = vmatmul.mubr.f32.gmra.mxu0 %v1491
    %v1493 = vpop.f32.mrf.mxu0
    %v1494 = vadd.f32 %v1419, %v1493
    %v1495 = vpop.f32.mrf.mxu0
    %1496 = vdwg.mxu0
    %vm1497 = vcmask 64512
    %v1499 = vsel %vm1497, %v18, 0
    %v1502 = vsel %vm1497, %v19, 0
    %1504 = vmatprep.subr.mxu0 0.0
    %1505 = vmatpush1.msra.mxu0 0.0
    %1506 = vmatprep.subr.mxu0 0.0
    %1507 = vmatpush1.msra.mxu0 0.0
    %1508 = vmatprep.subr.mxu0 0.0
    %1509 = vmatpush1.msra.mxu0 0.0
    %1510 = vmatprep.subr.mxu0 0.0
    %1511 = vmatpush1.msra.mxu0 0.0
    %1512 = vmatprep.subr.mxu0 0.0
    %1513 = vmatpush1.msra.mxu0 0.0
    %1514 = vmatprep.subr.mxu0 0.0
    %1515 = vmatpush1.msra.mxu0 0.0
    %1516 = vmatprep.subr.mxu0 0.0
    %1517 = vmatpush1.msra.mxu0 0.0
    %1518 = vmatprep.subr.mxu0 0.0
    %1519 = vmatpush1.msra.mxu0 0.0
    %1520 = vmatprep.subr.mxu0 0.0
    %1521 = vmatpush1.msra.mxu0 0.0
    %1522 = vmatprep.subr.mxu0 0.0
    %1523 = vmatpush1.msra.mxu0 0.0
    %1524 = vmatprep.subr.mxu0 0.0
    %1525 = vmatpush1.msra.mxu0 0.0
    %1526 = vmatprep.subr.mxu0 0.0
    %1527 = vmatpush1.msra.mxu0 0.0
    %1528 = vmatprep.subr.mxu0 0.0
    %1529 = vmatpush1.msra.mxu0 0.0
    %1530 = vmatprep.subr.mxu0 0.0
    %1531 = vmatpush1.msra.mxu0 0.0
    %1532 = vmatprep.subr.mxu0 0.0
    %1533 = vmatpush1.msra.mxu0 0.0
    %1534 = vmatprep.subr.mxu0 0.0
    %v1535 = vand.u32 %v516, 4294901760
    %1536 = vmatpush1.msra.mxu0 %v1535
    %1537 = vmatprep.subr.mxu0 0.0
    %1538 = vmatpush2.msra.mxu0 0.0
    %1539 = vmatprep.subr.mxu0 0.0
    %1540 = vmatpush2.msra.mxu0 0.0
    %1541 = vmatprep.subr.mxu0 0.0
    %1542 = vmatpush2.msra.mxu0 0.0
    %1543 = vmatprep.subr.mxu0 0.0
    %1544 = vmatpush2.msra.mxu0 0.0
    %1545 = vmatprep.subr.mxu0 0.0
    %1546 = vmatpush2.msra.mxu0 0.0
    %1547 = vmatprep.subr.mxu0 0.0
    %1548 = vmatpush2.msra.mxu0 0.0
    %1549 = vmatprep.subr.mxu0 0.0
    %1550 = vmatpush2.msra.mxu0 0.0
    %1551 = vmatprep.subr.mxu0 0.0
    %1552 = vmatpush2.msra.mxu0 0.0
    %1553 = vmatprep.subr.mxu0 0.0
    %1554 = vmatpush2.msra.mxu0 0.0
    %1555 = vmatprep.subr.mxu0 0.0
    %1556 = vmatpush2.msra.mxu0 0.0
    %1557 = vmatprep.subr.mxu0 0.0
    %1558 = vmatpush2.msra.mxu0 0.0
    %1559 = vmatprep.subr.mxu0 0.0
    %1560 = vmatpush2.msra.mxu0 0.0
    %1561 = vmatprep.subr.mxu0 0.0
    %1562 = vmatpush2.msra.mxu0 0.0
    %1563 = vmatprep.subr.mxu0 0.0
    %1564 = vmatpush2.msra.mxu0 0.0
    %1565 = vmatprep.subr.mxu0 0.0
    %1566 = vmatpush2.msra.mxu0 0.0
    %1567 = vmatprep.subr.mxu0 0.0
    %1568 = vmatpush2.msra.mxu0 0.0
    %1569 = vmatprep.mubr.f32.mxu0 0.0
    %v1570 = vand.u32 %v1499, 4294901760
    %v1571 = vsub.f32 %v1499, %v1570
    %v1572 = vand.u32 %v1571, 4294901760
    %v1573 = vsub.f32 %v1571, %v1572
    %v1574 = vand.u32 %v1573, 4294901760
    %1575 = vmatmul.mubr.f32.gmra.mxu0 %v1574
    %v1576 = vpop.f32.mrf.mxu0
    %v1577 = vadd.f32 0.0, %v1576
    %v1578 = vpop.f32.mrf.mxu0
    %1579 = vmatprep.mubr.f32.mxu0 0.0
    %v1580 = vand.u32 %v1502, 4294901760
    %v1581 = vsub.f32 %v1502, %v1580
    %v1582 = vand.u32 %v1581, 4294901760
    %v1583 = vsub.f32 %v1581, %v1582
    %v1584 = vand.u32 %v1583, 4294901760
    %1585 = vmatmul.mubr.f32.gmra.mxu0 %v1584
    %v1586 = vpop.f32.mrf.mxu0
    %v1587 = vadd.f32 0.0, %v1586
    %v1588 = vpop.f32.mrf.mxu0
    %1589 = vdwg.mxu0
    %1590 = vmatprep.subr.mxu0 0.0
    %1591 = vmatpush1.msra.mxu0 0.0
    %1592 = vmatprep.subr.mxu0 0.0
    %1593 = vmatpush1.msra.mxu0 0.0
    %1594 = vmatprep.subr.mxu0 0.0
    %1595 = vmatpush1.msra.mxu0 0.0
    %1596 = vmatprep.subr.mxu0 0.0
    %1597 = vmatpush1.msra.mxu0 0.0
    %1598 = vmatprep.subr.mxu0 0.0
    %1599 = vmatpush1.msra.mxu0 0.0
    %1600 = vmatprep.subr.mxu0 0.0
    %1601 = vmatpush1.msra.mxu0 0.0
    %1602 = vmatprep.subr.mxu0 0.0
    %1603 = vmatpush1.msra.mxu0 0.0
    %1604 = vmatprep.subr.mxu0 0.0
    %1605 = vmatpush1.msra.mxu0 0.0
    %1606 = vmatprep.subr.mxu0 0.0
    %1607 = vmatpush1.msra.mxu0 0.0
    %1608 = vmatprep.subr.mxu0 0.0
    %1609 = vmatpush1.msra.mxu0 0.0
    %1610 = vmatprep.subr.mxu0 0.0
    %1611 = vmatpush1.msra.mxu0 0.0
    %1612 = vmatprep.subr.mxu0 0.0
    %1613 = vmatpush1.msra.mxu0 0.0
    %1614 = vmatprep.subr.mxu0 0.0
    %1615 = vmatpush1.msra.mxu0 0.0
    %1616 = vmatprep.subr.mxu0 0.0
    %1617 = vmatpush1.msra.mxu0 0.0
    %1618 = vmatprep.subr.mxu0 0.0
    %1619 = vmatpush1.msra.mxu0 0.0
    %1620 = vmatprep.subr.mxu0 0.0
    %v1621 = vand.u32 %v516, 4294901760
    %v1622 = vsub.f32 %v516, %v1621
    %v1623 = vand.u32 %v1622, 4294901760
    %v1624 = vsub.f32 %v1622, %v1623
    %v1625 = vand.u32 %v1624, 4294901760
    %1626 = vmatpush1.msra.mxu0 %v1625
    %1627 = vmatprep.subr.mxu0 0.0
    %1628 = vmatpush2.msra.mxu0 0.0
    %1629 = vmatprep.subr.mxu0 0.0
    %1630 = vmatpush2.msra.mxu0 0.0
    %1631 = vmatprep.subr.mxu0 0.0
    %1632 = vmatpush2.msra.mxu0 0.0
    %1633 = vmatprep.subr.mxu0 0.0
    %1634 = vmatpush2.msra.mxu0 0.0
    %1635 = vmatprep.subr.mxu0 0.0
    %1636 = vmatpush2.msra.mxu0 0.0
    %1637 = vmatprep.subr.mxu0 0.0
    %1638 = vmatpush2.msra.mxu0 0.0
    %1639 = vmatprep.subr.mxu0 0.0
    %1640 = vmatpush2.msra.mxu0 0.0
    %1641 = vmatprep.subr.mxu0 0.0
    %1642 = vmatpush2.msra.mxu0 0.0
    %1643 = vmatprep.subr.mxu0 0.0
    %1644 = vmatpush2.msra.mxu0 0.0
    %1645 = vmatprep.subr.mxu0 0.0
    %1646 = vmatpush2.msra.mxu0 0.0
    %1647 = vmatprep.subr.mxu0 0.0
    %1648 = vmatpush2.msra.mxu0 0.0
    %1649 = vmatprep.subr.mxu0 0.0
    %1650 = vmatpush2.msra.mxu0 0.0
    %1651 = vmatprep.subr.mxu0 0.0
    %1652 = vmatpush2.msra.mxu0 0.0
    %1653 = vmatprep.subr.mxu0 0.0
    %1654 = vmatpush2.msra.mxu0 0.0
    %1655 = vmatprep.subr.mxu0 0.0
    %1656 = vmatpush2.msra.mxu0 0.0
    %1657 = vmatprep.subr.mxu0 0.0
    %1658 = vmatpush2.msra.mxu0 0.0
    %1659 = vmatprep.mubr.f32.mxu0 0.0
    %v1660 = vand.u32 %v1499, 4294901760
    %1661 = vmatmul.mubr.f32.gmra.mxu0 %v1660
    %v1662 = vpop.f32.mrf.mxu0
    %v1663 = vadd.f32 %v1577, %v1662
    %v1664 = vpop.f32.mrf.mxu0
    %1665 = vmatprep.mubr.f32.mxu0 0.0
    %v1666 = vand.u32 %v1502, 4294901760
    %1667 = vmatmul.mubr.f32.gmra.mxu0 %v1666
    %v1668 = vpop.f32.mrf.mxu0
    %v1669 = vadd.f32 %v1587, %v1668
    %v1670 = vpop.f32.mrf.mxu0
    %1671 = vdwg.mxu0
    %1672 = vmatprep.subr.mxu0 0.0
    %1673 = vmatpush1.msra.mxu0 0.0
    %1674 = vmatprep.subr.mxu0 0.0
    %1675 = vmatpush1.msra.mxu0 0.0
    %1676 = vmatprep.subr.mxu0 0.0
    %1677 = vmatpush1.msra.mxu0 0.0
    %1678 = vmatprep.subr.mxu0 0.0
    %1679 = vmatpush1.msra.mxu0 0.0
    %1680 = vmatprep.subr.mxu0 0.0
    %1681 = vmatpush1.msra.mxu0 0.0
    %1682 = vmatprep.subr.mxu0 0.0
    %1683 = vmatpush1.msra.mxu0 0.0
    %1684 = vmatprep.subr.mxu0 0.0
    %1685 = vmatpush1.msra.mxu0 0.0
    %1686 = vmatprep.subr.mxu0 0.0
    %1687 = vmatpush1.msra.mxu0 0.0
    %1688 = vmatprep.subr.mxu0 0.0
    %1689 = vmatpush1.msra.mxu0 0.0
    %1690 = vmatprep.subr.mxu0 0.0
    %1691 = vmatpush1.msra.mxu0 0.0
    %1692 = vmatprep.subr.mxu0 0.0
    %1693 = vmatpush1.msra.mxu0 0.0
    %1694 = vmatprep.subr.mxu0 0.0
    %1695 = vmatpush1.msra.mxu0 0.0
    %1696 = vmatprep.subr.mxu0 0.0
    %1697 = vmatpush1.msra.mxu0 0.0
    %1698 = vmatprep.subr.mxu0 0.0
    %1699 = vmatpush1.msra.mxu0 0.0
    %1700 = vmatprep.subr.mxu0 0.0
    %1701 = vmatpush1.msra.mxu0 0.0
    %1702 = vmatprep.subr.mxu0 0.0
    %v1703 = vand.u32 %v516, 4294901760
    %v1704 = vsub.f32 %v516, %v1703
    %1705 = vmatpush1.msra.mxu0 %v1704
    %1706 = vmatprep.subr.mxu0 0.0
    %1707 = vmatpush2.msra.mxu0 0.0
    %1708 = vmatprep.subr.mxu0 0.0
    %1709 = vmatpush2.msra.mxu0 0.0
    %1710 = vmatprep.subr.mxu0 0.0
    %1711 = vmatpush2.msra.mxu0 0.0
    %1712 = vmatprep.subr.mxu0 0.0
    %1713 = vmatpush2.msra.mxu0 0.0
    %1714 = vmatprep.subr.mxu0 0.0
    %1715 = vmatpush2.msra.mxu0 0.0
    %1716 = vmatprep.subr.mxu0 0.0
    %1717 = vmatpush2.msra.mxu0 0.0
    %1718 = vmatprep.subr.mxu0 0.0
    %1719 = vmatpush2.msra.mxu0 0.0
    %1720 = vmatprep.subr.mxu0 0.0
    %1721 = vmatpush2.msra.mxu0 0.0
    %1722 = vmatprep.subr.mxu0 0.0
    %1723 = vmatpush2.msra.mxu0 0.0
    %1724 = vmatprep.subr.mxu0 0.0
    %1725 = vmatpush2.msra.mxu0 0.0
    %1726 = vmatprep.subr.mxu0 0.0
    %1727 = vmatpush2.msra.mxu0 0.0
    %1728 = vmatprep.subr.mxu0 0.0
    %1729 = vmatpush2.msra.mxu0 0.0
    %1730 = vmatprep.subr.mxu0 0.0
    %1731 = vmatpush2.msra.mxu0 0.0
    %1732 = vmatprep.subr.mxu0 0.0
    %1733 = vmatpush2.msra.mxu0 0.0
    %1734 = vmatprep.subr.mxu0 0.0
    %1735 = vmatpush2.msra.mxu0 0.0
    %1736 = vmatprep.subr.mxu0 0.0
    %1737 = vmatpush2.msra.mxu0 0.0
    %1738 = vmatprep.mubr.f32.mxu0 0.0
    %v1739 = vand.u32 %v1499, 4294901760
    %v1740 = vsub.f32 %v1499, %v1739
    %1741 = vmatmul.mubr.f32.gmra.mxu0 %v1740
    %v1742 = vpop.f32.mrf.mxu0
    %v1743 = vadd.f32 %v1663, %v1742
    %v1744 = vpop.f32.mrf.mxu0
    %1745 = vmatprep.mubr.f32.mxu0 0.0
    %v1746 = vand.u32 %v1502, 4294901760
    %v1747 = vsub.f32 %v1502, %v1746
    %1748 = vmatmul.mubr.f32.gmra.mxu0 %v1747
    %v1749 = vpop.f32.mrf.mxu0
    %v1750 = vadd.f32 %v1669, %v1749
    %v1751 = vpop.f32.mrf.mxu0
    %1752 = vdwg.mxu0
    %1753 = vmatprep.subr.mxu0 0.0
    %1754 = vmatpush1.msra.mxu0 0.0
    %1755 = vmatprep.subr.mxu0 0.0
    %1756 = vmatpush1.msra.mxu0 0.0
    %1757 = vmatprep.subr.mxu0 0.0
    %1758 = vmatpush1.msra.mxu0 0.0
    %1759 = vmatprep.subr.mxu0 0.0
    %1760 = vmatpush1.msra.mxu0 0.0
    %1761 = vmatprep.subr.mxu0 0.0
    %1762 = vmatpush1.msra.mxu0 0.0
    %1763 = vmatprep.subr.mxu0 0.0
    %1764 = vmatpush1.msra.mxu0 0.0
    %1765 = vmatprep.subr.mxu0 0.0
    %1766 = vmatpush1.msra.mxu0 0.0
    %1767 = vmatprep.subr.mxu0 0.0
    %1768 = vmatpush1.msra.mxu0 0.0
    %1769 = vmatprep.subr.mxu0 0.0
    %1770 = vmatpush1.msra.mxu0 0.0
    %1771 = vmatprep.subr.mxu0 0.0
    %1772 = vmatpush1.msra.mxu0 0.0
    %1773 = vmatprep.subr.mxu0 0.0
    %1774 = vmatpush1.msra.mxu0 0.0
    %1775 = vmatprep.subr.mxu0 0.0
    %1776 = vmatpush1.msra.mxu0 0.0
    %1777 = vmatprep.subr.mxu0 0.0
    %1778 = vmatpush1.msra.mxu0 0.0
    %1779 = vmatprep.subr.mxu0 0.0
    %1780 = vmatpush1.msra.mxu0 0.0
    %1781 = vmatprep.subr.mxu0 0.0
    %1782 = vmatpush1.msra.mxu0 0.0
    %1783 = vmatprep.subr.mxu0 0.0
    %v1784 = vand.u32 %v516, 4294901760
    %1785 = vmatpush1.msra.mxu0 %v1784
    %1786 = vmatprep.subr.mxu0 0.0
    %1787 = vmatpush2.msra.mxu0 0.0
    %1788 = vmatprep.subr.mxu0 0.0
    %1789 = vmatpush2.msra.mxu0 0.0
    %1790 = vmatprep.subr.mxu0 0.0
    %1791 = vmatpush2.msra.mxu0 0.0
    %1792 = vmatprep.subr.mxu0 0.0
    %1793 = vmatpush2.msra.mxu0 0.0
    %1794 = vmatprep.subr.mxu0 0.0
    %1795 = vmatpush2.msra.mxu0 0.0
    %1796 = vmatprep.subr.mxu0 0.0
    %1797 = vmatpush2.msra.mxu0 0.0
    %1798 = vmatprep.subr.mxu0 0.0
    %1799 = vmatpush2.msra.mxu0 0.0
    %1800 = vmatprep.subr.mxu0 0.0
    %1801 = vmatpush2.msra.mxu0 0.0
    %1802 = vmatprep.subr.mxu0 0.0
    %1803 = vmatpush2.msra.mxu0 0.0
    %1804 = vmatprep.subr.mxu0 0.0
    %1805 = vmatpush2.msra.mxu0 0.0
    %1806 = vmatprep.subr.mxu0 0.0
    %1807 = vmatpush2.msra.mxu0 0.0
    %1808 = vmatprep.subr.mxu0 0.0
    %1809 = vmatpush2.msra.mxu0 0.0
    %1810 = vmatprep.subr.mxu0 0.0
    %1811 = vmatpush2.msra.mxu0 0.0
    %1812 = vmatprep.subr.mxu0 0.0
    %1813 = vmatpush2.msra.mxu0 0.0
    %1814 = vmatprep.subr.mxu0 0.0
    %1815 = vmatpush2.msra.mxu0 0.0
    %1816 = vmatprep.subr.mxu0 0.0
    %1817 = vmatpush2.msra.mxu0 0.0
    %1818 = vmatprep.mubr.f32.mxu0 0.0
    %v1819 = vand.u32 %v1499, 4294901760
    %v1820 = vsub.f32 %v1499, %v1819
    %v1821 = vand.u32 %v1820, 4294901760
    %1822 = vmatmul.mubr.f32.gmra.mxu0 %v1821
    %v1823 = vpop.f32.mrf.mxu0
    %v1824 = vadd.f32 %v1743, %v1823
    %v1825 = vpop.f32.mrf.mxu0
    %1826 = vmatprep.mubr.f32.mxu0 0.0
    %v1827 = vand.u32 %v1502, 4294901760
    %v1828 = vsub.f32 %v1502, %v1827
    %v1829 = vand.u32 %v1828, 4294901760
    %1830 = vmatmul.mubr.f32.gmra.mxu0 %v1829
    %v1831 = vpop.f32.mrf.mxu0
    %v1832 = vadd.f32 %v1750, %v1831
    %v1833 = vpop.f32.mrf.mxu0
    %1834 = vdwg.mxu0
    %1835 = vmatprep.subr.mxu0 0.0
    %1836 = vmatpush1.msra.mxu0 0.0
    %1837 = vmatprep.subr.mxu0 0.0
    %1838 = vmatpush1.msra.mxu0 0.0
    %1839 = vmatprep.subr.mxu0 0.0
    %1840 = vmatpush1.msra.mxu0 0.0
    %1841 = vmatprep.subr.mxu0 0.0
    %1842 = vmatpush1.msra.mxu0 0.0
    %1843 = vmatprep.subr.mxu0 0.0
    %1844 = vmatpush1.msra.mxu0 0.0
    %1845 = vmatprep.subr.mxu0 0.0
    %1846 = vmatpush1.msra.mxu0 0.0
    %1847 = vmatprep.subr.mxu0 0.0
    %1848 = vmatpush1.msra.mxu0 0.0
    %1849 = vmatprep.subr.mxu0 0.0
    %1850 = vmatpush1.msra.mxu0 0.0
    %1851 = vmatprep.subr.mxu0 0.0
    %1852 = vmatpush1.msra.mxu0 0.0
    %1853 = vmatprep.subr.mxu0 0.0
    %1854 = vmatpush1.msra.mxu0 0.0
    %1855 = vmatprep.subr.mxu0 0.0
    %1856 = vmatpush1.msra.mxu0 0.0
    %1857 = vmatprep.subr.mxu0 0.0
    %1858 = vmatpush1.msra.mxu0 0.0
    %1859 = vmatprep.subr.mxu0 0.0
    %1860 = vmatpush1.msra.mxu0 0.0
    %1861 = vmatprep.subr.mxu0 0.0
    %1862 = vmatpush1.msra.mxu0 0.0
    %1863 = vmatprep.subr.mxu0 0.0
    %1864 = vmatpush1.msra.mxu0 0.0
    %1865 = vmatprep.subr.mxu0 0.0
    %v1866 = vand.u32 %v516, 4294901760
    %v1867 = vsub.f32 %v516, %v1866
    %v1868 = vand.u32 %v1867, 4294901760
    %1869 = vmatpush1.msra.mxu0 %v1868
    %1870 = vmatprep.subr.mxu0 0.0
    %1871 = vmatpush2.msra.mxu0 0.0
    %1872 = vmatprep.subr.mxu0 0.0
    %1873 = vmatpush2.msra.mxu0 0.0
    %1874 = vmatprep.subr.mxu0 0.0
    %1875 = vmatpush2.msra.mxu0 0.0
    %1876 = vmatprep.subr.mxu0 0.0
    %1877 = vmatpush2.msra.mxu0 0.0
    %1878 = vmatprep.subr.mxu0 0.0
    %1879 = vmatpush2.msra.mxu0 0.0
    %1880 = vmatprep.subr.mxu0 0.0
    %1881 = vmatpush2.msra.mxu0 0.0
    %1882 = vmatprep.subr.mxu0 0.0
    %1883 = vmatpush2.msra.mxu0 0.0
    %1884 = vmatprep.subr.mxu0 0.0
    %1885 = vmatpush2.msra.mxu0 0.0
    %1886 = vmatprep.subr.mxu0 0.0
    %1887 = vmatpush2.msra.mxu0 0.0
    %1888 = vmatprep.subr.mxu0 0.0
    %1889 = vmatpush2.msra.mxu0 0.0
    %1890 = vmatprep.subr.mxu0 0.0
    %1891 = vmatpush2.msra.mxu0 0.0
    %1892 = vmatprep.subr.mxu0 0.0
    %1893 = vmatpush2.msra.mxu0 0.0
    %1894 = vmatprep.subr.mxu0 0.0
    %1895 = vmatpush2.msra.mxu0 0.0
    %1896 = vmatprep.subr.mxu0 0.0
    %1897 = vmatpush2.msra.mxu0 0.0
    %1898 = vmatprep.subr.mxu0 0.0
    %1899 = vmatpush2.msra.mxu0 0.0
    %1900 = vmatprep.subr.mxu0 0.0
    %1901 = vmatpush2.msra.mxu0 0.0
    %1902 = vmatprep.mubr.f32.mxu0 0.0
    %v1903 = vand.u32 %v1499, 4294901760
    %1904 = vmatmul.mubr.f32.gmra.mxu0 %v1903
    %v1905 = vpop.f32.mrf.mxu0
    %v1906 = vadd.f32 %v1824, %v1905
    %v1907 = vpop.f32.mrf.mxu0
    %1908 = vmatprep.mubr.f32.mxu0 0.0
    %v1909 = vand.u32 %v1502, 4294901760
    %1910 = vmatmul.mubr.f32.gmra.mxu0 %v1909
    %v1911 = vpop.f32.mrf.mxu0
    %v1912 = vadd.f32 %v1832, %v1911
    %v1913 = vpop.f32.mrf.mxu0
    %1914 = vdwg.mxu0
    %1915 = vmatprep.subr.mxu0 0.0
    %1916 = vmatpush1.msra.mxu0 0.0
    %1917 = vmatprep.subr.mxu0 0.0
    %1918 = vmatpush1.msra.mxu0 0.0
    %1919 = vmatprep.subr.mxu0 0.0
    %1920 = vmatpush1.msra.mxu0 0.0
    %1921 = vmatprep.subr.mxu0 0.0
    %1922 = vmatpush1.msra.mxu0 0.0
    %1923 = vmatprep.subr.mxu0 0.0
    %1924 = vmatpush1.msra.mxu0 0.0
    %1925 = vmatprep.subr.mxu0 0.0
    %1926 = vmatpush1.msra.mxu0 0.0
    %1927 = vmatprep.subr.mxu0 0.0
    %1928 = vmatpush1.msra.mxu0 0.0
    %1929 = vmatprep.subr.mxu0 0.0
    %1930 = vmatpush1.msra.mxu0 0.0
    %1931 = vmatprep.subr.mxu0 0.0
    %1932 = vmatpush1.msra.mxu0 0.0
    %1933 = vmatprep.subr.mxu0 0.0
    %1934 = vmatpush1.msra.mxu0 0.0
    %1935 = vmatprep.subr.mxu0 0.0
    %1936 = vmatpush1.msra.mxu0 0.0
    %1937 = vmatprep.subr.mxu0 0.0
    %1938 = vmatpush1.msra.mxu0 0.0
    %1939 = vmatprep.subr.mxu0 0.0
    %1940 = vmatpush1.msra.mxu0 0.0
    %1941 = vmatprep.subr.mxu0 0.0
    %1942 = vmatpush1.msra.mxu0 0.0
    %1943 = vmatprep.subr.mxu0 0.0
    %1944 = vmatpush1.msra.mxu0 0.0
    %1945 = vmatprep.subr.mxu0 0.0
    %v1946 = vand.u32 %v516, 4294901760
    %1947 = vmatpush1.msra.mxu0 %v1946
    %1948 = vmatprep.subr.mxu0 0.0
    %1949 = vmatpush2.msra.mxu0 0.0
    %1950 = vmatprep.subr.mxu0 0.0
    %1951 = vmatpush2.msra.mxu0 0.0
    %1952 = vmatprep.subr.mxu0 0.0
    %1953 = vmatpush2.msra.mxu0 0.0
    %1954 = vmatprep.subr.mxu0 0.0
    %1955 = vmatpush2.msra.mxu0 0.0
    %1956 = vmatprep.subr.mxu0 0.0
    %1957 = vmatpush2.msra.mxu0 0.0
    %1958 = vmatprep.subr.mxu0 0.0
    %1959 = vmatpush2.msra.mxu0 0.0
    %1960 = vmatprep.subr.mxu0 0.0
    %1961 = vmatpush2.msra.mxu0 0.0
    %1962 = vmatprep.subr.mxu0 0.0
    %1963 = vmatpush2.msra.mxu0 0.0
    %1964 = vmatprep.subr.mxu0 0.0
    %1965 = vmatpush2.msra.mxu0 0.0
    %1966 = vmatprep.subr.mxu0 0.0
    %1967 = vmatpush2.msra.mxu0 0.0
    %1968 = vmatprep.subr.mxu0 0.0
    %1969 = vmatpush2.msra.mxu0 0.0
    %1970 = vmatprep.subr.mxu0 0.0
    %1971 = vmatpush2.msra.mxu0 0.0
    %1972 = vmatprep.subr.mxu0 0.0
    %1973 = vmatpush2.msra.mxu0 0.0
    %1974 = vmatprep.subr.mxu0 0.0
    %1975 = vmatpush2.msra.mxu0 0.0
    %1976 = vmatprep.subr.mxu0 0.0
    %1977 = vmatpush2.msra.mxu0 0.0
    %1978 = vmatprep.subr.mxu0 0.0
    %1979 = vmatpush2.msra.mxu0 0.0
    %1980 = vmatprep.mubr.f32.mxu0 0.0
    %v1981 = vand.u32 %v1499, 4294901760
    %1982 = vmatmul.mubr.f32.gmra.mxu0 %v1981
    %v1983 = vpop.f32.mrf.mxu0
    %v1984 = vadd.f32 %v1906, %v1983
    %v1985 = vpop.f32.mrf.mxu0
    %1986 = vmatprep.mubr.f32.mxu0 0.0
    %v1987 = vand.u32 %v1502, 4294901760
    %1988 = vmatmul.mubr.f32.gmra.mxu0 %v1987
    %v1989 = vpop.f32.mrf.mxu0
    %v1990 = vadd.f32 %v1912, %v1989
    %v1991 = vpop.f32.mrf.mxu0
    %1992 = vdwg.mxu0
    %v1994 = vsel %vm1497, %v20, 0
    %v1997 = vsel %vm1497, %v21, 0
    %1999 = vmatprep.subr.mxu0 0.0
    %2000 = vmatpush1.msra.mxu0 0.0
    %2001 = vmatprep.subr.mxu0 0.0
    %2002 = vmatpush1.msra.mxu0 0.0
    %2003 = vmatprep.subr.mxu0 0.0
    %2004 = vmatpush1.msra.mxu0 0.0
    %2005 = vmatprep.subr.mxu0 0.0
    %2006 = vmatpush1.msra.mxu0 0.0
    %2007 = vmatprep.subr.mxu0 0.0
    %2008 = vmatpush1.msra.mxu0 0.0
    %2009 = vmatprep.subr.mxu0 0.0
    %2010 = vmatpush1.msra.mxu0 0.0
    %2011 = vmatprep.subr.mxu0 0.0
    %2012 = vmatpush1.msra.mxu0 0.0
    %2013 = vmatprep.subr.mxu0 0.0
    %2014 = vmatpush1.msra.mxu0 0.0
    %2015 = vmatprep.subr.mxu0 0.0
    %2016 = vmatpush1.msra.mxu0 0.0
    %2017 = vmatprep.subr.mxu0 0.0
    %2018 = vmatpush1.msra.mxu0 0.0
    %2019 = vmatprep.subr.mxu0 0.0
    %2020 = vmatpush1.msra.mxu0 0.0
    %2021 = vmatprep.subr.mxu0 0.0
    %2022 = vmatpush1.msra.mxu0 0.0
    %2023 = vmatprep.subr.mxu0 0.0
    %2024 = vmatpush1.msra.mxu0 0.0
    %2025 = vmatprep.subr.mxu0 0.0
    %2026 = vmatpush1.msra.mxu0 0.0
    %2027 = vmatprep.subr.mxu0 0.0
    %2028 = vmatpush1.msra.mxu0 0.0
    %2029 = vmatprep.subr.mxu0 0.0
    %v2030 = vand.u32 %v516, 4294901760
    %2031 = vmatpush1.msra.mxu0 %v2030
    %2032 = vmatprep.subr.mxu0 0.0
    %2033 = vmatpush2.msra.mxu0 0.0
    %2034 = vmatprep.subr.mxu0 0.0
    %2035 = vmatpush2.msra.mxu0 0.0
    %2036 = vmatprep.subr.mxu0 0.0
    %2037 = vmatpush2.msra.mxu0 0.0
    %2038 = vmatprep.subr.mxu0 0.0
    %2039 = vmatpush2.msra.mxu0 0.0
    %2040 = vmatprep.subr.mxu0 0.0
    %2041 = vmatpush2.msra.mxu0 0.0
    %2042 = vmatprep.subr.mxu0 0.0
    %2043 = vmatpush2.msra.mxu0 0.0
    %2044 = vmatprep.subr.mxu0 0.0
    %2045 = vmatpush2.msra.mxu0 0.0
    %2046 = vmatprep.subr.mxu0 0.0
    %2047 = vmatpush2.msra.mxu0 0.0
    %2048 = vmatprep.subr.mxu0 0.0
    %2049 = vmatpush2.msra.mxu0 0.0
    %2050 = vmatprep.subr.mxu0 0.0
    %2051 = vmatpush2.msra.mxu0 0.0
    %2052 = vmatprep.subr.mxu0 0.0
    %2053 = vmatpush2.msra.mxu0 0.0
    %2054 = vmatprep.subr.mxu0 0.0
    %2055 = vmatpush2.msra.mxu0 0.0
    %2056 = vmatprep.subr.mxu0 0.0
    %2057 = vmatpush2.msra.mxu0 0.0
    %2058 = vmatprep.subr.mxu0 0.0
    %2059 = vmatpush2.msra.mxu0 0.0
    %2060 = vmatprep.subr.mxu0 0.0
    %2061 = vmatpush2.msra.mxu0 0.0
    %2062 = vmatprep.subr.mxu0 0.0
    %2063 = vmatpush2.msra.mxu0 0.0
    %2064 = vmatprep.mubr.f32.mxu0 0.0
    %v2065 = vand.u32 %v1994, 4294901760
    %v2066 = vsub.f32 %v1994, %v2065
    %v2067 = vand.u32 %v2066, 4294901760
    %v2068 = vsub.f32 %v2066, %v2067
    %v2069 = vand.u32 %v2068, 4294901760
    %2070 = vmatmul.mubr.f32.gmra.mxu0 %v2069
    %v2071 = vpop.f32.mrf.mxu0
    %v2072 = vadd.f32 0.0, %v2071
    %v2073 = vpop.f32.mrf.mxu0
    %2074 = vmatprep.mubr.f32.mxu0 0.0
    %v2075 = vand.u32 %v1997, 4294901760
    %v2076 = vsub.f32 %v1997, %v2075
    %v2077 = vand.u32 %v2076, 4294901760
    %v2078 = vsub.f32 %v2076, %v2077
    %v2079 = vand.u32 %v2078, 4294901760
    %2080 = vmatmul.mubr.f32.gmra.mxu0 %v2079
    %v2081 = vpop.f32.mrf.mxu0
    %v2082 = vadd.f32 0.0, %v2081
    %v2083 = vpop.f32.mrf.mxu0
    %2084 = vdwg.mxu0
    %2085 = vmatprep.subr.mxu0 0.0
    %2086 = vmatpush1.msra.mxu0 0.0
    %2087 = vmatprep.subr.mxu0 0.0
    %2088 = vmatpush1.msra.mxu0 0.0
    %2089 = vmatprep.subr.mxu0 0.0
    %2090 = vmatpush1.msra.mxu0 0.0
    %2091 = vmatprep.subr.mxu0 0.0
    %2092 = vmatpush1.msra.mxu0 0.0
    %2093 = vmatprep.subr.mxu0 0.0
    %2094 = vmatpush1.msra.mxu0 0.0
    %2095 = vmatprep.subr.mxu0 0.0
    %2096 = vmatpush1.msra.mxu0 0.0
    %2097 = vmatprep.subr.mxu0 0.0
    %2098 = vmatpush1.msra.mxu0 0.0
    %2099 = vmatprep.subr.mxu0 0.0
    %2100 = vmatpush1.msra.mxu0 0.0
    %2101 = vmatprep.subr.mxu0 0.0
    %2102 = vmatpush1.msra.mxu0 0.0
    %2103 = vmatprep.subr.mxu0 0.0
    %2104 = vmatpush1.msra.mxu0 0.0
    %2105 = vmatprep.subr.mxu0 0.0
    %2106 = vmatpush1.msra.mxu0 0.0
    %2107 = vmatprep.subr.mxu0 0.0
    %2108 = vmatpush1.msra.mxu0 0.0
    %2109 = vmatprep.subr.mxu0 0.0
    %2110 = vmatpush1.msra.mxu0 0.0
    %2111 = vmatprep.subr.mxu0 0.0
    %2112 = vmatpush1.msra.mxu0 0.0
    %2113 = vmatprep.subr.mxu0 0.0
    %2114 = vmatpush1.msra.mxu0 0.0
    %2115 = vmatprep.subr.mxu0 0.0
    %v2116 = vand.u32 %v516, 4294901760
    %v2117 = vsub.f32 %v516, %v2116
    %v2118 = vand.u32 %v2117, 4294901760
    %v2119 = vsub.f32 %v2117, %v2118
    %v2120 = vand.u32 %v2119, 4294901760
    %2121 = vmatpush1.msra.mxu0 %v2120
    %2122 = vmatprep.subr.mxu0 0.0
    %2123 = vmatpush2.msra.mxu0 0.0
    %2124 = vmatprep.subr.mxu0 0.0
    %2125 = vmatpush2.msra.mxu0 0.0
    %2126 = vmatprep.subr.mxu0 0.0
    %2127 = vmatpush2.msra.mxu0 0.0
    %2128 = vmatprep.subr.mxu0 0.0
    %2129 = vmatpush2.msra.mxu0 0.0
    %2130 = vmatprep.subr.mxu0 0.0
    %2131 = vmatpush2.msra.mxu0 0.0
    %2132 = vmatprep.subr.mxu0 0.0
    %2133 = vmatpush2.msra.mxu0 0.0
    %2134 = vmatprep.subr.mxu0 0.0
    %2135 = vmatpush2.msra.mxu0 0.0
    %2136 = vmatprep.subr.mxu0 0.0
    %2137 = vmatpush2.msra.mxu0 0.0
    %2138 = vmatprep.subr.mxu0 0.0
    %2139 = vmatpush2.msra.mxu0 0.0
    %2140 = vmatprep.subr.mxu0 0.0
    %2141 = vmatpush2.msra.mxu0 0.0
    %2142 = vmatprep.subr.mxu0 0.0
    %2143 = vmatpush2.msra.mxu0 0.0
    %2144 = vmatprep.subr.mxu0 0.0
    %2145 = vmatpush2.msra.mxu0 0.0
    %2146 = vmatprep.subr.mxu0 0.0
    %2147 = vmatpush2.msra.mxu0 0.0
    %2148 = vmatprep.subr.mxu0 0.0
    %2149 = vmatpush2.msra.mxu0 0.0
    %2150 = vmatprep.subr.mxu0 0.0
    %2151 = vmatpush2.msra.mxu0 0.0
    %2152 = vmatprep.subr.mxu0 0.0
    %2153 = vmatpush2.msra.mxu0 0.0
    %2154 = vmatprep.mubr.f32.mxu0 0.0
    %v2155 = vand.u32 %v1994, 4294901760
    %2156 = vmatmul.mubr.f32.gmra.mxu0 %v2155
    %v2157 = vpop.f32.mrf.mxu0
    %v2158 = vadd.f32 %v2072, %v2157
    %v2159 = vpop.f32.mrf.mxu0
    %2160 = vmatprep.mubr.f32.mxu0 0.0
    %v2161 = vand.u32 %v1997, 4294901760
    %2162 = vmatmul.mubr.f32.gmra.mxu0 %v2161
    %v2163 = vpop.f32.mrf.mxu0
    %v2164 = vadd.f32 %v2082, %v2163
    %v2165 = vpop.f32.mrf.mxu0
    %2166 = vdwg.mxu0
    %2167 = vmatprep.subr.mxu0 0.0
    %2168 = vmatpush1.msra.mxu0 0.0
    %2169 = vmatprep.subr.mxu0 0.0
    %2170 = vmatpush1.msra.mxu0 0.0
    %2171 = vmatprep.subr.mxu0 0.0
    %2172 = vmatpush1.msra.mxu0 0.0
    %2173 = vmatprep.subr.mxu0 0.0
    %2174 = vmatpush1.msra.mxu0 0.0
    %2175 = vmatprep.subr.mxu0 0.0
    %2176 = vmatpush1.msra.mxu0 0.0
    %2177 = vmatprep.subr.mxu0 0.0
    %2178 = vmatpush1.msra.mxu0 0.0
    %2179 = vmatprep.subr.mxu0 0.0
    %2180 = vmatpush1.msra.mxu0 0.0
    %2181 = vmatprep.subr.mxu0 0.0
    %2182 = vmatpush1.msra.mxu0 0.0
    %2183 = vmatprep.subr.mxu0 0.0
    %2184 = vmatpush1.msra.mxu0 0.0
    %2185 = vmatprep.subr.mxu0 0.0
    %2186 = vmatpush1.msra.mxu0 0.0
    %2187 = vmatprep.subr.mxu0 0.0
    %2188 = vmatpush1.msra.mxu0 0.0
    %2189 = vmatprep.subr.mxu0 0.0
    %2190 = vmatpush1.msra.mxu0 0.0
    %2191 = vmatprep.subr.mxu0 0.0
    %2192 = vmatpush1.msra.mxu0 0.0
    %2193 = vmatprep.subr.mxu0 0.0
    %2194 = vmatpush1.msra.mxu0 0.0
    %2195 = vmatprep.subr.mxu0 0.0
    %2196 = vmatpush1.msra.mxu0 0.0
    %2197 = vmatprep.subr.mxu0 0.0
    %v2198 = vand.u32 %v516, 4294901760
    %v2199 = vsub.f32 %v516, %v2198
    %2200 = vmatpush1.msra.mxu0 %v2199
    %2201 = vmatprep.subr.mxu0 0.0
    %2202 = vmatpush2.msra.mxu0 0.0
    %2203 = vmatprep.subr.mxu0 0.0
    %2204 = vmatpush2.msra.mxu0 0.0
    %2205 = vmatprep.subr.mxu0 0.0
    %2206 = vmatpush2.msra.mxu0 0.0
    %2207 = vmatprep.subr.mxu0 0.0
    %2208 = vmatpush2.msra.mxu0 0.0
    %2209 = vmatprep.subr.mxu0 0.0
    %2210 = vmatpush2.msra.mxu0 0.0
    %2211 = vmatprep.subr.mxu0 0.0
    %2212 = vmatpush2.msra.mxu0 0.0
    %2213 = vmatprep.subr.mxu0 0.0
    %2214 = vmatpush2.msra.mxu0 0.0
    %2215 = vmatprep.subr.mxu0 0.0
    %2216 = vmatpush2.msra.mxu0 0.0
    %2217 = vmatprep.subr.mxu0 0.0
    %2218 = vmatpush2.msra.mxu0 0.0
    %2219 = vmatprep.subr.mxu0 0.0
    %2220 = vmatpush2.msra.mxu0 0.0
    %2221 = vmatprep.subr.mxu0 0.0
    %2222 = vmatpush2.msra.mxu0 0.0
    %2223 = vmatprep.subr.mxu0 0.0
    %2224 = vmatpush2.msra.mxu0 0.0
    %2225 = vmatprep.subr.mxu0 0.0
    %2226 = vmatpush2.msra.mxu0 0.0
    %2227 = vmatprep.subr.mxu0 0.0
    %2228 = vmatpush2.msra.mxu0 0.0
    %2229 = vmatprep.subr.mxu0 0.0
    %2230 = vmatpush2.msra.mxu0 0.0
    %2231 = vmatprep.subr.mxu0 0.0
    %2232 = vmatpush2.msra.mxu0 0.0
    %2233 = vmatprep.mubr.f32.mxu0 0.0
    %v2234 = vand.u32 %v1994, 4294901760
    %v2235 = vsub.f32 %v1994, %v2234
    %2236 = vmatmul.mubr.f32.gmra.mxu0 %v2235
    %v2237 = vpop.f32.mrf.mxu0
    %v2238 = vadd.f32 %v2158, %v2237
    %v2239 = vpop.f32.mrf.mxu0
    %2240 = vmatprep.mubr.f32.mxu0 0.0
    %v2241 = vand.u32 %v1997, 4294901760
    %v2242 = vsub.f32 %v1997, %v2241
    %2243 = vmatmul.mubr.f32.gmra.mxu0 %v2242
    %v2244 = vpop.f32.mrf.mxu0
    %v2245 = vadd.f32 %v2164, %v2244
    %v2246 = vpop.f32.mrf.mxu0
    %2247 = vdwg.mxu0
    %2248 = vmatprep.subr.mxu0 0.0
    %2249 = vmatpush1.msra.mxu0 0.0
    %2250 = vmatprep.subr.mxu0 0.0
    %2251 = vmatpush1.msra.mxu0 0.0
    %2252 = vmatprep.subr.mxu0 0.0
    %2253 = vmatpush1.msra.mxu0 0.0
    %2254 = vmatprep.subr.mxu0 0.0
    %2255 = vmatpush1.msra.mxu0 0.0
    %2256 = vmatprep.subr.mxu0 0.0
    %2257 = vmatpush1.msra.mxu0 0.0
    %2258 = vmatprep.subr.mxu0 0.0
    %2259 = vmatpush1.msra.mxu0 0.0
    %2260 = vmatprep.subr.mxu0 0.0
    %2261 = vmatpush1.msra.mxu0 0.0
    %2262 = vmatprep.subr.mxu0 0.0
    %2263 = vmatpush1.msra.mxu0 0.0
    %2264 = vmatprep.subr.mxu0 0.0
    %2265 = vmatpush1.msra.mxu0 0.0
    %2266 = vmatprep.subr.mxu0 0.0
    %2267 = vmatpush1.msra.mxu0 0.0
    %2268 = vmatprep.subr.mxu0 0.0
    %2269 = vmatpush1.msra.mxu0 0.0
    %2270 = vmatprep.subr.mxu0 0.0
    %2271 = vmatpush1.msra.mxu0 0.0
    %2272 = vmatprep.subr.mxu0 0.0
    %2273 = vmatpush1.msra.mxu0 0.0
    %2274 = vmatprep.subr.mxu0 0.0
    %2275 = vmatpush1.msra.mxu0 0.0
    %2276 = vmatprep.subr.mxu0 0.0
    %2277 = vmatpush1.msra.mxu0 0.0
    %2278 = vmatprep.subr.mxu0 0.0
    %v2279 = vand.u32 %v516, 4294901760
    %2280 = vmatpush1.msra.mxu0 %v2279
    %2281 = vmatprep.subr.mxu0 0.0
    %2282 = vmatpush2.msra.mxu0 0.0
    %2283 = vmatprep.subr.mxu0 0.0
    %2284 = vmatpush2.msra.mxu0 0.0
    %2285 = vmatprep.subr.mxu0 0.0
    %2286 = vmatpush2.msra.mxu0 0.0
    %2287 = vmatprep.subr.mxu0 0.0
    %2288 = vmatpush2.msra.mxu0 0.0
    %2289 = vmatprep.subr.mxu0 0.0
    %2290 = vmatpush2.msra.mxu0 0.0
    %2291 = vmatprep.subr.mxu0 0.0
    %2292 = vmatpush2.msra.mxu0 0.0
    %2293 = vmatprep.subr.mxu0 0.0
    %2294 = vmatpush2.msra.mxu0 0.0
    %2295 = vmatprep.subr.mxu0 0.0
    %2296 = vmatpush2.msra.mxu0 0.0
    %2297 = vmatprep.subr.mxu0 0.0
    %2298 = vmatpush2.msra.mxu0 0.0
    %2299 = vmatprep.subr.mxu0 0.0
    %2300 = vmatpush2.msra.mxu0 0.0
    %2301 = vmatprep.subr.mxu0 0.0
    %2302 = vmatpush2.msra.mxu0 0.0
    %2303 = vmatprep.subr.mxu0 0.0
    %2304 = vmatpush2.msra.mxu0 0.0
    %2305 = vmatprep.subr.mxu0 0.0
    %2306 = vmatpush2.msra.mxu0 0.0
    %2307 = vmatprep.subr.mxu0 0.0
    %2308 = vmatpush2.msra.mxu0 0.0
    %2309 = vmatprep.subr.mxu0 0.0
    %2310 = vmatpush2.msra.mxu0 0.0
    %2311 = vmatprep.subr.mxu0 0.0
    %2312 = vmatpush2.msra.mxu0 0.0
    %2313 = vmatprep.mubr.f32.mxu0 0.0
    %v2314 = vand.u32 %v1994, 4294901760
    %v2315 = vsub.f32 %v1994, %v2314
    %v2316 = vand.u32 %v2315, 4294901760
    %2317 = vmatmul.mubr.f32.gmra.mxu0 %v2316
    %v2318 = vpop.f32.mrf.mxu0
    %v2319 = vadd.f32 %v2238, %v2318
    %v2320 = vpop.f32.mrf.mxu0
    %2321 = vmatprep.mubr.f32.mxu0 0.0
    %v2322 = vand.u32 %v1997, 4294901760
    %v2323 = vsub.f32 %v1997, %v2322
    %v2324 = vand.u32 %v2323, 4294901760
    %2325 = vmatmul.mubr.f32.gmra.mxu0 %v2324
    %v2326 = vpop.f32.mrf.mxu0
    %v2327 = vadd.f32 %v2245, %v2326
    %v2328 = vpop.f32.mrf.mxu0
    %2329 = vdwg.mxu0
    %2330 = vmatprep.subr.mxu0 0.0
    %2331 = vmatpush1.msra.mxu0 0.0
    %2332 = vmatprep.subr.mxu0 0.0
    %2333 = vmatpush1.msra.mxu0 0.0
    %2334 = vmatprep.subr.mxu0 0.0
    %2335 = vmatpush1.msra.mxu0 0.0
    %2336 = vmatprep.subr.mxu0 0.0
    %2337 = vmatpush1.msra.mxu0 0.0
    %2338 = vmatprep.subr.mxu0 0.0
    %2339 = vmatpush1.msra.mxu0 0.0
    %2340 = vmatprep.subr.mxu0 0.0
    %2341 = vmatpush1.msra.mxu0 0.0
    %2342 = vmatprep.subr.mxu0 0.0
    %2343 = vmatpush1.msra.mxu0 0.0
    %2344 = vmatprep.subr.mxu0 0.0
    %2345 = vmatpush1.msra.mxu0 0.0
    %2346 = vmatprep.subr.mxu0 0.0
    %2347 = vmatpush1.msra.mxu0 0.0
    %2348 = vmatprep.subr.mxu0 0.0
    %2349 = vmatpush1.msra.mxu0 0.0
    %2350 = vmatprep.subr.mxu0 0.0
    %2351 = vmatpush1.msra.mxu0 0.0
    %2352 = vmatprep.subr.mxu0 0.0
    %2353 = vmatpush1.msra.mxu0 0.0
    %2354 = vmatprep.subr.mxu0 0.0
    %2355 = vmatpush1.msra.mxu0 0.0
    %2356 = vmatprep.subr.mxu0 0.0
    %2357 = vmatpush1.msra.mxu0 0.0
    %2358 = vmatprep.subr.mxu0 0.0
    %2359 = vmatpush1.msra.mxu0 0.0
    %2360 = vmatprep.subr.mxu0 0.0
    %v2361 = vand.u32 %v516, 4294901760
    %v2362 = vsub.f32 %v516, %v2361
    %v2363 = vand.u32 %v2362, 4294901760
    %2364 = vmatpush1.msra.mxu0 %v2363
    %2365 = vmatprep.subr.mxu0 0.0
    %2366 = vmatpush2.msra.mxu0 0.0
    %2367 = vmatprep.subr.mxu0 0.0
    %2368 = vmatpush2.msra.mxu0 0.0
    %2369 = vmatprep.subr.mxu0 0.0
    %2370 = vmatpush2.msra.mxu0 0.0
    %2371 = vmatprep.subr.mxu0 0.0
    %2372 = vmatpush2.msra.mxu0 0.0
    %2373 = vmatprep.subr.mxu0 0.0
    %2374 = vmatpush2.msra.mxu0 0.0
    %2375 = vmatprep.subr.mxu0 0.0
    %2376 = vmatpush2.msra.mxu0 0.0
    %2377 = vmatprep.subr.mxu0 0.0
    %2378 = vmatpush2.msra.mxu0 0.0
    %2379 = vmatprep.subr.mxu0 0.0
    %2380 = vmatpush2.msra.mxu0 0.0
    %2381 = vmatprep.subr.mxu0 0.0
    %2382 = vmatpush2.msra.mxu0 0.0
    %2383 = vmatprep.subr.mxu0 0.0
    %2384 = vmatpush2.msra.mxu0 0.0
    %2385 = vmatprep.subr.mxu0 0.0
    %2386 = vmatpush2.msra.mxu0 0.0
    %2387 = vmatprep.subr.mxu0 0.0
    %2388 = vmatpush2.msra.mxu0 0.0
    %2389 = vmatprep.subr.mxu0 0.0
    %2390 = vmatpush2.msra.mxu0 0.0
    %2391 = vmatprep.subr.mxu0 0.0
    %2392 = vmatpush2.msra.mxu0 0.0
    %2393 = vmatprep.subr.mxu0 0.0
    %2394 = vmatpush2.msra.mxu0 0.0
    %2395 = vmatprep.subr.mxu0 0.0
    %2396 = vmatpush2.msra.mxu0 0.0
    %2397 = vmatprep.mubr.f32.mxu0 0.0
    %v2398 = vand.u32 %v1994, 4294901760
    %2399 = vmatmul.mubr.f32.gmra.mxu0 %v2398
    %v2400 = vpop.f32.mrf.mxu0
    %v2401 = vadd.f32 %v2319, %v2400
    %v2402 = vpop.f32.mrf.mxu0
    %2403 = vmatprep.mubr.f32.mxu0 0.0
    %v2404 = vand.u32 %v1997, 4294901760
    %2405 = vmatmul.mubr.f32.gmra.mxu0 %v2404
    %v2406 = vpop.f32.mrf.mxu0
    %v2407 = vadd.f32 %v2327, %v2406
    %v2408 = vpop.f32.mrf.mxu0
    %2409 = vdwg.mxu0
    %2410 = vmatprep.subr.mxu0 0.0
    %2411 = vmatpush1.msra.mxu0 0.0
    %2412 = vmatprep.subr.mxu0 0.0
    %2413 = vmatpush1.msra.mxu0 0.0
    %2414 = vmatprep.subr.mxu0 0.0
    %2415 = vmatpush1.msra.mxu0 0.0
    %2416 = vmatprep.subr.mxu0 0.0
    %2417 = vmatpush1.msra.mxu0 0.0
    %2418 = vmatprep.subr.mxu0 0.0
    %2419 = vmatpush1.msra.mxu0 0.0
    %2420 = vmatprep.subr.mxu0 0.0
    %2421 = vmatpush1.msra.mxu0 0.0
    %2422 = vmatprep.subr.mxu0 0.0
    %2423 = vmatpush1.msra.mxu0 0.0
    %2424 = vmatprep.subr.mxu0 0.0
    %2425 = vmatpush1.msra.mxu0 0.0
    %2426 = vmatprep.subr.mxu0 0.0
    %2427 = vmatpush1.msra.mxu0 0.0
    %2428 = vmatprep.subr.mxu0 0.0
    %2429 = vmatpush1.msra.mxu0 0.0
    %2430 = vmatprep.subr.mxu0 0.0
    %2431 = vmatpush1.msra.mxu0 0.0
    %2432 = vmatprep.subr.mxu0 0.0
    %2433 = vmatpush1.msra.mxu0 0.0
    %2434 = vmatprep.subr.mxu0 0.0
    %2435 = vmatpush1.msra.mxu0 0.0
    %2436 = vmatprep.subr.mxu0 0.0
    %2437 = vmatpush1.msra.mxu0 0.0
    %2438 = vmatprep.subr.mxu0 0.0
    %2439 = vmatpush1.msra.mxu0 0.0
    %2440 = vmatprep.subr.mxu0 0.0
    %v2441 = vand.u32 %v516, 4294901760
    %2442 = vmatpush1.msra.mxu0 %v2441
    %2443 = vmatprep.subr.mxu0 0.0
    %2444 = vmatpush2.msra.mxu0 0.0
    %2445 = vmatprep.subr.mxu0 0.0
    %2446 = vmatpush2.msra.mxu0 0.0
    %2447 = vmatprep.subr.mxu0 0.0
    %2448 = vmatpush2.msra.mxu0 0.0
    %2449 = vmatprep.subr.mxu0 0.0
    %2450 = vmatpush2.msra.mxu0 0.0
    %2451 = vmatprep.subr.mxu0 0.0
    %2452 = vmatpush2.msra.mxu0 0.0
    %2453 = vmatprep.subr.mxu0 0.0
    %2454 = vmatpush2.msra.mxu0 0.0
    %2455 = vmatprep.subr.mxu0 0.0
    %2456 = vmatpush2.msra.mxu0 0.0
    %2457 = vmatprep.subr.mxu0 0.0
    %2458 = vmatpush2.msra.mxu0 0.0
    %2459 = vmatprep.subr.mxu0 0.0
    %2460 = vmatpush2.msra.mxu0 0.0
    %2461 = vmatprep.subr.mxu0 0.0
    %2462 = vmatpush2.msra.mxu0 0.0
    %2463 = vmatprep.subr.mxu0 0.0
    %2464 = vmatpush2.msra.mxu0 0.0
    %2465 = vmatprep.subr.mxu0 0.0
    %2466 = vmatpush2.msra.mxu0 0.0
    %2467 = vmatprep.subr.mxu0 0.0
    %2468 = vmatpush2.msra.mxu0 0.0
    %2469 = vmatprep.subr.mxu0 0.0
    %2470 = vmatpush2.msra.mxu0 0.0
    %2471 = vmatprep.subr.mxu0 0.0
    %2472 = vmatpush2.msra.mxu0 0.0
    %2473 = vmatprep.subr.mxu0 0.0
    %2474 = vmatpush2.msra.mxu0 0.0
    %2475 = vmatprep.mubr.f32.mxu0 0.0
    %v2476 = vand.u32 %v1994, 4294901760
    %2477 = vmatmul.mubr.f32.gmra.mxu0 %v2476
    %v2478 = vpop.f32.mrf.mxu0
    %v2479 = vadd.f32 %v2401, %v2478
    %v2480 = vpop.f32.mrf.mxu0
    %2481 = vmatprep.mubr.f32.mxu0 0.0
    %v2482 = vand.u32 %v1997, 4294901760
    %2483 = vmatmul.mubr.f32.gmra.mxu0 %v2482
    %v2484 = vpop.f32.mrf.mxu0
    %v2485 = vadd.f32 %v2407, %v2484
    %v2486 = vpop.f32.mrf.mxu0
    %2487 = vdwg.mxu0
    %2488 = vmatprep.subr.mxu0 0.0
    %2489 = vmatpush1.msra.mxu0 0.0
    %2490 = vmatprep.subr.mxu0 0.0
    %2491 = vmatpush1.msra.mxu0 0.0
    %2492 = vmatprep.subr.mxu0 0.0
    %2493 = vmatpush1.msra.mxu0 0.0
    %2494 = vmatprep.subr.mxu0 0.0
    %2495 = vmatpush1.msra.mxu0 0.0
    %2496 = vmatprep.subr.mxu0 0.0
    %2497 = vmatpush1.msra.mxu0 0.0
    %2498 = vmatprep.subr.mxu0 0.0
    %2499 = vmatpush1.msra.mxu0 0.0
    %2500 = vmatprep.subr.mxu0 0.0
    %2501 = vmatpush1.msra.mxu0 0.0
    %2502 = vmatprep.subr.mxu0 0.0
    %2503 = vmatpush1.msra.mxu0 0.0
    %2504 = vmatprep.subr.mxu0 0.0
    %2505 = vmatpush1.msra.mxu0 0.0
    %2506 = vmatprep.subr.mxu0 0.0
    %2507 = vmatpush1.msra.mxu0 0.0
    %2508 = vmatprep.subr.mxu0 0.0
    %2509 = vmatpush1.msra.mxu0 0.0
    %2510 = vmatprep.subr.mxu0 0.0
    %2511 = vmatpush1.msra.mxu0 0.0
    %2512 = vmatprep.subr.mxu0 0.0
    %2513 = vmatpush1.msra.mxu0 0.0
    %2514 = vmatprep.subr.mxu0 0.0
    %2515 = vmatpush1.msra.mxu0 0.0
    %2516 = vmatprep.subr.mxu0 0.0
    %2517 = vmatpush1.msra.mxu0 0.0
    %2518 = vmatprep.subr.mxu0 0.0
    %v2519 = vand.u32 %v1005, 4294901760
    %2520 = vmatpush1.msra.mxu0 %v2519
    %2521 = vmatprep.subr.mxu0 0.0
    %2522 = vmatpush2.msra.mxu0 0.0
    %2523 = vmatprep.subr.mxu0 0.0
    %2524 = vmatpush2.msra.mxu0 0.0
    %2525 = vmatprep.subr.mxu0 0.0
    %2526 = vmatpush2.msra.mxu0 0.0
    %2527 = vmatprep.subr.mxu0 0.0
    %2528 = vmatpush2.msra.mxu0 0.0
    %2529 = vmatprep.subr.mxu0 0.0
    %2530 = vmatpush2.msra.mxu0 0.0
    %2531 = vmatprep.subr.mxu0 0.0
    %2532 = vmatpush2.msra.mxu0 0.0
    %2533 = vmatprep.subr.mxu0 0.0
    %2534 = vmatpush2.msra.mxu0 0.0
    %2535 = vmatprep.subr.mxu0 0.0
    %2536 = vmatpush2.msra.mxu0 0.0
    %2537 = vmatprep.subr.mxu0 0.0
    %2538 = vmatpush2.msra.mxu0 0.0
    %2539 = vmatprep.subr.mxu0 0.0
    %2540 = vmatpush2.msra.mxu0 0.0
    %2541 = vmatprep.subr.mxu0 0.0
    %2542 = vmatpush2.msra.mxu0 0.0
    %2543 = vmatprep.subr.mxu0 0.0
    %2544 = vmatpush2.msra.mxu0 0.0
    %2545 = vmatprep.subr.mxu0 0.0
    %2546 = vmatpush2.msra.mxu0 0.0
    %2547 = vmatprep.subr.mxu0 0.0
    %2548 = vmatpush2.msra.mxu0 0.0
    %2549 = vmatprep.subr.mxu0 0.0
    %2550 = vmatpush2.msra.mxu0 0.0
    %2551 = vmatprep.subr.mxu0 0.0
    %2552 = vmatpush2.msra.mxu0 0.0
    %2553 = vmatprep.mubr.f32.mxu0 0.0
    %v2554 = vand.u32 %v1499, 4294901760
    %v2555 = vsub.f32 %v1499, %v2554
    %v2556 = vand.u32 %v2555, 4294901760
    %v2557 = vsub.f32 %v2555, %v2556
    %v2558 = vand.u32 %v2557, 4294901760
    %2559 = vmatmul.mubr.f32.gmra.mxu0 %v2558
    %v2560 = vpop.f32.mrf.mxu0
    %v2561 = vadd.f32 0.0, %v2560
    %v2562 = vpop.f32.mrf.mxu0
    %2563 = vmatprep.mubr.f32.mxu0 0.0
    %v2564 = vand.u32 %v1502, 4294901760
    %v2565 = vsub.f32 %v1502, %v2564
    %v2566 = vand.u32 %v2565, 4294901760
    %v2567 = vsub.f32 %v2565, %v2566
    %v2568 = vand.u32 %v2567, 4294901760
    %2569 = vmatmul.mubr.f32.gmra.mxu0 %v2568
    %v2570 = vpop.f32.mrf.mxu0
    %v2571 = vadd.f32 0.0, %v2570
    %v2572 = vpop.f32.mrf.mxu0
    %2573 = vdwg.mxu0
    %2574 = vmatprep.subr.mxu0 0.0
    %2575 = vmatpush1.msra.mxu0 0.0
    %2576 = vmatprep.subr.mxu0 0.0
    %2577 = vmatpush1.msra.mxu0 0.0
    %2578 = vmatprep.subr.mxu0 0.0
    %2579 = vmatpush1.msra.mxu0 0.0
    %2580 = vmatprep.subr.mxu0 0.0
    %2581 = vmatpush1.msra.mxu0 0.0
    %2582 = vmatprep.subr.mxu0 0.0
    %2583 = vmatpush1.msra.mxu0 0.0
    %2584 = vmatprep.subr.mxu0 0.0
    %2585 = vmatpush1.msra.mxu0 0.0
    %2586 = vmatprep.subr.mxu0 0.0
    %2587 = vmatpush1.msra.mxu0 0.0
    %2588 = vmatprep.subr.mxu0 0.0
    %2589 = vmatpush1.msra.mxu0 0.0
    %2590 = vmatprep.subr.mxu0 0.0
    %2591 = vmatpush1.msra.mxu0 0.0
    %2592 = vmatprep.subr.mxu0 0.0
    %2593 = vmatpush1.msra.mxu0 0.0
    %2594 = vmatprep.subr.mxu0 0.0
    %2595 = vmatpush1.msra.mxu0 0.0
    %2596 = vmatprep.subr.mxu0 0.0
    %2597 = vmatpush1.msra.mxu0 0.0
    %2598 = vmatprep.subr.mxu0 0.0
    %2599 = vmatpush1.msra.mxu0 0.0
    %2600 = vmatprep.subr.mxu0 0.0
    %2601 = vmatpush1.msra.mxu0 0.0
    %2602 = vmatprep.subr.mxu0 0.0
    %2603 = vmatpush1.msra.mxu0 0.0
    %2604 = vmatprep.subr.mxu0 0.0
    %v2605 = vand.u32 %v1005, 4294901760
    %v2606 = vsub.f32 %v1005, %v2605
    %v2607 = vand.u32 %v2606, 4294901760
    %v2608 = vsub.f32 %v2606, %v2607
    %v2609 = vand.u32 %v2608, 4294901760
    %2610 = vmatpush1.msra.mxu0 %v2609
    %2611 = vmatprep.subr.mxu0 0.0
    %2612 = vmatpush2.msra.mxu0 0.0
    %2613 = vmatprep.subr.mxu0 0.0
    %2614 = vmatpush2.msra.mxu0 0.0
    %2615 = vmatprep.subr.mxu0 0.0
    %2616 = vmatpush2.msra.mxu0 0.0
    %2617 = vmatprep.subr.mxu0 0.0
    %2618 = vmatpush2.msra.mxu0 0.0
    %2619 = vmatprep.subr.mxu0 0.0
    %2620 = vmatpush2.msra.mxu0 0.0
    %2621 = vmatprep.subr.mxu0 0.0
    %2622 = vmatpush2.msra.mxu0 0.0
    %2623 = vmatprep.subr.mxu0 0.0
    %2624 = vmatpush2.msra.mxu0 0.0
    %2625 = vmatprep.subr.mxu0 0.0
    %2626 = vmatpush2.msra.mxu0 0.0
    %2627 = vmatprep.subr.mxu0 0.0
    %2628 = vmatpush2.msra.mxu0 0.0
    %2629 = vmatprep.subr.mxu0 0.0
    %2630 = vmatpush2.msra.mxu0 0.0
    %2631 = vmatprep.subr.mxu0 0.0
    %2632 = vmatpush2.msra.mxu0 0.0
    %2633 = vmatprep.subr.mxu0 0.0
    %2634 = vmatpush2.msra.mxu0 0.0
    %2635 = vmatprep.subr.mxu0 0.0
    %2636 = vmatpush2.msra.mxu0 0.0
    %2637 = vmatprep.subr.mxu0 0.0
    %2638 = vmatpush2.msra.mxu0 0.0
    %2639 = vmatprep.subr.mxu0 0.0
    %2640 = vmatpush2.msra.mxu0 0.0
    %2641 = vmatprep.subr.mxu0 0.0
    %2642 = vmatpush2.msra.mxu0 0.0
    %2643 = vmatprep.mubr.f32.mxu0 0.0
    %v2644 = vand.u32 %v1499, 4294901760
    %2645 = vmatmul.mubr.f32.gmra.mxu0 %v2644
    %v2646 = vpop.f32.mrf.mxu0
    %v2647 = vadd.f32 %v2561, %v2646
    %v2648 = vpop.f32.mrf.mxu0
    %2649 = vmatprep.mubr.f32.mxu0 0.0
    %v2650 = vand.u32 %v1502, 4294901760
    %2651 = vmatmul.mubr.f32.gmra.mxu0 %v2650
    %v2652 = vpop.f32.mrf.mxu0
    %v2653 = vadd.f32 %v2571, %v2652
    %v2654 = vpop.f32.mrf.mxu0
    %2655 = vdwg.mxu0
    %2656 = vmatprep.subr.mxu0 0.0
    %2657 = vmatpush1.msra.mxu0 0.0
    %2658 = vmatprep.subr.mxu0 0.0
    %2659 = vmatpush1.msra.mxu0 0.0
    %2660 = vmatprep.subr.mxu0 0.0
    %2661 = vmatpush1.msra.mxu0 0.0
    %2662 = vmatprep.subr.mxu0 0.0
    %2663 = vmatpush1.msra.mxu0 0.0
    %2664 = vmatprep.subr.mxu0 0.0
    %2665 = vmatpush1.msra.mxu0 0.0
    %2666 = vmatprep.subr.mxu0 0.0
    %2667 = vmatpush1.msra.mxu0 0.0
    %2668 = vmatprep.subr.mxu0 0.0
    %2669 = vmatpush1.msra.mxu0 0.0
    %2670 = vmatprep.subr.mxu0 0.0
    %2671 = vmatpush1.msra.mxu0 0.0
    %2672 = vmatprep.subr.mxu0 0.0
    %2673 = vmatpush1.msra.mxu0 0.0
    %2674 = vmatprep.subr.mxu0 0.0
    %2675 = vmatpush1.msra.mxu0 0.0
    %2676 = vmatprep.subr.mxu0 0.0
    %2677 = vmatpush1.msra.mxu0 0.0
    %2678 = vmatprep.subr.mxu0 0.0
    %2679 = vmatpush1.msra.mxu0 0.0
    %2680 = vmatprep.subr.mxu0 0.0
    %2681 = vmatpush1.msra.mxu0 0.0
    %2682 = vmatprep.subr.mxu0 0.0
    %2683 = vmatpush1.msra.mxu0 0.0
    %2684 = vmatprep.subr.mxu0 0.0
    %2685 = vmatpush1.msra.mxu0 0.0
    %2686 = vmatprep.subr.mxu0 0.0
    %v2687 = vand.u32 %v1005, 4294901760
    %v2688 = vsub.f32 %v1005, %v2687
    %2689 = vmatpush1.msra.mxu0 %v2688
    %2690 = vmatprep.subr.mxu0 0.0
    %2691 = vmatpush2.msra.mxu0 0.0
    %2692 = vmatprep.subr.mxu0 0.0
    %2693 = vmatpush2.msra.mxu0 0.0
    %2694 = vmatprep.subr.mxu0 0.0
    %2695 = vmatpush2.msra.mxu0 0.0
    %2696 = vmatprep.subr.mxu0 0.0
    %2697 = vmatpush2.msra.mxu0 0.0
    %2698 = vmatprep.subr.mxu0 0.0
    %2699 = vmatpush2.msra.mxu0 0.0
    %2700 = vmatprep.subr.mxu0 0.0
    %2701 = vmatpush2.msra.mxu0 0.0
    %2702 = vmatprep.subr.mxu0 0.0
    %2703 = vmatpush2.msra.mxu0 0.0
    %2704 = vmatprep.subr.mxu0 0.0
    %2705 = vmatpush2.msra.mxu0 0.0
    %2706 = vmatprep.subr.mxu0 0.0
    %2707 = vmatpush2.msra.mxu0 0.0
    %2708 = vmatprep.subr.mxu0 0.0
    %2709 = vmatpush2.msra.mxu0 0.0
    %2710 = vmatprep.subr.mxu0 0.0
    %2711 = vmatpush2.msra.mxu0 0.0
    %2712 = vmatprep.subr.mxu0 0.0
    %2713 = vmatpush2.msra.mxu0 0.0
    %2714 = vmatprep.subr.mxu0 0.0
    %2715 = vmatpush2.msra.mxu0 0.0
    %2716 = vmatprep.subr.mxu0 0.0
    %2717 = vmatpush2.msra.mxu0 0.0
    %2718 = vmatprep.subr.mxu0 0.0
    %2719 = vmatpush2.msra.mxu0 0.0
    %2720 = vmatprep.subr.mxu0 0.0
    %2721 = vmatpush2.msra.mxu0 0.0
    %2722 = vmatprep.mubr.f32.mxu0 0.0
    %v2723 = vand.u32 %v1499, 4294901760
    %v2724 = vsub.f32 %v1499, %v2723
    %2725 = vmatmul.mubr.f32.gmra.mxu0 %v2724
    %v2726 = vpop.f32.mrf.mxu0
    %v2727 = vadd.f32 %v2647, %v2726
    %v2728 = vpop.f32.mrf.mxu0
    %2729 = vmatprep.mubr.f32.mxu0 0.0
    %v2730 = vand.u32 %v1502, 4294901760
    %v2731 = vsub.f32 %v1502, %v2730
    %2732 = vmatmul.mubr.f32.gmra.mxu0 %v2731
    %v2733 = vpop.f32.mrf.mxu0
    %v2734 = vadd.f32 %v2653, %v2733
    %v2735 = vpop.f32.mrf.mxu0
    %2736 = vdwg.mxu0
    %2737 = vmatprep.subr.mxu0 0.0
    %2738 = vmatpush1.msra.mxu0 0.0
    %2739 = vmatprep.subr.mxu0 0.0
    %2740 = vmatpush1.msra.mxu0 0.0
    %2741 = vmatprep.subr.mxu0 0.0
    %2742 = vmatpush1.msra.mxu0 0.0
    %2743 = vmatprep.subr.mxu0 0.0
    %2744 = vmatpush1.msra.mxu0 0.0
    %2745 = vmatprep.subr.mxu0 0.0
    %2746 = vmatpush1.msra.mxu0 0.0
    %2747 = vmatprep.subr.mxu0 0.0
    %2748 = vmatpush1.msra.mxu0 0.0
    %2749 = vmatprep.subr.mxu0 0.0
    %2750 = vmatpush1.msra.mxu0 0.0
    %2751 = vmatprep.subr.mxu0 0.0
    %2752 = vmatpush1.msra.mxu0 0.0
    %2753 = vmatprep.subr.mxu0 0.0
    %2754 = vmatpush1.msra.mxu0 0.0
    %2755 = vmatprep.subr.mxu0 0.0
    %2756 = vmatpush1.msra.mxu0 0.0
    %2757 = vmatprep.subr.mxu0 0.0
    %2758 = vmatpush1.msra.mxu0 0.0
    %2759 = vmatprep.subr.mxu0 0.0
    %2760 = vmatpush1.msra.mxu0 0.0
    %2761 = vmatprep.subr.mxu0 0.0
    %2762 = vmatpush1.msra.mxu0 0.0
    %2763 = vmatprep.subr.mxu0 0.0
    %2764 = vmatpush1.msra.mxu0 0.0
    %2765 = vmatprep.subr.mxu0 0.0
    %2766 = vmatpush1.msra.mxu0 0.0
    %2767 = vmatprep.subr.mxu0 0.0
    %v2768 = vand.u32 %v1005, 4294901760
    %2769 = vmatpush1.msra.mxu0 %v2768
    %2770 = vmatprep.subr.mxu0 0.0
    %2771 = vmatpush2.msra.mxu0 0.0
    %2772 = vmatprep.subr.mxu0 0.0
    %2773 = vmatpush2.msra.mxu0 0.0
    %2774 = vmatprep.subr.mxu0 0.0
    %2775 = vmatpush2.msra.mxu0 0.0
    %2776 = vmatprep.subr.mxu0 0.0
    %2777 = vmatpush2.msra.mxu0 0.0
    %2778 = vmatprep.subr.mxu0 0.0
    %2779 = vmatpush2.msra.mxu0 0.0
    %2780 = vmatprep.subr.mxu0 0.0
    %2781 = vmatpush2.msra.mxu0 0.0
    %2782 = vmatprep.subr.mxu0 0.0
    %2783 = vmatpush2.msra.mxu0 0.0
    %2784 = vmatprep.subr.mxu0 0.0
    %2785 = vmatpush2.msra.mxu0 0.0
    %2786 = vmatprep.subr.mxu0 0.0
    %2787 = vmatpush2.msra.mxu0 0.0
    %2788 = vmatprep.subr.mxu0 0.0
    %2789 = vmatpush2.msra.mxu0 0.0
    %2790 = vmatprep.subr.mxu0 0.0
    %2791 = vmatpush2.msra.mxu0 0.0
    %2792 = vmatprep.subr.mxu0 0.0
    %2793 = vmatpush2.msra.mxu0 0.0
    %2794 = vmatprep.subr.mxu0 0.0
    %2795 = vmatpush2.msra.mxu0 0.0
    %2796 = vmatprep.subr.mxu0 0.0
    %2797 = vmatpush2.msra.mxu0 0.0
    %2798 = vmatprep.subr.mxu0 0.0
    %2799 = vmatpush2.msra.mxu0 0.0
    %2800 = vmatprep.subr.mxu0 0.0
    %2801 = vmatpush2.msra.mxu0 0.0
    %2802 = vmatprep.mubr.f32.mxu0 0.0
    %v2803 = vand.u32 %v1499, 4294901760
    %v2804 = vsub.f32 %v1499, %v2803
    %v2805 = vand.u32 %v2804, 4294901760
    %2806 = vmatmul.mubr.f32.gmra.mxu0 %v2805
    %v2807 = vpop.f32.mrf.mxu0
    %v2808 = vadd.f32 %v2727, %v2807
    %v2809 = vpop.f32.mrf.mxu0
    %2810 = vmatprep.mubr.f32.mxu0 0.0
    %v2811 = vand.u32 %v1502, 4294901760
    %v2812 = vsub.f32 %v1502, %v2811
    %v2813 = vand.u32 %v2812, 4294901760
    %2814 = vmatmul.mubr.f32.gmra.mxu0 %v2813
    %v2815 = vpop.f32.mrf.mxu0
    %v2816 = vadd.f32 %v2734, %v2815
    %v2817 = vpop.f32.mrf.mxu0
    %2818 = vdwg.mxu0
    %2819 = vmatprep.subr.mxu0 0.0
    %2820 = vmatpush1.msra.mxu0 0.0
    %2821 = vmatprep.subr.mxu0 0.0
    %2822 = vmatpush1.msra.mxu0 0.0
    %2823 = vmatprep.subr.mxu0 0.0
    %2824 = vmatpush1.msra.mxu0 0.0
    %2825 = vmatprep.subr.mxu0 0.0
    %2826 = vmatpush1.msra.mxu0 0.0
    %2827 = vmatprep.subr.mxu0 0.0
    %2828 = vmatpush1.msra.mxu0 0.0
    %2829 = vmatprep.subr.mxu0 0.0
    %2830 = vmatpush1.msra.mxu0 0.0
    %2831 = vmatprep.subr.mxu0 0.0
    %2832 = vmatpush1.msra.mxu0 0.0
    %2833 = vmatprep.subr.mxu0 0.0
    %2834 = vmatpush1.msra.mxu0 0.0
    %2835 = vmatprep.subr.mxu0 0.0
    %2836 = vmatpush1.msra.mxu0 0.0
    %2837 = vmatprep.subr.mxu0 0.0
    %2838 = vmatpush1.msra.mxu0 0.0
    %2839 = vmatprep.subr.mxu0 0.0
    %2840 = vmatpush1.msra.mxu0 0.0
    %2841 = vmatprep.subr.mxu0 0.0
    %2842 = vmatpush1.msra.mxu0 0.0
    %2843 = vmatprep.subr.mxu0 0.0
    %2844 = vmatpush1.msra.mxu0 0.0
    %2845 = vmatprep.subr.mxu0 0.0
    %2846 = vmatpush1.msra.mxu0 0.0
    %2847 = vmatprep.subr.mxu0 0.0
    %2848 = vmatpush1.msra.mxu0 0.0
    %2849 = vmatprep.subr.mxu0 0.0
    %v2850 = vand.u32 %v1005, 4294901760
    %v2851 = vsub.f32 %v1005, %v2850
    %v2852 = vand.u32 %v2851, 4294901760
    %2853 = vmatpush1.msra.mxu0 %v2852
    %2854 = vmatprep.subr.mxu0 0.0
    %2855 = vmatpush2.msra.mxu0 0.0
    %2856 = vmatprep.subr.mxu0 0.0
    %2857 = vmatpush2.msra.mxu0 0.0
    %2858 = vmatprep.subr.mxu0 0.0
    %2859 = vmatpush2.msra.mxu0 0.0
    %2860 = vmatprep.subr.mxu0 0.0
    %2861 = vmatpush2.msra.mxu0 0.0
    %2862 = vmatprep.subr.mxu0 0.0
    %2863 = vmatpush2.msra.mxu0 0.0
    %2864 = vmatprep.subr.mxu0 0.0
    %2865 = vmatpush2.msra.mxu0 0.0
    %2866 = vmatprep.subr.mxu0 0.0
    %2867 = vmatpush2.msra.mxu0 0.0
    %2868 = vmatprep.subr.mxu0 0.0
    %2869 = vmatpush2.msra.mxu0 0.0
    %2870 = vmatprep.subr.mxu0 0.0
    %2871 = vmatpush2.msra.mxu0 0.0
    %2872 = vmatprep.subr.mxu0 0.0
    %2873 = vmatpush2.msra.mxu0 0.0
    %2874 = vmatprep.subr.mxu0 0.0
    %2875 = vmatpush2.msra.mxu0 0.0
    %2876 = vmatprep.subr.mxu0 0.0
    %2877 = vmatpush2.msra.mxu0 0.0
    %2878 = vmatprep.subr.mxu0 0.0
    %2879 = vmatpush2.msra.mxu0 0.0
    %2880 = vmatprep.subr.mxu0 0.0
    %2881 = vmatpush2.msra.mxu0 0.0
    %2882 = vmatprep.subr.mxu0 0.0
    %2883 = vmatpush2.msra.mxu0 0.0
    %2884 = vmatprep.subr.mxu0 0.0
    %2885 = vmatpush2.msra.mxu0 0.0
    %2886 = vmatprep.mubr.f32.mxu0 0.0
    %v2887 = vand.u32 %v1499, 4294901760
    %2888 = vmatmul.mubr.f32.gmra.mxu0 %v2887
    %v2889 = vpop.f32.mrf.mxu0
    %v2890 = vadd.f32 %v2808, %v2889
    %v2891 = vpop.f32.mrf.mxu0
    %2892 = vmatprep.mubr.f32.mxu0 0.0
    %v2893 = vand.u32 %v1502, 4294901760
    %2894 = vmatmul.mubr.f32.gmra.mxu0 %v2893
    %v2895 = vpop.f32.mrf.mxu0
    %v2896 = vadd.f32 %v2816, %v2895
    %v2897 = vpop.f32.mrf.mxu0
    %2898 = vdwg.mxu0
    %2899 = vmatprep.subr.mxu0 0.0
    %2900 = vmatpush1.msra.mxu0 0.0
    %2901 = vmatprep.subr.mxu0 0.0
    %2902 = vmatpush1.msra.mxu0 0.0
    %2903 = vmatprep.subr.mxu0 0.0
    %2904 = vmatpush1.msra.mxu0 0.0
    %2905 = vmatprep.subr.mxu0 0.0
    %2906 = vmatpush1.msra.mxu0 0.0
    %2907 = vmatprep.subr.mxu0 0.0
    %2908 = vmatpush1.msra.mxu0 0.0
    %2909 = vmatprep.subr.mxu0 0.0
    %2910 = vmatpush1.msra.mxu0 0.0
    %2911 = vmatprep.subr.mxu0 0.0
    %2912 = vmatpush1.msra.mxu0 0.0
    %2913 = vmatprep.subr.mxu0 0.0
    %2914 = vmatpush1.msra.mxu0 0.0
    %2915 = vmatprep.subr.mxu0 0.0
    %2916 = vmatpush1.msra.mxu0 0.0
    %2917 = vmatprep.subr.mxu0 0.0
    %2918 = vmatpush1.msra.mxu0 0.0
    %2919 = vmatprep.subr.mxu0 0.0
    %2920 = vmatpush1.msra.mxu0 0.0
    %2921 = vmatprep.subr.mxu0 0.0
    %2922 = vmatpush1.msra.mxu0 0.0
    %2923 = vmatprep.subr.mxu0 0.0
    %2924 = vmatpush1.msra.mxu0 0.0
    %2925 = vmatprep.subr.mxu0 0.0
    %2926 = vmatpush1.msra.mxu0 0.0
    %2927 = vmatprep.subr.mxu0 0.0
    %2928 = vmatpush1.msra.mxu0 0.0
    %2929 = vmatprep.subr.mxu0 0.0
    %v2930 = vand.u32 %v1005, 4294901760
    %2931 = vmatpush1.msra.mxu0 %v2930
    %2932 = vmatprep.subr.mxu0 0.0
    %2933 = vmatpush2.msra.mxu0 0.0
    %2934 = vmatprep.subr.mxu0 0.0
    %2935 = vmatpush2.msra.mxu0 0.0
    %2936 = vmatprep.subr.mxu0 0.0
    %2937 = vmatpush2.msra.mxu0 0.0
    %2938 = vmatprep.subr.mxu0 0.0
    %2939 = vmatpush2.msra.mxu0 0.0
    %2940 = vmatprep.subr.mxu0 0.0
    %2941 = vmatpush2.msra.mxu0 0.0
    %2942 = vmatprep.subr.mxu0 0.0
    %2943 = vmatpush2.msra.mxu0 0.0
    %2944 = vmatprep.subr.mxu0 0.0
    %2945 = vmatpush2.msra.mxu0 0.0
    %2946 = vmatprep.subr.mxu0 0.0
    %2947 = vmatpush2.msra.mxu0 0.0
    %2948 = vmatprep.subr.mxu0 0.0
    %2949 = vmatpush2.msra.mxu0 0.0
    %2950 = vmatprep.subr.mxu0 0.0
    %2951 = vmatpush2.msra.mxu0 0.0
    %2952 = vmatprep.subr.mxu0 0.0
    %2953 = vmatpush2.msra.mxu0 0.0
    %2954 = vmatprep.subr.mxu0 0.0
    %2955 = vmatpush2.msra.mxu0 0.0
    %2956 = vmatprep.subr.mxu0 0.0
    %2957 = vmatpush2.msra.mxu0 0.0
    %2958 = vmatprep.subr.mxu0 0.0
    %2959 = vmatpush2.msra.mxu0 0.0
    %2960 = vmatprep.subr.mxu0 0.0
    %2961 = vmatpush2.msra.mxu0 0.0
    %2962 = vmatprep.subr.mxu0 0.0
    %2963 = vmatpush2.msra.mxu0 0.0
    %2964 = vmatprep.mubr.f32.mxu0 0.0
    %v2965 = vand.u32 %v1499, 4294901760
    %2966 = vmatmul.mubr.f32.gmra.mxu0 %v2965
    %v2967 = vpop.f32.mrf.mxu0
    %v2968 = vadd.f32 %v2890, %v2967
    %v2969 = vpop.f32.mrf.mxu0
    %2970 = vmatprep.mubr.f32.mxu0 0.0
    %v2971 = vand.u32 %v1502, 4294901760
    %2972 = vmatmul.mubr.f32.gmra.mxu0 %v2971
    %v2973 = vpop.f32.mrf.mxu0
    %v2974 = vadd.f32 %v2896, %v2973
    %v2975 = vpop.f32.mrf.mxu0
    %2976 = vdwg.mxu0
    %v2977 = vld [vmem:[%s2 + $0x60] sm:$0xff]
    %v2978 = vld [vmem:[%s2 + $0x68] sm:$0xff]
    %v2979 = vld [vmem:[%s2 + $0x70] sm:$0xff]
    %v2980 = vld [vmem:[%s2 + $0x78] sm:$0xff]
    %v2981 = vld [vmem:[%s2 + $0x80] sm:$0xff]
    %v2982 = vld [vmem:[%s2 + $0x88] sm:$0xff]
    %v2983 = vld [vmem:[%s2 + $0x90] sm:$0xff]
    %v2984 = vld [vmem:[%s2 + $0x98] sm:$0xff]
    %v2986 = vsel %vm30, %v2479, 0
    %v2989 = vsel %vm30, %v2485, 0
    %2991 = vmatprep.subr.mxu0 0.0
    %2992 = vmatpush1.msra.mxu0 0.0
    %2993 = vmatprep.subr.mxu0 0.0
    %2994 = vmatpush1.msra.mxu0 0.0
    %2995 = vmatprep.subr.mxu0 0.0
    %2996 = vmatpush1.msra.mxu0 0.0
    %2997 = vmatprep.subr.mxu0 0.0
    %2998 = vmatpush1.msra.mxu0 0.0
    %2999 = vmatprep.subr.mxu0 0.0
    %3000 = vmatpush1.msra.mxu0 0.0
    %3001 = vmatprep.subr.mxu0 0.0
    %3002 = vmatpush1.msra.mxu0 0.0
    %3003 = vmatprep.subr.mxu0 0.0
    %3004 = vmatpush1.msra.mxu0 0.0
    %3005 = vmatprep.subr.mxu0 0.0
    %3006 = vmatpush1.msra.mxu0 0.0
    %3007 = vmatprep.subr.mxu0 0.0
    %3008 = vmatpush1.msra.mxu0 0.0
    %3009 = vmatprep.subr.mxu0 0.0
    %3010 = vmatpush1.msra.mxu0 0.0
    %3011 = vmatprep.subr.mxu0 0.0
    %3012 = vmatpush1.msra.mxu0 0.0
    %3013 = vmatprep.subr.mxu0 0.0
    %3014 = vmatpush1.msra.mxu0 0.0
    %3015 = vmatprep.subr.mxu0 0.0
    %v3016 = vand.u32 %v2984, 4294901760
    %3017 = vmatpush1.msra.mxu0 %v3016
    %3018 = vmatprep.subr.mxu0 0.0
    %v3019 = vand.u32 %v2983, 4294901760
    %3020 = vmatpush1.msra.mxu0 %v3019
    %3021 = vmatprep.subr.mxu0 0.0
    %v3022 = vand.u32 %v2982, 4294901760
    %3023 = vmatpush1.msra.mxu0 %v3022
    %3024 = vmatprep.subr.mxu0 0.0
    %v3025 = vand.u32 %v2981, 4294901760
    %3026 = vmatpush1.msra.mxu0 %v3025
    %3027 = vmatprep.subr.mxu0 0.0
    %3028 = vmatpush2.msra.mxu0 0.0
    %3029 = vmatprep.subr.mxu0 0.0
    %3030 = vmatpush2.msra.mxu0 0.0
    %3031 = vmatprep.subr.mxu0 0.0
    %3032 = vmatpush2.msra.mxu0 0.0
    %3033 = vmatprep.subr.mxu0 0.0
    %3034 = vmatpush2.msra.mxu0 0.0
    %3035 = vmatprep.subr.mxu0 0.0
    %3036 = vmatpush2.msra.mxu0 0.0
    %3037 = vmatprep.subr.mxu0 0.0
    %3038 = vmatpush2.msra.mxu0 0.0
    %3039 = vmatprep.subr.mxu0 0.0
    %3040 = vmatpush2.msra.mxu0 0.0
    %3041 = vmatprep.subr.mxu0 0.0
    %3042 = vmatpush2.msra.mxu0 0.0
    %3043 = vmatprep.subr.mxu0 0.0
    %3044 = vmatpush2.msra.mxu0 0.0
    %3045 = vmatprep.subr.mxu0 0.0
    %3046 = vmatpush2.msra.mxu0 0.0
    %3047 = vmatprep.subr.mxu0 0.0
    %3048 = vmatpush2.msra.mxu0 0.0
    %3049 = vmatprep.subr.mxu0 0.0
    %3050 = vmatpush2.msra.mxu0 0.0
    %3051 = vmatprep.subr.mxu0 0.0
    %3052 = vmatpush2.msra.mxu0 0.0
    %3053 = vmatprep.subr.mxu0 0.0
    %3054 = vmatpush2.msra.mxu0 0.0
    %3055 = vmatprep.subr.mxu0 0.0
    %3056 = vmatpush2.msra.mxu0 0.0
    %3057 = vmatprep.subr.mxu0 0.0
    %3058 = vmatpush2.msra.mxu0 0.0
    %3059 = vmatprep.mubr.f32.mxu0 0.0
    %v3060 = vand.u32 %v2986, 4294901760
    %v3061 = vsub.f32 %v2986, %v3060
    %v3062 = vand.u32 %v3061, 4294901760
    %v3063 = vsub.f32 %v3061, %v3062
    %v3064 = vand.u32 %v3063, 4294901760
    %3065 = vmatmul.mubr.f32.gmra.mxu0 %v3064
    %v3066 = vpop.f32.mrf.mxu0
    %v3067 = vadd.f32 0.0, %v3066
    %v3068 = vpop.f32.mrf.mxu0
    %3069 = vmatprep.mubr.f32.mxu0 0.0
    %v3070 = vand.u32 %v2989, 4294901760
    %v3071 = vsub.f32 %v2989, %v3070
    %v3072 = vand.u32 %v3071, 4294901760
    %v3073 = vsub.f32 %v3071, %v3072
    %v3074 = vand.u32 %v3073, 4294901760
    %3075 = vmatmul.mubr.f32.gmra.mxu0 %v3074
    %v3076 = vpop.f32.mrf.mxu0
    %v3077 = vadd.f32 0.0, %v3076
    %v3078 = vpop.f32.mrf.mxu0
    %3079 = vdwg.mxu0
    %3080 = vmatprep.subr.mxu0 0.0
    %3081 = vmatpush1.msra.mxu0 0.0
    %3082 = vmatprep.subr.mxu0 0.0
    %3083 = vmatpush1.msra.mxu0 0.0
    %3084 = vmatprep.subr.mxu0 0.0
    %3085 = vmatpush1.msra.mxu0 0.0
    %3086 = vmatprep.subr.mxu0 0.0
    %3087 = vmatpush1.msra.mxu0 0.0
    %3088 = vmatprep.subr.mxu0 0.0
    %3089 = vmatpush1.msra.mxu0 0.0
    %3090 = vmatprep.subr.mxu0 0.0
    %3091 = vmatpush1.msra.mxu0 0.0
    %3092 = vmatprep.subr.mxu0 0.0
    %3093 = vmatpush1.msra.mxu0 0.0
    %3094 = vmatprep.subr.mxu0 0.0
    %3095 = vmatpush1.msra.mxu0 0.0
    %3096 = vmatprep.subr.mxu0 0.0
    %3097 = vmatpush1.msra.mxu0 0.0
    %3098 = vmatprep.subr.mxu0 0.0
    %3099 = vmatpush1.msra.mxu0 0.0
    %3100 = vmatprep.subr.mxu0 0.0
    %3101 = vmatpush1.msra.mxu0 0.0
    %3102 = vmatprep.subr.mxu0 0.0
    %3103 = vmatpush1.msra.mxu0 0.0
    %3104 = vmatprep.subr.mxu0 0.0
    %v3105 = vand.u32 %v2984, 4294901760
    %v3106 = vsub.f32 %v2984, %v3105
    %v3107 = vand.u32 %v3106, 4294901760
    %v3108 = vsub.f32 %v3106, %v3107
    %v3109 = vand.u32 %v3108, 4294901760
    %3110 = vmatpush1.msra.mxu0 %v3109
    %3111 = vmatprep.subr.mxu0 0.0
    %v3112 = vand.u32 %v2983, 4294901760
    %v3113 = vsub.f32 %v2983, %v3112
    %v3114 = vand.u32 %v3113, 4294901760
    %v3115 = vsub.f32 %v3113, %v3114
    %v3116 = vand.u32 %v3115, 4294901760
    %3117 = vmatpush1.msra.mxu0 %v3116
    %3118 = vmatprep.subr.mxu0 0.0
    %v3119 = vand.u32 %v2982, 4294901760
    %v3120 = vsub.f32 %v2982, %v3119
    %v3121 = vand.u32 %v3120, 4294901760
    %v3122 = vsub.f32 %v3120, %v3121
    %v3123 = vand.u32 %v3122, 4294901760
    %3124 = vmatpush1.msra.mxu0 %v3123
    %3125 = vmatprep.subr.mxu0 0.0
    %v3126 = vand.u32 %v2981, 4294901760
    %v3127 = vsub.f32 %v2981, %v3126
    %v3128 = vand.u32 %v3127, 4294901760
    %v3129 = vsub.f32 %v3127, %v3128
    %v3130 = vand.u32 %v3129, 4294901760
    %3131 = vmatpush1.msra.mxu0 %v3130
    %3132 = vmatprep.subr.mxu0 0.0
    %3133 = vmatpush2.msra.mxu0 0.0
    %3134 = vmatprep.subr.mxu0 0.0
    %3135 = vmatpush2.msra.mxu0 0.0
    %3136 = vmatprep.subr.mxu0 0.0
    %3137 = vmatpush2.msra.mxu0 0.0
    %3138 = vmatprep.subr.mxu0 0.0
    %3139 = vmatpush2.msra.mxu0 0.0
    %3140 = vmatprep.subr.mxu0 0.0
    %3141 = vmatpush2.msra.mxu0 0.0
    %3142 = vmatprep.subr.mxu0 0.0
    %3143 = vmatpush2.msra.mxu0 0.0
    %3144 = vmatprep.subr.mxu0 0.0
    %3145 = vmatpush2.msra.mxu0 0.0
    %3146 = vmatprep.subr.mxu0 0.0
    %3147 = vmatpush2.msra.mxu0 0.0
    %3148 = vmatprep.subr.mxu0 0.0
    %3149 = vmatpush2.msra.mxu0 0.0
    %3150 = vmatprep.subr.mxu0 0.0
    %3151 = vmatpush2.msra.mxu0 0.0
    %3152 = vmatprep.subr.mxu0 0.0
    %3153 = vmatpush2.msra.mxu0 0.0
    %3154 = vmatprep.subr.mxu0 0.0
    %3155 = vmatpush2.msra.mxu0 0.0
    %3156 = vmatprep.subr.mxu0 0.0
    %3157 = vmatpush2.msra.mxu0 0.0
    %3158 = vmatprep.subr.mxu0 0.0
    %3159 = vmatpush2.msra.mxu0 0.0
    %3160 = vmatprep.subr.mxu0 0.0
    %3161 = vmatpush2.msra.mxu0 0.0
    %3162 = vmatprep.subr.mxu0 0.0
    %3163 = vmatpush2.msra.mxu0 0.0
    %3164 = vmatprep.mubr.f32.mxu0 0.0
    %v3165 = vand.u32 %v2986, 4294901760
    %3166 = vmatmul.mubr.f32.gmra.mxu0 %v3165
    %v3167 = vpop.f32.mrf.mxu0
    %v3168 = vadd.f32 %v3067, %v3167
    %v3169 = vpop.f32.mrf.mxu0
    %3170 = vmatprep.mubr.f32.mxu0 0.0
    %v3171 = vand.u32 %v2989, 4294901760
    %3172 = vmatmul.mubr.f32.gmra.mxu0 %v3171
    %v3173 = vpop.f32.mrf.mxu0
    %v3174 = vadd.f32 %v3077, %v3173
    %v3175 = vpop.f32.mrf.mxu0
    %3176 = vdwg.mxu0
    %3177 = vmatprep.subr.mxu0 0.0
    %3178 = vmatpush1.msra.mxu0 0.0
    %3179 = vmatprep.subr.mxu0 0.0
    %3180 = vmatpush1.msra.mxu0 0.0
    %3181 = vmatprep.subr.mxu0 0.0
    %3182 = vmatpush1.msra.mxu0 0.0
    %3183 = vmatprep.subr.mxu0 0.0
    %3184 = vmatpush1.msra.mxu0 0.0
    %3185 = vmatprep.subr.mxu0 0.0
    %3186 = vmatpush1.msra.mxu0 0.0
    %3187 = vmatprep.subr.mxu0 0.0
    %3188 = vmatpush1.msra.mxu0 0.0
    %3189 = vmatprep.subr.mxu0 0.0
    %3190 = vmatpush1.msra.mxu0 0.0
    %3191 = vmatprep.subr.mxu0 0.0
    %3192 = vmatpush1.msra.mxu0 0.0
    %3193 = vmatprep.subr.mxu0 0.0
    %3194 = vmatpush1.msra.mxu0 0.0
    %3195 = vmatprep.subr.mxu0 0.0
    %3196 = vmatpush1.msra.mxu0 0.0
    %3197 = vmatprep.subr.mxu0 0.0
    %3198 = vmatpush1.msra.mxu0 0.0
    %3199 = vmatprep.subr.mxu0 0.0
    %3200 = vmatpush1.msra.mxu0 0.0
    %3201 = vmatprep.subr.mxu0 0.0
    %v3202 = vand.u32 %v2984, 4294901760
    %v3203 = vsub.f32 %v2984, %v3202
    %3204 = vmatpush1.msra.mxu0 %v3203
    %3205 = vmatprep.subr.mxu0 0.0
    %v3206 = vand.u32 %v2983, 4294901760
    %v3207 = vsub.f32 %v2983, %v3206
    %3208 = vmatpush1.msra.mxu0 %v3207
    %3209 = vmatprep.subr.mxu0 0.0
    %v3210 = vand.u32 %v2982, 4294901760
    %v3211 = vsub.f32 %v2982, %v3210
    %3212 = vmatpush1.msra.mxu0 %v3211
    %3213 = vmatprep.subr.mxu0 0.0
    %v3214 = vand.u32 %v2981, 4294901760
    %v3215 = vsub.f32 %v2981, %v3214
    %3216 = vmatpush1.msra.mxu0 %v3215
    %3217 = vmatprep.subr.mxu0 0.0
    %3218 = vmatpush2.msra.mxu0 0.0
    %3219 = vmatprep.subr.mxu0 0.0
    %3220 = vmatpush2.msra.mxu0 0.0
    %3221 = vmatprep.subr.mxu0 0.0
    %3222 = vmatpush2.msra.mxu0 0.0
    %3223 = vmatprep.subr.mxu0 0.0
    %3224 = vmatpush2.msra.mxu0 0.0
    %3225 = vmatprep.subr.mxu0 0.0
    %3226 = vmatpush2.msra.mxu0 0.0
    %3227 = vmatprep.subr.mxu0 0.0
    %3228 = vmatpush2.msra.mxu0 0.0
    %3229 = vmatprep.subr.mxu0 0.0
    %3230 = vmatpush2.msra.mxu0 0.0
    %3231 = vmatprep.subr.mxu0 0.0
    %3232 = vmatpush2.msra.mxu0 0.0
    %3233 = vmatprep.subr.mxu0 0.0
    %3234 = vmatpush2.msra.mxu0 0.0
    %3235 = vmatprep.subr.mxu0 0.0
    %3236 = vmatpush2.msra.mxu0 0.0
    %3237 = vmatprep.subr.mxu0 0.0
    %3238 = vmatpush2.msra.mxu0 0.0
    %3239 = vmatprep.subr.mxu0 0.0
    %3240 = vmatpush2.msra.mxu0 0.0
    %3241 = vmatprep.subr.mxu0 0.0
    %3242 = vmatpush2.msra.mxu0 0.0
    %3243 = vmatprep.subr.mxu0 0.0
    %3244 = vmatpush2.msra.mxu0 0.0
    %3245 = vmatprep.subr.mxu0 0.0
    %3246 = vmatpush2.msra.mxu0 0.0
    %3247 = vmatprep.subr.mxu0 0.0
    %3248 = vmatpush2.msra.mxu0 0.0
    %3249 = vmatprep.mubr.f32.mxu0 0.0
    %v3250 = vand.u32 %v2986, 4294901760
    %v3251 = vsub.f32 %v2986, %v3250
    %3252 = vmatmul.mubr.f32.gmra.mxu0 %v3251
    %v3253 = vpop.f32.mrf.mxu0
    %v3254 = vadd.f32 %v3168, %v3253
    %v3255 = vpop.f32.mrf.mxu0
    %3256 = vmatprep.mubr.f32.mxu0 0.0
    %v3257 = vand.u32 %v2989, 4294901760
    %v3258 = vsub.f32 %v2989, %v3257
    %3259 = vmatmul.mubr.f32.gmra.mxu0 %v3258
    %v3260 = vpop.f32.mrf.mxu0
    %v3261 = vadd.f32 %v3174, %v3260
    %v3262 = vpop.f32.mrf.mxu0
    %3263 = vdwg.mxu0
    %3264 = vmatprep.subr.mxu0 0.0
    %3265 = vmatpush1.msra.mxu0 0.0
    %3266 = vmatprep.subr.mxu0 0.0
    %3267 = vmatpush1.msra.mxu0 0.0
    %3268 = vmatprep.subr.mxu0 0.0
    %3269 = vmatpush1.msra.mxu0 0.0
    %3270 = vmatprep.subr.mxu0 0.0
    %3271 = vmatpush1.msra.mxu0 0.0
    %3272 = vmatprep.subr.mxu0 0.0
    %3273 = vmatpush1.msra.mxu0 0.0
    %3274 = vmatprep.subr.mxu0 0.0
    %3275 = vmatpush1.msra.mxu0 0.0
    %3276 = vmatprep.subr.mxu0 0.0
    %3277 = vmatpush1.msra.mxu0 0.0
    %3278 = vmatprep.subr.mxu0 0.0
    %3279 = vmatpush1.msra.mxu0 0.0
    %3280 = vmatprep.subr.mxu0 0.0
    %3281 = vmatpush1.msra.mxu0 0.0
    %3282 = vmatprep.subr.mxu0 0.0
    %3283 = vmatpush1.msra.mxu0 0.0
    %3284 = vmatprep.subr.mxu0 0.0
    %3285 = vmatpush1.msra.mxu0 0.0
    %3286 = vmatprep.subr.mxu0 0.0
    %3287 = vmatpush1.msra.mxu0 0.0
    %3288 = vmatprep.subr.mxu0 0.0
    %v3289 = vand.u32 %v2984, 4294901760
    %3290 = vmatpush1.msra.mxu0 %v3289
    %3291 = vmatprep.subr.mxu0 0.0
    %v3292 = vand.u32 %v2983, 4294901760
    %3293 = vmatpush1.msra.mxu0 %v3292
    %3294 = vmatprep.subr.mxu0 0.0
    %v3295 = vand.u32 %v2982, 4294901760
    %3296 = vmatpush1.msra.mxu0 %v3295
    %3297 = vmatprep.subr.mxu0 0.0
    %v3298 = vand.u32 %v2981, 4294901760
    %3299 = vmatpush1.msra.mxu0 %v3298
    %3300 = vmatprep.subr.mxu0 0.0
    %3301 = vmatpush2.msra.mxu0 0.0
    %3302 = vmatprep.subr.mxu0 0.0
    %3303 = vmatpush2.msra.mxu0 0.0
    %3304 = vmatprep.subr.mxu0 0.0
    %3305 = vmatpush2.msra.mxu0 0.0
    %3306 = vmatprep.subr.mxu0 0.0
    %3307 = vmatpush2.msra.mxu0 0.0
    %3308 = vmatprep.subr.mxu0 0.0
    %3309 = vmatpush2.msra.mxu0 0.0
    %3310 = vmatprep.subr.mxu0 0.0
    %3311 = vmatpush2.msra.mxu0 0.0
    %3312 = vmatprep.subr.mxu0 0.0
    %3313 = vmatpush2.msra.mxu0 0.0
    %3314 = vmatprep.subr.mxu0 0.0
    %3315 = vmatpush2.msra.mxu0 0.0
    %3316 = vmatprep.subr.mxu0 0.0
    %3317 = vmatpush2.msra.mxu0 0.0
    %3318 = vmatprep.subr.mxu0 0.0
    %3319 = vmatpush2.msra.mxu0 0.0
    %3320 = vmatprep.subr.mxu0 0.0
    %3321 = vmatpush2.msra.mxu0 0.0
    %3322 = vmatprep.subr.mxu0 0.0
    %3323 = vmatpush2.msra.mxu0 0.0
    %3324 = vmatprep.subr.mxu0 0.0
    %3325 = vmatpush2.msra.mxu0 0.0
    %3326 = vmatprep.subr.mxu0 0.0
    %3327 = vmatpush2.msra.mxu0 0.0
    %3328 = vmatprep.subr.mxu0 0.0
    %3329 = vmatpush2.msra.mxu0 0.0
    %3330 = vmatprep.subr.mxu0 0.0
    %3331 = vmatpush2.msra.mxu0 0.0
    %3332 = vmatprep.mubr.f32.mxu0 0.0
    %v3333 = vand.u32 %v2986, 4294901760
    %v3334 = vsub.f32 %v2986, %v3333
    %v3335 = vand.u32 %v3334, 4294901760
    %3336 = vmatmul.mubr.f32.gmra.mxu0 %v3335
    %v3337 = vpop.f32.mrf.mxu0
    %v3338 = vadd.f32 %v3254, %v3337
    %v3339 = vpop.f32.mrf.mxu0
    %3340 = vmatprep.mubr.f32.mxu0 0.0
    %v3341 = vand.u32 %v2989, 4294901760
    %v3342 = vsub.f32 %v2989, %v3341
    %v3343 = vand.u32 %v3342, 4294901760
    %3344 = vmatmul.mubr.f32.gmra.mxu0 %v3343
    %v3345 = vpop.f32.mrf.mxu0
    %v3346 = vadd.f32 %v3261, %v3345
    %v3347 = vpop.f32.mrf.mxu0
    %3348 = vdwg.mxu0
    %3349 = vmatprep.subr.mxu0 0.0
    %3350 = vmatpush1.msra.mxu0 0.0
    %3351 = vmatprep.subr.mxu0 0.0
    %3352 = vmatpush1.msra.mxu0 0.0
    %3353 = vmatprep.subr.mxu0 0.0
    %3354 = vmatpush1.msra.mxu0 0.0
    %3355 = vmatprep.subr.mxu0 0.0
    %3356 = vmatpush1.msra.mxu0 0.0
    %3357 = vmatprep.subr.mxu0 0.0
    %3358 = vmatpush1.msra.mxu0 0.0
    %3359 = vmatprep.subr.mxu0 0.0
    %3360 = vmatpush1.msra.mxu0 0.0
    %3361 = vmatprep.subr.mxu0 0.0
    %3362 = vmatpush1.msra.mxu0 0.0
    %3363 = vmatprep.subr.mxu0 0.0
    %3364 = vmatpush1.msra.mxu0 0.0
    %3365 = vmatprep.subr.mxu0 0.0
    %3366 = vmatpush1.msra.mxu0 0.0
    %3367 = vmatprep.subr.mxu0 0.0
    %3368 = vmatpush1.msra.mxu0 0.0
    %3369 = vmatprep.subr.mxu0 0.0
    %3370 = vmatpush1.msra.mxu0 0.0
    %3371 = vmatprep.subr.mxu0 0.0
    %3372 = vmatpush1.msra.mxu0 0.0
    %3373 = vmatprep.subr.mxu0 0.0
    %v3374 = vand.u32 %v2984, 4294901760
    %v3375 = vsub.f32 %v2984, %v3374
    %v3376 = vand.u32 %v3375, 4294901760
    %3377 = vmatpush1.msra.mxu0 %v3376
    %3378 = vmatprep.subr.mxu0 0.0
    %v3379 = vand.u32 %v2983, 4294901760
    %v3380 = vsub.f32 %v2983, %v3379
    %v3381 = vand.u32 %v3380, 4294901760
    %3382 = vmatpush1.msra.mxu0 %v3381
    %3383 = vmatprep.subr.mxu0 0.0
    %v3384 = vand.u32 %v2982, 4294901760
    %v3385 = vsub.f32 %v2982, %v3384
    %v3386 = vand.u32 %v3385, 4294901760
    %3387 = vmatpush1.msra.mxu0 %v3386
    %3388 = vmatprep.subr.mxu0 0.0
    %v3389 = vand.u32 %v2981, 4294901760
    %v3390 = vsub.f32 %v2981, %v3389
    %v3391 = vand.u32 %v3390, 4294901760
    %3392 = vmatpush1.msra.mxu0 %v3391
    %3393 = vmatprep.subr.mxu0 0.0
    %3394 = vmatpush2.msra.mxu0 0.0
    %3395 = vmatprep.subr.mxu0 0.0
    %3396 = vmatpush2.msra.mxu0 0.0
    %3397 = vmatprep.subr.mxu0 0.0
    %3398 = vmatpush2.msra.mxu0 0.0
    %3399 = vmatprep.subr.mxu0 0.0
    %3400 = vmatpush2.msra.mxu0 0.0
    %3401 = vmatprep.subr.mxu0 0.0
    %3402 = vmatpush2.msra.mxu0 0.0
    %3403 = vmatprep.subr.mxu0 0.0
    %3404 = vmatpush2.msra.mxu0 0.0
    %3405 = vmatprep.subr.mxu0 0.0
    %3406 = vmatpush2.msra.mxu0 0.0
    %3407 = vmatprep.subr.mxu0 0.0
    %3408 = vmatpush2.msra.mxu0 0.0
    %3409 = vmatprep.subr.mxu0 0.0
    %3410 = vmatpush2.msra.mxu0 0.0
    %3411 = vmatprep.subr.mxu0 0.0
    %3412 = vmatpush2.msra.mxu0 0.0
    %3413 = vmatprep.subr.mxu0 0.0
    %3414 = vmatpush2.msra.mxu0 0.0
    %3415 = vmatprep.subr.mxu0 0.0
    %3416 = vmatpush2.msra.mxu0 0.0
    %3417 = vmatprep.subr.mxu0 0.0
    %3418 = vmatpush2.msra.mxu0 0.0
    %3419 = vmatprep.subr.mxu0 0.0
    %3420 = vmatpush2.msra.mxu0 0.0
    %3421 = vmatprep.subr.mxu0 0.0
    %3422 = vmatpush2.msra.mxu0 0.0
    %3423 = vmatprep.subr.mxu0 0.0
    %3424 = vmatpush2.msra.mxu0 0.0
    %3425 = vmatprep.mubr.f32.mxu0 0.0
    %v3426 = vand.u32 %v2986, 4294901760
    %3427 = vmatmul.mubr.f32.gmra.mxu0 %v3426
    %v3428 = vpop.f32.mrf.mxu0
    %v3429 = vadd.f32 %v3338, %v3428
    %v3430 = vpop.f32.mrf.mxu0
    %3431 = vmatprep.mubr.f32.mxu0 0.0
    %v3432 = vand.u32 %v2989, 4294901760
    %3433 = vmatmul.mubr.f32.gmra.mxu0 %v3432
    %v3434 = vpop.f32.mrf.mxu0
    %v3435 = vadd.f32 %v3346, %v3434
    %v3436 = vpop.f32.mrf.mxu0
    %3437 = vdwg.mxu0
    %3438 = vmatprep.subr.mxu0 0.0
    %3439 = vmatpush1.msra.mxu0 0.0
    %3440 = vmatprep.subr.mxu0 0.0
    %3441 = vmatpush1.msra.mxu0 0.0
    %3442 = vmatprep.subr.mxu0 0.0
    %3443 = vmatpush1.msra.mxu0 0.0
    %3444 = vmatprep.subr.mxu0 0.0
    %3445 = vmatpush1.msra.mxu0 0.0
    %3446 = vmatprep.subr.mxu0 0.0
    %3447 = vmatpush1.msra.mxu0 0.0
    %3448 = vmatprep.subr.mxu0 0.0
    %3449 = vmatpush1.msra.mxu0 0.0
    %3450 = vmatprep.subr.mxu0 0.0
    %3451 = vmatpush1.msra.mxu0 0.0
    %3452 = vmatprep.subr.mxu0 0.0
    %3453 = vmatpush1.msra.mxu0 0.0
    %3454 = vmatprep.subr.mxu0 0.0
    %3455 = vmatpush1.msra.mxu0 0.0
    %3456 = vmatprep.subr.mxu0 0.0
    %3457 = vmatpush1.msra.mxu0 0.0
    %3458 = vmatprep.subr.mxu0 0.0
    %3459 = vmatpush1.msra.mxu0 0.0
    %3460 = vmatprep.subr.mxu0 0.0
    %3461 = vmatpush1.msra.mxu0 0.0
    %3462 = vmatprep.subr.mxu0 0.0
    %v3463 = vand.u32 %v2984, 4294901760
    %3464 = vmatpush1.msra.mxu0 %v3463
    %3465 = vmatprep.subr.mxu0 0.0
    %v3466 = vand.u32 %v2983, 4294901760
    %3467 = vmatpush1.msra.mxu0 %v3466
    %3468 = vmatprep.subr.mxu0 0.0
    %v3469 = vand.u32 %v2982, 4294901760
    %3470 = vmatpush1.msra.mxu0 %v3469
    %3471 = vmatprep.subr.mxu0 0.0
    %v3472 = vand.u32 %v2981, 4294901760
    %3473 = vmatpush1.msra.mxu0 %v3472
    %3474 = vmatprep.subr.mxu0 0.0
    %3475 = vmatpush2.msra.mxu0 0.0
    %3476 = vmatprep.subr.mxu0 0.0
    %3477 = vmatpush2.msra.mxu0 0.0
    %3478 = vmatprep.subr.mxu0 0.0
    %3479 = vmatpush2.msra.mxu0 0.0
    %3480 = vmatprep.subr.mxu0 0.0
    %3481 = vmatpush2.msra.mxu0 0.0
    %3482 = vmatprep.subr.mxu0 0.0
    %3483 = vmatpush2.msra.mxu0 0.0
    %3484 = vmatprep.subr.mxu0 0.0
    %3485 = vmatpush2.msra.mxu0 0.0
    %3486 = vmatprep.subr.mxu0 0.0
    %3487 = vmatpush2.msra.mxu0 0.0
    %3488 = vmatprep.subr.mxu0 0.0
    %3489 = vmatpush2.msra.mxu0 0.0
    %3490 = vmatprep.subr.mxu0 0.0
    %3491 = vmatpush2.msra.mxu0 0.0
    %3492 = vmatprep.subr.mxu0 0.0
    %3493 = vmatpush2.msra.mxu0 0.0
    %3494 = vmatprep.subr.mxu0 0.0
    %3495 = vmatpush2.msra.mxu0 0.0
    %3496 = vmatprep.subr.mxu0 0.0
    %3497 = vmatpush2.msra.mxu0 0.0
    %3498 = vmatprep.subr.mxu0 0.0
    %3499 = vmatpush2.msra.mxu0 0.0
    %3500 = vmatprep.subr.mxu0 0.0
    %3501 = vmatpush2.msra.mxu0 0.0
    %3502 = vmatprep.subr.mxu0 0.0
    %3503 = vmatpush2.msra.mxu0 0.0
    %3504 = vmatprep.subr.mxu0 0.0
    %3505 = vmatpush2.msra.mxu0 0.0
    %3506 = vmatprep.mubr.f32.mxu0 0.0
    %v3507 = vand.u32 %v2986, 4294901760
    %3508 = vmatmul.mubr.f32.gmra.mxu0 %v3507
    %v3509 = vpop.f32.mrf.mxu0
    %v3510 = vadd.f32 %v3429, %v3509
    %v3511 = vpop.f32.mrf.mxu0
    %3512 = vmatprep.mubr.f32.mxu0 0.0
    %v3513 = vand.u32 %v2989, 4294901760
    %3514 = vmatmul.mubr.f32.gmra.mxu0 %v3513
    %v3515 = vpop.f32.mrf.mxu0
    %v3516 = vadd.f32 %v3435, %v3515
    %v3517 = vpop.f32.mrf.mxu0
    %3518 = vdwg.mxu0
    %v3520 = vsel %vm30, %v1984, 0
    %v3523 = vsel %vm30, %v1990, 0
    %3525 = vmatprep.subr.mxu0 0.0
    %3526 = vmatpush1.msra.mxu0 0.0
    %3527 = vmatprep.subr.mxu0 0.0
    %3528 = vmatpush1.msra.mxu0 0.0
    %3529 = vmatprep.subr.mxu0 0.0
    %3530 = vmatpush1.msra.mxu0 0.0
    %3531 = vmatprep.subr.mxu0 0.0
    %3532 = vmatpush1.msra.mxu0 0.0
    %3533 = vmatprep.subr.mxu0 0.0
    %3534 = vmatpush1.msra.mxu0 0.0
    %3535 = vmatprep.subr.mxu0 0.0
    %3536 = vmatpush1.msra.mxu0 0.0
    %3537 = vmatprep.subr.mxu0 0.0
    %3538 = vmatpush1.msra.mxu0 0.0
    %3539 = vmatprep.subr.mxu0 0.0
    %3540 = vmatpush1.msra.mxu0 0.0
    %3541 = vmatprep.subr.mxu0 0.0
    %3542 = vmatpush1.msra.mxu0 0.0
    %3543 = vmatprep.subr.mxu0 0.0
    %3544 = vmatpush1.msra.mxu0 0.0
    %3545 = vmatprep.subr.mxu0 0.0
    %3546 = vmatpush1.msra.mxu0 0.0
    %3547 = vmatprep.subr.mxu0 0.0
    %3548 = vmatpush1.msra.mxu0 0.0
    %3549 = vmatprep.subr.mxu0 0.0
    %v3550 = vand.u32 %v2980, 4294901760
    %3551 = vmatpush1.msra.mxu0 %v3550
    %3552 = vmatprep.subr.mxu0 0.0
    %v3553 = vand.u32 %v2979, 4294901760
    %3554 = vmatpush1.msra.mxu0 %v3553
    %3555 = vmatprep.subr.mxu0 0.0
    %v3556 = vand.u32 %v2978, 4294901760
    %3557 = vmatpush1.msra.mxu0 %v3556
    %3558 = vmatprep.subr.mxu0 0.0
    %v3559 = vand.u32 %v2977, 4294901760
    %3560 = vmatpush1.msra.mxu0 %v3559
    %3561 = vmatprep.subr.mxu0 0.0
    %3562 = vmatpush2.msra.mxu0 0.0
    %3563 = vmatprep.subr.mxu0 0.0
    %3564 = vmatpush2.msra.mxu0 0.0
    %3565 = vmatprep.subr.mxu0 0.0
    %3566 = vmatpush2.msra.mxu0 0.0
    %3567 = vmatprep.subr.mxu0 0.0
    %3568 = vmatpush2.msra.mxu0 0.0
    %3569 = vmatprep.subr.mxu0 0.0
    %3570 = vmatpush2.msra.mxu0 0.0
    %3571 = vmatprep.subr.mxu0 0.0
    %3572 = vmatpush2.msra.mxu0 0.0
    %3573 = vmatprep.subr.mxu0 0.0
    %3574 = vmatpush2.msra.mxu0 0.0
    %3575 = vmatprep.subr.mxu0 0.0
    %3576 = vmatpush2.msra.mxu0 0.0
    %3577 = vmatprep.subr.mxu0 0.0
    %3578 = vmatpush2.msra.mxu0 0.0
    %3579 = vmatprep.subr.mxu0 0.0
    %3580 = vmatpush2.msra.mxu0 0.0
    %3581 = vmatprep.subr.mxu0 0.0
    %3582 = vmatpush2.msra.mxu0 0.0
    %3583 = vmatprep.subr.mxu0 0.0
    %3584 = vmatpush2.msra.mxu0 0.0
    %3585 = vmatprep.subr.mxu0 0.0
    %3586 = vmatpush2.msra.mxu0 0.0
    %3587 = vmatprep.subr.mxu0 0.0
    %3588 = vmatpush2.msra.mxu0 0.0
    %3589 = vmatprep.subr.mxu0 0.0
    %3590 = vmatpush2.msra.mxu0 0.0
    %3591 = vmatprep.subr.mxu0 0.0
    %3592 = vmatpush2.msra.mxu0 0.0
    %3593 = vmatprep.mubr.f32.mxu0 0.0
    %v3594 = vand.u32 %v3520, 4294901760
    %v3595 = vsub.f32 %v3520, %v3594
    %v3596 = vand.u32 %v3595, 4294901760
    %v3597 = vsub.f32 %v3595, %v3596
    %v3598 = vand.u32 %v3597, 4294901760
    %3599 = vmatmul.mubr.f32.gmra.mxu0 %v3598
    %v3600 = vpop.f32.mrf.mxu0
    %v3601 = vadd.f32 %v3510, %v3600
    %v3602 = vpop.f32.mrf.mxu0
    %3603 = vmatprep.mubr.f32.mxu0 0.0
    %v3604 = vand.u32 %v3523, 4294901760
    %v3605 = vsub.f32 %v3523, %v3604
    %v3606 = vand.u32 %v3605, 4294901760
    %v3607 = vsub.f32 %v3605, %v3606
    %v3608 = vand.u32 %v3607, 4294901760
    %3609 = vmatmul.mubr.f32.gmra.mxu0 %v3608
    %v3610 = vpop.f32.mrf.mxu0
    %v3611 = vadd.f32 %v3516, %v3610
    %v3612 = vpop.f32.mrf.mxu0
    %3613 = vdwg.mxu0
    %3614 = vmatprep.subr.mxu0 0.0
    %3615 = vmatpush1.msra.mxu0 0.0
    %3616 = vmatprep.subr.mxu0 0.0
    %3617 = vmatpush1.msra.mxu0 0.0
    %3618 = vmatprep.subr.mxu0 0.0
    %3619 = vmatpush1.msra.mxu0 0.0
    %3620 = vmatprep.subr.mxu0 0.0
    %3621 = vmatpush1.msra.mxu0 0.0
    %3622 = vmatprep.subr.mxu0 0.0
    %3623 = vmatpush1.msra.mxu0 0.0
    %3624 = vmatprep.subr.mxu0 0.0
    %3625 = vmatpush1.msra.mxu0 0.0
    %3626 = vmatprep.subr.mxu0 0.0
    %3627 = vmatpush1.msra.mxu0 0.0
    %3628 = vmatprep.subr.mxu0 0.0
    %3629 = vmatpush1.msra.mxu0 0.0
    %3630 = vmatprep.subr.mxu0 0.0
    %3631 = vmatpush1.msra.mxu0 0.0
    %3632 = vmatprep.subr.mxu0 0.0
    %3633 = vmatpush1.msra.mxu0 0.0
    %3634 = vmatprep.subr.mxu0 0.0
    %3635 = vmatpush1.msra.mxu0 0.0
    %3636 = vmatprep.subr.mxu0 0.0
    %3637 = vmatpush1.msra.mxu0 0.0
    %3638 = vmatprep.subr.mxu0 0.0
    %v3639 = vand.u32 %v2980, 4294901760
    %v3640 = vsub.f32 %v2980, %v3639
    %v3641 = vand.u32 %v3640, 4294901760
    %v3642 = vsub.f32 %v3640, %v3641
    %v3643 = vand.u32 %v3642, 4294901760
    %3644 = vmatpush1.msra.mxu0 %v3643
    %3645 = vmatprep.subr.mxu0 0.0
    %v3646 = vand.u32 %v2979, 4294901760
    %v3647 = vsub.f32 %v2979, %v3646
    %v3648 = vand.u32 %v3647, 4294901760
    %v3649 = vsub.f32 %v3647, %v3648
    %v3650 = vand.u32 %v3649, 4294901760
    %3651 = vmatpush1.msra.mxu0 %v3650
    %3652 = vmatprep.subr.mxu0 0.0
    %v3653 = vand.u32 %v2978, 4294901760
    %v3654 = vsub.f32 %v2978, %v3653
    %v3655 = vand.u32 %v3654, 4294901760
    %v3656 = vsub.f32 %v3654, %v3655
    %v3657 = vand.u32 %v3656, 4294901760
    %3658 = vmatpush1.msra.mxu0 %v3657
    %3659 = vmatprep.subr.mxu0 0.0
    %v3660 = vand.u32 %v2977, 4294901760
    %v3661 = vsub.f32 %v2977, %v3660
    %v3662 = vand.u32 %v3661, 4294901760
    %v3663 = vsub.f32 %v3661, %v3662
    %v3664 = vand.u32 %v3663, 4294901760
    %3665 = vmatpush1.msra.mxu0 %v3664
    %3666 = vmatprep.subr.mxu0 0.0
    %3667 = vmatpush2.msra.mxu0 0.0
    %3668 = vmatprep.subr.mxu0 0.0
    %3669 = vmatpush2.msra.mxu0 0.0
    %3670 = vmatprep.subr.mxu0 0.0
    %3671 = vmatpush2.msra.mxu0 0.0
    %3672 = vmatprep.subr.mxu0 0.0
    %3673 = vmatpush2.msra.mxu0 0.0
    %3674 = vmatprep.subr.mxu0 0.0
    %3675 = vmatpush2.msra.mxu0 0.0
    %3676 = vmatprep.subr.mxu0 0.0
    %3677 = vmatpush2.msra.mxu0 0.0
    %3678 = vmatprep.subr.mxu0 0.0
    %3679 = vmatpush2.msra.mxu0 0.0
    %3680 = vmatprep.subr.mxu0 0.0
    %3681 = vmatpush2.msra.mxu0 0.0
    %3682 = vmatprep.subr.mxu0 0.0
    %3683 = vmatpush2.msra.mxu0 0.0
    %3684 = vmatprep.subr.mxu0 0.0
    %3685 = vmatpush2.msra.mxu0 0.0
    %3686 = vmatprep.subr.mxu0 0.0
    %3687 = vmatpush2.msra.mxu0 0.0
    %3688 = vmatprep.subr.mxu0 0.0
    %3689 = vmatpush2.msra.mxu0 0.0
    %3690 = vmatprep.subr.mxu0 0.0
    %3691 = vmatpush2.msra.mxu0 0.0
    %3692 = vmatprep.subr.mxu0 0.0
    %3693 = vmatpush2.msra.mxu0 0.0
    %3694 = vmatprep.subr.mxu0 0.0
    %3695 = vmatpush2.msra.mxu0 0.0
    %3696 = vmatprep.subr.mxu0 0.0
    %3697 = vmatpush2.msra.mxu0 0.0
    %3698 = vmatprep.mubr.f32.mxu0 0.0
    %v3699 = vand.u32 %v3520, 4294901760
    %3700 = vmatmul.mubr.f32.gmra.mxu0 %v3699
    %v3701 = vpop.f32.mrf.mxu0
    %v3702 = vadd.f32 %v3601, %v3701
    %v3703 = vpop.f32.mrf.mxu0
    %3704 = vmatprep.mubr.f32.mxu0 0.0
    %v3705 = vand.u32 %v3523, 4294901760
    %3706 = vmatmul.mubr.f32.gmra.mxu0 %v3705
    %v3707 = vpop.f32.mrf.mxu0
    %v3708 = vadd.f32 %v3611, %v3707
    %v3709 = vpop.f32.mrf.mxu0
    %3710 = vdwg.mxu0
    %3711 = vmatprep.subr.mxu0 0.0
    %3712 = vmatpush1.msra.mxu0 0.0
    %3713 = vmatprep.subr.mxu0 0.0
    %3714 = vmatpush1.msra.mxu0 0.0
    %3715 = vmatprep.subr.mxu0 0.0
    %3716 = vmatpush1.msra.mxu0 0.0
    %3717 = vmatprep.subr.mxu0 0.0
    %3718 = vmatpush1.msra.mxu0 0.0
    %3719 = vmatprep.subr.mxu0 0.0
    %3720 = vmatpush1.msra.mxu0 0.0
    %3721 = vmatprep.subr.mxu0 0.0
    %3722 = vmatpush1.msra.mxu0 0.0
    %3723 = vmatprep.subr.mxu0 0.0
    %3724 = vmatpush1.msra.mxu0 0.0
    %3725 = vmatprep.subr.mxu0 0.0
    %3726 = vmatpush1.msra.mxu0 0.0
    %3727 = vmatprep.subr.mxu0 0.0
    %3728 = vmatpush1.msra.mxu0 0.0
    %3729 = vmatprep.subr.mxu0 0.0
    %3730 = vmatpush1.msra.mxu0 0.0
    %3731 = vmatprep.subr.mxu0 0.0
    %3732 = vmatpush1.msra.mxu0 0.0
    %3733 = vmatprep.subr.mxu0 0.0
    %3734 = vmatpush1.msra.mxu0 0.0
    %3735 = vmatprep.subr.mxu0 0.0
    %v3736 = vand.u32 %v2980, 4294901760
    %v3737 = vsub.f32 %v2980, %v3736
    %3738 = vmatpush1.msra.mxu0 %v3737
    %3739 = vmatprep.subr.mxu0 0.0
    %v3740 = vand.u32 %v2979, 4294901760
    %v3741 = vsub.f32 %v2979, %v3740
    %3742 = vmatpush1.msra.mxu0 %v3741
    %3743 = vmatprep.subr.mxu0 0.0
    %v3744 = vand.u32 %v2978, 4294901760
    %v3745 = vsub.f32 %v2978, %v3744
    %3746 = vmatpush1.msra.mxu0 %v3745
    %3747 = vmatprep.subr.mxu0 0.0
    %v3748 = vand.u32 %v2977, 4294901760
    %v3749 = vsub.f32 %v2977, %v3748
    %3750 = vmatpush1.msra.mxu0 %v3749
    %3751 = vmatprep.subr.mxu0 0.0
    %3752 = vmatpush2.msra.mxu0 0.0
    %3753 = vmatprep.subr.mxu0 0.0
    %3754 = vmatpush2.msra.mxu0 0.0
    %3755 = vmatprep.subr.mxu0 0.0
    %3756 = vmatpush2.msra.mxu0 0.0
    %3757 = vmatprep.subr.mxu0 0.0
    %3758 = vmatpush2.msra.mxu0 0.0
    %3759 = vmatprep.subr.mxu0 0.0
    %3760 = vmatpush2.msra.mxu0 0.0
    %3761 = vmatprep.subr.mxu0 0.0
    %3762 = vmatpush2.msra.mxu0 0.0
    %3763 = vmatprep.subr.mxu0 0.0
    %3764 = vmatpush2.msra.mxu0 0.0
    %3765 = vmatprep.subr.mxu0 0.0
    %3766 = vmatpush2.msra.mxu0 0.0
    %3767 = vmatprep.subr.mxu0 0.0
    %3768 = vmatpush2.msra.mxu0 0.0
    %3769 = vmatprep.subr.mxu0 0.0
    %3770 = vmatpush2.msra.mxu0 0.0
    %3771 = vmatprep.subr.mxu0 0.0
    %3772 = vmatpush2.msra.mxu0 0.0
    %3773 = vmatprep.subr.mxu0 0.0
    %3774 = vmatpush2.msra.mxu0 0.0
    %3775 = vmatprep.subr.mxu0 0.0
    %3776 = vmatpush2.msra.mxu0 0.0
    %3777 = vmatprep.subr.mxu0 0.0
    %3778 = vmatpush2.msra.mxu0 0.0
    %3779 = vmatprep.subr.mxu0 0.0
    %3780 = vmatpush2.msra.mxu0 0.0
    %3781 = vmatprep.subr.mxu0 0.0
    %3782 = vmatpush2.msra.mxu0 0.0
    %3783 = vmatprep.mubr.f32.mxu0 0.0
    %v3784 = vand.u32 %v3520, 4294901760
    %v3785 = vsub.f32 %v3520, %v3784
    %3786 = vmatmul.mubr.f32.gmra.mxu0 %v3785
    %v3787 = vpop.f32.mrf.mxu0
    %v3788 = vadd.f32 %v3702, %v3787
    %v3789 = vpop.f32.mrf.mxu0
    %3790 = vmatprep.mubr.f32.mxu0 0.0
    %v3791 = vand.u32 %v3523, 4294901760
    %v3792 = vsub.f32 %v3523, %v3791
    %3793 = vmatmul.mubr.f32.gmra.mxu0 %v3792
    %v3794 = vpop.f32.mrf.mxu0
    %v3795 = vadd.f32 %v3708, %v3794
    %v3796 = vpop.f32.mrf.mxu0
    %3797 = vdwg.mxu0
    %3798 = vmatprep.subr.mxu0 0.0
    %3799 = vmatpush1.msra.mxu0 0.0
    %3800 = vmatprep.subr.mxu0 0.0
    %3801 = vmatpush1.msra.mxu0 0.0
    %3802 = vmatprep.subr.mxu0 0.0
    %3803 = vmatpush1.msra.mxu0 0.0
    %3804 = vmatprep.subr.mxu0 0.0
    %3805 = vmatpush1.msra.mxu0 0.0
    %3806 = vmatprep.subr.mxu0 0.0
    %3807 = vmatpush1.msra.mxu0 0.0
    %3808 = vmatprep.subr.mxu0 0.0
    %3809 = vmatpush1.msra.mxu0 0.0
    %3810 = vmatprep.subr.mxu0 0.0
    %3811 = vmatpush1.msra.mxu0 0.0
    %3812 = vmatprep.subr.mxu0 0.0
    %3813 = vmatpush1.msra.mxu0 0.0
    %3814 = vmatprep.subr.mxu0 0.0
    %3815 = vmatpush1.msra.mxu0 0.0
    %3816 = vmatprep.subr.mxu0 0.0
    %3817 = vmatpush1.msra.mxu0 0.0
    %3818 = vmatprep.subr.mxu0 0.0
    %3819 = vmatpush1.msra.mxu0 0.0
    %3820 = vmatprep.subr.mxu0 0.0
    %3821 = vmatpush1.msra.mxu0 0.0
    %3822 = vmatprep.subr.mxu0 0.0
    %v3823 = vand.u32 %v2980, 4294901760
    %3824 = vmatpush1.msra.mxu0 %v3823
    %3825 = vmatprep.subr.mxu0 0.0
    %v3826 = vand.u32 %v2979, 4294901760
    %3827 = vmatpush1.msra.mxu0 %v3826
    %3828 = vmatprep.subr.mxu0 0.0
    %v3829 = vand.u32 %v2978, 4294901760
    %3830 = vmatpush1.msra.mxu0 %v3829
    %3831 = vmatprep.subr.mxu0 0.0
    %v3832 = vand.u32 %v2977, 4294901760
    %3833 = vmatpush1.msra.mxu0 %v3832
    %3834 = vmatprep.subr.mxu0 0.0
    %3835 = vmatpush2.msra.mxu0 0.0
    %3836 = vmatprep.subr.mxu0 0.0
    %3837 = vmatpush2.msra.mxu0 0.0
    %3838 = vmatprep.subr.mxu0 0.0
    %3839 = vmatpush2.msra.mxu0 0.0
    %3840 = vmatprep.subr.mxu0 0.0
    %3841 = vmatpush2.msra.mxu0 0.0
    %3842 = vmatprep.subr.mxu0 0.0
    %3843 = vmatpush2.msra.mxu0 0.0
    %3844 = vmatprep.subr.mxu0 0.0
    %3845 = vmatpush2.msra.mxu0 0.0
    %3846 = vmatprep.subr.mxu0 0.0
    %3847 = vmatpush2.msra.mxu0 0.0
    %3848 = vmatprep.subr.mxu0 0.0
    %3849 = vmatpush2.msra.mxu0 0.0
    %3850 = vmatprep.subr.mxu0 0.0
    %3851 = vmatpush2.msra.mxu0 0.0
    %3852 = vmatprep.subr.mxu0 0.0
    %3853 = vmatpush2.msra.mxu0 0.0
    %3854 = vmatprep.subr.mxu0 0.0
    %3855 = vmatpush2.msra.mxu0 0.0
    %3856 = vmatprep.subr.mxu0 0.0
    %3857 = vmatpush2.msra.mxu0 0.0
    %3858 = vmatprep.subr.mxu0 0.0
    %3859 = vmatpush2.msra.mxu0 0.0
    %3860 = vmatprep.subr.mxu0 0.0
    %3861 = vmatpush2.msra.mxu0 0.0
    %3862 = vmatprep.subr.mxu0 0.0
    %3863 = vmatpush2.msra.mxu0 0.0
    %3864 = vmatprep.subr.mxu0 0.0
    %3865 = vmatpush2.msra.mxu0 0.0
    %3866 = vmatprep.mubr.f32.mxu0 0.0
    %v3867 = vand.u32 %v3520, 4294901760
    %v3868 = vsub.f32 %v3520, %v3867
    %v3869 = vand.u32 %v3868, 4294901760
    %3870 = vmatmul.mubr.f32.gmra.mxu0 %v3869
    %v3871 = vpop.f32.mrf.mxu0
    %v3872 = vadd.f32 %v3788, %v3871
    %v3873 = vpop.f32.mrf.mxu0
    %3874 = vmatprep.mubr.f32.mxu0 0.0
    %v3875 = vand.u32 %v3523, 4294901760
    %v3876 = vsub.f32 %v3523, %v3875
    %v3877 = vand.u32 %v3876, 4294901760
    %3878 = vmatmul.mubr.f32.gmra.mxu0 %v3877
    %v3879 = vpop.f32.mrf.mxu0
    %v3880 = vadd.f32 %v3795, %v3879
    %v3881 = vpop.f32.mrf.mxu0
    %3882 = vdwg.mxu0
    %3883 = vmatprep.subr.mxu0 0.0
    %3884 = vmatpush1.msra.mxu0 0.0
    %3885 = vmatprep.subr.mxu0 0.0
    %3886 = vmatpush1.msra.mxu0 0.0
    %3887 = vmatprep.subr.mxu0 0.0
    %3888 = vmatpush1.msra.mxu0 0.0
    %3889 = vmatprep.subr.mxu0 0.0
    %3890 = vmatpush1.msra.mxu0 0.0
    %3891 = vmatprep.subr.mxu0 0.0
    %3892 = vmatpush1.msra.mxu0 0.0
    %3893 = vmatprep.subr.mxu0 0.0
    %3894 = vmatpush1.msra.mxu0 0.0
    %3895 = vmatprep.subr.mxu0 0.0
    %3896 = vmatpush1.msra.mxu0 0.0
    %3897 = vmatprep.subr.mxu0 0.0
    %3898 = vmatpush1.msra.mxu0 0.0
    %3899 = vmatprep.subr.mxu0 0.0
    %3900 = vmatpush1.msra.mxu0 0.0
    %3901 = vmatprep.subr.mxu0 0.0
    %3902 = vmatpush1.msra.mxu0 0.0
    %3903 = vmatprep.subr.mxu0 0.0
    %3904 = vmatpush1.msra.mxu0 0.0
    %3905 = vmatprep.subr.mxu0 0.0
    %3906 = vmatpush1.msra.mxu0 0.0
    %3907 = vmatprep.subr.mxu0 0.0
    %v3908 = vand.u32 %v2980, 4294901760
    %v3909 = vsub.f32 %v2980, %v3908
    %v3910 = vand.u32 %v3909, 4294901760
    %3911 = vmatpush1.msra.mxu0 %v3910
    %3912 = vmatprep.subr.mxu0 0.0
    %v3913 = vand.u32 %v2979, 4294901760
    %v3914 = vsub.f32 %v2979, %v3913
    %v3915 = vand.u32 %v3914, 4294901760
    %3916 = vmatpush1.msra.mxu0 %v3915
    %3917 = vmatprep.subr.mxu0 0.0
    %v3918 = vand.u32 %v2978, 4294901760
    %v3919 = vsub.f32 %v2978, %v3918
    %v3920 = vand.u32 %v3919, 4294901760
    %3921 = vmatpush1.msra.mxu0 %v3920
    %3922 = vmatprep.subr.mxu0 0.0
    %v3923 = vand.u32 %v2977, 4294901760
    %v3924 = vsub.f32 %v2977, %v3923
    %v3925 = vand.u32 %v3924, 4294901760
    %3926 = vmatpush1.msra.mxu0 %v3925
    %3927 = vmatprep.subr.mxu0 0.0
    %3928 = vmatpush2.msra.mxu0 0.0
    %3929 = vmatprep.subr.mxu0 0.0
    %3930 = vmatpush2.msra.mxu0 0.0
    %3931 = vmatprep.subr.mxu0 0.0
    %3932 = vmatpush2.msra.mxu0 0.0
    %3933 = vmatprep.subr.mxu0 0.0
    %3934 = vmatpush2.msra.mxu0 0.0
    %3935 = vmatprep.subr.mxu0 0.0
    %3936 = vmatpush2.msra.mxu0 0.0
    %3937 = vmatprep.subr.mxu0 0.0
    %3938 = vmatpush2.msra.mxu0 0.0
    %3939 = vmatprep.subr.mxu0 0.0
    %3940 = vmatpush2.msra.mxu0 0.0
    %3941 = vmatprep.subr.mxu0 0.0
    %3942 = vmatpush2.msra.mxu0 0.0
    %3943 = vmatprep.subr.mxu0 0.0
    %3944 = vmatpush2.msra.mxu0 0.0
    %3945 = vmatprep.subr.mxu0 0.0
    %3946 = vmatpush2.msra.mxu0 0.0
    %3947 = vmatprep.subr.mxu0 0.0
    %3948 = vmatpush2.msra.mxu0 0.0
    %3949 = vmatprep.subr.mxu0 0.0
    %3950 = vmatpush2.msra.mxu0 0.0
    %3951 = vmatprep.subr.mxu0 0.0
    %3952 = vmatpush2.msra.mxu0 0.0
    %3953 = vmatprep.subr.mxu0 0.0
    %3954 = vmatpush2.msra.mxu0 0.0
    %3955 = vmatprep.subr.mxu0 0.0
    %3956 = vmatpush2.msra.mxu0 0.0
    %3957 = vmatprep.subr.mxu0 0.0
    %3958 = vmatpush2.msra.mxu0 0.0
    %3959 = vmatprep.mubr.f32.mxu0 0.0
    %v3960 = vand.u32 %v3520, 4294901760
    %3961 = vmatmul.mubr.f32.gmra.mxu0 %v3960
    %v3962 = vpop.f32.mrf.mxu0
    %v3963 = vadd.f32 %v3872, %v3962
    %v3964 = vpop.f32.mrf.mxu0
    %3965 = vmatprep.mubr.f32.mxu0 0.0
    %v3966 = vand.u32 %v3523, 4294901760
    %3967 = vmatmul.mubr.f32.gmra.mxu0 %v3966
    %v3968 = vpop.f32.mrf.mxu0
    %v3969 = vadd.f32 %v3880, %v3968
    %v3970 = vpop.f32.mrf.mxu0
    %3971 = vdwg.mxu0
    %3972 = vmatprep.subr.mxu0 0.0
    %3973 = vmatpush1.msra.mxu0 0.0
    %3974 = vmatprep.subr.mxu0 0.0
    %3975 = vmatpush1.msra.mxu0 0.0
    %3976 = vmatprep.subr.mxu0 0.0
    %3977 = vmatpush1.msra.mxu0 0.0
    %3978 = vmatprep.subr.mxu0 0.0
    %3979 = vmatpush1.msra.mxu0 0.0
    %3980 = vmatprep.subr.mxu0 0.0
    %3981 = vmatpush1.msra.mxu0 0.0
    %3982 = vmatprep.subr.mxu0 0.0
    %3983 = vmatpush1.msra.mxu0 0.0
    %3984 = vmatprep.subr.mxu0 0.0
    %3985 = vmatpush1.msra.mxu0 0.0
    %3986 = vmatprep.subr.mxu0 0.0
    %3987 = vmatpush1.msra.mxu0 0.0
    %3988 = vmatprep.subr.mxu0 0.0
    %3989 = vmatpush1.msra.mxu0 0.0
    %3990 = vmatprep.subr.mxu0 0.0
    %3991 = vmatpush1.msra.mxu0 0.0
    %3992 = vmatprep.subr.mxu0 0.0
    %3993 = vmatpush1.msra.mxu0 0.0
    %3994 = vmatprep.subr.mxu0 0.0
    %3995 = vmatpush1.msra.mxu0 0.0
    %3996 = vmatprep.subr.mxu0 0.0
    %v3997 = vand.u32 %v2980, 4294901760
    %3998 = vmatpush1.msra.mxu0 %v3997
    %3999 = vmatprep.subr.mxu0 0.0
    %v4000 = vand.u32 %v2979, 4294901760
    %4001 = vmatpush1.msra.mxu0 %v4000
    %4002 = vmatprep.subr.mxu0 0.0
    %v4003 = vand.u32 %v2978, 4294901760
    %4004 = vmatpush1.msra.mxu0 %v4003
    %4005 = vmatprep.subr.mxu0 0.0
    %v4006 = vand.u32 %v2977, 4294901760
    %4007 = vmatpush1.msra.mxu0 %v4006
    %4008 = vmatprep.subr.mxu0 0.0
    %4009 = vmatpush2.msra.mxu0 0.0
    %4010 = vmatprep.subr.mxu0 0.0
    %4011 = vmatpush2.msra.mxu0 0.0
    %4012 = vmatprep.subr.mxu0 0.0
    %4013 = vmatpush2.msra.mxu0 0.0
    %4014 = vmatprep.subr.mxu0 0.0
    %4015 = vmatpush2.msra.mxu0 0.0
    %4016 = vmatprep.subr.mxu0 0.0
    %4017 = vmatpush2.msra.mxu0 0.0
    %4018 = vmatprep.subr.mxu0 0.0
    %4019 = vmatpush2.msra.mxu0 0.0
    %4020 = vmatprep.subr.mxu0 0.0
    %4021 = vmatpush2.msra.mxu0 0.0
    %4022 = vmatprep.subr.mxu0 0.0
    %4023 = vmatpush2.msra.mxu0 0.0
    %4024 = vmatprep.subr.mxu0 0.0
    %4025 = vmatpush2.msra.mxu0 0.0
    %4026 = vmatprep.subr.mxu0 0.0
    %4027 = vmatpush2.msra.mxu0 0.0
    %4028 = vmatprep.subr.mxu0 0.0
    %4029 = vmatpush2.msra.mxu0 0.0
    %4030 = vmatprep.subr.mxu0 0.0
    %4031 = vmatpush2.msra.mxu0 0.0
    %4032 = vmatprep.subr.mxu0 0.0
    %4033 = vmatpush2.msra.mxu0 0.0
    %4034 = vmatprep.subr.mxu0 0.0
    %4035 = vmatpush2.msra.mxu0 0.0
    %4036 = vmatprep.subr.mxu0 0.0
    %4037 = vmatpush2.msra.mxu0 0.0
    %4038 = vmatprep.subr.mxu0 0.0
    %4039 = vmatpush2.msra.mxu0 0.0
    %4040 = vmatprep.mubr.f32.mxu0 0.0
    %v4041 = vand.u32 %v3520, 4294901760
    %4042 = vmatmul.mubr.f32.gmra.mxu0 %v4041
    %v4043 = vpop.f32.mrf.mxu0
    %v4044 = vadd.f32 %v3963, %v4043
    %v4045 = vpop.f32.mrf.mxu0
    %4046 = vmatprep.mubr.f32.mxu0 0.0
    %v4047 = vand.u32 %v3523, 4294901760
    %4048 = vmatmul.mubr.f32.gmra.mxu0 %v4047
    %v4049 = vpop.f32.mrf.mxu0
    %v4050 = vadd.f32 %v3969, %v4049
    %v4051 = vpop.f32.mrf.mxu0
    %4052 = vdwg.mxu0
    %v4053 = vld [vmem:[%s2 + $0xa0] sm:$0xff]
    %v4055 = vsel %vm1497, %v22, 0
    %v4058 = vsel %vm1497, %v23, 0
    %4060 = vmatprep.subr.mxu0 0.0
    %4061 = vmatpush1.msra.mxu0 0.0
    %4062 = vmatprep.subr.mxu0 0.0
    %4063 = vmatpush1.msra.mxu0 0.0
    %4064 = vmatprep.subr.mxu0 0.0
    %4065 = vmatpush1.msra.mxu0 0.0
    %4066 = vmatprep.subr.mxu0 0.0
    %4067 = vmatpush1.msra.mxu0 0.0
    %4068 = vmatprep.subr.mxu0 0.0
    %4069 = vmatpush1.msra.mxu0 0.0
    %4070 = vmatprep.subr.mxu0 0.0
    %4071 = vmatpush1.msra.mxu0 0.0
    %4072 = vmatprep.subr.mxu0 0.0
    %4073 = vmatpush1.msra.mxu0 0.0
    %4074 = vmatprep.subr.mxu0 0.0
    %4075 = vmatpush1.msra.mxu0 0.0
    %4076 = vmatprep.subr.mxu0 0.0
    %4077 = vmatpush1.msra.mxu0 0.0
    %4078 = vmatprep.subr.mxu0 0.0
    %4079 = vmatpush1.msra.mxu0 0.0
    %4080 = vmatprep.subr.mxu0 0.0
    %4081 = vmatpush1.msra.mxu0 0.0
    %4082 = vmatprep.subr.mxu0 0.0
    %4083 = vmatpush1.msra.mxu0 0.0
    %4084 = vmatprep.subr.mxu0 0.0
    %4085 = vmatpush1.msra.mxu0 0.0
    %4086 = vmatprep.subr.mxu0 0.0
    %4087 = vmatpush1.msra.mxu0 0.0
    %4088 = vmatprep.subr.mxu0 0.0
    %4089 = vmatpush1.msra.mxu0 0.0
    %4090 = vmatprep.subr.mxu0 0.0
    %v4091 = vand.u32 %v4053, 4294901760
    %4092 = vmatpush1.msra.mxu0 %v4091
    %4093 = vmatprep.subr.mxu0 0.0
    %4094 = vmatpush2.msra.mxu0 0.0
    %4095 = vmatprep.subr.mxu0 0.0
    %4096 = vmatpush2.msra.mxu0 0.0
    %4097 = vmatprep.subr.mxu0 0.0
    %4098 = vmatpush2.msra.mxu0 0.0
    %4099 = vmatprep.subr.mxu0 0.0
    %4100 = vmatpush2.msra.mxu0 0.0
    %4101 = vmatprep.subr.mxu0 0.0
    %4102 = vmatpush2.msra.mxu0 0.0
    %4103 = vmatprep.subr.mxu0 0.0
    %4104 = vmatpush2.msra.mxu0 0.0
    %4105 = vmatprep.subr.mxu0 0.0
    %4106 = vmatpush2.msra.mxu0 0.0
    %4107 = vmatprep.subr.mxu0 0.0
    %4108 = vmatpush2.msra.mxu0 0.0
    %4109 = vmatprep.subr.mxu0 0.0
    %4110 = vmatpush2.msra.mxu0 0.0
    %4111 = vmatprep.subr.mxu0 0.0
    %4112 = vmatpush2.msra.mxu0 0.0
    %4113 = vmatprep.subr.mxu0 0.0
    %4114 = vmatpush2.msra.mxu0 0.0
    %4115 = vmatprep.subr.mxu0 0.0
    %4116 = vmatpush2.msra.mxu0 0.0
    %4117 = vmatprep.subr.mxu0 0.0
    %4118 = vmatpush2.msra.mxu0 0.0
    %4119 = vmatprep.subr.mxu0 0.0
    %4120 = vmatpush2.msra.mxu0 0.0
    %4121 = vmatprep.subr.mxu0 0.0
    %4122 = vmatpush2.msra.mxu0 0.0
    %4123 = vmatprep.subr.mxu0 0.0
    %4124 = vmatpush2.msra.mxu0 0.0
    %4125 = vmatprep.mubr.f32.mxu0 0.0
    %v4126 = vand.u32 %v4055, 4294901760
    %v4127 = vsub.f32 %v4055, %v4126
    %v4128 = vand.u32 %v4127, 4294901760
    %v4129 = vsub.f32 %v4127, %v4128
    %v4130 = vand.u32 %v4129, 4294901760
    %4131 = vmatmul.mubr.f32.gmra.mxu0 %v4130
    %v4132 = vpop.f32.mrf.mxu0
    %v4133 = vadd.f32 0.0, %v4132
    %v4134 = vpop.f32.mrf.mxu0
    %4135 = vmatprep.mubr.f32.mxu0 0.0
    %v4136 = vand.u32 %v4058, 4294901760
    %v4137 = vsub.f32 %v4058, %v4136
    %v4138 = vand.u32 %v4137, 4294901760
    %v4139 = vsub.f32 %v4137, %v4138
    %v4140 = vand.u32 %v4139, 4294901760
    %4141 = vmatmul.mubr.f32.gmra.mxu0 %v4140
    %v4142 = vpop.f32.mrf.mxu0
    %v4143 = vadd.f32 0.0, %v4142
    %v4144 = vpop.f32.mrf.mxu0
    %4145 = vdwg.mxu0
    %4146 = vmatprep.subr.mxu0 0.0
    %4147 = vmatpush1.msra.mxu0 0.0
    %4148 = vmatprep.subr.mxu0 0.0
    %4149 = vmatpush1.msra.mxu0 0.0
    %4150 = vmatprep.subr.mxu0 0.0
    %4151 = vmatpush1.msra.mxu0 0.0
    %4152 = vmatprep.subr.mxu0 0.0
    %4153 = vmatpush1.msra.mxu0 0.0
    %4154 = vmatprep.subr.mxu0 0.0
    %4155 = vmatpush1.msra.mxu0 0.0
    %4156 = vmatprep.subr.mxu0 0.0
    %4157 = vmatpush1.msra.mxu0 0.0
    %4158 = vmatprep.subr.mxu0 0.0
    %4159 = vmatpush1.msra.mxu0 0.0
    %4160 = vmatprep.subr.mxu0 0.0
    %4161 = vmatpush1.msra.mxu0 0.0
    %4162 = vmatprep.subr.mxu0 0.0
    %4163 = vmatpush1.msra.mxu0 0.0
    %4164 = vmatprep.subr.mxu0 0.0
    %4165 = vmatpush1.msra.mxu0 0.0
    %4166 = vmatprep.subr.mxu0 0.0
    %4167 = vmatpush1.msra.mxu0 0.0
    %4168 = vmatprep.subr.mxu0 0.0
    %4169 = vmatpush1.msra.mxu0 0.0
    %4170 = vmatprep.subr.mxu0 0.0
    %4171 = vmatpush1.msra.mxu0 0.0
    %4172 = vmatprep.subr.mxu0 0.0
    %4173 = vmatpush1.msra.mxu0 0.0
    %4174 = vmatprep.subr.mxu0 0.0
    %4175 = vmatpush1.msra.mxu0 0.0
    %4176 = vmatprep.subr.mxu0 0.0
    %v4177 = vand.u32 %v4053, 4294901760
    %v4178 = vsub.f32 %v4053, %v4177
    %v4179 = vand.u32 %v4178, 4294901760
    %v4180 = vsub.f32 %v4178, %v4179
    %v4181 = vand.u32 %v4180, 4294901760
    %4182 = vmatpush1.msra.mxu0 %v4181
    %4183 = vmatprep.subr.mxu0 0.0
    %4184 = vmatpush2.msra.mxu0 0.0
    %4185 = vmatprep.subr.mxu0 0.0
    %4186 = vmatpush2.msra.mxu0 0.0
    %4187 = vmatprep.subr.mxu0 0.0
    %4188 = vmatpush2.msra.mxu0 0.0
    %4189 = vmatprep.subr.mxu0 0.0
    %4190 = vmatpush2.msra.mxu0 0.0
    %4191 = vmatprep.subr.mxu0 0.0
    %4192 = vmatpush2.msra.mxu0 0.0
    %4193 = vmatprep.subr.mxu0 0.0
    %4194 = vmatpush2.msra.mxu0 0.0
    %4195 = vmatprep.subr.mxu0 0.0
    %4196 = vmatpush2.msra.mxu0 0.0
    %4197 = vmatprep.subr.mxu0 0.0
    %4198 = vmatpush2.msra.mxu0 0.0
    %4199 = vmatprep.subr.mxu0 0.0
    %4200 = vmatpush2.msra.mxu0 0.0
    %4201 = vmatprep.subr.mxu0 0.0
    %4202 = vmatpush2.msra.mxu0 0.0
    %4203 = vmatprep.subr.mxu0 0.0
    %4204 = vmatpush2.msra.mxu0 0.0
    %4205 = vmatprep.subr.mxu0 0.0
    %4206 = vmatpush2.msra.mxu0 0.0
    %4207 = vmatprep.subr.mxu0 0.0
    %4208 = vmatpush2.msra.mxu0 0.0
    %4209 = vmatprep.subr.mxu0 0.0
    %4210 = vmatpush2.msra.mxu0 0.0
    %4211 = vmatprep.subr.mxu0 0.0
    %4212 = vmatpush2.msra.mxu0 0.0
    %4213 = vmatprep.subr.mxu0 0.0
    %4214 = vmatpush2.msra.mxu0 0.0
    %4215 = vmatprep.mubr.f32.mxu0 0.0
    %v4216 = vand.u32 %v4055, 4294901760
    %4217 = vmatmul.mubr.f32.gmra.mxu0 %v4216
    %v4218 = vpop.f32.mrf.mxu0
    %v4219 = vadd.f32 %v4133, %v4218
    %v4220 = vpop.f32.mrf.mxu0
    %4221 = vmatprep.mubr.f32.mxu0 0.0
    %v4222 = vand.u32 %v4058, 4294901760
    %4223 = vmatmul.mubr.f32.gmra.mxu0 %v4222
    %v4224 = vpop.f32.mrf.mxu0
    %v4225 = vadd.f32 %v4143, %v4224
    %v4226 = vpop.f32.mrf.mxu0
    %4227 = vdwg.mxu0
    %4228 = vmatprep.subr.mxu0 0.0
    %4229 = vmatpush1.msra.mxu0 0.0
    %4230 = vmatprep.subr.mxu0 0.0
    %4231 = vmatpush1.msra.mxu0 0.0
    %4232 = vmatprep.subr.mxu0 0.0
    %4233 = vmatpush1.msra.mxu0 0.0
    %4234 = vmatprep.subr.mxu0 0.0
    %4235 = vmatpush1.msra.mxu0 0.0
    %4236 = vmatprep.subr.mxu0 0.0
    %4237 = vmatpush1.msra.mxu0 0.0
    %4238 = vmatprep.subr.mxu0 0.0
    %4239 = vmatpush1.msra.mxu0 0.0
    %4240 = vmatprep.subr.mxu0 0.0
    %4241 = vmatpush1.msra.mxu0 0.0
    %4242 = vmatprep.subr.mxu0 0.0
    %4243 = vmatpush1.msra.mxu0 0.0
    %4244 = vmatprep.subr.mxu0 0.0
    %4245 = vmatpush1.msra.mxu0 0.0
    %4246 = vmatprep.subr.mxu0 0.0
    %4247 = vmatpush1.msra.mxu0 0.0
    %4248 = vmatprep.subr.mxu0 0.0
    %4249 = vmatpush1.msra.mxu0 0.0
    %4250 = vmatprep.subr.mxu0 0.0
    %4251 = vmatpush1.msra.mxu0 0.0
    %4252 = vmatprep.subr.mxu0 0.0
    %4253 = vmatpush1.msra.mxu0 0.0
    %4254 = vmatprep.subr.mxu0 0.0
    %4255 = vmatpush1.msra.mxu0 0.0
    %4256 = vmatprep.subr.mxu0 0.0
    %4257 = vmatpush1.msra.mxu0 0.0
    %4258 = vmatprep.subr.mxu0 0.0
    %v4259 = vand.u32 %v4053, 4294901760
    %v4260 = vsub.f32 %v4053, %v4259
    %4261 = vmatpush1.msra.mxu0 %v4260
    %4262 = vmatprep.subr.mxu0 0.0
    %4263 = vmatpush2.msra.mxu0 0.0
    %4264 = vmatprep.subr.mxu0 0.0
    %4265 = vmatpush2.msra.mxu0 0.0
    %4266 = vmatprep.subr.mxu0 0.0
    %4267 = vmatpush2.msra.mxu0 0.0
    %4268 = vmatprep.subr.mxu0 0.0
    %4269 = vmatpush2.msra.mxu0 0.0
    %4270 = vmatprep.subr.mxu0 0.0
    %4271 = vmatpush2.msra.mxu0 0.0
    %4272 = vmatprep.subr.mxu0 0.0
    %4273 = vmatpush2.msra.mxu0 0.0
    %4274 = vmatprep.subr.mxu0 0.0
    %4275 = vmatpush2.msra.mxu0 0.0
    %4276 = vmatprep.subr.mxu0 0.0
    %4277 = vmatpush2.msra.mxu0 0.0
    %4278 = vmatprep.subr.mxu0 0.0
    %4279 = vmatpush2.msra.mxu0 0.0
    %4280 = vmatprep.subr.mxu0 0.0
    %4281 = vmatpush2.msra.mxu0 0.0
    %4282 = vmatprep.subr.mxu0 0.0
    %4283 = vmatpush2.msra.mxu0 0.0
    %4284 = vmatprep.subr.mxu0 0.0
    %4285 = vmatpush2.msra.mxu0 0.0
    %4286 = vmatprep.subr.mxu0 0.0
    %4287 = vmatpush2.msra.mxu0 0.0
    %4288 = vmatprep.subr.mxu0 0.0
    %4289 = vmatpush2.msra.mxu0 0.0
    %4290 = vmatprep.subr.mxu0 0.0
    %4291 = vmatpush2.msra.mxu0 0.0
    %4292 = vmatprep.subr.mxu0 0.0
    %4293 = vmatpush2.msra.mxu0 0.0
    %4294 = vmatprep.mubr.f32.mxu0 0.0
    %v4295 = vand.u32 %v4055, 4294901760
    %v4296 = vsub.f32 %v4055, %v4295
    %4297 = vmatmul.mubr.f32.gmra.mxu0 %v4296
    %v4298 = vpop.f32.mrf.mxu0
    %v4299 = vadd.f32 %v4219, %v4298
    %v4300 = vpop.f32.mrf.mxu0
    %4301 = vmatprep.mubr.f32.mxu0 0.0
    %v4302 = vand.u32 %v4058, 4294901760
    %v4303 = vsub.f32 %v4058, %v4302
    %4304 = vmatmul.mubr.f32.gmra.mxu0 %v4303
    %v4305 = vpop.f32.mrf.mxu0
    %v4306 = vadd.f32 %v4225, %v4305
    %v4307 = vpop.f32.mrf.mxu0
    %4308 = vdwg.mxu0
    %4309 = vmatprep.subr.mxu0 0.0
    %4310 = vmatpush1.msra.mxu0 0.0
    %4311 = vmatprep.subr.mxu0 0.0
    %4312 = vmatpush1.msra.mxu0 0.0
    %4313 = vmatprep.subr.mxu0 0.0
    %4314 = vmatpush1.msra.mxu0 0.0
    %4315 = vmatprep.subr.mxu0 0.0
    %4316 = vmatpush1.msra.mxu0 0.0
    %4317 = vmatprep.subr.mxu0 0.0
    %4318 = vmatpush1.msra.mxu0 0.0
    %4319 = vmatprep.subr.mxu0 0.0
    %4320 = vmatpush1.msra.mxu0 0.0
    %4321 = vmatprep.subr.mxu0 0.0
    %4322 = vmatpush1.msra.mxu0 0.0
    %4323 = vmatprep.subr.mxu0 0.0
    %4324 = vmatpush1.msra.mxu0 0.0
    %4325 = vmatprep.subr.mxu0 0.0
    %4326 = vmatpush1.msra.mxu0 0.0
    %4327 = vmatprep.subr.mxu0 0.0
    %4328 = vmatpush1.msra.mxu0 0.0
    %4329 = vmatprep.subr.mxu0 0.0
    %4330 = vmatpush1.msra.mxu0 0.0
    %4331 = vmatprep.subr.mxu0 0.0
    %4332 = vmatpush1.msra.mxu0 0.0
    %4333 = vmatprep.subr.mxu0 0.0
    %4334 = vmatpush1.msra.mxu0 0.0
    %4335 = vmatprep.subr.mxu0 0.0
    %4336 = vmatpush1.msra.mxu0 0.0
    %4337 = vmatprep.subr.mxu0 0.0
    %4338 = vmatpush1.msra.mxu0 0.0
    %4339 = vmatprep.subr.mxu0 0.0
    %v4340 = vand.u32 %v4053, 4294901760
    %4341 = vmatpush1.msra.mxu0 %v4340
    %4342 = vmatprep.subr.mxu0 0.0
    %4343 = vmatpush2.msra.mxu0 0.0
    %4344 = vmatprep.subr.mxu0 0.0
    %4345 = vmatpush2.msra.mxu0 0.0
    %4346 = vmatprep.subr.mxu0 0.0
    %4347 = vmatpush2.msra.mxu0 0.0
    %4348 = vmatprep.subr.mxu0 0.0
    %4349 = vmatpush2.msra.mxu0 0.0
    %4350 = vmatprep.subr.mxu0 0.0
    %4351 = vmatpush2.msra.mxu0 0.0
    %4352 = vmatprep.subr.mxu0 0.0
    %4353 = vmatpush2.msra.mxu0 0.0
    %4354 = vmatprep.subr.mxu0 0.0
    %4355 = vmatpush2.msra.mxu0 0.0
    %4356 = vmatprep.subr.mxu0 0.0
    %4357 = vmatpush2.msra.mxu0 0.0
    %4358 = vmatprep.subr.mxu0 0.0
    %4359 = vmatpush2.msra.mxu0 0.0
    %4360 = vmatprep.subr.mxu0 0.0
    %4361 = vmatpush2.msra.mxu0 0.0
    %4362 = vmatprep.subr.mxu0 0.0
    %4363 = vmatpush2.msra.mxu0 0.0
    %4364 = vmatprep.subr.mxu0 0.0
    %4365 = vmatpush2.msra.mxu0 0.0
    %4366 = vmatprep.subr.mxu0 0.0
    %4367 = vmatpush2.msra.mxu0 0.0
    %4368 = vmatprep.subr.mxu0 0.0
    %4369 = vmatpush2.msra.mxu0 0.0
    %4370 = vmatprep.subr.mxu0 0.0
    %4371 = vmatpush2.msra.mxu0 0.0
    %4372 = vmatprep.subr.mxu0 0.0
    %4373 = vmatpush2.msra.mxu0 0.0
    %4374 = vmatprep.mubr.f32.mxu0 0.0
    %v4375 = vand.u32 %v4055, 4294901760
    %v4376 = vsub.f32 %v4055, %v4375
    %v4377 = vand.u32 %v4376, 4294901760
    %4378 = vmatmul.mubr.f32.gmra.mxu0 %v4377
    %v4379 = vpop.f32.mrf.mxu0
    %v4380 = vadd.f32 %v4299, %v4379
    %v4381 = vpop.f32.mrf.mxu0
    %4382 = vmatprep.mubr.f32.mxu0 0.0
    %v4383 = vand.u32 %v4058, 4294901760
    %v4384 = vsub.f32 %v4058, %v4383
    %v4385 = vand.u32 %v4384, 4294901760
    %4386 = vmatmul.mubr.f32.gmra.mxu0 %v4385
    %v4387 = vpop.f32.mrf.mxu0
    %v4388 = vadd.f32 %v4306, %v4387
    %v4389 = vpop.f32.mrf.mxu0
    %4390 = vdwg.mxu0
    %4391 = vmatprep.subr.mxu0 0.0
    %4392 = vmatpush1.msra.mxu0 0.0
    %4393 = vmatprep.subr.mxu0 0.0
    %4394 = vmatpush1.msra.mxu0 0.0
    %4395 = vmatprep.subr.mxu0 0.0
    %4396 = vmatpush1.msra.mxu0 0.0
    %4397 = vmatprep.subr.mxu0 0.0
    %4398 = vmatpush1.msra.mxu0 0.0
    %4399 = vmatprep.subr.mxu0 0.0
    %4400 = vmatpush1.msra.mxu0 0.0
    %4401 = vmatprep.subr.mxu0 0.0
    %4402 = vmatpush1.msra.mxu0 0.0
    %4403 = vmatprep.subr.mxu0 0.0
    %4404 = vmatpush1.msra.mxu0 0.0
    %4405 = vmatprep.subr.mxu0 0.0
    %4406 = vmatpush1.msra.mxu0 0.0
    %4407 = vmatprep.subr.mxu0 0.0
    %4408 = vmatpush1.msra.mxu0 0.0
    %4409 = vmatprep.subr.mxu0 0.0
    %4410 = vmatpush1.msra.mxu0 0.0
    %4411 = vmatprep.subr.mxu0 0.0
    %4412 = vmatpush1.msra.mxu0 0.0
    %4413 = vmatprep.subr.mxu0 0.0
    %4414 = vmatpush1.msra.mxu0 0.0
    %4415 = vmatprep.subr.mxu0 0.0
    %4416 = vmatpush1.msra.mxu0 0.0
    %4417 = vmatprep.subr.mxu0 0.0
    %4418 = vmatpush1.msra.mxu0 0.0
    %4419 = vmatprep.subr.mxu0 0.0
    %4420 = vmatpush1.msra.mxu0 0.0
    %4421 = vmatprep.subr.mxu0 0.0
    %v4422 = vand.u32 %v4053, 4294901760
    %v4423 = vsub.f32 %v4053, %v4422
    %v4424 = vand.u32 %v4423, 4294901760
    %4425 = vmatpush1.msra.mxu0 %v4424
    %4426 = vmatprep.subr.mxu0 0.0
    %4427 = vmatpush2.msra.mxu0 0.0
    %4428 = vmatprep.subr.mxu0 0.0
    %4429 = vmatpush2.msra.mxu0 0.0
    %4430 = vmatprep.subr.mxu0 0.0
    %4431 = vmatpush2.msra.mxu0 0.0
    %4432 = vmatprep.subr.mxu0 0.0
    %4433 = vmatpush2.msra.mxu0 0.0
    %4434 = vmatprep.subr.mxu0 0.0
    %4435 = vmatpush2.msra.mxu0 0.0
    %4436 = vmatprep.subr.mxu0 0.0
    %4437 = vmatpush2.msra.mxu0 0.0
    %4438 = vmatprep.subr.mxu0 0.0
    %4439 = vmatpush2.msra.mxu0 0.0
    %4440 = vmatprep.subr.mxu0 0.0
    %4441 = vmatpush2.msra.mxu0 0.0
    %4442 = vmatprep.subr.mxu0 0.0
    %4443 = vmatpush2.msra.mxu0 0.0
    %4444 = vmatprep.subr.mxu0 0.0
    %4445 = vmatpush2.msra.mxu0 0.0
    %4446 = vmatprep.subr.mxu0 0.0
    %4447 = vmatpush2.msra.mxu0 0.0
    %4448 = vmatprep.subr.mxu0 0.0
    %4449 = vmatpush2.msra.mxu0 0.0
    %4450 = vmatprep.subr.mxu0 0.0
    %4451 = vmatpush2.msra.mxu0 0.0
    %4452 = vmatprep.subr.mxu0 0.0
    %4453 = vmatpush2.msra.mxu0 0.0
    %4454 = vmatprep.subr.mxu0 0.0
    %4455 = vmatpush2.msra.mxu0 0.0
    %4456 = vmatprep.subr.mxu0 0.0
    %4457 = vmatpush2.msra.mxu0 0.0
    %4458 = vmatprep.mubr.f32.mxu0 0.0
    %v4459 = vand.u32 %v4055, 4294901760
    %4460 = vmatmul.mubr.f32.gmra.mxu0 %v4459
    %v4461 = vpop.f32.mrf.mxu0
    %v4462 = vadd.f32 %v4380, %v4461
    %v4463 = vpop.f32.mrf.mxu0
    %4464 = vmatprep.mubr.f32.mxu0 0.0
    %v4465 = vand.u32 %v4058, 4294901760
    %4466 = vmatmul.mubr.f32.gmra.mxu0 %v4465
    %v4467 = vpop.f32.mrf.mxu0
    %v4468 = vadd.f32 %v4388, %v4467
    %v4469 = vpop.f32.mrf.mxu0
    %4470 = vdwg.mxu0
    %4471 = vmatprep.subr.mxu0 0.0
    %4472 = vmatpush1.msra.mxu0 0.0
    %4473 = vmatprep.subr.mxu0 0.0
    %4474 = vmatpush1.msra.mxu0 0.0
    %4475 = vmatprep.subr.mxu0 0.0
    %4476 = vmatpush1.msra.mxu0 0.0
    %4477 = vmatprep.subr.mxu0 0.0
    %4478 = vmatpush1.msra.mxu0 0.0
    %4479 = vmatprep.subr.mxu0 0.0
    %4480 = vmatpush1.msra.mxu0 0.0
    %4481 = vmatprep.subr.mxu0 0.0
    %4482 = vmatpush1.msra.mxu0 0.0
    %4483 = vmatprep.subr.mxu0 0.0
    %4484 = vmatpush1.msra.mxu0 0.0
    %4485 = vmatprep.subr.mxu0 0.0
    %4486 = vmatpush1.msra.mxu0 0.0
    %4487 = vmatprep.subr.mxu0 0.0
    %4488 = vmatpush1.msra.mxu0 0.0
    %4489 = vmatprep.subr.mxu0 0.0
    %4490 = vmatpush1.msra.mxu0 0.0
    %4491 = vmatprep.subr.mxu0 0.0
    %4492 = vmatpush1.msra.mxu0 0.0
    %4493 = vmatprep.subr.mxu0 0.0
    %4494 = vmatpush1.msra.mxu0 0.0
    %4495 = vmatprep.subr.mxu0 0.0
    %4496 = vmatpush1.msra.mxu0 0.0
    %4497 = vmatprep.subr.mxu0 0.0
    %4498 = vmatpush1.msra.mxu0 0.0
    %4499 = vmatprep.subr.mxu0 0.0
    %4500 = vmatpush1.msra.mxu0 0.0
    %4501 = vmatprep.subr.mxu0 0.0
    %v4502 = vand.u32 %v4053, 4294901760
    %4503 = vmatpush1.msra.mxu0 %v4502
    %4504 = vmatprep.subr.mxu0 0.0
    %4505 = vmatpush2.msra.mxu0 0.0
    %4506 = vmatprep.subr.mxu0 0.0
    %4507 = vmatpush2.msra.mxu0 0.0
    %4508 = vmatprep.subr.mxu0 0.0
    %4509 = vmatpush2.msra.mxu0 0.0
    %4510 = vmatprep.subr.mxu0 0.0
    %4511 = vmatpush2.msra.mxu0 0.0
    %4512 = vmatprep.subr.mxu0 0.0
    %4513 = vmatpush2.msra.mxu0 0.0
    %4514 = vmatprep.subr.mxu0 0.0
    %4515 = vmatpush2.msra.mxu0 0.0
    %4516 = vmatprep.subr.mxu0 0.0
    %4517 = vmatpush2.msra.mxu0 0.0
    %4518 = vmatprep.subr.mxu0 0.0
    %4519 = vmatpush2.msra.mxu0 0.0
    %4520 = vmatprep.subr.mxu0 0.0
    %4521 = vmatpush2.msra.mxu0 0.0
    %4522 = vmatprep.subr.mxu0 0.0
    %4523 = vmatpush2.msra.mxu0 0.0
    %4524 = vmatprep.subr.mxu0 0.0
    %4525 = vmatpush2.msra.mxu0 0.0
    %4526 = vmatprep.subr.mxu0 0.0
    %4527 = vmatpush2.msra.mxu0 0.0
    %4528 = vmatprep.subr.mxu0 0.0
    %4529 = vmatpush2.msra.mxu0 0.0
    %4530 = vmatprep.subr.mxu0 0.0
    %4531 = vmatpush2.msra.mxu0 0.0
    %4532 = vmatprep.subr.mxu0 0.0
    %4533 = vmatpush2.msra.mxu0 0.0
    %4534 = vmatprep.subr.mxu0 0.0
    %4535 = vmatpush2.msra.mxu0 0.0
    %4536 = vmatprep.mubr.f32.mxu0 0.0
    %v4537 = vand.u32 %v4055, 4294901760
    %4538 = vmatmul.mubr.f32.gmra.mxu0 %v4537
    %v4539 = vpop.f32.mrf.mxu0
    %v4540 = vadd.f32 %v4462, %v4539
    %v4541 = vpop.f32.mrf.mxu0
    %4542 = vmatprep.mubr.f32.mxu0 0.0
    %v4543 = vand.u32 %v4058, 4294901760
    %4544 = vmatmul.mubr.f32.gmra.mxu0 %v4543
    %v4545 = vpop.f32.mrf.mxu0
    %v4546 = vadd.f32 %v4468, %v4545
    %v4547 = vpop.f32.mrf.mxu0
    %4548 = vdwg.mxu0
    %v4549 = vadd.f32 %v4044, %v4540
    %v4550 = vadd.f32 %v4050, %v4546
    %vm4551 = vcmp.ge.f32.partialorder %v4549, 0.0
    %vm4552 = vcmp.ge.f32.partialorder %v4550, 0.0
    %v4553 = vmul.f32 %v4549, 0.2
    %v4554 = vmul.f32 %v4550, 0.2
    %v4555 = vsel %vm4551, %v4549, %v4553
    %v4556 = vsel %vm4552, %v4550, %v4554
    %v4557 = vsel %vm30, %v4555, -inf
    %v4558 = vsel %vm30, %v4556, -inf
    %v4559 = vmax.f32 %v4557, %v4558
    %4560 = vmax.xlane.f32.xlu0 %v4559
    %v4561 = vpop.xlane.xlu0 %4560
    %v4562 = vrot.slane %v4561, 4
    %v4563 = vmax.f32 %v4561, %v4562
    %v4564 = vrot.slane %v4563, 2
    %v4565 = vmax.f32 %v4563, %v4564
    %v4566 = vrot.slane %v4565, 1
    %v4567 = vmax.f32 %v4565, %v4566
    %s4568 = vtos %v4567
    %v4569 = vstv %s4568
    %v4570 = vsub.f32 %v4555, %v4569
    %v4571 = vsub.f32 %v4556, %v4569
    %v4572 = vmul.f32 %v4570, 1.442695
    %v4573 = vpow.pop %v4572
    %v4574 = vmul.f32 %v4571, 1.442695
    %v4575 = vpow.pop %v4574
    %4576 = vxpose.xlu0.b32.start [1/16] %v20, 128
    %4577 = vxpose.xlu0.b32.cont [2/16] %v21, 128
    %4578 = vxpose.xlu0.b32.cont [3/16] 0.0, 128
    %4579 = vxpose.xlu0.b32.cont [4/16] 0.0, 128
    %4580 = vxpose.xlu0.b32.cont [5/16] 0.0, 128
    %4581 = vxpose.xlu0.b32.cont [6/16] 0.0, 128
    %4582 = vxpose.xlu0.b32.cont [7/16] 0.0, 128
    %4583 = vxpose.xlu0.b32.cont [8/16] 0.0, 128
    %4584 = vxpose.xlu0.b32.cont [9/16] 0.0, 128
    %4585 = vxpose.xlu0.b32.cont [10/16] 0.0, 128
    %4586 = vxpose.xlu0.b32.cont [11/16] 0.0, 128
    %4587 = vxpose.xlu0.b32.cont [12/16] 0.0, 128
    %4588 = vxpose.xlu0.b32.cont [13/16] 0.0, 128
    %4589 = vxpose.xlu0.b32.cont [14/16] 0.0, 128
    %4590 = vxpose.xlu0.b32.cont [15/16] 0.0, 128
    %4591 = vxpose.xlu0.b32.end [16/16] 0.0, 128
    %v4592 = vpop.trf.xlu0
    %v4593 = vpop.trf.xlu0
    %v4594 = vpop.trf.xlu0
    %v4595 = vpop.trf.xlu0
    %v4596 = vpop.trf.xlu0
    %v4597 = vpop.trf.xlu0
    %v4598 = vpop.trf.xlu0
    %v4599 = vpop.trf.xlu0
    %v4600 = vpop.trf.xlu0
    %v4601 = vpop.trf.xlu0
    %v4602 = vpop.trf.xlu0
    %v4603 = vpop.trf.xlu0
    %v4604 = vpop.trf.xlu0
    %v4605 = vpop.trf.xlu0
    %v4606 = vpop.trf.xlu0
    %v4607 = vpop.trf.xlu0
    %vm4608 = vcmask 130048
    %v4610 = vsel %vm4608, %v4592, 0
    %4612 = vmatprep.subr.mxu0 0.0
    %4613 = vmatpush1.msra.mxu0 0.0
    %4614 = vmatprep.subr.mxu0 0.0
    %4615 = vmatpush1.msra.mxu0 0.0
    %4616 = vmatprep.subr.mxu0 0.0
    %4617 = vmatpush1.msra.mxu0 0.0
    %4618 = vmatprep.subr.mxu0 0.0
    %4619 = vmatpush1.msra.mxu0 0.0
    %4620 = vmatprep.subr.mxu0 0.0
    %4621 = vmatpush1.msra.mxu0 0.0
    %4622 = vmatprep.subr.mxu0 0.0
    %4623 = vmatpush1.msra.mxu0 0.0
    %4624 = vmatprep.subr.mxu0 0.0
    %4625 = vmatpush1.msra.mxu0 0.0
    %4626 = vmatprep.subr.mxu0 0.0
    %4627 = vmatpush1.msra.mxu0 0.0
    %4628 = vmatprep.subr.mxu0 0.0
    %4629 = vmatpush1.msra.mxu0 0.0
    %4630 = vmatprep.subr.mxu0 0.0
    %4631 = vmatpush1.msra.mxu0 0.0
    %4632 = vmatprep.subr.mxu0 0.0
    %4633 = vmatpush1.msra.mxu0 0.0
    %4634 = vmatprep.subr.mxu0 0.0
    %4635 = vmatpush1.msra.mxu0 0.0
    %4636 = vmatprep.subr.mxu0 0.0
    %4637 = vmatpush1.msra.mxu0 0.0
    %4638 = vmatprep.subr.mxu0 0.0
    %4639 = vmatpush1.msra.mxu0 0.0
    %4640 = vmatprep.subr.mxu0 0.0
    %v4641 = vand.u32 %v4575, 4294901760
    %4642 = vmatpush1.msra.mxu0 %v4641
    %4643 = vmatprep.subr.mxu0 0.0
    %v4644 = vand.u32 %v4573, 4294901760
    %4645 = vmatpush1.msra.mxu0 %v4644
    %4646 = vmatprep.subr.mxu0 0.0
    %4647 = vmatpush2.msra.mxu0 0.0
    %4648 = vmatprep.subr.mxu0 0.0
    %4649 = vmatpush2.msra.mxu0 0.0
    %4650 = vmatprep.subr.mxu0 0.0
    %4651 = vmatpush2.msra.mxu0 0.0
    %4652 = vmatprep.subr.mxu0 0.0
    %4653 = vmatpush2.msra.mxu0 0.0
    %4654 = vmatprep.subr.mxu0 0.0
    %4655 = vmatpush2.msra.mxu0 0.0
    %4656 = vmatprep.subr.mxu0 0.0
    %4657 = vmatpush2.msra.mxu0 0.0
    %4658 = vmatprep.subr.mxu0 0.0
    %4659 = vmatpush2.msra.mxu0 0.0
    %4660 = vmatprep.subr.mxu0 0.0
    %4661 = vmatpush2.msra.mxu0 0.0
    %4662 = vmatprep.subr.mxu0 0.0
    %4663 = vmatpush2.msra.mxu0 0.0
    %4664 = vmatprep.subr.mxu0 0.0
    %4665 = vmatpush2.msra.mxu0 0.0
    %4666 = vmatprep.subr.mxu0 0.0
    %4667 = vmatpush2.msra.mxu0 0.0
    %4668 = vmatprep.subr.mxu0 0.0
    %4669 = vmatpush2.msra.mxu0 0.0
    %4670 = vmatprep.subr.mxu0 0.0
    %4671 = vmatpush2.msra.mxu0 0.0
    %4672 = vmatprep.subr.mxu0 0.0
    %4673 = vmatpush2.msra.mxu0 0.0
    %4674 = vmatprep.subr.mxu0 0.0
    %4675 = vmatpush2.msra.mxu0 0.0
    %4676 = vmatprep.subr.mxu0 0.0
    %4677 = vmatpush2.msra.mxu0 0.0
    %4678 = vmatprep.mubr.f32.mxu0 0.0
    %v4679 = vand.u32 %v4610, 4294901760
    %v4680 = vsub.f32 %v4610, %v4679
    %v4681 = vand.u32 %v4680, 4294901760
    %v4682 = vsub.f32 %v4680, %v4681
    %v4683 = vand.u32 %v4682, 4294901760
    %4684 = vmatmul.mubr.f32.gmra.mxu0 %v4683
    %v4685 = vpop.f32.mrf.mxu0
    %v4686 = vadd.f32 0.0, %v4685
    %v4687 = vpop.f32.mrf.mxu0
    %4688 = vdwg.mxu0
    %4689 = vmatprep.subr.mxu0 0.0
    %4690 = vmatpush1.msra.mxu0 0.0
    %4691 = vmatprep.subr.mxu0 0.0
    %4692 = vmatpush1.msra.mxu0 0.0
    %4693 = vmatprep.subr.mxu0 0.0
    %4694 = vmatpush1.msra.mxu0 0.0
    %4695 = vmatprep.subr.mxu0 0.0
    %4696 = vmatpush1.msra.mxu0 0.0
    %4697 = vmatprep.subr.mxu0 0.0
    %4698 = vmatpush1.msra.mxu0 0.0
    %4699 = vmatprep.subr.mxu0 0.0
    %4700 = vmatpush1.msra.mxu0 0.0
    %4701 = vmatprep.subr.mxu0 0.0
    %4702 = vmatpush1.msra.mxu0 0.0
    %4703 = vmatprep.subr.mxu0 0.0
    %4704 = vmatpush1.msra.mxu0 0.0
    %4705 = vmatprep.subr.mxu0 0.0
    %4706 = vmatpush1.msra.mxu0 0.0
    %4707 = vmatprep.subr.mxu0 0.0
    %4708 = vmatpush1.msra.mxu0 0.0
    %4709 = vmatprep.subr.mxu0 0.0
    %4710 = vmatpush1.msra.mxu0 0.0
    %4711 = vmatprep.subr.mxu0 0.0
    %4712 = vmatpush1.msra.mxu0 0.0
    %4713 = vmatprep.subr.mxu0 0.0
    %4714 = vmatpush1.msra.mxu0 0.0
    %4715 = vmatprep.subr.mxu0 0.0
    %4716 = vmatpush1.msra.mxu0 0.0
    %4717 = vmatprep.subr.mxu0 0.0
    %v4718 = vand.u32 %v4575, 4294901760
    %v4719 = vsub.f32 %v4575, %v4718
    %v4720 = vand.u32 %v4719, 4294901760
    %v4721 = vsub.f32 %v4719, %v4720
    %v4722 = vand.u32 %v4721, 4294901760
    %4723 = vmatpush1.msra.mxu0 %v4722
    %4724 = vmatprep.subr.mxu0 0.0
    %v4725 = vand.u32 %v4573, 4294901760
    %v4726 = vsub.f32 %v4573, %v4725
    %v4727 = vand.u32 %v4726, 4294901760
    %v4728 = vsub.f32 %v4726, %v4727
    %v4729 = vand.u32 %v4728, 4294901760
    %4730 = vmatpush1.msra.mxu0 %v4729
    %4731 = vmatprep.subr.mxu0 0.0
    %4732 = vmatpush2.msra.mxu0 0.0
    %4733 = vmatprep.subr.mxu0 0.0
    %4734 = vmatpush2.msra.mxu0 0.0
    %4735 = vmatprep.subr.mxu0 0.0
    %4736 = vmatpush2.msra.mxu0 0.0
    %4737 = vmatprep.subr.mxu0 0.0
    %4738 = vmatpush2.msra.mxu0 0.0
    %4739 = vmatprep.subr.mxu0 0.0
    %4740 = vmatpush2.msra.mxu0 0.0
    %4741 = vmatprep.subr.mxu0 0.0
    %4742 = vmatpush2.msra.mxu0 0.0
    %4743 = vmatprep.subr.mxu0 0.0
    %4744 = vmatpush2.msra.mxu0 0.0
    %4745 = vmatprep.subr.mxu0 0.0
    %4746 = vmatpush2.msra.mxu0 0.0
    %4747 = vmatprep.subr.mxu0 0.0
    %4748 = vmatpush2.msra.mxu0 0.0
    %4749 = vmatprep.subr.mxu0 0.0
    %4750 = vmatpush2.msra.mxu0 0.0
    %4751 = vmatprep.subr.mxu0 0.0
    %4752 = vmatpush2.msra.mxu0 0.0
    %4753 = vmatprep.subr.mxu0 0.0
    %4754 = vmatpush2.msra.mxu0 0.0
    %4755 = vmatprep.subr.mxu0 0.0
    %4756 = vmatpush2.msra.mxu0 0.0
    %4757 = vmatprep.subr.mxu0 0.0
    %4758 = vmatpush2.msra.mxu0 0.0
    %4759 = vmatprep.subr.mxu0 0.0
    %4760 = vmatpush2.msra.mxu0 0.0
    %4761 = vmatprep.subr.mxu0 0.0
    %4762 = vmatpush2.msra.mxu0 0.0
    %4763 = vmatprep.mubr.f32.mxu0 0.0
    %v4764 = vand.u32 %v4610, 4294901760
    %4765 = vmatmul.mubr.f32.gmra.mxu0 %v4764
    %v4766 = vpop.f32.mrf.mxu0
    %v4767 = vadd.f32 %v4686, %v4766
    %v4768 = vpop.f32.mrf.mxu0
    %4769 = vdwg.mxu0
    %4770 = vmatprep.subr.mxu0 0.0
    %4771 = vmatpush1.msra.mxu0 0.0
    %4772 = vmatprep.subr.mxu0 0.0
    %4773 = vmatpush1.msra.mxu0 0.0
    %4774 = vmatprep.subr.mxu0 0.0
    %4775 = vmatpush1.msra.mxu0 0.0
    %4776 = vmatprep.subr.mxu0 0.0
    %4777 = vmatpush1.msra.mxu0 0.0
    %4778 = vmatprep.subr.mxu0 0.0
    %4779 = vmatpush1.msra.mxu0 0.0
    %4780 = vmatprep.subr.mxu0 0.0
    %4781 = vmatpush1.msra.mxu0 0.0
    %4782 = vmatprep.subr.mxu0 0.0
    %4783 = vmatpush1.msra.mxu0 0.0
    %4784 = vmatprep.subr.mxu0 0.0
    %4785 = vmatpush1.msra.mxu0 0.0
    %4786 = vmatprep.subr.mxu0 0.0
    %4787 = vmatpush1.msra.mxu0 0.0
    %4788 = vmatprep.subr.mxu0 0.0
    %4789 = vmatpush1.msra.mxu0 0.0
    %4790 = vmatprep.subr.mxu0 0.0
    %4791 = vmatpush1.msra.mxu0 0.0
    %4792 = vmatprep.subr.mxu0 0.0
    %4793 = vmatpush1.msra.mxu0 0.0
    %4794 = vmatprep.subr.mxu0 0.0
    %4795 = vmatpush1.msra.mxu0 0.0
    %4796 = vmatprep.subr.mxu0 0.0
    %4797 = vmatpush1.msra.mxu0 0.0
    %4798 = vmatprep.subr.mxu0 0.0
    %v4799 = vand.u32 %v4575, 4294901760
    %v4800 = vsub.f32 %v4575, %v4799
    %4801 = vmatpush1.msra.mxu0 %v4800
    %4802 = vmatprep.subr.mxu0 0.0
    %v4803 = vand.u32 %v4573, 4294901760
    %v4804 = vsub.f32 %v4573, %v4803
    %4805 = vmatpush1.msra.mxu0 %v4804
    %4806 = vmatprep.subr.mxu0 0.0
    %4807 = vmatpush2.msra.mxu0 0.0
    %4808 = vmatprep.subr.mxu0 0.0
    %4809 = vmatpush2.msra.mxu0 0.0
    %4810 = vmatprep.subr.mxu0 0.0
    %4811 = vmatpush2.msra.mxu0 0.0
    %4812 = vmatprep.subr.mxu0 0.0
    %4813 = vmatpush2.msra.mxu0 0.0
    %4814 = vmatprep.subr.mxu0 0.0
    %4815 = vmatpush2.msra.mxu0 0.0
    %4816 = vmatprep.subr.mxu0 0.0
    %4817 = vmatpush2.msra.mxu0 0.0
    %4818 = vmatprep.subr.mxu0 0.0
    %4819 = vmatpush2.msra.mxu0 0.0
    %4820 = vmatprep.subr.mxu0 0.0
    %4821 = vmatpush2.msra.mxu0 0.0
    %4822 = vmatprep.subr.mxu0 0.0
    %4823 = vmatpush2.msra.mxu0 0.0
    %4824 = vmatprep.subr.mxu0 0.0
    %4825 = vmatpush2.msra.mxu0 0.0
    %4826 = vmatprep.subr.mxu0 0.0
    %4827 = vmatpush2.msra.mxu0 0.0
    %4828 = vmatprep.subr.mxu0 0.0
    %4829 = vmatpush2.msra.mxu0 0.0
    %4830 = vmatprep.subr.mxu0 0.0
    %4831 = vmatpush2.msra.mxu0 0.0
    %4832 = vmatprep.subr.mxu0 0.0
    %4833 = vmatpush2.msra.mxu0 0.0
    %4834 = vmatprep.subr.mxu0 0.0
    %4835 = vmatpush2.msra.mxu0 0.0
    %4836 = vmatprep.subr.mxu0 0.0
    %4837 = vmatpush2.msra.mxu0 0.0
    %4838 = vmatprep.mubr.f32.mxu0 0.0
    %v4839 = vand.u32 %v4610, 4294901760
    %v4840 = vsub.f32 %v4610, %v4839
    %4841 = vmatmul.mubr.f32.gmra.mxu0 %v4840
    %v4842 = vpop.f32.mrf.mxu0
    %v4843 = vadd.f32 %v4767, %v4842
    %v4844 = vpop.f32.mrf.mxu0
    %4845 = vdwg.mxu0
    %4846 = vmatprep.subr.mxu0 0.0
    %4847 = vmatpush1.msra.mxu0 0.0
    %4848 = vmatprep.subr.mxu0 0.0
    %4849 = vmatpush1.msra.mxu0 0.0
    %4850 = vmatprep.subr.mxu0 0.0
    %4851 = vmatpush1.msra.mxu0 0.0
    %4852 = vmatprep.subr.mxu0 0.0
    %4853 = vmatpush1.msra.mxu0 0.0
    %4854 = vmatprep.subr.mxu0 0.0
    %4855 = vmatpush1.msra.mxu0 0.0
    %4856 = vmatprep.subr.mxu0 0.0
    %4857 = vmatpush1.msra.mxu0 0.0
    %4858 = vmatprep.subr.mxu0 0.0
    %4859 = vmatpush1.msra.mxu0 0.0
    %4860 = vmatprep.subr.mxu0 0.0
    %4861 = vmatpush1.msra.mxu0 0.0
    %4862 = vmatprep.subr.mxu0 0.0
    %4863 = vmatpush1.msra.mxu0 0.0
    %4864 = vmatprep.subr.mxu0 0.0
    %4865 = vmatpush1.msra.mxu0 0.0
    %4866 = vmatprep.subr.mxu0 0.0
    %4867 = vmatpush1.msra.mxu0 0.0
    %4868 = vmatprep.subr.mxu0 0.0
    %4869 = vmatpush1.msra.mxu0 0.0
    %4870 = vmatprep.subr.mxu0 0.0
    %4871 = vmatpush1.msra.mxu0 0.0
    %4872 = vmatprep.subr.mxu0 0.0
    %4873 = vmatpush1.msra.mxu0 0.0
    %4874 = vmatprep.subr.mxu0 0.0
    %v4875 = vand.u32 %v4575, 4294901760
    %4876 = vmatpush1.msra.mxu0 %v4875
    %4877 = vmatprep.subr.mxu0 0.0
    %v4878 = vand.u32 %v4573, 4294901760
    %4879 = vmatpush1.msra.mxu0 %v4878
    %4880 = vmatprep.subr.mxu0 0.0
    %4881 = vmatpush2.msra.mxu0 0.0
    %4882 = vmatprep.subr.mxu0 0.0
    %4883 = vmatpush2.msra.mxu0 0.0
    %4884 = vmatprep.subr.mxu0 0.0
    %4885 = vmatpush2.msra.mxu0 0.0
    %4886 = vmatprep.subr.mxu0 0.0
    %4887 = vmatpush2.msra.mxu0 0.0
    %4888 = vmatprep.subr.mxu0 0.0
    %4889 = vmatpush2.msra.mxu0 0.0
    %4890 = vmatprep.subr.mxu0 0.0
    %4891 = vmatpush2.msra.mxu0 0.0
    %4892 = vmatprep.subr.mxu0 0.0
    %4893 = vmatpush2.msra.mxu0 0.0
    %4894 = vmatprep.subr.mxu0 0.0
    %4895 = vmatpush2.msra.mxu0 0.0
    %4896 = vmatprep.subr.mxu0 0.0
    %4897 = vmatpush2.msra.mxu0 0.0
    %4898 = vmatprep.subr.mxu0 0.0
    %4899 = vmatpush2.msra.mxu0 0.0
    %4900 = vmatprep.subr.mxu0 0.0
    %4901 = vmatpush2.msra.mxu0 0.0
    %4902 = vmatprep.subr.mxu0 0.0
    %4903 = vmatpush2.msra.mxu0 0.0
    %4904 = vmatprep.subr.mxu0 0.0
    %4905 = vmatpush2.msra.mxu0 0.0
    %4906 = vmatprep.subr.mxu0 0.0
    %4907 = vmatpush2.msra.mxu0 0.0
    %4908 = vmatprep.subr.mxu0 0.0
    %4909 = vmatpush2.msra.mxu0 0.0
    %4910 = vmatprep.subr.mxu0 0.0
    %4911 = vmatpush2.msra.mxu0 0.0
    %4912 = vmatprep.mubr.f32.mxu0 0.0
    %v4913 = vand.u32 %v4610, 4294901760
    %v4914 = vsub.f32 %v4610, %v4913
    %v4915 = vand.u32 %v4914, 4294901760
    %4916 = vmatmul.mubr.f32.gmra.mxu0 %v4915
    %v4917 = vpop.f32.mrf.mxu0
    %v4918 = vadd.f32 %v4843, %v4917
    %v4919 = vpop.f32.mrf.mxu0
    %4920 = vdwg.mxu0
    %4921 = vmatprep.subr.mxu0 0.0
    %4922 = vmatpush1.msra.mxu0 0.0
    %4923 = vmatprep.subr.mxu0 0.0
    %4924 = vmatpush1.msra.mxu0 0.0
    %4925 = vmatprep.subr.mxu0 0.0
    %4926 = vmatpush1.msra.mxu0 0.0
    %4927 = vmatprep.subr.mxu0 0.0
    %4928 = vmatpush1.msra.mxu0 0.0
    %4929 = vmatprep.subr.mxu0 0.0
    %4930 = vmatpush1.msra.mxu0 0.0
    %4931 = vmatprep.subr.mxu0 0.0
    %4932 = vmatpush1.msra.mxu0 0.0
    %4933 = vmatprep.subr.mxu0 0.0
    %4934 = vmatpush1.msra.mxu0 0.0
    %4935 = vmatprep.subr.mxu0 0.0
    %4936 = vmatpush1.msra.mxu0 0.0
    %4937 = vmatprep.subr.mxu0 0.0
    %4938 = vmatpush1.msra.mxu0 0.0
    %4939 = vmatprep.subr.mxu0 0.0
    %4940 = vmatpush1.msra.mxu0 0.0
    %4941 = vmatprep.subr.mxu0 0.0
    %4942 = vmatpush1.msra.mxu0 0.0
    %4943 = vmatprep.subr.mxu0 0.0
    %4944 = vmatpush1.msra.mxu0 0.0
    %4945 = vmatprep.subr.mxu0 0.0
    %4946 = vmatpush1.msra.mxu0 0.0
    %4947 = vmatprep.subr.mxu0 0.0
    %4948 = vmatpush1.msra.mxu0 0.0
    %4949 = vmatprep.subr.mxu0 0.0
    %v4950 = vand.u32 %v4575, 4294901760
    %v4951 = vsub.f32 %v4575, %v4950
    %v4952 = vand.u32 %v4951, 4294901760
    %4953 = vmatpush1.msra.mxu0 %v4952
    %4954 = vmatprep.subr.mxu0 0.0
    %v4955 = vand.u32 %v4573, 4294901760
    %v4956 = vsub.f32 %v4573, %v4955
    %v4957 = vand.u32 %v4956, 4294901760
    %4958 = vmatpush1.msra.mxu0 %v4957
    %4959 = vmatprep.subr.mxu0 0.0
    %4960 = vmatpush2.msra.mxu0 0.0
    %4961 = vmatprep.subr.mxu0 0.0
    %4962 = vmatpush2.msra.mxu0 0.0
    %4963 = vmatprep.subr.mxu0 0.0
    %4964 = vmatpush2.msra.mxu0 0.0
    %4965 = vmatprep.subr.mxu0 0.0
    %4966 = vmatpush2.msra.mxu0 0.0
    %4967 = vmatprep.subr.mxu0 0.0
    %4968 = vmatpush2.msra.mxu0 0.0
    %4969 = vmatprep.subr.mxu0 0.0
    %4970 = vmatpush2.msra.mxu0 0.0
    %4971 = vmatprep.subr.mxu0 0.0
    %4972 = vmatpush2.msra.mxu0 0.0
    %4973 = vmatprep.subr.mxu0 0.0
    %4974 = vmatpush2.msra.mxu0 0.0
    %4975 = vmatprep.subr.mxu0 0.0
    %4976 = vmatpush2.msra.mxu0 0.0
    %4977 = vmatprep.subr.mxu0 0.0
    %4978 = vmatpush2.msra.mxu0 0.0
    %4979 = vmatprep.subr.mxu0 0.0
    %4980 = vmatpush2.msra.mxu0 0.0
    %4981 = vmatprep.subr.mxu0 0.0
    %4982 = vmatpush2.msra.mxu0 0.0
    %4983 = vmatprep.subr.mxu0 0.0
    %4984 = vmatpush2.msra.mxu0 0.0
    %4985 = vmatprep.subr.mxu0 0.0
    %4986 = vmatpush2.msra.mxu0 0.0
    %4987 = vmatprep.subr.mxu0 0.0
    %4988 = vmatpush2.msra.mxu0 0.0
    %4989 = vmatprep.subr.mxu0 0.0
    %4990 = vmatpush2.msra.mxu0 0.0
    %4991 = vmatprep.mubr.f32.mxu0 0.0
    %v4992 = vand.u32 %v4610, 4294901760
    %4993 = vmatmul.mubr.f32.gmra.mxu0 %v4992
    %v4994 = vpop.f32.mrf.mxu0
    %v4995 = vadd.f32 %v4918, %v4994
    %v4996 = vpop.f32.mrf.mxu0
    %4997 = vdwg.mxu0
    %4998 = vmatprep.subr.mxu0 0.0
    %4999 = vmatpush1.msra.mxu0 0.0
    %5000 = vmatprep.subr.mxu0 0.0
    %5001 = vmatpush1.msra.mxu0 0.0
    %5002 = vmatprep.subr.mxu0 0.0
    %5003 = vmatpush1.msra.mxu0 0.0
    %5004 = vmatprep.subr.mxu0 0.0
    %5005 = vmatpush1.msra.mxu0 0.0
    %5006 = vmatprep.subr.mxu0 0.0
    %5007 = vmatpush1.msra.mxu0 0.0
    %5008 = vmatprep.subr.mxu0 0.0
    %5009 = vmatpush1.msra.mxu0 0.0
    %5010 = vmatprep.subr.mxu0 0.0
    %5011 = vmatpush1.msra.mxu0 0.0
    %5012 = vmatprep.subr.mxu0 0.0
    %5013 = vmatpush1.msra.mxu0 0.0
    %5014 = vmatprep.subr.mxu0 0.0
    %5015 = vmatpush1.msra.mxu0 0.0
    %5016 = vmatprep.subr.mxu0 0.0
    %5017 = vmatpush1.msra.mxu0 0.0
    %5018 = vmatprep.subr.mxu0 0.0
    %5019 = vmatpush1.msra.mxu0 0.0
    %5020 = vmatprep.subr.mxu0 0.0
    %5021 = vmatpush1.msra.mxu0 0.0
    %5022 = vmatprep.subr.mxu0 0.0
    %5023 = vmatpush1.msra.mxu0 0.0
    %5024 = vmatprep.subr.mxu0 0.0
    %5025 = vmatpush1.msra.mxu0 0.0
    %5026 = vmatprep.subr.mxu0 0.0
    %v5027 = vand.u32 %v4575, 4294901760
    %5028 = vmatpush1.msra.mxu0 %v5027
    %5029 = vmatprep.subr.mxu0 0.0
    %v5030 = vand.u32 %v4573, 4294901760
    %5031 = vmatpush1.msra.mxu0 %v5030
    %5032 = vmatprep.subr.mxu0 0.0
    %5033 = vmatpush2.msra.mxu0 0.0
    %5034 = vmatprep.subr.mxu0 0.0
    %5035 = vmatpush2.msra.mxu0 0.0
    %5036 = vmatprep.subr.mxu0 0.0
    %5037 = vmatpush2.msra.mxu0 0.0
    %5038 = vmatprep.subr.mxu0 0.0
    %5039 = vmatpush2.msra.mxu0 0.0
    %5040 = vmatprep.subr.mxu0 0.0
    %5041 = vmatpush2.msra.mxu0 0.0
    %5042 = vmatprep.subr.mxu0 0.0
    %5043 = vmatpush2.msra.mxu0 0.0
    %5044 = vmatprep.subr.mxu0 0.0
    %5045 = vmatpush2.msra.mxu0 0.0
    %5046 = vmatprep.subr.mxu0 0.0
    %5047 = vmatpush2.msra.mxu0 0.0
    %5048 = vmatprep.subr.mxu0 0.0
    %5049 = vmatpush2.msra.mxu0 0.0
    %5050 = vmatprep.subr.mxu0 0.0
    %5051 = vmatpush2.msra.mxu0 0.0
    %5052 = vmatprep.subr.mxu0 0.0
    %5053 = vmatpush2.msra.mxu0 0.0
    %5054 = vmatprep.subr.mxu0 0.0
    %5055 = vmatpush2.msra.mxu0 0.0
    %5056 = vmatprep.subr.mxu0 0.0
    %5057 = vmatpush2.msra.mxu0 0.0
    %5058 = vmatprep.subr.mxu0 0.0
    %5059 = vmatpush2.msra.mxu0 0.0
    %5060 = vmatprep.subr.mxu0 0.0
    %5061 = vmatpush2.msra.mxu0 0.0
    %5062 = vmatprep.subr.mxu0 0.0
    %5063 = vmatpush2.msra.mxu0 0.0
    %5064 = vmatprep.mubr.f32.mxu0 0.0
    %v5065 = vand.u32 %v4610, 4294901760
    %5066 = vmatmul.mubr.f32.gmra.mxu0 %v5065
    %v5067 = vpop.f32.mrf.mxu0
    %v5068 = vadd.f32 %v4995, %v5067
    %v5069 = vpop.f32.mrf.mxu0
    %5070 = vdwg.mxu0
    %5071 = vmatprep.subr.mxu0 0.0
    %5072 = vmatpush1.msra.mxu0 0.0
    %5073 = vmatprep.subr.mxu0 0.0
    %5074 = vmatpush1.msra.mxu0 0.0
    %5075 = vmatprep.subr.mxu0 0.0
    %5076 = vmatpush1.msra.mxu0 0.0
    %5077 = vmatprep.subr.mxu0 0.0
    %5078 = vmatpush1.msra.mxu0 0.0
    %5079 = vmatprep.subr.mxu0 0.0
    %5080 = vmatpush1.msra.mxu0 0.0
    %5081 = vmatprep.subr.mxu0 0.0
    %5082 = vmatpush1.msra.mxu0 0.0
    %5083 = vmatprep.subr.mxu0 0.0
    %5084 = vmatpush1.msra.mxu0 0.0
    %5085 = vmatprep.subr.mxu0 0.0
    %5086 = vmatpush1.msra.mxu0 0.0
    %5087 = vmatprep.subr.mxu0 0.0
    %5088 = vmatpush1.msra.mxu0 0.0
    %5089 = vmatprep.subr.mxu0 0.0
    %5090 = vmatpush1.msra.mxu0 0.0
    %5091 = vmatprep.subr.mxu0 0.0
    %5092 = vmatpush1.msra.mxu0 0.0
    %5093 = vmatprep.subr.mxu0 0.0
    %5094 = vmatpush1.msra.mxu0 0.0
    %5095 = vmatprep.subr.mxu0 0.0
    %5096 = vmatpush1.msra.mxu0 0.0
    %5097 = vmatprep.subr.mxu0 0.0
    %5098 = vmatpush1.msra.mxu0 0.0
    %5099 = vmatprep.subr.mxu0 0.0
    %5100 = vmatpush1.msra.mxu0 0.0
    %5101 = vmatprep.subr.mxu0 0.0
    %v5102 = vand.u32 %v5068, 4294901760
    %5103 = vmatpush1.msra.mxu0 %v5102
    %5104 = vmatprep.subr.mxu0 0.0
    %5105 = vmatpush2.msra.mxu0 0.0
    %5106 = vmatprep.subr.mxu0 0.0
    %5107 = vmatpush2.msra.mxu0 0.0
    %5108 = vmatprep.subr.mxu0 0.0
    %5109 = vmatpush2.msra.mxu0 0.0
    %5110 = vmatprep.subr.mxu0 0.0
    %5111 = vmatpush2.msra.mxu0 0.0
    %5112 = vmatprep.subr.mxu0 0.0
    %5113 = vmatpush2.msra.mxu0 0.0
    %5114 = vmatprep.subr.mxu0 0.0
    %5115 = vmatpush2.msra.mxu0 0.0
    %5116 = vmatprep.subr.mxu0 0.0
    %5117 = vmatpush2.msra.mxu0 0.0
    %5118 = vmatprep.subr.mxu0 0.0
    %5119 = vmatpush2.msra.mxu0 0.0
    %5120 = vmatprep.subr.mxu0 0.0
    %5121 = vmatpush2.msra.mxu0 0.0
    %5122 = vmatprep.subr.mxu0 0.0
    %5123 = vmatpush2.msra.mxu0 0.0
    %5124 = vmatprep.subr.mxu0 0.0
    %5125 = vmatpush2.msra.mxu0 0.0
    %5126 = vmatprep.subr.mxu0 0.0
    %5127 = vmatpush2.msra.mxu0 0.0
    %5128 = vmatprep.subr.mxu0 0.0
    %5129 = vmatpush2.msra.mxu0 0.0
    %5130 = vmatprep.subr.mxu0 0.0
    %5131 = vmatpush2.msra.mxu0 0.0
    %5132 = vmatprep.subr.mxu0 0.0
    %5133 = vmatpush2.msra.mxu0 0.0
    %5134 = vmatprep.subr.mxu0 0.0
    %5135 = vmatpush2.msra.mxu0 0.0
    %5136 = vmatprep.mubr.f32.mxu0 0.0
    %v5137 = vand.u32 %v1994, 4294901760
    %v5138 = vsub.f32 %v1994, %v5137
    %v5139 = vand.u32 %v5138, 4294901760
    %v5140 = vsub.f32 %v5138, %v5139
    %v5141 = vand.u32 %v5140, 4294901760
    %5142 = vmatmul.mubr.f32.gmra.mxu0 %v5141
    %v5143 = vpop.f32.mrf.mxu0
    %v5144 = vadd.f32 1e-12, %v5143
    %v5145 = vpop.f32.mrf.mxu0
    %5146 = vmatprep.mubr.f32.mxu0 0.0
    %v5147 = vand.u32 %v1997, 4294901760
    %v5148 = vsub.f32 %v1997, %v5147
    %v5149 = vand.u32 %v5148, 4294901760
    %v5150 = vsub.f32 %v5148, %v5149
    %v5151 = vand.u32 %v5150, 4294901760
    %5152 = vmatmul.mubr.f32.gmra.mxu0 %v5151
    %v5153 = vpop.f32.mrf.mxu0
    %v5154 = vadd.f32 1e-12, %v5153
    %v5155 = vpop.f32.mrf.mxu0
    %5156 = vdwg.mxu0
    %5157 = vmatprep.subr.mxu0 0.0
    %5158 = vmatpush1.msra.mxu0 0.0
    %5159 = vmatprep.subr.mxu0 0.0
    %5160 = vmatpush1.msra.mxu0 0.0
    %5161 = vmatprep.subr.mxu0 0.0
    %5162 = vmatpush1.msra.mxu0 0.0
    %5163 = vmatprep.subr.mxu0 0.0
    %5164 = vmatpush1.msra.mxu0 0.0
    %5165 = vmatprep.subr.mxu0 0.0
    %5166 = vmatpush1.msra.mxu0 0.0
    %5167 = vmatprep.subr.mxu0 0.0
    %5168 = vmatpush1.msra.mxu0 0.0
    %5169 = vmatprep.subr.mxu0 0.0
    %5170 = vmatpush1.msra.mxu0 0.0
    %5171 = vmatprep.subr.mxu0 0.0
    %5172 = vmatpush1.msra.mxu0 0.0
    %5173 = vmatprep.subr.mxu0 0.0
    %5174 = vmatpush1.msra.mxu0 0.0
    %5175 = vmatprep.subr.mxu0 0.0
    %5176 = vmatpush1.msra.mxu0 0.0
    %5177 = vmatprep.subr.mxu0 0.0
    %5178 = vmatpush1.msra.mxu0 0.0
    %5179 = vmatprep.subr.mxu0 0.0
    %5180 = vmatpush1.msra.mxu0 0.0
    %5181 = vmatprep.subr.mxu0 0.0
    %5182 = vmatpush1.msra.mxu0 0.0
    %5183 = vmatprep.subr.mxu0 0.0
    %5184 = vmatpush1.msra.mxu0 0.0
    %5185 = vmatprep.subr.mxu0 0.0
    %5186 = vmatpush1.msra.mxu0 0.0
    %5187 = vmatprep.subr.mxu0 0.0
    %v5188 = vand.u32 %v5068, 4294901760
    %v5189 = vsub.f32 %v5068, %v5188
    %v5190 = vand.u32 %v5189, 4294901760
    %v5191 = vsub.f32 %v5189, %v5190
    %v5192 = vand.u32 %v5191, 4294901760
    %5193 = vmatpush1.msra.mxu0 %v5192
    %5194 = vmatprep.subr.mxu0 0.0
    %5195 = vmatpush2.msra.mxu0 0.0
    %5196 = vmatprep.subr.mxu0 0.0
    %5197 = vmatpush2.msra.mxu0 0.0
    %5198 = vmatprep.subr.mxu0 0.0
    %5199 = vmatpush2.msra.mxu0 0.0
    %5200 = vmatprep.subr.mxu0 0.0
    %5201 = vmatpush2.msra.mxu0 0.0
    %5202 = vmatprep.subr.mxu0 0.0
    %5203 = vmatpush2.msra.mxu0 0.0
    %5204 = vmatprep.subr.mxu0 0.0
    %5205 = vmatpush2.msra.mxu0 0.0
    %5206 = vmatprep.subr.mxu0 0.0
    %5207 = vmatpush2.msra.mxu0 0.0
    %5208 = vmatprep.subr.mxu0 0.0
    %5209 = vmatpush2.msra.mxu0 0.0
    %5210 = vmatprep.subr.mxu0 0.0
    %5211 = vmatpush2.msra.mxu0 0.0
    %5212 = vmatprep.subr.mxu0 0.0
    %5213 = vmatpush2.msra.mxu0 0.0
    %5214 = vmatprep.subr.mxu0 0.0
    %5215 = vmatpush2.msra.mxu0 0.0
    %5216 = vmatprep.subr.mxu0 0.0
    %5217 = vmatpush2.msra.mxu0 0.0
    %5218 = vmatprep.subr.mxu0 0.0
    %5219 = vmatpush2.msra.mxu0 0.0
    %5220 = vmatprep.subr.mxu0 0.0
    %5221 = vmatpush2.msra.mxu0 0.0
    %5222 = vmatprep.subr.mxu0 0.0
    %5223 = vmatpush2.msra.mxu0 0.0
    %5224 = vmatprep.subr.mxu0 0.0
    %5225 = vmatpush2.msra.mxu0 0.0
    %5226 = vmatprep.mubr.f32.mxu0 0.0
    %v5227 = vand.u32 %v1994, 4294901760
    %5228 = vmatmul.mubr.f32.gmra.mxu0 %v5227
    %v5229 = vpop.f32.mrf.mxu0
    %v5230 = vadd.f32 %v5144, %v5229
    %v5231 = vpop.f32.mrf.mxu0
    %5232 = vmatprep.mubr.f32.mxu0 0.0
    %v5233 = vand.u32 %v1997, 4294901760
    %5234 = vmatmul.mubr.f32.gmra.mxu0 %v5233
    %v5235 = vpop.f32.mrf.mxu0
    %v5236 = vadd.f32 %v5154, %v5235
    %v5237 = vpop.f32.mrf.mxu0
    %5238 = vdwg.mxu0
    %5239 = vmatprep.subr.mxu0 0.0
    %5240 = vmatpush1.msra.mxu0 0.0
    %5241 = vmatprep.subr.mxu0 0.0
    %5242 = vmatpush1.msra.mxu0 0.0
    %5243 = vmatprep.subr.mxu0 0.0
    %5244 = vmatpush1.msra.mxu0 0.0
    %5245 = vmatprep.subr.mxu0 0.0
    %5246 = vmatpush1.msra.mxu0 0.0
    %5247 = vmatprep.subr.mxu0 0.0
    %5248 = vmatpush1.msra.mxu0 0.0
    %5249 = vmatprep.subr.mxu0 0.0
    %5250 = vmatpush1.msra.mxu0 0.0
    %5251 = vmatprep.subr.mxu0 0.0
    %5252 = vmatpush1.msra.mxu0 0.0
    %5253 = vmatprep.subr.mxu0 0.0
    %5254 = vmatpush1.msra.mxu0 0.0
    %5255 = vmatprep.subr.mxu0 0.0
    %5256 = vmatpush1.msra.mxu0 0.0
    %5257 = vmatprep.subr.mxu0 0.0
    %5258 = vmatpush1.msra.mxu0 0.0
    %5259 = vmatprep.subr.mxu0 0.0
    %5260 = vmatpush1.msra.mxu0 0.0
    %5261 = vmatprep.subr.mxu0 0.0
    %5262 = vmatpush1.msra.mxu0 0.0
    %5263 = vmatprep.subr.mxu0 0.0
    %5264 = vmatpush1.msra.mxu0 0.0
    %5265 = vmatprep.subr.mxu0 0.0
    %5266 = vmatpush1.msra.mxu0 0.0
    %5267 = vmatprep.subr.mxu0 0.0
    %5268 = vmatpush1.msra.mxu0 0.0
    %5269 = vmatprep.subr.mxu0 0.0
    %v5270 = vand.u32 %v5068, 4294901760
    %v5271 = vsub.f32 %v5068, %v5270
    %5272 = vmatpush1.msra.mxu0 %v5271
    %5273 = vmatprep.subr.mxu0 0.0
    %5274 = vmatpush2.msra.mxu0 0.0
    %5275 = vmatprep.subr.mxu0 0.0
    %5276 = vmatpush2.msra.mxu0 0.0
    %5277 = vmatprep.subr.mxu0 0.0
    %5278 = vmatpush2.msra.mxu0 0.0
    %5279 = vmatprep.subr.mxu0 0.0
    %5280 = vmatpush2.msra.mxu0 0.0
    %5281 = vmatprep.subr.mxu0 0.0
    %5282 = vmatpush2.msra.mxu0 0.0
    %5283 = vmatprep.subr.mxu0 0.0
    %5284 = vmatpush2.msra.mxu0 0.0
    %5285 = vmatprep.subr.mxu0 0.0
    %5286 = vmatpush2.msra.mxu0 0.0
    %5287 = vmatprep.subr.mxu0 0.0
    %5288 = vmatpush2.msra.mxu0 0.0
    %5289 = vmatprep.subr.mxu0 0.0
    %5290 = vmatpush2.msra.mxu0 0.0
    %5291 = vmatprep.subr.mxu0 0.0
    %5292 = vmatpush2.msra.mxu0 0.0
    %5293 = vmatprep.subr.mxu0 0.0
    %5294 = vmatpush2.msra.mxu0 0.0
    %5295 = vmatprep.subr.mxu0 0.0
    %5296 = vmatpush2.msra.mxu0 0.0
    %5297 = vmatprep.subr.mxu0 0.0
    %5298 = vmatpush2.msra.mxu0 0.0
    %5299 = vmatprep.subr.mxu0 0.0
    %5300 = vmatpush2.msra.mxu0 0.0
    %5301 = vmatprep.subr.mxu0 0.0
    %5302 = vmatpush2.msra.mxu0 0.0
    %5303 = vmatprep.subr.mxu0 0.0
    %5304 = vmatpush2.msra.mxu0 0.0
    %5305 = vmatprep.mubr.f32.mxu0 0.0
    %v5306 = vand.u32 %v1994, 4294901760
    %v5307 = vsub.f32 %v1994, %v5306
    %5308 = vmatmul.mubr.f32.gmra.mxu0 %v5307
    %v5309 = vpop.f32.mrf.mxu0
    %v5310 = vadd.f32 %v5230, %v5309
    %v5311 = vpop.f32.mrf.mxu0
    %5312 = vmatprep.mubr.f32.mxu0 0.0
    %v5313 = vand.u32 %v1997, 4294901760
    %v5314 = vsub.f32 %v1997, %v5313
    %5315 = vmatmul.mubr.f32.gmra.mxu0 %v5314
    %v5316 = vpop.f32.mrf.mxu0
    %v5317 = vadd.f32 %v5236, %v5316
    %v5318 = vpop.f32.mrf.mxu0
    %5319 = vdwg.mxu0
    %5320 = vmatprep.subr.mxu0 0.0
    %5321 = vmatpush1.msra.mxu0 0.0
    %5322 = vmatprep.subr.mxu0 0.0
    %5323 = vmatpush1.msra.mxu0 0.0
    %5324 = vmatprep.subr.mxu0 0.0
    %5325 = vmatpush1.msra.mxu0 0.0
    %5326 = vmatprep.subr.mxu0 0.0
    %5327 = vmatpush1.msra.mxu0 0.0
    %5328 = vmatprep.subr.mxu0 0.0
    %5329 = vmatpush1.msra.mxu0 0.0
    %5330 = vmatprep.subr.mxu0 0.0
    %5331 = vmatpush1.msra.mxu0 0.0
    %5332 = vmatprep.subr.mxu0 0.0
    %5333 = vmatpush1.msra.mxu0 0.0
    %5334 = vmatprep.subr.mxu0 0.0
    %5335 = vmatpush1.msra.mxu0 0.0
    %5336 = vmatprep.subr.mxu0 0.0
    %5337 = vmatpush1.msra.mxu0 0.0
    %5338 = vmatprep.subr.mxu0 0.0
    %5339 = vmatpush1.msra.mxu0 0.0
    %5340 = vmatprep.subr.mxu0 0.0
    %5341 = vmatpush1.msra.mxu0 0.0
    %5342 = vmatprep.subr.mxu0 0.0
    %5343 = vmatpush1.msra.mxu0 0.0
    %5344 = vmatprep.subr.mxu0 0.0
    %5345 = vmatpush1.msra.mxu0 0.0
    %5346 = vmatprep.subr.mxu0 0.0
    %5347 = vmatpush1.msra.mxu0 0.0
    %5348 = vmatprep.subr.mxu0 0.0
    %5349 = vmatpush1.msra.mxu0 0.0
    %5350 = vmatprep.subr.mxu0 0.0
    %v5351 = vand.u32 %v5068, 4294901760
    %5352 = vmatpush1.msra.mxu0 %v5351
    %5353 = vmatprep.subr.mxu0 0.0
    %5354 = vmatpush2.msra.mxu0 0.0
    %5355 = vmatprep.subr.mxu0 0.0
    %5356 = vmatpush2.msra.mxu0 0.0
    %5357 = vmatprep.subr.mxu0 0.0
    %5358 = vmatpush2.msra.mxu0 0.0
    %5359 = vmatprep.subr.mxu0 0.0
    %5360 = vmatpush2.msra.mxu0 0.0
    %5361 = vmatprep.subr.mxu0 0.0
    %5362 = vmatpush2.msra.mxu0 0.0
    %5363 = vmatprep.subr.mxu0 0.0
    %5364 = vmatpush2.msra.mxu0 0.0
    %5365 = vmatprep.subr.mxu0 0.0
    %5366 = vmatpush2.msra.mxu0 0.0
    %5367 = vmatprep.subr.mxu0 0.0
    %5368 = vmatpush2.msra.mxu0 0.0
    %5369 = vmatprep.subr.mxu0 0.0
    %5370 = vmatpush2.msra.mxu0 0.0
    %5371 = vmatprep.subr.mxu0 0.0
    %5372 = vmatpush2.msra.mxu0 0.0
    %5373 = vmatprep.subr.mxu0 0.0
    %5374 = vmatpush2.msra.mxu0 0.0
    %5375 = vmatprep.subr.mxu0 0.0
    %5376 = vmatpush2.msra.mxu0 0.0
    %5377 = vmatprep.subr.mxu0 0.0
    %5378 = vmatpush2.msra.mxu0 0.0
    %5379 = vmatprep.subr.mxu0 0.0
    %5380 = vmatpush2.msra.mxu0 0.0
    %5381 = vmatprep.subr.mxu0 0.0
    %5382 = vmatpush2.msra.mxu0 0.0
    %5383 = vmatprep.subr.mxu0 0.0
    %5384 = vmatpush2.msra.mxu0 0.0
    %5385 = vmatprep.mubr.f32.mxu0 0.0
    %v5386 = vand.u32 %v1994, 4294901760
    %v5387 = vsub.f32 %v1994, %v5386
    %v5388 = vand.u32 %v5387, 4294901760
    %5389 = vmatmul.mubr.f32.gmra.mxu0 %v5388
    %v5390 = vpop.f32.mrf.mxu0
    %v5391 = vadd.f32 %v5310, %v5390
    %v5392 = vpop.f32.mrf.mxu0
    %5393 = vmatprep.mubr.f32.mxu0 0.0
    %v5394 = vand.u32 %v1997, 4294901760
    %v5395 = vsub.f32 %v1997, %v5394
    %v5396 = vand.u32 %v5395, 4294901760
    %5397 = vmatmul.mubr.f32.gmra.mxu0 %v5396
    %v5398 = vpop.f32.mrf.mxu0
    %v5399 = vadd.f32 %v5317, %v5398
    %v5400 = vpop.f32.mrf.mxu0
    %5401 = vdwg.mxu0
    %5402 = vmatprep.subr.mxu0 0.0
    %5403 = vmatpush1.msra.mxu0 0.0
    %5404 = vmatprep.subr.mxu0 0.0
    %5405 = vmatpush1.msra.mxu0 0.0
    %5406 = vmatprep.subr.mxu0 0.0
    %5407 = vmatpush1.msra.mxu0 0.0
    %5408 = vmatprep.subr.mxu0 0.0
    %5409 = vmatpush1.msra.mxu0 0.0
    %5410 = vmatprep.subr.mxu0 0.0
    %5411 = vmatpush1.msra.mxu0 0.0
    %5412 = vmatprep.subr.mxu0 0.0
    %5413 = vmatpush1.msra.mxu0 0.0
    %5414 = vmatprep.subr.mxu0 0.0
    %5415 = vmatpush1.msra.mxu0 0.0
    %5416 = vmatprep.subr.mxu0 0.0
    %5417 = vmatpush1.msra.mxu0 0.0
    %5418 = vmatprep.subr.mxu0 0.0
    %5419 = vmatpush1.msra.mxu0 0.0
    %5420 = vmatprep.subr.mxu0 0.0
    %5421 = vmatpush1.msra.mxu0 0.0
    %5422 = vmatprep.subr.mxu0 0.0
    %5423 = vmatpush1.msra.mxu0 0.0
    %5424 = vmatprep.subr.mxu0 0.0
    %5425 = vmatpush1.msra.mxu0 0.0
    %5426 = vmatprep.subr.mxu0 0.0
    %5427 = vmatpush1.msra.mxu0 0.0
    %5428 = vmatprep.subr.mxu0 0.0
    %5429 = vmatpush1.msra.mxu0 0.0
    %5430 = vmatprep.subr.mxu0 0.0
    %5431 = vmatpush1.msra.mxu0 0.0
    %5432 = vmatprep.subr.mxu0 0.0
    %v5433 = vand.u32 %v5068, 4294901760
    %v5434 = vsub.f32 %v5068, %v5433
    %v5435 = vand.u32 %v5434, 4294901760
    %5436 = vmatpush1.msra.mxu0 %v5435
    %5437 = vmatprep.subr.mxu0 0.0
    %5438 = vmatpush2.msra.mxu0 0.0
    %5439 = vmatprep.subr.mxu0 0.0
    %5440 = vmatpush2.msra.mxu0 0.0
    %5441 = vmatprep.subr.mxu0 0.0
    %5442 = vmatpush2.msra.mxu0 0.0
    %5443 = vmatprep.subr.mxu0 0.0
    %5444 = vmatpush2.msra.mxu0 0.0
    %5445 = vmatprep.subr.mxu0 0.0
    %5446 = vmatpush2.msra.mxu0 0.0
    %5447 = vmatprep.subr.mxu0 0.0
    %5448 = vmatpush2.msra.mxu0 0.0
    %5449 = vmatprep.subr.mxu0 0.0
    %5450 = vmatpush2.msra.mxu0 0.0
    %5451 = vmatprep.subr.mxu0 0.0
    %5452 = vmatpush2.msra.mxu0 0.0
    %5453 = vmatprep.subr.mxu0 0.0
    %5454 = vmatpush2.msra.mxu0 0.0
    %5455 = vmatprep.subr.mxu0 0.0
    %5456 = vmatpush2.msra.mxu0 0.0
    %5457 = vmatprep.subr.mxu0 0.0
    %5458 = vmatpush2.msra.mxu0 0.0
    %5459 = vmatprep.subr.mxu0 0.0
    %5460 = vmatpush2.msra.mxu0 0.0
    %5461 = vmatprep.subr.mxu0 0.0
    %5462 = vmatpush2.msra.mxu0 0.0
    %5463 = vmatprep.subr.mxu0 0.0
    %5464 = vmatpush2.msra.mxu0 0.0
    %5465 = vmatprep.subr.mxu0 0.0
    %5466 = vmatpush2.msra.mxu0 0.0
    %5467 = vmatprep.subr.mxu0 0.0
    %5468 = vmatpush2.msra.mxu0 0.0
    %5469 = vmatprep.mubr.f32.mxu0 0.0
    %v5470 = vand.u32 %v1994, 4294901760
    %5471 = vmatmul.mubr.f32.gmra.mxu0 %v5470
    %v5472 = vpop.f32.mrf.mxu0
    %v5473 = vadd.f32 %v5391, %v5472
    %v5474 = vpop.f32.mrf.mxu0
    %5475 = vmatprep.mubr.f32.mxu0 0.0
    %v5476 = vand.u32 %v1997, 4294901760
    %5477 = vmatmul.mubr.f32.gmra.mxu0 %v5476
    %v5478 = vpop.f32.mrf.mxu0
    %v5479 = vadd.f32 %v5399, %v5478
    %v5480 = vpop.f32.mrf.mxu0
    %5481 = vdwg.mxu0
    %5482 = vmatprep.subr.mxu0 0.0
    %5483 = vmatpush1.msra.mxu0 0.0
    %5484 = vmatprep.subr.mxu0 0.0
    %5485 = vmatpush1.msra.mxu0 0.0
    %5486 = vmatprep.subr.mxu0 0.0
    %5487 = vmatpush1.msra.mxu0 0.0
    %5488 = vmatprep.subr.mxu0 0.0
    %5489 = vmatpush1.msra.mxu0 0.0
    %5490 = vmatprep.subr.mxu0 0.0
    %5491 = vmatpush1.msra.mxu0 0.0
    %5492 = vmatprep.subr.mxu0 0.0
    %5493 = vmatpush1.msra.mxu0 0.0
    %5494 = vmatprep.subr.mxu0 0.0
    %5495 = vmatpush1.msra.mxu0 0.0
    %5496 = vmatprep.subr.mxu0 0.0
    %5497 = vmatpush1.msra.mxu0 0.0
    %5498 = vmatprep.subr.mxu0 0.0
    %5499 = vmatpush1.msra.mxu0 0.0
    %5500 = vmatprep.subr.mxu0 0.0
    %5501 = vmatpush1.msra.mxu0 0.0
    %5502 = vmatprep.subr.mxu0 0.0
    %5503 = vmatpush1.msra.mxu0 0.0
    %5504 = vmatprep.subr.mxu0 0.0
    %5505 = vmatpush1.msra.mxu0 0.0
    %5506 = vmatprep.subr.mxu0 0.0
    %5507 = vmatpush1.msra.mxu0 0.0
    %5508 = vmatprep.subr.mxu0 0.0
    %5509 = vmatpush1.msra.mxu0 0.0
    %5510 = vmatprep.subr.mxu0 0.0
    %5511 = vmatpush1.msra.mxu0 0.0
    %5512 = vmatprep.subr.mxu0 0.0
    %v5513 = vand.u32 %v5068, 4294901760
    %5514 = vmatpush1.msra.mxu0 %v5513
    %5515 = vmatprep.subr.mxu0 0.0
    %5516 = vmatpush2.msra.mxu0 0.0
    %5517 = vmatprep.subr.mxu0 0.0
    %5518 = vmatpush2.msra.mxu0 0.0
    %5519 = vmatprep.subr.mxu0 0.0
    %5520 = vmatpush2.msra.mxu0 0.0
    %5521 = vmatprep.subr.mxu0 0.0
    %5522 = vmatpush2.msra.mxu0 0.0
    %5523 = vmatprep.subr.mxu0 0.0
    %5524 = vmatpush2.msra.mxu0 0.0
    %5525 = vmatprep.subr.mxu0 0.0
    %5526 = vmatpush2.msra.mxu0 0.0
    %5527 = vmatprep.subr.mxu0 0.0
    %5528 = vmatpush2.msra.mxu0 0.0
    %5529 = vmatprep.subr.mxu0 0.0
    %5530 = vmatpush2.msra.mxu0 0.0
    %5531 = vmatprep.subr.mxu0 0.0
    %5532 = vmatpush2.msra.mxu0 0.0
    %5533 = vmatprep.subr.mxu0 0.0
    %5534 = vmatpush2.msra.mxu0 0.0
    %5535 = vmatprep.subr.mxu0 0.0
    %5536 = vmatpush2.msra.mxu0 0.0
    %5537 = vmatprep.subr.mxu0 0.0
    %5538 = vmatpush2.msra.mxu0 0.0
    %5539 = vmatprep.subr.mxu0 0.0
    %5540 = vmatpush2.msra.mxu0 0.0
    %5541 = vmatprep.subr.mxu0 0.0
    %5542 = vmatpush2.msra.mxu0 0.0
    %5543 = vmatprep.subr.mxu0 0.0
    %5544 = vmatpush2.msra.mxu0 0.0
    %5545 = vmatprep.subr.mxu0 0.0
    %5546 = vmatpush2.msra.mxu0 0.0
    %5547 = vmatprep.mubr.f32.mxu0 0.0
    %v5548 = vand.u32 %v1994, 4294901760
    %5549 = vmatmul.mubr.f32.gmra.mxu0 %v5548
    %v5550 = vpop.f32.mrf.mxu0
    %v5551 = vadd.f32 %v5473, %v5550
    %v5552 = vpop.f32.mrf.mxu0
    %5553 = vmatprep.mubr.f32.mxu0 0.0
    %v5554 = vand.u32 %v1997, 4294901760
    %5555 = vmatmul.mubr.f32.gmra.mxu0 %v5554
    %v5556 = vpop.f32.mrf.mxu0
    %v5557 = vadd.f32 %v5479, %v5556
    %v5558 = vpop.f32.mrf.mxu0
    %5559 = vdwg.mxu0
    %v5560 = vrcp.pop %v5551
    %v5561 = vmul.f32 %v4573, %v5560
    %v5562 = vrcp.pop %v5557
    %v5563 = vmul.f32 %v4575, %v5562
    %v5564 = vld [vmem:[%s2 + $0xa8] sm:$0xff]
    %v5565 = vld [vmem:[%s2 + $0xb0] sm:$0xff]
    %v5566 = vld [vmem:[%s2 + $0xb8] sm:$0xff]
    %v5567 = vld [vmem:[%s2 + $0xc0] sm:$0xff]
    %v5568 = vld [vmem:[%s2 + $0xc8] sm:$0xff]
    %v5569 = vld [vmem:[%s2 + $0xd0] sm:$0xff]
    %v5571 = vsel %vm30, %v5561, 0
    %v5574 = vsel %vm30, %v5563, 0
    %5576 = vmatprep.subr.mxu0 0.0
    %5577 = vmatpush1.msra.mxu0 0.0
    %5578 = vmatprep.subr.mxu0 0.0
    %5579 = vmatpush1.msra.mxu0 0.0
    %5580 = vmatprep.subr.mxu0 0.0
    %5581 = vmatpush1.msra.mxu0 0.0
    %5582 = vmatprep.subr.mxu0 0.0
    %5583 = vmatpush1.msra.mxu0 0.0
    %5584 = vmatprep.subr.mxu0 0.0
    %5585 = vmatpush1.msra.mxu0 0.0
    %5586 = vmatprep.subr.mxu0 0.0
    %5587 = vmatpush1.msra.mxu0 0.0
    %5588 = vmatprep.subr.mxu0 0.0
    %5589 = vmatpush1.msra.mxu0 0.0
    %5590 = vmatprep.subr.mxu0 0.0
    %5591 = vmatpush1.msra.mxu0 0.0
    %5592 = vmatprep.subr.mxu0 0.0
    %5593 = vmatpush1.msra.mxu0 0.0
    %5594 = vmatprep.subr.mxu0 0.0
    %5595 = vmatpush1.msra.mxu0 0.0
    %5596 = vmatprep.subr.mxu0 0.0
    %5597 = vmatpush1.msra.mxu0 0.0
    %5598 = vmatprep.subr.mxu0 0.0
    %5599 = vmatpush1.msra.mxu0 0.0
    %5600 = vmatprep.subr.mxu0 0.0
    %v5601 = vand.u32 %v5569, 4294901760
    %5602 = vmatpush1.msra.mxu0 %v5601
    %5603 = vmatprep.subr.mxu0 0.0
    %v5604 = vand.u32 %v5568, 4294901760
    %5605 = vmatpush1.msra.mxu0 %v5604
    %5606 = vmatprep.subr.mxu0 0.0
    %v5607 = vand.u32 %v5567, 4294901760
    %5608 = vmatpush1.msra.mxu0 %v5607
    %5609 = vmatprep.subr.mxu0 0.0
    %v5610 = vand.u32 %v5566, 4294901760
    %5611 = vmatpush1.msra.mxu0 %v5610
    %5612 = vmatprep.subr.mxu0 0.0
    %5613 = vmatpush2.msra.mxu0 0.0
    %5614 = vmatprep.subr.mxu0 0.0
    %5615 = vmatpush2.msra.mxu0 0.0
    %5616 = vmatprep.subr.mxu0 0.0
    %5617 = vmatpush2.msra.mxu0 0.0
    %5618 = vmatprep.subr.mxu0 0.0
    %5619 = vmatpush2.msra.mxu0 0.0
    %5620 = vmatprep.subr.mxu0 0.0
    %5621 = vmatpush2.msra.mxu0 0.0
    %5622 = vmatprep.subr.mxu0 0.0
    %5623 = vmatpush2.msra.mxu0 0.0
    %5624 = vmatprep.subr.mxu0 0.0
    %5625 = vmatpush2.msra.mxu0 0.0
    %5626 = vmatprep.subr.mxu0 0.0
    %5627 = vmatpush2.msra.mxu0 0.0
    %5628 = vmatprep.subr.mxu0 0.0
    %5629 = vmatpush2.msra.mxu0 0.0
    %5630 = vmatprep.subr.mxu0 0.0
    %5631 = vmatpush2.msra.mxu0 0.0
    %5632 = vmatprep.subr.mxu0 0.0
    %5633 = vmatpush2.msra.mxu0 0.0
    %5634 = vmatprep.subr.mxu0 0.0
    %5635 = vmatpush2.msra.mxu0 0.0
    %5636 = vmatprep.subr.mxu0 0.0
    %5637 = vmatpush2.msra.mxu0 0.0
    %5638 = vmatprep.subr.mxu0 0.0
    %5639 = vmatpush2.msra.mxu0 0.0
    %5640 = vmatprep.subr.mxu0 0.0
    %5641 = vmatpush2.msra.mxu0 0.0
    %5642 = vmatprep.subr.mxu0 0.0
    %5643 = vmatpush2.msra.mxu0 0.0
    %5644 = vmatprep.mubr.f32.mxu0 0.0
    %v5645 = vand.u32 %v5571, 4294901760
    %v5646 = vsub.f32 %v5571, %v5645
    %v5647 = vand.u32 %v5646, 4294901760
    %v5648 = vsub.f32 %v5646, %v5647
    %v5649 = vand.u32 %v5648, 4294901760
    %5650 = vmatmul.mubr.f32.gmra.mxu0 %v5649
    %v5651 = vpop.f32.mrf.mxu0
    %v5652 = vadd.f32 0.0, %v5651
    %v5653 = vpop.f32.mrf.mxu0
    %5654 = vmatprep.mubr.f32.mxu0 0.0
    %v5655 = vand.u32 %v5574, 4294901760
    %v5656 = vsub.f32 %v5574, %v5655
    %v5657 = vand.u32 %v5656, 4294901760
    %v5658 = vsub.f32 %v5656, %v5657
    %v5659 = vand.u32 %v5658, 4294901760
    %5660 = vmatmul.mubr.f32.gmra.mxu0 %v5659
    %v5661 = vpop.f32.mrf.mxu0
    %v5662 = vadd.f32 0.0, %v5661
    %v5663 = vpop.f32.mrf.mxu0
    %5664 = vdwg.mxu0
    %5665 = vmatprep.subr.mxu0 0.0
    %5666 = vmatpush1.msra.mxu0 0.0
    %5667 = vmatprep.subr.mxu0 0.0
    %5668 = vmatpush1.msra.mxu0 0.0
    %5669 = vmatprep.subr.mxu0 0.0
    %5670 = vmatpush1.msra.mxu0 0.0
    %5671 = vmatprep.subr.mxu0 0.0
    %5672 = vmatpush1.msra.mxu0 0.0
    %5673 = vmatprep.subr.mxu0 0.0
    %5674 = vmatpush1.msra.mxu0 0.0
    %5675 = vmatprep.subr.mxu0 0.0
    %5676 = vmatpush1.msra.mxu0 0.0
    %5677 = vmatprep.subr.mxu0 0.0
    %5678 = vmatpush1.msra.mxu0 0.0
    %5679 = vmatprep.subr.mxu0 0.0
    %5680 = vmatpush1.msra.mxu0 0.0
    %5681 = vmatprep.subr.mxu0 0.0
    %5682 = vmatpush1.msra.mxu0 0.0
    %5683 = vmatprep.subr.mxu0 0.0
    %5684 = vmatpush1.msra.mxu0 0.0
    %5685 = vmatprep.subr.mxu0 0.0
    %5686 = vmatpush1.msra.mxu0 0.0
    %5687 = vmatprep.subr.mxu0 0.0
    %5688 = vmatpush1.msra.mxu0 0.0
    %5689 = vmatprep.subr.mxu0 0.0
    %v5690 = vand.u32 %v5569, 4294901760
    %v5691 = vsub.f32 %v5569, %v5690
    %v5692 = vand.u32 %v5691, 4294901760
    %v5693 = vsub.f32 %v5691, %v5692
    %v5694 = vand.u32 %v5693, 4294901760
    %5695 = vmatpush1.msra.mxu0 %v5694
    %5696 = vmatprep.subr.mxu0 0.0
    %v5697 = vand.u32 %v5568, 4294901760
    %v5698 = vsub.f32 %v5568, %v5697
    %v5699 = vand.u32 %v5698, 4294901760
    %v5700 = vsub.f32 %v5698, %v5699
    %v5701 = vand.u32 %v5700, 4294901760
    %5702 = vmatpush1.msra.mxu0 %v5701
    %5703 = vmatprep.subr.mxu0 0.0
    %v5704 = vand.u32 %v5567, 4294901760
    %v5705 = vsub.f32 %v5567, %v5704
    %v5706 = vand.u32 %v5705, 4294901760
    %v5707 = vsub.f32 %v5705, %v5706
    %v5708 = vand.u32 %v5707, 4294901760
    %5709 = vmatpush1.msra.mxu0 %v5708
    %5710 = vmatprep.subr.mxu0 0.0
    %v5711 = vand.u32 %v5566, 4294901760
    %v5712 = vsub.f32 %v5566, %v5711
    %v5713 = vand.u32 %v5712, 4294901760
    %v5714 = vsub.f32 %v5712, %v5713
    %v5715 = vand.u32 %v5714, 4294901760
    %5716 = vmatpush1.msra.mxu0 %v5715
    %5717 = vmatprep.subr.mxu0 0.0
    %5718 = vmatpush2.msra.mxu0 0.0
    %5719 = vmatprep.subr.mxu0 0.0
    %5720 = vmatpush2.msra.mxu0 0.0
    %5721 = vmatprep.subr.mxu0 0.0
    %5722 = vmatpush2.msra.mxu0 0.0
    %5723 = vmatprep.subr.mxu0 0.0
    %5724 = vmatpush2.msra.mxu0 0.0
    %5725 = vmatprep.subr.mxu0 0.0
    %5726 = vmatpush2.msra.mxu0 0.0
    %5727 = vmatprep.subr.mxu0 0.0
    %5728 = vmatpush2.msra.mxu0 0.0
    %5729 = vmatprep.subr.mxu0 0.0
    %5730 = vmatpush2.msra.mxu0 0.0
    %5731 = vmatprep.subr.mxu0 0.0
    %5732 = vmatpush2.msra.mxu0 0.0
    %5733 = vmatprep.subr.mxu0 0.0
    %5734 = vmatpush2.msra.mxu0 0.0
    %5735 = vmatprep.subr.mxu0 0.0
    %5736 = vmatpush2.msra.mxu0 0.0
    %5737 = vmatprep.subr.mxu0 0.0
    %5738 = vmatpush2.msra.mxu0 0.0
    %5739 = vmatprep.subr.mxu0 0.0
    %5740 = vmatpush2.msra.mxu0 0.0
    %5741 = vmatprep.subr.mxu0 0.0
    %5742 = vmatpush2.msra.mxu0 0.0
    %5743 = vmatprep.subr.mxu0 0.0
    %5744 = vmatpush2.msra.mxu0 0.0
    %5745 = vmatprep.subr.mxu0 0.0
    %5746 = vmatpush2.msra.mxu0 0.0
    %5747 = vmatprep.subr.mxu0 0.0
    %5748 = vmatpush2.msra.mxu0 0.0
    %5749 = vmatprep.mubr.f32.mxu0 0.0
    %v5750 = vand.u32 %v5571, 4294901760
    %5751 = vmatmul.mubr.f32.gmra.mxu0 %v5750
    %v5752 = vpop.f32.mrf.mxu0
    %v5753 = vadd.f32 %v5652, %v5752
    %v5754 = vpop.f32.mrf.mxu0
    %5755 = vmatprep.mubr.f32.mxu0 0.0
    %v5756 = vand.u32 %v5574, 4294901760
    %5757 = vmatmul.mubr.f32.gmra.mxu0 %v5756
    %v5758 = vpop.f32.mrf.mxu0
    %v5759 = vadd.f32 %v5662, %v5758
    %v5760 = vpop.f32.mrf.mxu0
    %5761 = vdwg.mxu0
    %5762 = vmatprep.subr.mxu0 0.0
    %5763 = vmatpush1.msra.mxu0 0.0
    %5764 = vmatprep.subr.mxu0 0.0
    %5765 = vmatpush1.msra.mxu0 0.0
    %5766 = vmatprep.subr.mxu0 0.0
    %5767 = vmatpush1.msra.mxu0 0.0
    %5768 = vmatprep.subr.mxu0 0.0
    %5769 = vmatpush1.msra.mxu0 0.0
    %5770 = vmatprep.subr.mxu0 0.0
    %5771 = vmatpush1.msra.mxu0 0.0
    %5772 = vmatprep.subr.mxu0 0.0
    %5773 = vmatpush1.msra.mxu0 0.0
    %5774 = vmatprep.subr.mxu0 0.0
    %5775 = vmatpush1.msra.mxu0 0.0
    %5776 = vmatprep.subr.mxu0 0.0
    %5777 = vmatpush1.msra.mxu0 0.0
    %5778 = vmatprep.subr.mxu0 0.0
    %5779 = vmatpush1.msra.mxu0 0.0
    %5780 = vmatprep.subr.mxu0 0.0
    %5781 = vmatpush1.msra.mxu0 0.0
    %5782 = vmatprep.subr.mxu0 0.0
    %5783 = vmatpush1.msra.mxu0 0.0
    %5784 = vmatprep.subr.mxu0 0.0
    %5785 = vmatpush1.msra.mxu0 0.0
    %5786 = vmatprep.subr.mxu0 0.0
    %v5787 = vand.u32 %v5569, 4294901760
    %v5788 = vsub.f32 %v5569, %v5787
    %5789 = vmatpush1.msra.mxu0 %v5788
    %5790 = vmatprep.subr.mxu0 0.0
    %v5791 = vand.u32 %v5568, 4294901760
    %v5792 = vsub.f32 %v5568, %v5791
    %5793 = vmatpush1.msra.mxu0 %v5792
    %5794 = vmatprep.subr.mxu0 0.0
    %v5795 = vand.u32 %v5567, 4294901760
    %v5796 = vsub.f32 %v5567, %v5795
    %5797 = vmatpush1.msra.mxu0 %v5796
    %5798 = vmatprep.subr.mxu0 0.0
    %v5799 = vand.u32 %v5566, 4294901760
    %v5800 = vsub.f32 %v5566, %v5799
    %5801 = vmatpush1.msra.mxu0 %v5800
    %5802 = vmatprep.subr.mxu0 0.0
    %5803 = vmatpush2.msra.mxu0 0.0
    %5804 = vmatprep.subr.mxu0 0.0
    %5805 = vmatpush2.msra.mxu0 0.0
    %5806 = vmatprep.subr.mxu0 0.0
    %5807 = vmatpush2.msra.mxu0 0.0
    %5808 = vmatprep.subr.mxu0 0.0
    %5809 = vmatpush2.msra.mxu0 0.0
    %5810 = vmatprep.subr.mxu0 0.0
    %5811 = vmatpush2.msra.mxu0 0.0
    %5812 = vmatprep.subr.mxu0 0.0
    %5813 = vmatpush2.msra.mxu0 0.0
    %5814 = vmatprep.subr.mxu0 0.0
    %5815 = vmatpush2.msra.mxu0 0.0
    %5816 = vmatprep.subr.mxu0 0.0
    %5817 = vmatpush2.msra.mxu0 0.0
    %5818 = vmatprep.subr.mxu0 0.0
    %5819 = vmatpush2.msra.mxu0 0.0
    %5820 = vmatprep.subr.mxu0 0.0
    %5821 = vmatpush2.msra.mxu0 0.0
    %5822 = vmatprep.subr.mxu0 0.0
    %5823 = vmatpush2.msra.mxu0 0.0
    %5824 = vmatprep.subr.mxu0 0.0
    %5825 = vmatpush2.msra.mxu0 0.0
    %5826 = vmatprep.subr.mxu0 0.0
    %5827 = vmatpush2.msra.mxu0 0.0
    %5828 = vmatprep.subr.mxu0 0.0
    %5829 = vmatpush2.msra.mxu0 0.0
    %5830 = vmatprep.subr.mxu0 0.0
    %5831 = vmatpush2.msra.mxu0 0.0
    %5832 = vmatprep.subr.mxu0 0.0
    %5833 = vmatpush2.msra.mxu0 0.0
    %5834 = vmatprep.mubr.f32.mxu0 0.0
    %v5835 = vand.u32 %v5571, 4294901760
    %v5836 = vsub.f32 %v5571, %v5835
    %5837 = vmatmul.mubr.f32.gmra.mxu0 %v5836
    %v5838 = vpop.f32.mrf.mxu0
    %v5839 = vadd.f32 %v5753, %v5838
    %v5840 = vpop.f32.mrf.mxu0
    %5841 = vmatprep.mubr.f32.mxu0 0.0
    %v5842 = vand.u32 %v5574, 4294901760
    %v5843 = vsub.f32 %v5574, %v5842
    %5844 = vmatmul.mubr.f32.gmra.mxu0 %v5843
    %v5845 = vpop.f32.mrf.mxu0
    %v5846 = vadd.f32 %v5759, %v5845
    %v5847 = vpop.f32.mrf.mxu0
    %5848 = vdwg.mxu0
    %5849 = vmatprep.subr.mxu0 0.0
    %5850 = vmatpush1.msra.mxu0 0.0
    %5851 = vmatprep.subr.mxu0 0.0
    %5852 = vmatpush1.msra.mxu0 0.0
    %5853 = vmatprep.subr.mxu0 0.0
    %5854 = vmatpush1.msra.mxu0 0.0
    %5855 = vmatprep.subr.mxu0 0.0
    %5856 = vmatpush1.msra.mxu0 0.0
    %5857 = vmatprep.subr.mxu0 0.0
    %5858 = vmatpush1.msra.mxu0 0.0
    %5859 = vmatprep.subr.mxu0 0.0
    %5860 = vmatpush1.msra.mxu0 0.0
    %5861 = vmatprep.subr.mxu0 0.0
    %5862 = vmatpush1.msra.mxu0 0.0
    %5863 = vmatprep.subr.mxu0 0.0
    %5864 = vmatpush1.msra.mxu0 0.0
    %5865 = vmatprep.subr.mxu0 0.0
    %5866 = vmatpush1.msra.mxu0 0.0
    %5867 = vmatprep.subr.mxu0 0.0
    %5868 = vmatpush1.msra.mxu0 0.0
    %5869 = vmatprep.subr.mxu0 0.0
    %5870 = vmatpush1.msra.mxu0 0.0
    %5871 = vmatprep.subr.mxu0 0.0
    %5872 = vmatpush1.msra.mxu0 0.0
    %5873 = vmatprep.subr.mxu0 0.0
    %v5874 = vand.u32 %v5569, 4294901760
    %5875 = vmatpush1.msra.mxu0 %v5874
    %5876 = vmatprep.subr.mxu0 0.0
    %v5877 = vand.u32 %v5568, 4294901760
    %5878 = vmatpush1.msra.mxu0 %v5877
    %5879 = vmatprep.subr.mxu0 0.0
    %v5880 = vand.u32 %v5567, 4294901760
    %5881 = vmatpush1.msra.mxu0 %v5880
    %5882 = vmatprep.subr.mxu0 0.0
    %v5883 = vand.u32 %v5566, 4294901760
    %5884 = vmatpush1.msra.mxu0 %v5883
    %5885 = vmatprep.subr.mxu0 0.0
    %5886 = vmatpush2.msra.mxu0 0.0
    %5887 = vmatprep.subr.mxu0 0.0
    %5888 = vmatpush2.msra.mxu0 0.0
    %5889 = vmatprep.subr.mxu0 0.0
    %5890 = vmatpush2.msra.mxu0 0.0
    %5891 = vmatprep.subr.mxu0 0.0
    %5892 = vmatpush2.msra.mxu0 0.0
    %5893 = vmatprep.subr.mxu0 0.0
    %5894 = vmatpush2.msra.mxu0 0.0
    %5895 = vmatprep.subr.mxu0 0.0
    %5896 = vmatpush2.msra.mxu0 0.0
    %5897 = vmatprep.subr.mxu0 0.0
    %5898 = vmatpush2.msra.mxu0 0.0
    %5899 = vmatprep.subr.mxu0 0.0
    %5900 = vmatpush2.msra.mxu0 0.0
    %5901 = vmatprep.subr.mxu0 0.0
    %5902 = vmatpush2.msra.mxu0 0.0
    %5903 = vmatprep.subr.mxu0 0.0
    %5904 = vmatpush2.msra.mxu0 0.0
    %5905 = vmatprep.subr.mxu0 0.0
    %5906 = vmatpush2.msra.mxu0 0.0
    %5907 = vmatprep.subr.mxu0 0.0
    %5908 = vmatpush2.msra.mxu0 0.0
    %5909 = vmatprep.subr.mxu0 0.0
    %5910 = vmatpush2.msra.mxu0 0.0
    %5911 = vmatprep.subr.mxu0 0.0
    %5912 = vmatpush2.msra.mxu0 0.0
    %5913 = vmatprep.subr.mxu0 0.0
    %5914 = vmatpush2.msra.mxu0 0.0
    %5915 = vmatprep.subr.mxu0 0.0
    %5916 = vmatpush2.msra.mxu0 0.0
    %5917 = vmatprep.mubr.f32.mxu0 0.0
    %v5918 = vand.u32 %v5571, 4294901760
    %v5919 = vsub.f32 %v5571, %v5918
    %v5920 = vand.u32 %v5919, 4294901760
    %5921 = vmatmul.mubr.f32.gmra.mxu0 %v5920
    %v5922 = vpop.f32.mrf.mxu0
    %v5923 = vadd.f32 %v5839, %v5922
    %v5924 = vpop.f32.mrf.mxu0
    %5925 = vmatprep.mubr.f32.mxu0 0.0
    %v5926 = vand.u32 %v5574, 4294901760
    %v5927 = vsub.f32 %v5574, %v5926
    %v5928 = vand.u32 %v5927, 4294901760
    %5929 = vmatmul.mubr.f32.gmra.mxu0 %v5928
    %v5930 = vpop.f32.mrf.mxu0
    %v5931 = vadd.f32 %v5846, %v5930
    %v5932 = vpop.f32.mrf.mxu0
    %5933 = vdwg.mxu0
    %5934 = vmatprep.subr.mxu0 0.0
    %5935 = vmatpush1.msra.mxu0 0.0
    %5936 = vmatprep.subr.mxu0 0.0
    %5937 = vmatpush1.msra.mxu0 0.0
    %5938 = vmatprep.subr.mxu0 0.0
    %5939 = vmatpush1.msra.mxu0 0.0
    %5940 = vmatprep.subr.mxu0 0.0
    %5941 = vmatpush1.msra.mxu0 0.0
    %5942 = vmatprep.subr.mxu0 0.0
    %5943 = vmatpush1.msra.mxu0 0.0
    %5944 = vmatprep.subr.mxu0 0.0
    %5945 = vmatpush1.msra.mxu0 0.0
    %5946 = vmatprep.subr.mxu0 0.0
    %5947 = vmatpush1.msra.mxu0 0.0
    %5948 = vmatprep.subr.mxu0 0.0
    %5949 = vmatpush1.msra.mxu0 0.0
    %5950 = vmatprep.subr.mxu0 0.0
    %5951 = vmatpush1.msra.mxu0 0.0
    %5952 = vmatprep.subr.mxu0 0.0
    %5953 = vmatpush1.msra.mxu0 0.0
    %5954 = vmatprep.subr.mxu0 0.0
    %5955 = vmatpush1.msra.mxu0 0.0
    %5956 = vmatprep.subr.mxu0 0.0
    %5957 = vmatpush1.msra.mxu0 0.0
    %5958 = vmatprep.subr.mxu0 0.0
    %v5959 = vand.u32 %v5569, 4294901760
    %v5960 = vsub.f32 %v5569, %v5959
    %v5961 = vand.u32 %v5960, 4294901760
    %5962 = vmatpush1.msra.mxu0 %v5961
    %5963 = vmatprep.subr.mxu0 0.0
    %v5964 = vand.u32 %v5568, 4294901760
    %v5965 = vsub.f32 %v5568, %v5964
    %v5966 = vand.u32 %v5965, 4294901760
    %5967 = vmatpush1.msra.mxu0 %v5966
    %5968 = vmatprep.subr.mxu0 0.0
    %v5969 = vand.u32 %v5567, 4294901760
    %v5970 = vsub.f32 %v5567, %v5969
    %v5971 = vand.u32 %v5970, 4294901760
    %5972 = vmatpush1.msra.mxu0 %v5971
    %5973 = vmatprep.subr.mxu0 0.0
    %v5974 = vand.u32 %v5566, 4294901760
    %v5975 = vsub.f32 %v5566, %v5974
    %v5976 = vand.u32 %v5975, 4294901760
    %5977 = vmatpush1.msra.mxu0 %v5976
    %5978 = vmatprep.subr.mxu0 0.0
    %5979 = vmatpush2.msra.mxu0 0.0
    %5980 = vmatprep.subr.mxu0 0.0
    %5981 = vmatpush2.msra.mxu0 0.0
    %5982 = vmatprep.subr.mxu0 0.0
    %5983 = vmatpush2.msra.mxu0 0.0
    %5984 = vmatprep.subr.mxu0 0.0
    %5985 = vmatpush2.msra.mxu0 0.0
    %5986 = vmatprep.subr.mxu0 0.0
    %5987 = vmatpush2.msra.mxu0 0.0
    %5988 = vmatprep.subr.mxu0 0.0
    %5989 = vmatpush2.msra.mxu0 0.0
    %5990 = vmatprep.subr.mxu0 0.0
    %5991 = vmatpush2.msra.mxu0 0.0
    %5992 = vmatprep.subr.mxu0 0.0
    %5993 = vmatpush2.msra.mxu0 0.0
    %5994 = vmatprep.subr.mxu0 0.0
    %5995 = vmatpush2.msra.mxu0 0.0
    %5996 = vmatprep.subr.mxu0 0.0
    %5997 = vmatpush2.msra.mxu0 0.0
    %5998 = vmatprep.subr.mxu0 0.0
    %5999 = vmatpush2.msra.mxu0 0.0
    %6000 = vmatprep.subr.mxu0 0.0
    %6001 = vmatpush2.msra.mxu0 0.0
    %6002 = vmatprep.subr.mxu0 0.0
    %6003 = vmatpush2.msra.mxu0 0.0
    %6004 = vmatprep.subr.mxu0 0.0
    %6005 = vmatpush2.msra.mxu0 0.0
    %6006 = vmatprep.subr.mxu0 0.0
    %6007 = vmatpush2.msra.mxu0 0.0
    %6008 = vmatprep.subr.mxu0 0.0
    %6009 = vmatpush2.msra.mxu0 0.0
    %6010 = vmatprep.mubr.f32.mxu0 0.0
    %v6011 = vand.u32 %v5571, 4294901760
    %6012 = vmatmul.mubr.f32.gmra.mxu0 %v6011
    %v6013 = vpop.f32.mrf.mxu0
    %v6014 = vadd.f32 %v5923, %v6013
    %v6015 = vpop.f32.mrf.mxu0
    %6016 = vmatprep.mubr.f32.mxu0 0.0
    %v6017 = vand.u32 %v5574, 4294901760
    %6018 = vmatmul.mubr.f32.gmra.mxu0 %v6017
    %v6019 = vpop.f32.mrf.mxu0
    %v6020 = vadd.f32 %v5931, %v6019
    %v6021 = vpop.f32.mrf.mxu0
    %6022 = vdwg.mxu0
    %6023 = vmatprep.subr.mxu0 0.0
    %6024 = vmatpush1.msra.mxu0 0.0
    %6025 = vmatprep.subr.mxu0 0.0
    %6026 = vmatpush1.msra.mxu0 0.0
    %6027 = vmatprep.subr.mxu0 0.0
    %6028 = vmatpush1.msra.mxu0 0.0
    %6029 = vmatprep.subr.mxu0 0.0
    %6030 = vmatpush1.msra.mxu0 0.0
    %6031 = vmatprep.subr.mxu0 0.0
    %6032 = vmatpush1.msra.mxu0 0.0
    %6033 = vmatprep.subr.mxu0 0.0
    %6034 = vmatpush1.msra.mxu0 0.0
    %6035 = vmatprep.subr.mxu0 0.0
    %6036 = vmatpush1.msra.mxu0 0.0
    %6037 = vmatprep.subr.mxu0 0.0
    %6038 = vmatpush1.msra.mxu0 0.0
    %6039 = vmatprep.subr.mxu0 0.0
    %6040 = vmatpush1.msra.mxu0 0.0
    %6041 = vmatprep.subr.mxu0 0.0
    %6042 = vmatpush1.msra.mxu0 0.0
    %6043 = vmatprep.subr.mxu0 0.0
    %6044 = vmatpush1.msra.mxu0 0.0
    %6045 = vmatprep.subr.mxu0 0.0
    %6046 = vmatpush1.msra.mxu0 0.0
    %6047 = vmatprep.subr.mxu0 0.0
    %v6048 = vand.u32 %v5569, 4294901760
    %6049 = vmatpush1.msra.mxu0 %v6048
    %6050 = vmatprep.subr.mxu0 0.0
    %v6051 = vand.u32 %v5568, 4294901760
    %6052 = vmatpush1.msra.mxu0 %v6051
    %6053 = vmatprep.subr.mxu0 0.0
    %v6054 = vand.u32 %v5567, 4294901760
    %6055 = vmatpush1.msra.mxu0 %v6054
    %6056 = vmatprep.subr.mxu0 0.0
    %v6057 = vand.u32 %v5566, 4294901760
    %6058 = vmatpush1.msra.mxu0 %v6057
    %6059 = vmatprep.subr.mxu0 0.0
    %6060 = vmatpush2.msra.mxu0 0.0
    %6061 = vmatprep.subr.mxu0 0.0
    %6062 = vmatpush2.msra.mxu0 0.0
    %6063 = vmatprep.subr.mxu0 0.0
    %6064 = vmatpush2.msra.mxu0 0.0
    %6065 = vmatprep.subr.mxu0 0.0
    %6066 = vmatpush2.msra.mxu0 0.0
    %6067 = vmatprep.subr.mxu0 0.0
    %6068 = vmatpush2.msra.mxu0 0.0
    %6069 = vmatprep.subr.mxu0 0.0
    %6070 = vmatpush2.msra.mxu0 0.0
    %6071 = vmatprep.subr.mxu0 0.0
    %6072 = vmatpush2.msra.mxu0 0.0
    %6073 = vmatprep.subr.mxu0 0.0
    %6074 = vmatpush2.msra.mxu0 0.0
    %6075 = vmatprep.subr.mxu0 0.0
    %6076 = vmatpush2.msra.mxu0 0.0
    %6077 = vmatprep.subr.mxu0 0.0
    %6078 = vmatpush2.msra.mxu0 0.0
    %6079 = vmatprep.subr.mxu0 0.0
    %6080 = vmatpush2.msra.mxu0 0.0
    %6081 = vmatprep.subr.mxu0 0.0
    %6082 = vmatpush2.msra.mxu0 0.0
    %6083 = vmatprep.subr.mxu0 0.0
    %6084 = vmatpush2.msra.mxu0 0.0
    %6085 = vmatprep.subr.mxu0 0.0
    %6086 = vmatpush2.msra.mxu0 0.0
    %6087 = vmatprep.subr.mxu0 0.0
    %6088 = vmatpush2.msra.mxu0 0.0
    %6089 = vmatprep.subr.mxu0 0.0
    %6090 = vmatpush2.msra.mxu0 0.0
    %6091 = vmatprep.mubr.f32.mxu0 0.0
    %v6092 = vand.u32 %v5571, 4294901760
    %6093 = vmatmul.mubr.f32.gmra.mxu0 %v6092
    %v6094 = vpop.f32.mrf.mxu0
    %v6095 = vadd.f32 %v6014, %v6094
    %v6096 = vpop.f32.mrf.mxu0
    %6097 = vmatprep.mubr.f32.mxu0 0.0
    %v6098 = vand.u32 %v5574, 4294901760
    %6099 = vmatmul.mubr.f32.gmra.mxu0 %v6098
    %v6100 = vpop.f32.mrf.mxu0
    %v6101 = vadd.f32 %v6020, %v6100
    %v6102 = vpop.f32.mrf.mxu0
    %6103 = vdwg.mxu0
    %v6105 = vsel %vm4608, %v24, 0
    %v6108 = vsel %vm4608, %v25, 0
    %6110 = vmatprep.subr.mxu0 0.0
    %6111 = vmatpush1.msra.mxu0 0.0
    %6112 = vmatprep.subr.mxu0 0.0
    %6113 = vmatpush1.msra.mxu0 0.0
    %6114 = vmatprep.subr.mxu0 0.0
    %6115 = vmatpush1.msra.mxu0 0.0
    %6116 = vmatprep.subr.mxu0 0.0
    %6117 = vmatpush1.msra.mxu0 0.0
    %6118 = vmatprep.subr.mxu0 0.0
    %6119 = vmatpush1.msra.mxu0 0.0
    %6120 = vmatprep.subr.mxu0 0.0
    %6121 = vmatpush1.msra.mxu0 0.0
    %6122 = vmatprep.subr.mxu0 0.0
    %6123 = vmatpush1.msra.mxu0 0.0
    %6124 = vmatprep.subr.mxu0 0.0
    %6125 = vmatpush1.msra.mxu0 0.0
    %6126 = vmatprep.subr.mxu0 0.0
    %6127 = vmatpush1.msra.mxu0 0.0
    %6128 = vmatprep.subr.mxu0 0.0
    %6129 = vmatpush1.msra.mxu0 0.0
    %6130 = vmatprep.subr.mxu0 0.0
    %6131 = vmatpush1.msra.mxu0 0.0
    %6132 = vmatprep.subr.mxu0 0.0
    %6133 = vmatpush1.msra.mxu0 0.0
    %6134 = vmatprep.subr.mxu0 0.0
    %6135 = vmatpush1.msra.mxu0 0.0
    %6136 = vmatprep.subr.mxu0 0.0
    %6137 = vmatpush1.msra.mxu0 0.0
    %6138 = vmatprep.subr.mxu0 0.0
    %v6139 = vand.u32 %v5565, 4294901760
    %6140 = vmatpush1.msra.mxu0 %v6139
    %6141 = vmatprep.subr.mxu0 0.0
    %v6142 = vand.u32 %v5564, 4294901760
    %6143 = vmatpush1.msra.mxu0 %v6142
    %6144 = vmatprep.subr.mxu0 0.0
    %6145 = vmatpush2.msra.mxu0 0.0
    %6146 = vmatprep.subr.mxu0 0.0
    %6147 = vmatpush2.msra.mxu0 0.0
    %6148 = vmatprep.subr.mxu0 0.0
    %6149 = vmatpush2.msra.mxu0 0.0
    %6150 = vmatprep.subr.mxu0 0.0
    %6151 = vmatpush2.msra.mxu0 0.0
    %6152 = vmatprep.subr.mxu0 0.0
    %6153 = vmatpush2.msra.mxu0 0.0
    %6154 = vmatprep.subr.mxu0 0.0
    %6155 = vmatpush2.msra.mxu0 0.0
    %6156 = vmatprep.subr.mxu0 0.0
    %6157 = vmatpush2.msra.mxu0 0.0
    %6158 = vmatprep.subr.mxu0 0.0
    %6159 = vmatpush2.msra.mxu0 0.0
    %6160 = vmatprep.subr.mxu0 0.0
    %6161 = vmatpush2.msra.mxu0 0.0
    %6162 = vmatprep.subr.mxu0 0.0
    %6163 = vmatpush2.msra.mxu0 0.0
    %6164 = vmatprep.subr.mxu0 0.0
    %6165 = vmatpush2.msra.mxu0 0.0
    %6166 = vmatprep.subr.mxu0 0.0
    %6167 = vmatpush2.msra.mxu0 0.0
    %6168 = vmatprep.subr.mxu0 0.0
    %6169 = vmatpush2.msra.mxu0 0.0
    %6170 = vmatprep.subr.mxu0 0.0
    %6171 = vmatpush2.msra.mxu0 0.0
    %6172 = vmatprep.subr.mxu0 0.0
    %6173 = vmatpush2.msra.mxu0 0.0
    %6174 = vmatprep.subr.mxu0 0.0
    %6175 = vmatpush2.msra.mxu0 0.0
    %6176 = vmatprep.mubr.f32.mxu0 0.0
    %v6177 = vand.u32 %v6105, 4294901760
    %v6178 = vsub.f32 %v6105, %v6177
    %v6179 = vand.u32 %v6178, 4294901760
    %v6180 = vsub.f32 %v6178, %v6179
    %v6181 = vand.u32 %v6180, 4294901760
    %6182 = vmatmul.mubr.f32.gmra.mxu0 %v6181
    %v6183 = vpop.f32.mrf.mxu0
    %v6184 = vadd.f32 %v6095, %v6183
    %v6185 = vpop.f32.mrf.mxu0
    %6186 = vmatprep.mubr.f32.mxu0 0.0
    %v6187 = vand.u32 %v6108, 4294901760
    %v6188 = vsub.f32 %v6108, %v6187
    %v6189 = vand.u32 %v6188, 4294901760
    %v6190 = vsub.f32 %v6188, %v6189
    %v6191 = vand.u32 %v6190, 4294901760
    %6192 = vmatmul.mubr.f32.gmra.mxu0 %v6191
    %v6193 = vpop.f32.mrf.mxu0
    %v6194 = vadd.f32 %v6101, %v6193
    %v6195 = vpop.f32.mrf.mxu0
    %6196 = vdwg.mxu0
    %6197 = vmatprep.subr.mxu0 0.0
    %6198 = vmatpush1.msra.mxu0 0.0
    %6199 = vmatprep.subr.mxu0 0.0
    %6200 = vmatpush1.msra.mxu0 0.0
    %6201 = vmatprep.subr.mxu0 0.0
    %6202 = vmatpush1.msra.mxu0 0.0
    %6203 = vmatprep.subr.mxu0 0.0
    %6204 = vmatpush1.msra.mxu0 0.0
    %6205 = vmatprep.subr.mxu0 0.0
    %6206 = vmatpush1.msra.mxu0 0.0
    %6207 = vmatprep.subr.mxu0 0.0
    %6208 = vmatpush1.msra.mxu0 0.0
    %6209 = vmatprep.subr.mxu0 0.0
    %6210 = vmatpush1.msra.mxu0 0.0
    %6211 = vmatprep.subr.mxu0 0.0
    %6212 = vmatpush1.msra.mxu0 0.0
    %6213 = vmatprep.subr.mxu0 0.0
    %6214 = vmatpush1.msra.mxu0 0.0
    %6215 = vmatprep.subr.mxu0 0.0
    %6216 = vmatpush1.msra.mxu0 0.0
    %6217 = vmatprep.subr.mxu0 0.0
    %6218 = vmatpush1.msra.mxu0 0.0
    %6219 = vmatprep.subr.mxu0 0.0
    %6220 = vmatpush1.msra.mxu0 0.0
    %6221 = vmatprep.subr.mxu0 0.0
    %6222 = vmatpush1.msra.mxu0 0.0
    %6223 = vmatprep.subr.mxu0 0.0
    %6224 = vmatpush1.msra.mxu0 0.0
    %6225 = vmatprep.subr.mxu0 0.0
    %v6226 = vand.u32 %v5565, 4294901760
    %v6227 = vsub.f32 %v5565, %v6226
    %v6228 = vand.u32 %v6227, 4294901760
    %v6229 = vsub.f32 %v6227, %v6228
    %v6230 = vand.u32 %v6229, 4294901760
    %6231 = vmatpush1.msra.mxu0 %v6230
    %6232 = vmatprep.subr.mxu0 0.0
    %v6233 = vand.u32 %v5564, 4294901760
    %v6234 = vsub.f32 %v5564, %v6233
    %v6235 = vand.u32 %v6234, 4294901760
    %v6236 = vsub.f32 %v6234, %v6235
    %v6237 = vand.u32 %v6236, 4294901760
    %6238 = vmatpush1.msra.mxu0 %v6237
    %6239 = vmatprep.subr.mxu0 0.0
    %6240 = vmatpush2.msra.mxu0 0.0
    %6241 = vmatprep.subr.mxu0 0.0
    %6242 = vmatpush2.msra.mxu0 0.0
    %6243 = vmatprep.subr.mxu0 0.0
    %6244 = vmatpush2.msra.mxu0 0.0
    %6245 = vmatprep.subr.mxu0 0.0
    %6246 = vmatpush2.msra.mxu0 0.0
    %6247 = vmatprep.subr.mxu0 0.0
    %6248 = vmatpush2.msra.mxu0 0.0
    %6249 = vmatprep.subr.mxu0 0.0
    %6250 = vmatpush2.msra.mxu0 0.0
    %6251 = vmatprep.subr.mxu0 0.0
    %6252 = vmatpush2.msra.mxu0 0.0
    %6253 = vmatprep.subr.mxu0 0.0
    %6254 = vmatpush2.msra.mxu0 0.0
    %6255 = vmatprep.subr.mxu0 0.0
    %6256 = vmatpush2.msra.mxu0 0.0
    %6257 = vmatprep.subr.mxu0 0.0
    %6258 = vmatpush2.msra.mxu0 0.0
    %6259 = vmatprep.subr.mxu0 0.0
    %6260 = vmatpush2.msra.mxu0 0.0
    %6261 = vmatprep.subr.mxu0 0.0
    %6262 = vmatpush2.msra.mxu0 0.0
    %6263 = vmatprep.subr.mxu0 0.0
    %6264 = vmatpush2.msra.mxu0 0.0
    %6265 = vmatprep.subr.mxu0 0.0
    %6266 = vmatpush2.msra.mxu0 0.0
    %6267 = vmatprep.subr.mxu0 0.0
    %6268 = vmatpush2.msra.mxu0 0.0
    %6269 = vmatprep.subr.mxu0 0.0
    %6270 = vmatpush2.msra.mxu0 0.0
    %6271 = vmatprep.mubr.f32.mxu0 0.0
    %v6272 = vand.u32 %v6105, 4294901760
    %6273 = vmatmul.mubr.f32.gmra.mxu0 %v6272
    %v6274 = vpop.f32.mrf.mxu0
    %v6275 = vadd.f32 %v6184, %v6274
    %v6276 = vpop.f32.mrf.mxu0
    %6277 = vmatprep.mubr.f32.mxu0 0.0
    %v6278 = vand.u32 %v6108, 4294901760
    %6279 = vmatmul.mubr.f32.gmra.mxu0 %v6278
    %v6280 = vpop.f32.mrf.mxu0
    %v6281 = vadd.f32 %v6194, %v6280
    %v6282 = vpop.f32.mrf.mxu0
    %6283 = vdwg.mxu0
    %6284 = vmatprep.subr.mxu0 0.0
    %6285 = vmatpush1.msra.mxu0 0.0
    %6286 = vmatprep.subr.mxu0 0.0
    %6287 = vmatpush1.msra.mxu0 0.0
    %6288 = vmatprep.subr.mxu0 0.0
    %6289 = vmatpush1.msra.mxu0 0.0
    %6290 = vmatprep.subr.mxu0 0.0
    %6291 = vmatpush1.msra.mxu0 0.0
    %6292 = vmatprep.subr.mxu0 0.0
    %6293 = vmatpush1.msra.mxu0 0.0
    %6294 = vmatprep.subr.mxu0 0.0
    %6295 = vmatpush1.msra.mxu0 0.0
    %6296 = vmatprep.subr.mxu0 0.0
    %6297 = vmatpush1.msra.mxu0 0.0
    %6298 = vmatprep.subr.mxu0 0.0
    %6299 = vmatpush1.msra.mxu0 0.0
    %6300 = vmatprep.subr.mxu0 0.0
    %6301 = vmatpush1.msra.mxu0 0.0
    %6302 = vmatprep.subr.mxu0 0.0
    %6303 = vmatpush1.msra.mxu0 0.0
    %6304 = vmatprep.subr.mxu0 0.0
    %6305 = vmatpush1.msra.mxu0 0.0
    %6306 = vmatprep.subr.mxu0 0.0
    %6307 = vmatpush1.msra.mxu0 0.0
    %6308 = vmatprep.subr.mxu0 0.0
    %6309 = vmatpush1.msra.mxu0 0.0
    %6310 = vmatprep.subr.mxu0 0.0
    %6311 = vmatpush1.msra.mxu0 0.0
    %6312 = vmatprep.subr.mxu0 0.0
    %v6313 = vand.u32 %v5565, 4294901760
    %v6314 = vsub.f32 %v5565, %v6313
    %6315 = vmatpush1.msra.mxu0 %v6314
    %6316 = vmatprep.subr.mxu0 0.0
    %v6317 = vand.u32 %v5564, 4294901760
    %v6318 = vsub.f32 %v5564, %v6317
    %6319 = vmatpush1.msra.mxu0 %v6318
    %6320 = vmatprep.subr.mxu0 0.0
    %6321 = vmatpush2.msra.mxu0 0.0
    %6322 = vmatprep.subr.mxu0 0.0
    %6323 = vmatpush2.msra.mxu0 0.0
    %6324 = vmatprep.subr.mxu0 0.0
    %6325 = vmatpush2.msra.mxu0 0.0
    %6326 = vmatprep.subr.mxu0 0.0
    %6327 = vmatpush2.msra.mxu0 0.0
    %6328 = vmatprep.subr.mxu0 0.0
    %6329 = vmatpush2.msra.mxu0 0.0
    %6330 = vmatprep.subr.mxu0 0.0
    %6331 = vmatpush2.msra.mxu0 0.0
    %6332 = vmatprep.subr.mxu0 0.0
    %6333 = vmatpush2.msra.mxu0 0.0
    %6334 = vmatprep.subr.mxu0 0.0
    %6335 = vmatpush2.msra.mxu0 0.0
    %6336 = vmatprep.subr.mxu0 0.0
    %6337 = vmatpush2.msra.mxu0 0.0
    %6338 = vmatprep.subr.mxu0 0.0
    %6339 = vmatpush2.msra.mxu0 0.0
    %6340 = vmatprep.subr.mxu0 0.0
    %6341 = vmatpush2.msra.mxu0 0.0
    %6342 = vmatprep.subr.mxu0 0.0
    %6343 = vmatpush2.msra.mxu0 0.0
    %6344 = vmatprep.subr.mxu0 0.0
    %6345 = vmatpush2.msra.mxu0 0.0
    %6346 = vmatprep.subr.mxu0 0.0
    %6347 = vmatpush2.msra.mxu0 0.0
    %6348 = vmatprep.subr.mxu0 0.0
    %6349 = vmatpush2.msra.mxu0 0.0
    %6350 = vmatprep.subr.mxu0 0.0
    %6351 = vmatpush2.msra.mxu0 0.0
    %6352 = vmatprep.mubr.f32.mxu0 0.0
    %v6353 = vand.u32 %v6105, 4294901760
    %v6354 = vsub.f32 %v6105, %v6353
    %6355 = vmatmul.mubr.f32.gmra.mxu0 %v6354
    %v6356 = vpop.f32.mrf.mxu0
    %v6357 = vadd.f32 %v6275, %v6356
    %v6358 = vpop.f32.mrf.mxu0
    %6359 = vmatprep.mubr.f32.mxu0 0.0
    %v6360 = vand.u32 %v6108, 4294901760
    %v6361 = vsub.f32 %v6108, %v6360
    %6362 = vmatmul.mubr.f32.gmra.mxu0 %v6361
    %v6363 = vpop.f32.mrf.mxu0
    %v6364 = vadd.f32 %v6281, %v6363
    %v6365 = vpop.f32.mrf.mxu0
    %6366 = vdwg.mxu0
    %6367 = vmatprep.subr.mxu0 0.0
    %6368 = vmatpush1.msra.mxu0 0.0
    %6369 = vmatprep.subr.mxu0 0.0
    %6370 = vmatpush1.msra.mxu0 0.0
    %6371 = vmatprep.subr.mxu0 0.0
    %6372 = vmatpush1.msra.mxu0 0.0
    %6373 = vmatprep.subr.mxu0 0.0
    %6374 = vmatpush1.msra.mxu0 0.0
    %6375 = vmatprep.subr.mxu0 0.0
    %6376 = vmatpush1.msra.mxu0 0.0
    %6377 = vmatprep.subr.mxu0 0.0
    %6378 = vmatpush1.msra.mxu0 0.0
    %6379 = vmatprep.subr.mxu0 0.0
    %6380 = vmatpush1.msra.mxu0 0.0
    %6381 = vmatprep.subr.mxu0 0.0
    %6382 = vmatpush1.msra.mxu0 0.0
    %6383 = vmatprep.subr.mxu0 0.0
    %6384 = vmatpush1.msra.mxu0 0.0
    %6385 = vmatprep.subr.mxu0 0.0
    %6386 = vmatpush1.msra.mxu0 0.0
    %6387 = vmatprep.subr.mxu0 0.0
    %6388 = vmatpush1.msra.mxu0 0.0
    %6389 = vmatprep.subr.mxu0 0.0
    %6390 = vmatpush1.msra.mxu0 0.0
    %6391 = vmatprep.subr.mxu0 0.0
    %6392 = vmatpush1.msra.mxu0 0.0
    %6393 = vmatprep.subr.mxu0 0.0
    %6394 = vmatpush1.msra.mxu0 0.0
    %6395 = vmatprep.subr.mxu0 0.0
    %v6396 = vand.u32 %v5565, 4294901760
    %6397 = vmatpush1.msra.mxu0 %v6396
    %6398 = vmatprep.subr.mxu0 0.0
    %v6399 = vand.u32 %v5564, 4294901760
    %6400 = vmatpush1.msra.mxu0 %v6399
    %6401 = vmatprep.subr.mxu0 0.0
    %6402 = vmatpush2.msra.mxu0 0.0
    %6403 = vmatprep.subr.mxu0 0.0
    %6404 = vmatpush2.msra.mxu0 0.0
    %6405 = vmatprep.subr.mxu0 0.0
    %6406 = vmatpush2.msra.mxu0 0.0
    %6407 = vmatprep.subr.mxu0 0.0
    %6408 = vmatpush2.msra.mxu0 0.0
    %6409 = vmatprep.subr.mxu0 0.0
    %6410 = vmatpush2.msra.mxu0 0.0
    %6411 = vmatprep.subr.mxu0 0.0
    %6412 = vmatpush2.msra.mxu0 0.0
    %6413 = vmatprep.subr.mxu0 0.0
    %6414 = vmatpush2.msra.mxu0 0.0
    %6415 = vmatprep.subr.mxu0 0.0
    %6416 = vmatpush2.msra.mxu0 0.0
    %6417 = vmatprep.subr.mxu0 0.0
    %6418 = vmatpush2.msra.mxu0 0.0
    %6419 = vmatprep.subr.mxu0 0.0
    %6420 = vmatpush2.msra.mxu0 0.0
    %6421 = vmatprep.subr.mxu0 0.0
    %6422 = vmatpush2.msra.mxu0 0.0
    %6423 = vmatprep.subr.mxu0 0.0
    %6424 = vmatpush2.msra.mxu0 0.0
    %6425 = vmatprep.subr.mxu0 0.0
    %6426 = vmatpush2.msra.mxu0 0.0
    %6427 = vmatprep.subr.mxu0 0.0
    %6428 = vmatpush2.msra.mxu0 0.0
    %6429 = vmatprep.subr.mxu0 0.0
    %6430 = vmatpush2.msra.mxu0 0.0
    %6431 = vmatprep.subr.mxu0 0.0
    %6432 = vmatpush2.msra.mxu0 0.0
    %6433 = vmatprep.mubr.f32.mxu0 0.0
    %v6434 = vand.u32 %v6105, 4294901760
    %v6435 = vsub.f32 %v6105, %v6434
    %v6436 = vand.u32 %v6435, 4294901760
    %6437 = vmatmul.mubr.f32.gmra.mxu0 %v6436
    %v6438 = vpop.f32.mrf.mxu0
    %v6439 = vadd.f32 %v6357, %v6438
    %v6440 = vpop.f32.mrf.mxu0
    %6441 = vmatprep.mubr.f32.mxu0 0.0
    %v6442 = vand.u32 %v6108, 4294901760
    %v6443 = vsub.f32 %v6108, %v6442
    %v6444 = vand.u32 %v6443, 4294901760
    %6445 = vmatmul.mubr.f32.gmra.mxu0 %v6444
    %v6446 = vpop.f32.mrf.mxu0
    %v6447 = vadd.f32 %v6364, %v6446
    %v6448 = vpop.f32.mrf.mxu0
    %6449 = vdwg.mxu0
    %6450 = vmatprep.subr.mxu0 0.0
    %6451 = vmatpush1.msra.mxu0 0.0
    %6452 = vmatprep.subr.mxu0 0.0
    %6453 = vmatpush1.msra.mxu0 0.0
    %6454 = vmatprep.subr.mxu0 0.0
    %6455 = vmatpush1.msra.mxu0 0.0
    %6456 = vmatprep.subr.mxu0 0.0
    %6457 = vmatpush1.msra.mxu0 0.0
    %6458 = vmatprep.subr.mxu0 0.0
    %6459 = vmatpush1.msra.mxu0 0.0
    %6460 = vmatprep.subr.mxu0 0.0
    %6461 = vmatpush1.msra.mxu0 0.0
    %6462 = vmatprep.subr.mxu0 0.0
    %6463 = vmatpush1.msra.mxu0 0.0
    %6464 = vmatprep.subr.mxu0 0.0
    %6465 = vmatpush1.msra.mxu0 0.0
    %6466 = vmatprep.subr.mxu0 0.0
    %6467 = vmatpush1.msra.mxu0 0.0
    %6468 = vmatprep.subr.mxu0 0.0
    %6469 = vmatpush1.msra.mxu0 0.0
    %6470 = vmatprep.subr.mxu0 0.0
    %6471 = vmatpush1.msra.mxu0 0.0
    %6472 = vmatprep.subr.mxu0 0.0
    %6473 = vmatpush1.msra.mxu0 0.0
    %6474 = vmatprep.subr.mxu0 0.0
    %6475 = vmatpush1.msra.mxu0 0.0
    %6476 = vmatprep.subr.mxu0 0.0
    %6477 = vmatpush1.msra.mxu0 0.0
    %6478 = vmatprep.subr.mxu0 0.0
    %v6479 = vand.u32 %v5565, 4294901760
    %v6480 = vsub.f32 %v5565, %v6479
    %v6481 = vand.u32 %v6480, 4294901760
    %6482 = vmatpush1.msra.mxu0 %v6481
    %6483 = vmatprep.subr.mxu0 0.0
    %v6484 = vand.u32 %v5564, 4294901760
    %v6485 = vsub.f32 %v5564, %v6484
    %v6486 = vand.u32 %v6485, 4294901760
    %6487 = vmatpush1.msra.mxu0 %v6486
    %6488 = vmatprep.subr.mxu0 0.0
    %6489 = vmatpush2.msra.mxu0 0.0
    %6490 = vmatprep.subr.mxu0 0.0
    %6491 = vmatpush2.msra.mxu0 0.0
    %6492 = vmatprep.subr.mxu0 0.0
    %6493 = vmatpush2.msra.mxu0 0.0
    %6494 = vmatprep.subr.mxu0 0.0
    %6495 = vmatpush2.msra.mxu0 0.0
    %6496 = vmatprep.subr.mxu0 0.0
    %6497 = vmatpush2.msra.mxu0 0.0
    %6498 = vmatprep.subr.mxu0 0.0
    %6499 = vmatpush2.msra.mxu0 0.0
    %6500 = vmatprep.subr.mxu0 0.0
    %6501 = vmatpush2.msra.mxu0 0.0
    %6502 = vmatprep.subr.mxu0 0.0
    %6503 = vmatpush2.msra.mxu0 0.0
    %6504 = vmatprep.subr.mxu0 0.0
    %6505 = vmatpush2.msra.mxu0 0.0
    %6506 = vmatprep.subr.mxu0 0.0
    %6507 = vmatpush2.msra.mxu0 0.0
    %6508 = vmatprep.subr.mxu0 0.0
    %6509 = vmatpush2.msra.mxu0 0.0
    %6510 = vmatprep.subr.mxu0 0.0
    %6511 = vmatpush2.msra.mxu0 0.0
    %6512 = vmatprep.subr.mxu0 0.0
    %6513 = vmatpush2.msra.mxu0 0.0
    %6514 = vmatprep.subr.mxu0 0.0
    %6515 = vmatpush2.msra.mxu0 0.0
    %6516 = vmatprep.subr.mxu0 0.0
    %6517 = vmatpush2.msra.mxu0 0.0
    %6518 = vmatprep.subr.mxu0 0.0
    %6519 = vmatpush2.msra.mxu0 0.0
    %6520 = vmatprep.mubr.f32.mxu0 0.0
    %v6521 = vand.u32 %v6105, 4294901760
    %6522 = vmatmul.mubr.f32.gmra.mxu0 %v6521
    %v6523 = vpop.f32.mrf.mxu0
    %v6524 = vadd.f32 %v6439, %v6523
    %v6525 = vpop.f32.mrf.mxu0
    %6526 = vmatprep.mubr.f32.mxu0 0.0
    %v6527 = vand.u32 %v6108, 4294901760
    %6528 = vmatmul.mubr.f32.gmra.mxu0 %v6527
    %v6529 = vpop.f32.mrf.mxu0
    %v6530 = vadd.f32 %v6447, %v6529
    %v6531 = vpop.f32.mrf.mxu0
    %6532 = vdwg.mxu0
    %6533 = vmatprep.subr.mxu0 0.0
    %6534 = vmatpush1.msra.mxu0 0.0
    %6535 = vmatprep.subr.mxu0 0.0
    %6536 = vmatpush1.msra.mxu0 0.0
    %6537 = vmatprep.subr.mxu0 0.0
    %6538 = vmatpush1.msra.mxu0 0.0
    %6539 = vmatprep.subr.mxu0 0.0
    %6540 = vmatpush1.msra.mxu0 0.0
    %6541 = vmatprep.subr.mxu0 0.0
    %6542 = vmatpush1.msra.mxu0 0.0
    %6543 = vmatprep.subr.mxu0 0.0
    %6544 = vmatpush1.msra.mxu0 0.0
    %6545 = vmatprep.subr.mxu0 0.0
    %6546 = vmatpush1.msra.mxu0 0.0
    %6547 = vmatprep.subr.mxu0 0.0
    %6548 = vmatpush1.msra.mxu0 0.0
    %6549 = vmatprep.subr.mxu0 0.0
    %6550 = vmatpush1.msra.mxu0 0.0
    %6551 = vmatprep.subr.mxu0 0.0
    %6552 = vmatpush1.msra.mxu0 0.0
    %6553 = vmatprep.subr.mxu0 0.0
    %6554 = vmatpush1.msra.mxu0 0.0
    %6555 = vmatprep.subr.mxu0 0.0
    %6556 = vmatpush1.msra.mxu0 0.0
    %6557 = vmatprep.subr.mxu0 0.0
    %6558 = vmatpush1.msra.mxu0 0.0
    %6559 = vmatprep.subr.mxu0 0.0
    %6560 = vmatpush1.msra.mxu0 0.0
    %6561 = vmatprep.subr.mxu0 0.0
    %v6562 = vand.u32 %v5565, 4294901760
    %6563 = vmatpush1.msra.mxu0 %v6562
    %6564 = vmatprep.subr.mxu0 0.0
    %v6565 = vand.u32 %v5564, 4294901760
    %6566 = vmatpush1.msra.mxu0 %v6565
    %6567 = vmatprep.subr.mxu0 0.0
    %6568 = vmatpush2.msra.mxu0 0.0
    %6569 = vmatprep.subr.mxu0 0.0
    %6570 = vmatpush2.msra.mxu0 0.0
    %6571 = vmatprep.subr.mxu0 0.0
    %6572 = vmatpush2.msra.mxu0 0.0
    %6573 = vmatprep.subr.mxu0 0.0
    %6574 = vmatpush2.msra.mxu0 0.0
    %6575 = vmatprep.subr.mxu0 0.0
    %6576 = vmatpush2.msra.mxu0 0.0
    %6577 = vmatprep.subr.mxu0 0.0
    %6578 = vmatpush2.msra.mxu0 0.0
    %6579 = vmatprep.subr.mxu0 0.0
    %6580 = vmatpush2.msra.mxu0 0.0
    %6581 = vmatprep.subr.mxu0 0.0
    %6582 = vmatpush2.msra.mxu0 0.0
    %6583 = vmatprep.subr.mxu0 0.0
    %6584 = vmatpush2.msra.mxu0 0.0
    %6585 = vmatprep.subr.mxu0 0.0
    %6586 = vmatpush2.msra.mxu0 0.0
    %6587 = vmatprep.subr.mxu0 0.0
    %6588 = vmatpush2.msra.mxu0 0.0
    %6589 = vmatprep.subr.mxu0 0.0
    %6590 = vmatpush2.msra.mxu0 0.0
    %6591 = vmatprep.subr.mxu0 0.0
    %6592 = vmatpush2.msra.mxu0 0.0
    %6593 = vmatprep.subr.mxu0 0.0
    %6594 = vmatpush2.msra.mxu0 0.0
    %6595 = vmatprep.subr.mxu0 0.0
    %6596 = vmatpush2.msra.mxu0 0.0
    %6597 = vmatprep.subr.mxu0 0.0
    %6598 = vmatpush2.msra.mxu0 0.0
    %6599 = vmatprep.mubr.f32.mxu0 0.0
    %v6600 = vand.u32 %v6105, 4294901760
    %6601 = vmatmul.mubr.f32.gmra.mxu0 %v6600
    %v6602 = vpop.f32.mrf.mxu0
    %v6603 = vadd.f32 %v6524, %v6602
    %v6604 = vpop.f32.mrf.mxu0
    %6605 = vmatprep.mubr.f32.mxu0 0.0
    %v6606 = vand.u32 %v6108, 4294901760
    %6607 = vmatmul.mubr.f32.gmra.mxu0 %v6606
    %v6608 = vpop.f32.mrf.mxu0
    %v6609 = vadd.f32 %v6530, %v6608
    %v6610 = vpop.f32.mrf.mxu0
    %6611 = vdwg.mxu0
    %vm6612 = vcmp.ge.f32.partialorder %v6603, 0.0
    %vm6613 = vcmp.ge.f32.partialorder %v6609, 0.0
    %v6614 = vmul.f32 %v6603, 0.2
    %v6615 = vmul.f32 %v6609, 0.2
    %v6616 = vsel %vm6612, %v6603, %v6614
    %v6617 = vsel %vm6613, %v6609, %v6615
    %6618 = vst.msk [vmem:[%s4] sm:$0xff] %vm30, %v6616
    %6619 = vst.msk [vmem:[%s4 + $0x8] sm:$0xff] %vm30, %v6617
    %v6620 = vmul.f32 %v2968, %v6616
    %v6621 = vmul.f32 %v2974, %v6617
    %6622 = vmatprep.subr.mxu0 0.0
    %6623 = vmatpush1.msra.mxu0 0.0
    %6624 = vmatprep.subr.mxu0 0.0
    %6625 = vmatpush1.msra.mxu0 0.0
    %6626 = vmatprep.subr.mxu0 0.0
    %6627 = vmatpush1.msra.mxu0 0.0
    %6628 = vmatprep.subr.mxu0 0.0
    %6629 = vmatpush1.msra.mxu0 0.0
    %6630 = vmatprep.subr.mxu0 0.0
    %6631 = vmatpush1.msra.mxu0 0.0
    %6632 = vmatprep.subr.mxu0 0.0
    %6633 = vmatpush1.msra.mxu0 0.0
    %6634 = vmatprep.subr.mxu0 0.0
    %6635 = vmatpush1.msra.mxu0 0.0
    %6636 = vmatprep.subr.mxu0 0.0
    %6637 = vmatpush1.msra.mxu0 0.0
    %6638 = vmatprep.subr.mxu0 0.0
    %6639 = vmatpush1.msra.mxu0 0.0
    %6640 = vmatprep.subr.mxu0 0.0
    %6641 = vmatpush1.msra.mxu0 0.0
    %6642 = vmatprep.subr.mxu0 0.0
    %6643 = vmatpush1.msra.mxu0 0.0
    %6644 = vmatprep.subr.mxu0 0.0
    %6645 = vmatpush1.msra.mxu0 0.0
    %6646 = vmatprep.subr.mxu0 0.0
    %6647 = vmatpush1.msra.mxu0 0.0
    %6648 = vmatprep.subr.mxu0 0.0
    %6649 = vmatpush1.msra.mxu0 0.0
    %6650 = vmatprep.subr.mxu0 0.0
    %v6651 = vand.u32 %v6621, 4294901760
    %6652 = vmatpush1.msra.mxu0 %v6651
    %6653 = vmatprep.subr.mxu0 0.0
    %v6654 = vand.u32 %v6620, 4294901760
    %6655 = vmatpush1.msra.mxu0 %v6654
    %6656 = vmatprep.subr.mxu0 0.0
    %6657 = vmatpush2.msra.mxu0 0.0
    %6658 = vmatprep.subr.mxu0 0.0
    %6659 = vmatpush2.msra.mxu0 0.0
    %6660 = vmatprep.subr.mxu0 0.0
    %6661 = vmatpush2.msra.mxu0 0.0
    %6662 = vmatprep.subr.mxu0 0.0
    %6663 = vmatpush2.msra.mxu0 0.0
    %6664 = vmatprep.subr.mxu0 0.0
    %6665 = vmatpush2.msra.mxu0 0.0
    %6666 = vmatprep.subr.mxu0 0.0
    %6667 = vmatpush2.msra.mxu0 0.0
    %6668 = vmatprep.subr.mxu0 0.0
    %6669 = vmatpush2.msra.mxu0 0.0
    %6670 = vmatprep.subr.mxu0 0.0
    %6671 = vmatpush2.msra.mxu0 0.0
    %6672 = vmatprep.subr.mxu0 0.0
    %6673 = vmatpush2.msra.mxu0 0.0
    %6674 = vmatprep.subr.mxu0 0.0
    %6675 = vmatpush2.msra.mxu0 0.0
    %6676 = vmatprep.subr.mxu0 0.0
    %6677 = vmatpush2.msra.mxu0 0.0
    %6678 = vmatprep.subr.mxu0 0.0
    %6679 = vmatpush2.msra.mxu0 0.0
    %6680 = vmatprep.subr.mxu0 0.0
    %6681 = vmatpush2.msra.mxu0 0.0
    %6682 = vmatprep.subr.mxu0 0.0
    %6683 = vmatpush2.msra.mxu0 0.0
    %6684 = vmatprep.subr.mxu0 0.0
    %6685 = vmatpush2.msra.mxu0 0.0
    %6686 = vmatprep.subr.mxu0 0.0
    %6687 = vmatpush2.msra.mxu0 0.0
    %6688 = vmatprep.mubr.f32.mxu0 0.0
    %v6689 = vand.u32 %v4610, 4294901760
    %v6690 = vsub.f32 %v4610, %v6689
    %v6691 = vand.u32 %v6690, 4294901760
    %v6692 = vsub.f32 %v6690, %v6691
    %v6693 = vand.u32 %v6692, 4294901760
    %6694 = vmatmul.mubr.f32.gmra.mxu0 %v6693
    %v6695 = vpop.f32.mrf.mxu0
    %v6696 = vadd.f32 0.0, %v6695
    %v6697 = vpop.f32.mrf.mxu0
    %6698 = vdwg.mxu0
    %6699 = vmatprep.subr.mxu0 0.0
    %6700 = vmatpush1.msra.mxu0 0.0
    %6701 = vmatprep.subr.mxu0 0.0
    %6702 = vmatpush1.msra.mxu0 0.0
    %6703 = vmatprep.subr.mxu0 0.0
    %6704 = vmatpush1.msra.mxu0 0.0
    %6705 = vmatprep.subr.mxu0 0.0
    %6706 = vmatpush1.msra.mxu0 0.0
    %6707 = vmatprep.subr.mxu0 0.0
    %6708 = vmatpush1.msra.mxu0 0.0
    %6709 = vmatprep.subr.mxu0 0.0
    %6710 = vmatpush1.msra.mxu0 0.0
    %6711 = vmatprep.subr.mxu0 0.0
    %6712 = vmatpush1.msra.mxu0 0.0
    %6713 = vmatprep.subr.mxu0 0.0
    %6714 = vmatpush1.msra.mxu0 0.0
    %6715 = vmatprep.subr.mxu0 0.0
    %6716 = vmatpush1.msra.mxu0 0.0
    %6717 = vmatprep.subr.mxu0 0.0
    %6718 = vmatpush1.msra.mxu0 0.0
    %6719 = vmatprep.subr.mxu0 0.0
    %6720 = vmatpush1.msra.mxu0 0.0
    %6721 = vmatprep.subr.mxu0 0.0
    %6722 = vmatpush1.msra.mxu0 0.0
    %6723 = vmatprep.subr.mxu0 0.0
    %6724 = vmatpush1.msra.mxu0 0.0
    %6725 = vmatprep.subr.mxu0 0.0
    %6726 = vmatpush1.msra.mxu0 0.0
    %6727 = vmatprep.subr.mxu0 0.0
    %v6728 = vand.u32 %v6621, 4294901760
    %v6729 = vsub.f32 %v6621, %v6728
    %v6730 = vand.u32 %v6729, 4294901760
    %v6731 = vsub.f32 %v6729, %v6730
    %v6732 = vand.u32 %v6731, 4294901760
    %6733 = vmatpush1.msra.mxu0 %v6732
    %6734 = vmatprep.subr.mxu0 0.0
    %v6735 = vand.u32 %v6620, 4294901760
    %v6736 = vsub.f32 %v6620, %v6735
    %v6737 = vand.u32 %v6736, 4294901760
    %v6738 = vsub.f32 %v6736, %v6737
    %v6739 = vand.u32 %v6738, 4294901760
    %6740 = vmatpush1.msra.mxu0 %v6739
    %6741 = vmatprep.subr.mxu0 0.0
    %6742 = vmatpush2.msra.mxu0 0.0
    %6743 = vmatprep.subr.mxu0 0.0
    %6744 = vmatpush2.msra.mxu0 0.0
    %6745 = vmatprep.subr.mxu0 0.0
    %6746 = vmatpush2.msra.mxu0 0.0
    %6747 = vmatprep.subr.mxu0 0.0
    %6748 = vmatpush2.msra.mxu0 0.0
    %6749 = vmatprep.subr.mxu0 0.0
    %6750 = vmatpush2.msra.mxu0 0.0
    %6751 = vmatprep.subr.mxu0 0.0
    %6752 = vmatpush2.msra.mxu0 0.0
    %6753 = vmatprep.subr.mxu0 0.0
    %6754 = vmatpush2.msra.mxu0 0.0
    %6755 = vmatprep.subr.mxu0 0.0
    %6756 = vmatpush2.msra.mxu0 0.0
    %6757 = vmatprep.subr.mxu0 0.0
    %6758 = vmatpush2.msra.mxu0 0.0
    %6759 = vmatprep.subr.mxu0 0.0
    %6760 = vmatpush2.msra.mxu0 0.0
    %6761 = vmatprep.subr.mxu0 0.0
    %6762 = vmatpush2.msra.mxu0 0.0
    %6763 = vmatprep.subr.mxu0 0.0
    %6764 = vmatpush2.msra.mxu0 0.0
    %6765 = vmatprep.subr.mxu0 0.0
    %6766 = vmatpush2.msra.mxu0 0.0
    %6767 = vmatprep.subr.mxu0 0.0
    %6768 = vmatpush2.msra.mxu0 0.0
    %6769 = vmatprep.subr.mxu0 0.0
    %6770 = vmatpush2.msra.mxu0 0.0
    %6771 = vmatprep.subr.mxu0 0.0
    %6772 = vmatpush2.msra.mxu0 0.0
    %6773 = vmatprep.mubr.f32.mxu0 0.0
    %v6774 = vand.u32 %v4610, 4294901760
    %6775 = vmatmul.mubr.f32.gmra.mxu0 %v6774
    %v6776 = vpop.f32.mrf.mxu0
    %v6777 = vadd.f32 %v6696, %v6776
    %v6778 = vpop.f32.mrf.mxu0
    %6779 = vdwg.mxu0
    %6780 = vmatprep.subr.mxu0 0.0
    %6781 = vmatpush1.msra.mxu0 0.0
    %6782 = vmatprep.subr.mxu0 0.0
    %6783 = vmatpush1.msra.mxu0 0.0
    %6784 = vmatprep.subr.mxu0 0.0
    %6785 = vmatpush1.msra.mxu0 0.0
    %6786 = vmatprep.subr.mxu0 0.0
    %6787 = vmatpush1.msra.mxu0 0.0
    %6788 = vmatprep.subr.mxu0 0.0
    %6789 = vmatpush1.msra.mxu0 0.0
    %6790 = vmatprep.subr.mxu0 0.0
    %6791 = vmatpush1.msra.mxu0 0.0
    %6792 = vmatprep.subr.mxu0 0.0
    %6793 = vmatpush1.msra.mxu0 0.0
    %6794 = vmatprep.subr.mxu0 0.0
    %6795 = vmatpush1.msra.mxu0 0.0
    %6796 = vmatprep.subr.mxu0 0.0
    %6797 = vmatpush1.msra.mxu0 0.0
    %6798 = vmatprep.subr.mxu0 0.0
    %6799 = vmatpush1.msra.mxu0 0.0
    %6800 = vmatprep.subr.mxu0 0.0
    %6801 = vmatpush1.msra.mxu0 0.0
    %6802 = vmatprep.subr.mxu0 0.0
    %6803 = vmatpush1.msra.mxu0 0.0
    %6804 = vmatprep.subr.mxu0 0.0
    %6805 = vmatpush1.msra.mxu0 0.0
    %6806 = vmatprep.subr.mxu0 0.0
    %6807 = vmatpush1.msra.mxu0 0.0
    %6808 = vmatprep.subr.mxu0 0.0
    %v6809 = vand.u32 %v6621, 4294901760
    %v6810 = vsub.f32 %v6621, %v6809
    %6811 = vmatpush1.msra.mxu0 %v6810
    %6812 = vmatprep.subr.mxu0 0.0
    %v6813 = vand.u32 %v6620, 4294901760
    %v6814 = vsub.f32 %v6620, %v6813
    %6815 = vmatpush1.msra.mxu0 %v6814
    %6816 = vmatprep.subr.mxu0 0.0
    %6817 = vmatpush2.msra.mxu0 0.0
    %6818 = vmatprep.subr.mxu0 0.0
    %6819 = vmatpush2.msra.mxu0 0.0
    %6820 = vmatprep.subr.mxu0 0.0
    %6821 = vmatpush2.msra.mxu0 0.0
    %6822 = vmatprep.subr.mxu0 0.0
    %6823 = vmatpush2.msra.mxu0 0.0
    %6824 = vmatprep.subr.mxu0 0.0
    %6825 = vmatpush2.msra.mxu0 0.0
    %6826 = vmatprep.subr.mxu0 0.0
    %6827 = vmatpush2.msra.mxu0 0.0
    %6828 = vmatprep.subr.mxu0 0.0
    %6829 = vmatpush2.msra.mxu0 0.0
    %6830 = vmatprep.subr.mxu0 0.0
    %6831 = vmatpush2.msra.mxu0 0.0
    %6832 = vmatprep.subr.mxu0 0.0
    %6833 = vmatpush2.msra.mxu0 0.0
    %6834 = vmatprep.subr.mxu0 0.0
    %6835 = vmatpush2.msra.mxu0 0.0
    %6836 = vmatprep.subr.mxu0 0.0
    %6837 = vmatpush2.msra.mxu0 0.0
    %6838 = vmatprep.subr.mxu0 0.0
    %6839 = vmatpush2.msra.mxu0 0.0
    %6840 = vmatprep.subr.mxu0 0.0
    %6841 = vmatpush2.msra.mxu0 0.0
    %6842 = vmatprep.subr.mxu0 0.0
    %6843 = vmatpush2.msra.mxu0 0.0
    %6844 = vmatprep.subr.mxu0 0.0
    %6845 = vmatpush2.msra.mxu0 0.0
    %6846 = vmatprep.subr.mxu0 0.0
    %6847 = vmatpush2.msra.mxu0 0.0
    %6848 = vmatprep.mubr.f32.mxu0 0.0
    %v6849 = vand.u32 %v4610, 4294901760
    %v6850 = vsub.f32 %v4610, %v6849
    %6851 = vmatmul.mubr.f32.gmra.mxu0 %v6850
    %v6852 = vpop.f32.mrf.mxu0
    %v6853 = vadd.f32 %v6777, %v6852
    %v6854 = vpop.f32.mrf.mxu0
    %6855 = vdwg.mxu0
    %6856 = vmatprep.subr.mxu0 0.0
    %6857 = vmatpush1.msra.mxu0 0.0
    %6858 = vmatprep.subr.mxu0 0.0
    %6859 = vmatpush1.msra.mxu0 0.0
    %6860 = vmatprep.subr.mxu0 0.0
    %6861 = vmatpush1.msra.mxu0 0.0
    %6862 = vmatprep.subr.mxu0 0.0
    %6863 = vmatpush1.msra.mxu0 0.0
    %6864 = vmatprep.subr.mxu0 0.0
    %6865 = vmatpush1.msra.mxu0 0.0
    %6866 = vmatprep.subr.mxu0 0.0
    %6867 = vmatpush1.msra.mxu0 0.0
    %6868 = vmatprep.subr.mxu0 0.0
    %6869 = vmatpush1.msra.mxu0 0.0
    %6870 = vmatprep.subr.mxu0 0.0
    %6871 = vmatpush1.msra.mxu0 0.0
    %6872 = vmatprep.subr.mxu0 0.0
    %6873 = vmatpush1.msra.mxu0 0.0
    %6874 = vmatprep.subr.mxu0 0.0
    %6875 = vmatpush1.msra.mxu0 0.0
    %6876 = vmatprep.subr.mxu0 0.0
    %6877 = vmatpush1.msra.mxu0 0.0
    %6878 = vmatprep.subr.mxu0 0.0
    %6879 = vmatpush1.msra.mxu0 0.0
    %6880 = vmatprep.subr.mxu0 0.0
    %6881 = vmatpush1.msra.mxu0 0.0
    %6882 = vmatprep.subr.mxu0 0.0
    %6883 = vmatpush1.msra.mxu0 0.0
    %6884 = vmatprep.subr.mxu0 0.0
    %v6885 = vand.u32 %v6621, 4294901760
    %6886 = vmatpush1.msra.mxu0 %v6885
    %6887 = vmatprep.subr.mxu0 0.0
    %v6888 = vand.u32 %v6620, 4294901760
    %6889 = vmatpush1.msra.mxu0 %v6888
    %6890 = vmatprep.subr.mxu0 0.0
    %6891 = vmatpush2.msra.mxu0 0.0
    %6892 = vmatprep.subr.mxu0 0.0
    %6893 = vmatpush2.msra.mxu0 0.0
    %6894 = vmatprep.subr.mxu0 0.0
    %6895 = vmatpush2.msra.mxu0 0.0
    %6896 = vmatprep.subr.mxu0 0.0
    %6897 = vmatpush2.msra.mxu0 0.0
    %6898 = vmatprep.subr.mxu0 0.0
    %6899 = vmatpush2.msra.mxu0 0.0
    %6900 = vmatprep.subr.mxu0 0.0
    %6901 = vmatpush2.msra.mxu0 0.0
    %6902 = vmatprep.subr.mxu0 0.0
    %6903 = vmatpush2.msra.mxu0 0.0
    %6904 = vmatprep.subr.mxu0 0.0
    %6905 = vmatpush2.msra.mxu0 0.0
    %6906 = vmatprep.subr.mxu0 0.0
    %6907 = vmatpush2.msra.mxu0 0.0
    %6908 = vmatprep.subr.mxu0 0.0
    %6909 = vmatpush2.msra.mxu0 0.0
    %6910 = vmatprep.subr.mxu0 0.0
    %6911 = vmatpush2.msra.mxu0 0.0
    %6912 = vmatprep.subr.mxu0 0.0
    %6913 = vmatpush2.msra.mxu0 0.0
    %6914 = vmatprep.subr.mxu0 0.0
    %6915 = vmatpush2.msra.mxu0 0.0
    %6916 = vmatprep.subr.mxu0 0.0
    %6917 = vmatpush2.msra.mxu0 0.0
    %6918 = vmatprep.subr.mxu0 0.0
    %6919 = vmatpush2.msra.mxu0 0.0
    %6920 = vmatprep.subr.mxu0 0.0
    %6921 = vmatpush2.msra.mxu0 0.0
    %6922 = vmatprep.mubr.f32.mxu0 0.0
    %v6923 = vand.u32 %v4610, 4294901760
    %v6924 = vsub.f32 %v4610, %v6923
    %v6925 = vand.u32 %v6924, 4294901760
    %6926 = vmatmul.mubr.f32.gmra.mxu0 %v6925
    %v6927 = vpop.f32.mrf.mxu0
    %v6928 = vadd.f32 %v6853, %v6927
    %v6929 = vpop.f32.mrf.mxu0
    %6930 = vdwg.mxu0
    %6931 = vmatprep.subr.mxu0 0.0
    %6932 = vmatpush1.msra.mxu0 0.0
    %6933 = vmatprep.subr.mxu0 0.0
    %6934 = vmatpush1.msra.mxu0 0.0
    %6935 = vmatprep.subr.mxu0 0.0
    %6936 = vmatpush1.msra.mxu0 0.0
    %6937 = vmatprep.subr.mxu0 0.0
    %6938 = vmatpush1.msra.mxu0 0.0
    %6939 = vmatprep.subr.mxu0 0.0
    %6940 = vmatpush1.msra.mxu0 0.0
    %6941 = vmatprep.subr.mxu0 0.0
    %6942 = vmatpush1.msra.mxu0 0.0
    %6943 = vmatprep.subr.mxu0 0.0
    %6944 = vmatpush1.msra.mxu0 0.0
    %6945 = vmatprep.subr.mxu0 0.0
    %6946 = vmatpush1.msra.mxu0 0.0
    %6947 = vmatprep.subr.mxu0 0.0
    %6948 = vmatpush1.msra.mxu0 0.0
    %6949 = vmatprep.subr.mxu0 0.0
    %6950 = vmatpush1.msra.mxu0 0.0
    %6951 = vmatprep.subr.mxu0 0.0
    %6952 = vmatpush1.msra.mxu0 0.0
    %6953 = vmatprep.subr.mxu0 0.0
    %6954 = vmatpush1.msra.mxu0 0.0
    %6955 = vmatprep.subr.mxu0 0.0
    %6956 = vmatpush1.msra.mxu0 0.0
    %6957 = vmatprep.subr.mxu0 0.0
    %6958 = vmatpush1.msra.mxu0 0.0
    %6959 = vmatprep.subr.mxu0 0.0
    %v6960 = vand.u32 %v6621, 4294901760
    %v6961 = vsub.f32 %v6621, %v6960
    %v6962 = vand.u32 %v6961, 4294901760
    %6963 = vmatpush1.msra.mxu0 %v6962
    %6964 = vmatprep.subr.mxu0 0.0
    %v6965 = vand.u32 %v6620, 4294901760
    %v6966 = vsub.f32 %v6620, %v6965
    %v6967 = vand.u32 %v6966, 4294901760
    %6968 = vmatpush1.msra.mxu0 %v6967
    %6969 = vmatprep.subr.mxu0 0.0
    %6970 = vmatpush2.msra.mxu0 0.0
    %6971 = vmatprep.subr.mxu0 0.0
    %6972 = vmatpush2.msra.mxu0 0.0
    %6973 = vmatprep.subr.mxu0 0.0
    %6974 = vmatpush2.msra.mxu0 0.0
    %6975 = vmatprep.subr.mxu0 0.0
    %6976 = vmatpush2.msra.mxu0 0.0
    %6977 = vmatprep.subr.mxu0 0.0
    %6978 = vmatpush2.msra.mxu0 0.0
    %6979 = vmatprep.subr.mxu0 0.0
    %6980 = vmatpush2.msra.mxu0 0.0
    %6981 = vmatprep.subr.mxu0 0.0
    %6982 = vmatpush2.msra.mxu0 0.0
    %6983 = vmatprep.subr.mxu0 0.0
    %6984 = vmatpush2.msra.mxu0 0.0
    %6985 = vmatprep.subr.mxu0 0.0
    %6986 = vmatpush2.msra.mxu0 0.0
    %6987 = vmatprep.subr.mxu0 0.0
    %6988 = vmatpush2.msra.mxu0 0.0
    %6989 = vmatprep.subr.mxu0 0.0
    %6990 = vmatpush2.msra.mxu0 0.0
    %6991 = vmatprep.subr.mxu0 0.0
    %6992 = vmatpush2.msra.mxu0 0.0
    %6993 = vmatprep.subr.mxu0 0.0
    %6994 = vmatpush2.msra.mxu0 0.0
    %6995 = vmatprep.subr.mxu0 0.0
    %6996 = vmatpush2.msra.mxu0 0.0
    %6997 = vmatprep.subr.mxu0 0.0
    %6998 = vmatpush2.msra.mxu0 0.0
    %6999 = vmatprep.subr.mxu0 0.0
    %7000 = vmatpush2.msra.mxu0 0.0
    %7001 = vmatprep.mubr.f32.mxu0 0.0
    %v7002 = vand.u32 %v4610, 4294901760
    %7003 = vmatmul.mubr.f32.gmra.mxu0 %v7002
    %v7004 = vpop.f32.mrf.mxu0
    %v7005 = vadd.f32 %v6928, %v7004
    %v7006 = vpop.f32.mrf.mxu0
    %7007 = vdwg.mxu0
    %7008 = vmatprep.subr.mxu0 0.0
    %7009 = vmatpush1.msra.mxu0 0.0
    %7010 = vmatprep.subr.mxu0 0.0
    %7011 = vmatpush1.msra.mxu0 0.0
    %7012 = vmatprep.subr.mxu0 0.0
    %7013 = vmatpush1.msra.mxu0 0.0
    %7014 = vmatprep.subr.mxu0 0.0
    %7015 = vmatpush1.msra.mxu0 0.0
    %7016 = vmatprep.subr.mxu0 0.0
    %7017 = vmatpush1.msra.mxu0 0.0
    %7018 = vmatprep.subr.mxu0 0.0
    %7019 = vmatpush1.msra.mxu0 0.0
    %7020 = vmatprep.subr.mxu0 0.0
    %7021 = vmatpush1.msra.mxu0 0.0
    %7022 = vmatprep.subr.mxu0 0.0
    %7023 = vmatpush1.msra.mxu0 0.0
    %7024 = vmatprep.subr.mxu0 0.0
    %7025 = vmatpush1.msra.mxu0 0.0
    %7026 = vmatprep.subr.mxu0 0.0
    %7027 = vmatpush1.msra.mxu0 0.0
    %7028 = vmatprep.subr.mxu0 0.0
    %7029 = vmatpush1.msra.mxu0 0.0
    %7030 = vmatprep.subr.mxu0 0.0
    %7031 = vmatpush1.msra.mxu0 0.0
    %7032 = vmatprep.subr.mxu0 0.0
    %7033 = vmatpush1.msra.mxu0 0.0
    %7034 = vmatprep.subr.mxu0 0.0
    %7035 = vmatpush1.msra.mxu0 0.0
    %7036 = vmatprep.subr.mxu0 0.0
    %v7037 = vand.u32 %v6621, 4294901760
    %7038 = vmatpush1.msra.mxu0 %v7037
    %7039 = vmatprep.subr.mxu0 0.0
    %v7040 = vand.u32 %v6620, 4294901760
    %7041 = vmatpush1.msra.mxu0 %v7040
    %7042 = vmatprep.subr.mxu0 0.0
    %7043 = vmatpush2.msra.mxu0 0.0
    %7044 = vmatprep.subr.mxu0 0.0
    %7045 = vmatpush2.msra.mxu0 0.0
    %7046 = vmatprep.subr.mxu0 0.0
    %7047 = vmatpush2.msra.mxu0 0.0
    %7048 = vmatprep.subr.mxu0 0.0
    %7049 = vmatpush2.msra.mxu0 0.0
    %7050 = vmatprep.subr.mxu0 0.0
    %7051 = vmatpush2.msra.mxu0 0.0
    %7052 = vmatprep.subr.mxu0 0.0
    %7053 = vmatpush2.msra.mxu0 0.0
    %7054 = vmatprep.subr.mxu0 0.0
    %7055 = vmatpush2.msra.mxu0 0.0
    %7056 = vmatprep.subr.mxu0 0.0
    %7057 = vmatpush2.msra.mxu0 0.0
    %7058 = vmatprep.subr.mxu0 0.0
    %7059 = vmatpush2.msra.mxu0 0.0
    %7060 = vmatprep.subr.mxu0 0.0
    %7061 = vmatpush2.msra.mxu0 0.0
    %7062 = vmatprep.subr.mxu0 0.0
    %7063 = vmatpush2.msra.mxu0 0.0
    %7064 = vmatprep.subr.mxu0 0.0
    %7065 = vmatpush2.msra.mxu0 0.0
    %7066 = vmatprep.subr.mxu0 0.0
    %7067 = vmatpush2.msra.mxu0 0.0
    %7068 = vmatprep.subr.mxu0 0.0
    %7069 = vmatpush2.msra.mxu0 0.0
    %7070 = vmatprep.subr.mxu0 0.0
    %7071 = vmatpush2.msra.mxu0 0.0
    %7072 = vmatprep.subr.mxu0 0.0
    %7073 = vmatpush2.msra.mxu0 0.0
    %7074 = vmatprep.mubr.f32.mxu0 0.0
    %v7075 = vand.u32 %v4610, 4294901760
    %7076 = vmatmul.mubr.f32.gmra.mxu0 %v7075
    %v7077 = vpop.f32.mrf.mxu0
    %v7078 = vadd.f32 %v7005, %v7077
    %v7079 = vpop.f32.mrf.mxu0
    %7080 = vdwg.mxu0
    %v7081 = vld [vmem:[%s2 + $0xd8] sm:$0xff]
    %v7082 = vld [vmem:[%s2 + $0xe0] sm:$0xff]
    %v7083 = vld [vmem:[%s2 + $0xe8] sm:$0xff]
    %v7084 = vld [vmem:[%s2 + $0xf0] sm:$0xff]
    %v7086 = vsel %vm30, %v7078, 0
    %7088 = vmatprep.subr.mxu0 0.0
    %7089 = vmatpush1.msra.mxu0 0.0
    %7090 = vmatprep.subr.mxu0 0.0
    %7091 = vmatpush1.msra.mxu0 0.0
    %7092 = vmatprep.subr.mxu0 0.0
    %7093 = vmatpush1.msra.mxu0 0.0
    %7094 = vmatprep.subr.mxu0 0.0
    %7095 = vmatpush1.msra.mxu0 0.0
    %7096 = vmatprep.subr.mxu0 0.0
    %7097 = vmatpush1.msra.mxu0 0.0
    %7098 = vmatprep.subr.mxu0 0.0
    %7099 = vmatpush1.msra.mxu0 0.0
    %7100 = vmatprep.subr.mxu0 0.0
    %7101 = vmatpush1.msra.mxu0 0.0
    %7102 = vmatprep.subr.mxu0 0.0
    %7103 = vmatpush1.msra.mxu0 0.0
    %7104 = vmatprep.subr.mxu0 0.0
    %7105 = vmatpush1.msra.mxu0 0.0
    %7106 = vmatprep.subr.mxu0 0.0
    %7107 = vmatpush1.msra.mxu0 0.0
    %7108 = vmatprep.subr.mxu0 0.0
    %7109 = vmatpush1.msra.mxu0 0.0
    %7110 = vmatprep.subr.mxu0 0.0
    %7111 = vmatpush1.msra.mxu0 0.0
    %7112 = vmatprep.subr.mxu0 0.0
    %v7113 = vand.u32 %v7084, 4294901760
    %7114 = vmatpush1.msra.mxu0 %v7113
    %7115 = vmatprep.subr.mxu0 0.0
    %v7116 = vand.u32 %v7083, 4294901760
    %7117 = vmatpush1.msra.mxu0 %v7116
    %7118 = vmatprep.subr.mxu0 0.0
    %v7119 = vand.u32 %v7082, 4294901760
    %7120 = vmatpush1.msra.mxu0 %v7119
    %7121 = vmatprep.subr.mxu0 0.0
    %v7122 = vand.u32 %v7081, 4294901760
    %7123 = vmatpush1.msra.mxu0 %v7122
    %7124 = vmatprep.subr.mxu0 0.0
    %7125 = vmatpush2.msra.mxu0 0.0
    %7126 = vmatprep.subr.mxu0 0.0
    %7127 = vmatpush2.msra.mxu0 0.0
    %7128 = vmatprep.subr.mxu0 0.0
    %7129 = vmatpush2.msra.mxu0 0.0
    %7130 = vmatprep.subr.mxu0 0.0
    %7131 = vmatpush2.msra.mxu0 0.0
    %7132 = vmatprep.subr.mxu0 0.0
    %7133 = vmatpush2.msra.mxu0 0.0
    %7134 = vmatprep.subr.mxu0 0.0
    %7135 = vmatpush2.msra.mxu0 0.0
    %7136 = vmatprep.subr.mxu0 0.0
    %7137 = vmatpush2.msra.mxu0 0.0
    %7138 = vmatprep.subr.mxu0 0.0
    %7139 = vmatpush2.msra.mxu0 0.0
    %7140 = vmatprep.subr.mxu0 0.0
    %7141 = vmatpush2.msra.mxu0 0.0
    %7142 = vmatprep.subr.mxu0 0.0
    %7143 = vmatpush2.msra.mxu0 0.0
    %7144 = vmatprep.subr.mxu0 0.0
    %7145 = vmatpush2.msra.mxu0 0.0
    %7146 = vmatprep.subr.mxu0 0.0
    %7147 = vmatpush2.msra.mxu0 0.0
    %7148 = vmatprep.subr.mxu0 0.0
    %7149 = vmatpush2.msra.mxu0 0.0
    %7150 = vmatprep.subr.mxu0 0.0
    %7151 = vmatpush2.msra.mxu0 0.0
    %7152 = vmatprep.subr.mxu0 0.0
    %7153 = vmatpush2.msra.mxu0 0.0
    %7154 = vmatprep.subr.mxu0 0.0
    %7155 = vmatpush2.msra.mxu0 0.0
    %7156 = vmatprep.mubr.f32.mxu0 0.0
    %v7157 = vand.u32 %v7086, 4294901760
    %v7158 = vsub.f32 %v7086, %v7157
    %v7159 = vand.u32 %v7158, 4294901760
    %v7160 = vsub.f32 %v7158, %v7159
    %v7161 = vand.u32 %v7160, 4294901760
    %7162 = vmatmul.mubr.f32.gmra.mxu0 %v7161
    %v7163 = vpop.f32.mrf.mxu0
    %v7164 = vadd.f32 %v1494, %v7163
    %v7165 = vpop.f32.mrf.mxu0
    %7166 = vdwg.mxu0
    %7167 = vmatprep.subr.mxu0 0.0
    %7168 = vmatpush1.msra.mxu0 0.0
    %7169 = vmatprep.subr.mxu0 0.0
    %7170 = vmatpush1.msra.mxu0 0.0
    %7171 = vmatprep.subr.mxu0 0.0
    %7172 = vmatpush1.msra.mxu0 0.0
    %7173 = vmatprep.subr.mxu0 0.0
    %7174 = vmatpush1.msra.mxu0 0.0
    %7175 = vmatprep.subr.mxu0 0.0
    %7176 = vmatpush1.msra.mxu0 0.0
    %7177 = vmatprep.subr.mxu0 0.0
    %7178 = vmatpush1.msra.mxu0 0.0
    %7179 = vmatprep.subr.mxu0 0.0
    %7180 = vmatpush1.msra.mxu0 0.0
    %7181 = vmatprep.subr.mxu0 0.0
    %7182 = vmatpush1.msra.mxu0 0.0
    %7183 = vmatprep.subr.mxu0 0.0
    %7184 = vmatpush1.msra.mxu0 0.0
    %7185 = vmatprep.subr.mxu0 0.0
    %7186 = vmatpush1.msra.mxu0 0.0
    %7187 = vmatprep.subr.mxu0 0.0
    %7188 = vmatpush1.msra.mxu0 0.0
    %7189 = vmatprep.subr.mxu0 0.0
    %7190 = vmatpush1.msra.mxu0 0.0
    %7191 = vmatprep.subr.mxu0 0.0
    %v7192 = vand.u32 %v7084, 4294901760
    %v7193 = vsub.f32 %v7084, %v7192
    %v7194 = vand.u32 %v7193, 4294901760
    %v7195 = vsub.f32 %v7193, %v7194
    %v7196 = vand.u32 %v7195, 4294901760
    %7197 = vmatpush1.msra.mxu0 %v7196
    %7198 = vmatprep.subr.mxu0 0.0
    %v7199 = vand.u32 %v7083, 4294901760
    %v7200 = vsub.f32 %v7083, %v7199
    %v7201 = vand.u32 %v7200, 4294901760
    %v7202 = vsub.f32 %v7200, %v7201
    %v7203 = vand.u32 %v7202, 4294901760
    %7204 = vmatpush1.msra.mxu0 %v7203
    %7205 = vmatprep.subr.mxu0 0.0
    %v7206 = vand.u32 %v7082, 4294901760
    %v7207 = vsub.f32 %v7082, %v7206
    %v7208 = vand.u32 %v7207, 4294901760
    %v7209 = vsub.f32 %v7207, %v7208
    %v7210 = vand.u32 %v7209, 4294901760
    %7211 = vmatpush1.msra.mxu0 %v7210
    %7212 = vmatprep.subr.mxu0 0.0
    %v7213 = vand.u32 %v7081, 4294901760
    %v7214 = vsub.f32 %v7081, %v7213
    %v7215 = vand.u32 %v7214, 4294901760
    %v7216 = vsub.f32 %v7214, %v7215
    %v7217 = vand.u32 %v7216, 4294901760
    %7218 = vmatpush1.msra.mxu0 %v7217
    %7219 = vmatprep.subr.mxu0 0.0
    %7220 = vmatpush2.msra.mxu0 0.0
    %7221 = vmatprep.subr.mxu0 0.0
    %7222 = vmatpush2.msra.mxu0 0.0
    %7223 = vmatprep.subr.mxu0 0.0
    %7224 = vmatpush2.msra.mxu0 0.0
    %7225 = vmatprep.subr.mxu0 0.0
    %7226 = vmatpush2.msra.mxu0 0.0
    %7227 = vmatprep.subr.mxu0 0.0
    %7228 = vmatpush2.msra.mxu0 0.0
    %7229 = vmatprep.subr.mxu0 0.0
    %7230 = vmatpush2.msra.mxu0 0.0
    %7231 = vmatprep.subr.mxu0 0.0
    %7232 = vmatpush2.msra.mxu0 0.0
    %7233 = vmatprep.subr.mxu0 0.0
    %7234 = vmatpush2.msra.mxu0 0.0
    %7235 = vmatprep.subr.mxu0 0.0
    %7236 = vmatpush2.msra.mxu0 0.0
    %7237 = vmatprep.subr.mxu0 0.0
    %7238 = vmatpush2.msra.mxu0 0.0
    %7239 = vmatprep.subr.mxu0 0.0
    %7240 = vmatpush2.msra.mxu0 0.0
    %7241 = vmatprep.subr.mxu0 0.0
    %7242 = vmatpush2.msra.mxu0 0.0
    %7243 = vmatprep.subr.mxu0 0.0
    %7244 = vmatpush2.msra.mxu0 0.0
    %7245 = vmatprep.subr.mxu0 0.0
    %7246 = vmatpush2.msra.mxu0 0.0
    %7247 = vmatprep.subr.mxu0 0.0
    %7248 = vmatpush2.msra.mxu0 0.0
    %7249 = vmatprep.subr.mxu0 0.0
    %7250 = vmatpush2.msra.mxu0 0.0
    %7251 = vmatprep.mubr.f32.mxu0 0.0
    %v7252 = vand.u32 %v7086, 4294901760
    %7253 = vmatmul.mubr.f32.gmra.mxu0 %v7252
    %v7254 = vpop.f32.mrf.mxu0
    %v7255 = vadd.f32 %v7164, %v7254
    %v7256 = vpop.f32.mrf.mxu0
    %7257 = vdwg.mxu0
    %7258 = vmatprep.subr.mxu0 0.0
    %7259 = vmatpush1.msra.mxu0 0.0
    %7260 = vmatprep.subr.mxu0 0.0
    %7261 = vmatpush1.msra.mxu0 0.0
    %7262 = vmatprep.subr.mxu0 0.0
    %7263 = vmatpush1.msra.mxu0 0.0
    %7264 = vmatprep.subr.mxu0 0.0
    %7265 = vmatpush1.msra.mxu0 0.0
    %7266 = vmatprep.subr.mxu0 0.0
    %7267 = vmatpush1.msra.mxu0 0.0
    %7268 = vmatprep.subr.mxu0 0.0
    %7269 = vmatpush1.msra.mxu0 0.0
    %7270 = vmatprep.subr.mxu0 0.0
    %7271 = vmatpush1.msra.mxu0 0.0
    %7272 = vmatprep.subr.mxu0 0.0
    %7273 = vmatpush1.msra.mxu0 0.0
    %7274 = vmatprep.subr.mxu0 0.0
    %7275 = vmatpush1.msra.mxu0 0.0
    %7276 = vmatprep.subr.mxu0 0.0
    %7277 = vmatpush1.msra.mxu0 0.0
    %7278 = vmatprep.subr.mxu0 0.0
    %7279 = vmatpush1.msra.mxu0 0.0
    %7280 = vmatprep.subr.mxu0 0.0
    %7281 = vmatpush1.msra.mxu0 0.0
    %7282 = vmatprep.subr.mxu0 0.0
    %v7283 = vand.u32 %v7084, 4294901760
    %v7284 = vsub.f32 %v7084, %v7283
    %7285 = vmatpush1.msra.mxu0 %v7284
    %7286 = vmatprep.subr.mxu0 0.0
    %v7287 = vand.u32 %v7083, 4294901760
    %v7288 = vsub.f32 %v7083, %v7287
    %7289 = vmatpush1.msra.mxu0 %v7288
    %7290 = vmatprep.subr.mxu0 0.0
    %v7291 = vand.u32 %v7082, 4294901760
    %v7292 = vsub.f32 %v7082, %v7291
    %7293 = vmatpush1.msra.mxu0 %v7292
    %7294 = vmatprep.subr.mxu0 0.0
    %v7295 = vand.u32 %v7081, 4294901760
    %v7296 = vsub.f32 %v7081, %v7295
    %7297 = vmatpush1.msra.mxu0 %v7296
    %7298 = vmatprep.subr.mxu0 0.0
    %7299 = vmatpush2.msra.mxu0 0.0
    %7300 = vmatprep.subr.mxu0 0.0
    %7301 = vmatpush2.msra.mxu0 0.0
    %7302 = vmatprep.subr.mxu0 0.0
    %7303 = vmatpush2.msra.mxu0 0.0
    %7304 = vmatprep.subr.mxu0 0.0
    %7305 = vmatpush2.msra.mxu0 0.0
    %7306 = vmatprep.subr.mxu0 0.0
    %7307 = vmatpush2.msra.mxu0 0.0
    %7308 = vmatprep.subr.mxu0 0.0
    %7309 = vmatpush2.msra.mxu0 0.0
    %7310 = vmatprep.subr.mxu0 0.0
    %7311 = vmatpush2.msra.mxu0 0.0
    %7312 = vmatprep.subr.mxu0 0.0
    %7313 = vmatpush2.msra.mxu0 0.0
    %7314 = vmatprep.subr.mxu0 0.0
    %7315 = vmatpush2.msra.mxu0 0.0
    %7316 = vmatprep.subr.mxu0 0.0
    %7317 = vmatpush2.msra.mxu0 0.0
    %7318 = vmatprep.subr.mxu0 0.0
    %7319 = vmatpush2.msra.mxu0 0.0
    %7320 = vmatprep.subr.mxu0 0.0
    %7321 = vmatpush2.msra.mxu0 0.0
    %7322 = vmatprep.subr.mxu0 0.0
    %7323 = vmatpush2.msra.mxu0 0.0
    %7324 = vmatprep.subr.mxu0 0.0
    %7325 = vmatpush2.msra.mxu0 0.0
    %7326 = vmatprep.subr.mxu0 0.0
    %7327 = vmatpush2.msra.mxu0 0.0
    %7328 = vmatprep.subr.mxu0 0.0
    %7329 = vmatpush2.msra.mxu0 0.0
    %7330 = vmatprep.mubr.f32.mxu0 0.0
    %v7331 = vand.u32 %v7086, 4294901760
    %v7332 = vsub.f32 %v7086, %v7331
    %7333 = vmatmul.mubr.f32.gmra.mxu0 %v7332
    %v7334 = vpop.f32.mrf.mxu0
    %v7335 = vadd.f32 %v7255, %v7334
    %v7336 = vpop.f32.mrf.mxu0
    %7337 = vdwg.mxu0
    %7338 = vmatprep.subr.mxu0 0.0
    %7339 = vmatpush1.msra.mxu0 0.0
    %7340 = vmatprep.subr.mxu0 0.0
    %7341 = vmatpush1.msra.mxu0 0.0
    %7342 = vmatprep.subr.mxu0 0.0
    %7343 = vmatpush1.msra.mxu0 0.0
    %7344 = vmatprep.subr.mxu0 0.0
    %7345 = vmatpush1.msra.mxu0 0.0
    %7346 = vmatprep.subr.mxu0 0.0
    %7347 = vmatpush1.msra.mxu0 0.0
    %7348 = vmatprep.subr.mxu0 0.0
    %7349 = vmatpush1.msra.mxu0 0.0
    %7350 = vmatprep.subr.mxu0 0.0
    %7351 = vmatpush1.msra.mxu0 0.0
    %7352 = vmatprep.subr.mxu0 0.0
    %7353 = vmatpush1.msra.mxu0 0.0
    %7354 = vmatprep.subr.mxu0 0.0
    %7355 = vmatpush1.msra.mxu0 0.0
    %7356 = vmatprep.subr.mxu0 0.0
    %7357 = vmatpush1.msra.mxu0 0.0
    %7358 = vmatprep.subr.mxu0 0.0
    %7359 = vmatpush1.msra.mxu0 0.0
    %7360 = vmatprep.subr.mxu0 0.0
    %7361 = vmatpush1.msra.mxu0 0.0
    %7362 = vmatprep.subr.mxu0 0.0
    %v7363 = vand.u32 %v7084, 4294901760
    %7364 = vmatpush1.msra.mxu0 %v7363
    %7365 = vmatprep.subr.mxu0 0.0
    %v7366 = vand.u32 %v7083, 4294901760
    %7367 = vmatpush1.msra.mxu0 %v7366
    %7368 = vmatprep.subr.mxu0 0.0
    %v7369 = vand.u32 %v7082, 4294901760
    %7370 = vmatpush1.msra.mxu0 %v7369
    %7371 = vmatprep.subr.mxu0 0.0
    %v7372 = vand.u32 %v7081, 4294901760
    %7373 = vmatpush1.msra.mxu0 %v7372
    %7374 = vmatprep.subr.mxu0 0.0
    %7375 = vmatpush2.msra.mxu0 0.0
    %7376 = vmatprep.subr.mxu0 0.0
    %7377 = vmatpush2.msra.mxu0 0.0
    %7378 = vmatprep.subr.mxu0 0.0
    %7379 = vmatpush2.msra.mxu0 0.0
    %7380 = vmatprep.subr.mxu0 0.0
    %7381 = vmatpush2.msra.mxu0 0.0
    %7382 = vmatprep.subr.mxu0 0.0
    %7383 = vmatpush2.msra.mxu0 0.0
    %7384 = vmatprep.subr.mxu0 0.0
    %7385 = vmatpush2.msra.mxu0 0.0
    %7386 = vmatprep.subr.mxu0 0.0
    %7387 = vmatpush2.msra.mxu0 0.0
    %7388 = vmatprep.subr.mxu0 0.0
    %7389 = vmatpush2.msra.mxu0 0.0
    %7390 = vmatprep.subr.mxu0 0.0
    %7391 = vmatpush2.msra.mxu0 0.0
    %7392 = vmatprep.subr.mxu0 0.0
    %7393 = vmatpush2.msra.mxu0 0.0
    %7394 = vmatprep.subr.mxu0 0.0
    %7395 = vmatpush2.msra.mxu0 0.0
    %7396 = vmatprep.subr.mxu0 0.0
    %7397 = vmatpush2.msra.mxu0 0.0
    %7398 = vmatprep.subr.mxu0 0.0
    %7399 = vmatpush2.msra.mxu0 0.0
    %7400 = vmatprep.subr.mxu0 0.0
    %7401 = vmatpush2.msra.mxu0 0.0
    %7402 = vmatprep.subr.mxu0 0.0
    %7403 = vmatpush2.msra.mxu0 0.0
    %7404 = vmatprep.subr.mxu0 0.0
    %7405 = vmatpush2.msra.mxu0 0.0
    %7406 = vmatprep.mubr.f32.mxu0 0.0
    %v7407 = vand.u32 %v7086, 4294901760
    %v7408 = vsub.f32 %v7086, %v7407
    %v7409 = vand.u32 %v7408, 4294901760
    %7410 = vmatmul.mubr.f32.gmra.mxu0 %v7409
    %v7411 = vpop.f32.mrf.mxu0
    %v7412 = vadd.f32 %v7335, %v7411
    %v7413 = vpop.f32.mrf.mxu0
    %7414 = vdwg.mxu0
    %7415 = vmatprep.subr.mxu0 0.0
    %7416 = vmatpush1.msra.mxu0 0.0
    %7417 = vmatprep.subr.mxu0 0.0
    %7418 = vmatpush1.msra.mxu0 0.0
    %7419 = vmatprep.subr.mxu0 0.0
    %7420 = vmatpush1.msra.mxu0 0.0
    %7421 = vmatprep.subr.mxu0 0.0
    %7422 = vmatpush1.msra.mxu0 0.0
    %7423 = vmatprep.subr.mxu0 0.0
    %7424 = vmatpush1.msra.mxu0 0.0
    %7425 = vmatprep.subr.mxu0 0.0
    %7426 = vmatpush1.msra.mxu0 0.0
    %7427 = vmatprep.subr.mxu0 0.0
    %7428 = vmatpush1.msra.mxu0 0.0
    %7429 = vmatprep.subr.mxu0 0.0
    %7430 = vmatpush1.msra.mxu0 0.0
    %7431 = vmatprep.subr.mxu0 0.0
    %7432 = vmatpush1.msra.mxu0 0.0
    %7433 = vmatprep.subr.mxu0 0.0
    %7434 = vmatpush1.msra.mxu0 0.0
    %7435 = vmatprep.subr.mxu0 0.0
    %7436 = vmatpush1.msra.mxu0 0.0
    %7437 = vmatprep.subr.mxu0 0.0
    %7438 = vmatpush1.msra.mxu0 0.0
    %7439 = vmatprep.subr.mxu0 0.0
    %v7440 = vand.u32 %v7084, 4294901760
    %v7441 = vsub.f32 %v7084, %v7440
    %v7442 = vand.u32 %v7441, 4294901760
    %7443 = vmatpush1.msra.mxu0 %v7442
    %7444 = vmatprep.subr.mxu0 0.0
    %v7445 = vand.u32 %v7083, 4294901760
    %v7446 = vsub.f32 %v7083, %v7445
    %v7447 = vand.u32 %v7446, 4294901760
    %7448 = vmatpush1.msra.mxu0 %v7447
    %7449 = vmatprep.subr.mxu0 0.0
    %v7450 = vand.u32 %v7082, 4294901760
    %v7451 = vsub.f32 %v7082, %v7450
    %v7452 = vand.u32 %v7451, 4294901760
    %7453 = vmatpush1.msra.mxu0 %v7452
    %7454 = vmatprep.subr.mxu0 0.0
    %v7455 = vand.u32 %v7081, 4294901760
    %v7456 = vsub.f32 %v7081, %v7455
    %v7457 = vand.u32 %v7456, 4294901760
    %7458 = vmatpush1.msra.mxu0 %v7457
    %7459 = vmatprep.subr.mxu0 0.0
    %7460 = vmatpush2.msra.mxu0 0.0
    %7461 = vmatprep.subr.mxu0 0.0
    %7462 = vmatpush2.msra.mxu0 0.0
    %7463 = vmatprep.subr.mxu0 0.0
    %7464 = vmatpush2.msra.mxu0 0.0
    %7465 = vmatprep.subr.mxu0 0.0
    %7466 = vmatpush2.msra.mxu0 0.0
    %7467 = vmatprep.subr.mxu0 0.0
    %7468 = vmatpush2.msra.mxu0 0.0
    %7469 = vmatprep.subr.mxu0 0.0
    %7470 = vmatpush2.msra.mxu0 0.0
    %7471 = vmatprep.subr.mxu0 0.0
    %7472 = vmatpush2.msra.mxu0 0.0
    %7473 = vmatprep.subr.mxu0 0.0
    %7474 = vmatpush2.msra.mxu0 0.0
    %7475 = vmatprep.subr.mxu0 0.0
    %7476 = vmatpush2.msra.mxu0 0.0
    %7477 = vmatprep.subr.mxu0 0.0
    %7478 = vmatpush2.msra.mxu0 0.0
    %7479 = vmatprep.subr.mxu0 0.0
    %7480 = vmatpush2.msra.mxu0 0.0
    %7481 = vmatprep.subr.mxu0 0.0
    %7482 = vmatpush2.msra.mxu0 0.0
    %7483 = vmatprep.subr.mxu0 0.0
    %7484 = vmatpush2.msra.mxu0 0.0
    %7485 = vmatprep.subr.mxu0 0.0
    %7486 = vmatpush2.msra.mxu0 0.0
    %7487 = vmatprep.subr.mxu0 0.0
    %7488 = vmatpush2.msra.mxu0 0.0
    %7489 = vmatprep.subr.mxu0 0.0
    %7490 = vmatpush2.msra.mxu0 0.0
    %7491 = vmatprep.mubr.f32.mxu0 0.0
    %v7492 = vand.u32 %v7086, 4294901760
    %7493 = vmatmul.mubr.f32.gmra.mxu0 %v7492
    %v7494 = vpop.f32.mrf.mxu0
    %v7495 = vadd.f32 %v7412, %v7494
    %v7496 = vpop.f32.mrf.mxu0
    %7497 = vdwg.mxu0
    %7498 = vmatprep.subr.mxu0 0.0
    %7499 = vmatpush1.msra.mxu0 0.0
    %7500 = vmatprep.subr.mxu0 0.0
    %7501 = vmatpush1.msra.mxu0 0.0
    %7502 = vmatprep.subr.mxu0 0.0
    %7503 = vmatpush1.msra.mxu0 0.0
    %7504 = vmatprep.subr.mxu0 0.0
    %7505 = vmatpush1.msra.mxu0 0.0
    %7506 = vmatprep.subr.mxu0 0.0
    %7507 = vmatpush1.msra.mxu0 0.0
    %7508 = vmatprep.subr.mxu0 0.0
    %7509 = vmatpush1.msra.mxu0 0.0
    %7510 = vmatprep.subr.mxu0 0.0
    %7511 = vmatpush1.msra.mxu0 0.0
    %7512 = vmatprep.subr.mxu0 0.0
    %7513 = vmatpush1.msra.mxu0 0.0
    %7514 = vmatprep.subr.mxu0 0.0
    %7515 = vmatpush1.msra.mxu0 0.0
    %7516 = vmatprep.subr.mxu0 0.0
    %7517 = vmatpush1.msra.mxu0 0.0
    %7518 = vmatprep.subr.mxu0 0.0
    %7519 = vmatpush1.msra.mxu0 0.0
    %7520 = vmatprep.subr.mxu0 0.0
    %7521 = vmatpush1.msra.mxu0 0.0
    %7522 = vmatprep.subr.mxu0 0.0
    %v7523 = vand.u32 %v7084, 4294901760
    %7524 = vmatpush1.msra.mxu0 %v7523
    %7525 = vmatprep.subr.mxu0 0.0
    %v7526 = vand.u32 %v7083, 4294901760
    %7527 = vmatpush1.msra.mxu0 %v7526
    %7528 = vmatprep.subr.mxu0 0.0
    %v7529 = vand.u32 %v7082, 4294901760
    %7530 = vmatpush1.msra.mxu0 %v7529
    %7531 = vmatprep.subr.mxu0 0.0
    %v7532 = vand.u32 %v7081, 4294901760
    %7533 = vmatpush1.msra.mxu0 %v7532
    %7534 = vmatprep.subr.mxu0 0.0
    %7535 = vmatpush2.msra.mxu0 0.0
    %7536 = vmatprep.subr.mxu0 0.0
    %7537 = vmatpush2.msra.mxu0 0.0
    %7538 = vmatprep.subr.mxu0 0.0
    %7539 = vmatpush2.msra.mxu0 0.0
    %7540 = vmatprep.subr.mxu0 0.0
    %7541 = vmatpush2.msra.mxu0 0.0
    %7542 = vmatprep.subr.mxu0 0.0
    %7543 = vmatpush2.msra.mxu0 0.0
    %7544 = vmatprep.subr.mxu0 0.0
    %7545 = vmatpush2.msra.mxu0 0.0
    %7546 = vmatprep.subr.mxu0 0.0
    %7547 = vmatpush2.msra.mxu0 0.0
    %7548 = vmatprep.subr.mxu0 0.0
    %7549 = vmatpush2.msra.mxu0 0.0
    %7550 = vmatprep.subr.mxu0 0.0
    %7551 = vmatpush2.msra.mxu0 0.0
    %7552 = vmatprep.subr.mxu0 0.0
    %7553 = vmatpush2.msra.mxu0 0.0
    %7554 = vmatprep.subr.mxu0 0.0
    %7555 = vmatpush2.msra.mxu0 0.0
    %7556 = vmatprep.subr.mxu0 0.0
    %7557 = vmatpush2.msra.mxu0 0.0
    %7558 = vmatprep.subr.mxu0 0.0
    %7559 = vmatpush2.msra.mxu0 0.0
    %7560 = vmatprep.subr.mxu0 0.0
    %7561 = vmatpush2.msra.mxu0 0.0
    %7562 = vmatprep.subr.mxu0 0.0
    %7563 = vmatpush2.msra.mxu0 0.0
    %7564 = vmatprep.subr.mxu0 0.0
    %7565 = vmatpush2.msra.mxu0 0.0
    %7566 = vmatprep.mubr.f32.mxu0 0.0
    %v7567 = vand.u32 %v7086, 4294901760
    %7568 = vmatmul.mubr.f32.gmra.mxu0 %v7567
    %v7569 = vpop.f32.mrf.mxu0
    %v7570 = vadd.f32 %v7495, %v7569
    %v7571 = vpop.f32.mrf.mxu0
    %7572 = vdwg.mxu0
    %v7573 = vld [vmem:[%s2 + $0xf8] sm:$0x1]
    %v7574 = vlaneseq
    %v7575 = vshrl.u32 %v7574, 7
    %v7576 = vsub.s32 0, %v7575
    %v7577 = vrot.slane %v7573, %v7576
    %v7578 = vadd.f32 %v7570, %v7577
    %7579 = vst.msk [vmem:[#allocation2] sm:$0xff] %vm30, %v7578
    // Predicated region
    $region14: #{argcn_forward.1} parent=1 // pred_check
      _
    $region15: #{argcn_forward.1} parent=1 // pred_check_branch
      %7581 = sbr.rel (0) target = $region17
    $region16: #{argcn_forward.1} parent=1 // pred_region
      %s7583 = ssub.s32 128, 128
      %7584 = vsyncadd [#allocation3], %s7583
      %s7586 = sshll.u32 [#allocation2], 4
      %s7587 = int_to_ptr.vmem [resolvable:$true] %s7586
      %7589 = dma.vmem_to_hbm [thread:$0]  %s7587, 128, %s3, [#allocation3]
    $region17: #{argcn_forward.1} parent=1 // pred_fallthru
      _
    // Predicated region
    $region18: #{argcn_forward.1} parent=1 // pred_check
      _
    $region19: #{argcn_forward.1} parent=1 // pred_check_branch
      %7591 = sbr.rel (0) target = $region21
    $region20: #{argcn_forward.1} parent=1 // pred_region
      _
    $region21: #{argcn_forward.1} parent=1 // pred_fallthru
      _
    // Predicated region
    $region22: #{argcn_forward.1} parent=1 // pred_check
      _
    $region23: #{argcn_forward.1} parent=1 // pred_check_branch
      %7593 = sbr.rel (0) target = $region25
    $region24: #{argcn_forward.1} parent=1 // pred_region
      %7594 = dma.done [#allocation3], 128
    $region25: #{argcn_forward.1} parent=1 // pred_fallthru
      _
    // Predicated region
    $region26: #{argcn_forward.1} parent=1 // pred_check
      _
    $region27: #{argcn_forward.1} parent=1 // pred_check_branch
      %7596 = sbr.rel (0) target = $region29
    $region28: #{argcn_forward.1} parent=1 // pred_region
      _
    $region29: #{argcn_forward.1} parent=1 // pred_fallthru
      _
    %7597 = vsyncpa [#allocation3], 1

</llo_original>
